<compile_context>
chip_gen: v7x
topology: tpu7x:2x2x1
jax: 0.10.0
libtpu: 0.0.40
codegen_flags: <defaults>
</compile_context>

<pallas_src>
import functools
import math

import jax
import jax.numpy as jnp
from jax.experimental import pallas as pl
from jax.experimental.pallas import tpu as pltpu

LEAKY_MODEL = 0.1        # nn.LeakyReLU(0.1) used throughout the network
LEAKY_GAT = 0.2          # GATConv default negative_slope for attention logits
NODES_PER_GRAPH = 40     # implied by x.view(len(x)/40, -1)
NEG_INF = -1e30


def _leaky(x, slope):
    return jnp.where(x > 0, x, slope * x)


def _mxu(a, b):
    """bf16-operand matmul with f32 accumulation (MXU-friendly on all gens)."""
    return jnp.dot(a.astype(jnp.bfloat16), b.astype(jnp.bfloat16),
                   preferred_element_type=jnp.float32)


# ------------------------------ fused Pallas kernel --------------------------

def _fused_kernel(p_ref, bias_ref, x_ref,
                  w1_ref, b1_ref, w2_ref, b2_ref,
                  w3_ref, asrc_ref, adst_ref, b3_ref,
                  rep_ref, emask_ref, sel_ref,
                  wl1_ref, bl1_ref, wl2_ref, bl2_ref, wl3_ref, bl3_ref,
                  o_ref):
    """One grid step == `pack` molecules (pack*40 rows), block-diagonal graph."""
    p = p_ref[0]          # [rows, rows]  block-diag (D^-1/2 (A+I) D^-1/2)^K
    bias = bias_ref[0]    # [rows, rows]  additive mask: 0 on edges/self, -1e30 else
    x = x_ref[0]          # [rows, C]

    # ---- SGConv1 + LeakyReLU(0.1)  (dropout = identity at inference) ----
    h = _mxu(p, x)
    h = _mxu(h, w1_ref[...]) + b1_ref[...]
    h = _leaky(h, LEAKY_MODEL)

    # ---- SGConv2 + LeakyReLU(0.1) ----
    h = _mxu(p, h)
    h = _mxu(h, w2_ref[...]) + b2_ref[...]
    h = _leaky(h, LEAKY_MODEL)

    # ---- GATConv (single head, self-loops) + LeakyReLU(0.1) ----
    hg = _mxu(h, w3_ref[...])                                     # [rows, H] f32
    hg_b = hg.astype(jnp.bfloat16)
    s_dst = jnp.dot(hg_b, adst_ref[...].astype(jnp.bfloat16),
                    preferred_element_type=jnp.float32)           # [rows, 1]
    s_src = jax.lax.dot_general(asrc_ref[...].astype(jnp.bfloat16), hg_b,
                                (((1,), (1,)), ((), ())),
                                preferred_element_type=jnp.float32)  # [1, rows]
    logits = _leaky(s_dst + s_src, LEAKY_GAT)                     # [rows, rows] f32
    e = logits + bias                                             # mask (f32 sentinel)
    e_max = jnp.max(e, axis=-1, keepdims=True)
    pexp = jnp.exp(e - e_max)              # masked entries underflow to exactly 0
    denom = jnp.sum(pexp, axis=-1, keepdims=True)
    alpha = pexp * pl.reciprocal(denom, approx=True)
    hgat = _mxu(alpha, hg_b) + b3_ref[...]
    hgat = _leaky(hgat, LEAKY_MODEL)                              # [rows, H]

    # ---- MLP head; flatten-per-graph done with MXU matmuls (no reshape) ----
    # hg_exp[r, n*H+h] = hgat[r, h] if (r % 40 == n) else 0
    hg_exp = _mxu(hgat, rep_ref[...]) * emask_ref[...]            # [rows, 40*H]
    x_flat = _mxu(sel_ref[...], hg_exp)                           # [pack, 40*H]
    y = _mxu(x_flat, wl1_ref[...]) + bl1_ref[...]                 # [pack, lin1]
    y = _leaky(y, LEAKY_MODEL)
    y = _leaky(_mxu(y, wl2_ref[...]) + bl2_ref[...], LEAKY_MODEL)
    y = _mxu(y, wl3_ref[...]) + bl3_ref[...]                      # [pack, out]
    o_ref[0] = y


# ------------------------------ plain-JAX glue --------------------------------

def build_graph_blocks(edge_index, num_graphs, num_blocks, pack, nodes_per_graph, K):
    """Per-pack block-diagonal P^K, additive GAT mask.  All plain JAX (wrapper)."""
    npg = nodes_per_graph
    g_pad = num_blocks * pack
    rows = pack * npg

    src, dst = edge_index[0], edge_index[1]
    g = dst // npg
    ls = src % npg
    ld = dst % npg
    A = jnp.zeros((g_pad, npg, npg), jnp.float32)
    A = A.at[g, ld, ls].set(1.0)                                 # A[dst, src]
    eye = jnp.eye(npg, dtype=jnp.float32)
    A_sl = jnp.minimum(A + eye[None], 1.0)                       # A + I
    deg = jnp.sum(A_sl, axis=-1)
    dinv = jax.lax.rsqrt(deg)
    a_hat = dinv[:, :, None] * A_sl * dinv[:, None, :]           # D^-1/2 (A+I) D^-1/2
    p = jnp.broadcast_to(eye[None], a_hat.shape)
    for _ in range(K):                                           # K static: P = A_hat^K
        p = jnp.matmul(a_hat, p)

    eyep = jnp.eye(pack, dtype=jnp.float32)

    def blockdiag(m):                                            # [g_pad,40,40] -> block-diag
        mb = m.reshape(num_blocks, pack, npg, npg)
        bd = jnp.einsum('bgij,gh->bgihj', mb, eyep)
        return bd.reshape(num_blocks, rows, rows)

    p_blocks = blockdiag(p)
    adj_blocks = blockdiag(A_sl)
    bias_blocks = jnp.where(adj_blocks > 0, 0.0, NEG_INF).astype(jnp.float32)
    return p_blocks, bias_blocks


def init_params(key, in_channel, hid1, hid2, hid3, lin1, lin2, out):
    keys = jax.random.split(key, 16)

    def unif(k, shape, fan_in):
        bound = 1.0 / math.sqrt(fan_in)
        return jax.random.uniform(k, shape, jnp.float32, -bound, bound)

    return {
        # SGConv 1 / 2 (weights stored [in, out] so kernel does x @ W)
        "w_c1": unif(keys[0], (in_channel, hid1), in_channel),
        "b_c1": unif(keys[1], (1, hid1), in_channel),
        "w_c2": unif(keys[2], (hid1, hid2), hid1),
        "b_c2": unif(keys[3], (1, hid2), hid1),
        # GATConv (single head)
        "w_c3": unif(keys[4], (hid2, hid3), hid2),
        "a_src": unif(keys[5], (1, hid3), hid3),
        "a_dst": unif(keys[6], (hid3, 1), hid3),
        "b_c3": jnp.zeros((1, hid3), jnp.float32),
        # MLP head
        "w_l1": unif(keys[7], (NODES_PER_GRAPH * hid3, lin1), NODES_PER_GRAPH * hid3),
        "b_l1": unif(keys[8], (1, lin1), NODES_PER_GRAPH * hid3),
        "w_l2": unif(keys[9], (lin1, lin2), lin1),
        "b_l2": unif(keys[10], (1, lin2), lin1),
        "w_l3": unif(keys[11], (lin2, out), lin2),
        "b_l3": unif(keys[12], (1, out), lin2),
    }


def sgc_network_forward(params, x, edge_index, *, K, num_graphs, pack=6):
    npg = NODES_PER_GRAPH
    N, C = x.shape
    G = num_graphs
    assert N == G * npg

    num_blocks = -(-G // pack)            # cdiv
    g_pad = num_blocks * pack
    rows = pack * npg

    hid3 = params["w_c3"].shape[1]
    lin_flat = npg * hid3
    out_dim = params["w_l3"].shape[1]

    p_blocks, bias_blocks = build_graph_blocks(edge_index, G, num_blocks, pack, npg, K)

    x_pad = jnp.zeros((g_pad * npg, C), x.dtype).at[:N].set(x)
    x_blocks = x_pad.reshape(num_blocks, rows, C)

    # Constants for the matmul-based per-graph flatten of the l1 layer.
    sel = jnp.repeat(jnp.eye(pack, dtype=jnp.float32), npg, axis=1)      # [pack, rows]
    rep = jnp.tile(jnp.eye(hid3, dtype=jnp.float32), (1, npg))           # [H, 40*H]
    col_node = jnp.arange(lin_flat, dtype=jnp.int32) // hid3
    row_node = jnp.arange(rows, dtype=jnp.int32) % npg
    emask = (row_node[:, None] == col_node[None, :]).astype(jnp.float32)  # [rows, 40*H]

    def per_block(shape):
        return pl.BlockSpec((1,) + tuple(shape[1:]), lambda b: (b, 0, 0))

    def replicated(shape):
        nd = len(shape)
        return pl.BlockSpec(tuple(shape), lambda b, _nd=nd: (0,) * _nd)

    inputs = [p_blocks, bias_blocks, x_blocks,
              params["w_c1"], params["b_c1"], params["w_c2"], params["b_c2"],
              params["w_c3"], params["a_src"], params["a_dst"], params["b_c3"],
              rep, emask, sel,
              params["w_l1"], params["b_l1"], params["w_l2"], params["b_l2"],
              params["w_l3"], params["b_l3"]]

    in_specs = ([per_block(p_blocks.shape),
                 per_block(bias_blocks.shape),
                 per_block(x_blocks.shape)]
                + [replicated(a.shape) for a in inputs[3:]])

    out = pl.pallas_call(
        _fused_kernel,
        grid=(num_blocks,),
        in_specs=in_specs,
        out_specs=pl.BlockSpec((1, pack, out_dim), lambda b: (b, 0, 0)),
        out_shape=jax.ShapeDtypeStruct((num_blocks, pack, out_dim), jnp.float32),
        compiler_params=pltpu.CompilerParams(
            dimension_semantics=("parallel",),
            vmem_limit_bytes=32 * 1024 * 1024),
    )(*inputs)
    return out.reshape(g_pad, out_dim)[:G]


# ----------------------------------- main -------------------------------------

if __name__ == "__main__":
    # Small deterministic config
    in_channel, hid1, hid2, hid3 = 16, 32, 32, 32
    lin1, lin2, out_dim = 64, 32, 2
    K = 2
    num_graphs = 12          # pack=6 -> grid=(2,): both v7x TensorCores get work
    pack = 6
    N = num_graphs * NODES_PER_GRAPH

    key = jax.random.PRNGKey(0)
    k_x, k_p = jax.random.split(key)

    # Deterministic edge_index: per-graph ring + chord(+7) edges, both directions.
    src_list, dst_list = [], []
    for g in range(num_graphs):
        base = g * NODES_PER_GRAPH
        for i in range(NODES_PER_GRAPH):
            j = (i + 1) % NODES_PER_GRAPH
            c = (i + 7) % NODES_PER_GRAPH
            for a, b in ((i, j), (j, i), (i, c), (c, i)):
                src_list.append(base + a)
                dst_list.append(base + b)
    edge_index = jnp.array([src_list, dst_list], dtype=jnp.int32)

    x = jax.random.normal(k_x, (N, in_channel), jnp.float32)
    params = init_params(k_p, in_channel, hid1, hid2, hid3, lin1, lin2, out_dim)

    # TODO(synk): dropout is identity (inference) and the grad_value/cam() hook
    # has no kernel-side equivalent.
    forward = jax.jit(functools.partial(sgc_network_forward, K=K,
                                        num_graphs=num_graphs, pack=pack))
    out = forward(params, x, edge_index)
    jax.block_until_ready(out)
    assert out.shape == (num_graphs, out_dim)
    print("KERNEL_OK")
</pallas_src>

<mosaic_0001>
module attributes {stable_mosaic.version = 11 : i64} {
  func.func @_fused_kernel(%arg0: i32, %arg1: memref<1x240x240xf32, #tpu.memory_space<vmem>>, %arg2: memref<1x240x240xf32, #tpu.memory_space<vmem>>, %arg3: memref<1x240x16xf32, #tpu.memory_space<vmem>>, %arg4: memref<16x32xf32, #tpu.memory_space<vmem>>, %arg5: memref<1x32xf32, #tpu.memory_space<vmem>>, %arg6: memref<32x32xf32, #tpu.memory_space<vmem>>, %arg7: memref<1x32xf32, #tpu.memory_space<vmem>>, %arg8: memref<32x32xf32, #tpu.memory_space<vmem>>, %arg9: memref<1x32xf32, #tpu.memory_space<vmem>>, %arg10: memref<32x1xf32, #tpu.memory_space<vmem>>, %arg11: memref<1x32xf32, #tpu.memory_space<vmem>>, %arg12: memref<32x1280xf32, #tpu.memory_space<vmem>>, %arg13: memref<240x1280xf32, #tpu.memory_space<vmem>>, %arg14: memref<6x240xf32, #tpu.memory_space<vmem>>, %arg15: memref<1280x64xf32, #tpu.memory_space<vmem>>, %arg16: memref<1x64xf32, #tpu.memory_space<vmem>>, %arg17: memref<64x32xf32, #tpu.memory_space<vmem>>, %arg18: memref<1x32xf32, #tpu.memory_space<vmem>>, %arg19: memref<32x2xf32, #tpu.memory_space<vmem>>, %arg20: memref<1x2xf32, #tpu.memory_space<vmem>>, %arg21: memref<1x6x2xf32, #tpu.memory_space<vmem>>) attributes {dimension_semantics = [#tpu.dimension_semantics<parallel>], iteration_bounds = array<i64: 2>, scalar_prefetch = 0 : i64, scratch_operands = 0 : i64, tpu.core_type = #tpu.core_type<tc>, window_params = [{transform_indices = @transform_0, window_bounds = array<i64: 1, 240, 240>}, {transform_indices = @transform_1, window_bounds = array<i64: 1, 240, 240>}, {transform_indices = @transform_2, window_bounds = array<i64: 1, 240, 16>}, {pipeline_mode = #tpu.pipeline_mode<synchronous>, transform_indices = @transform_3, window_bounds = array<i64: 16, 32>}, {pipeline_mode = #tpu.pipeline_mode<synchronous>, transform_indices = @transform_4, window_bounds = array<i64: 1, 32>}, {pipeline_mode = #tpu.pipeline_mode<synchronous>, transform_indices = @transform_5, window_bounds = array<i64: 32, 32>}, {pipeline_mode = #tpu.pipeline_mode<synchronous>, transform_indices = @transform_6, window_bounds = array<i64: 1, 32>}, {pipeline_mode = #tpu.pipeline_mode<synchronous>, transform_indices = @transform_7, window_bounds = array<i64: 32, 32>}, {pipeline_mode = #tpu.pipeline_mode<synchronous>, transform_indices = @transform_8, window_bounds = array<i64: 1, 32>}, {pipeline_mode = #tpu.pipeline_mode<synchronous>, transform_indices = @transform_9, window_bounds = array<i64: 32, 1>}, {pipeline_mode = #tpu.pipeline_mode<synchronous>, transform_indices = @transform_10, window_bounds = array<i64: 1, 32>}, {pipeline_mode = #tpu.pipeline_mode<synchronous>, transform_indices = @transform_11, window_bounds = array<i64: 32, 1280>}, {pipeline_mode = #tpu.pipeline_mode<synchronous>, transform_indices = @transform_12, window_bounds = array<i64: 240, 1280>}, {pipeline_mode = #tpu.pipeline_mode<synchronous>, transform_indices = @transform_13, window_bounds = array<i64: 6, 240>}, {pipeline_mode = #tpu.pipeline_mode<synchronous>, transform_indices = @transform_14, window_bounds = array<i64: 1280, 64>}, {pipeline_mode = #tpu.pipeline_mode<synchronous>, transform_indices = @transform_15, window_bounds = array<i64: 1, 64>}, {pipeline_mode = #tpu.pipeline_mode<synchronous>, transform_indices = @transform_16, window_bounds = array<i64: 64, 32>}, {pipeline_mode = #tpu.pipeline_mode<synchronous>, transform_indices = @transform_17, window_bounds = array<i64: 1, 32>}, {pipeline_mode = #tpu.pipeline_mode<synchronous>, transform_indices = @transform_18, window_bounds = array<i64: 32, 2>}, {pipeline_mode = #tpu.pipeline_mode<synchronous>, transform_indices = @transform_19, window_bounds = array<i64: 1, 2>}, {transform_indices = @transform_20, window_bounds = array<i64: 1, 6, 2>}]} {
    %c0 = arith.constant 0 : index
    %c0_0 = arith.constant 0 : index
    %c0_1 = arith.constant 0 : index
    %0 = vector.load %arg1[%c0, %c0_0, %c0_1] : memref<1x240x240xf32, #tpu.memory_space<vmem>>, vector<1x240x240xf32>
    %1 = vector.shape_cast %0 : vector<1x240x240xf32> to vector<240x240xf32>
    %c0_2 = arith.constant 0 : index
    %c0_3 = arith.constant 0 : index
    %c0_4 = arith.constant 0 : index
    %2 = vector.load %arg2[%c0_2, %c0_3, %c0_4] : memref<1x240x240xf32, #tpu.memory_space<vmem>>, vector<1x240x240xf32>
    %3 = vector.shape_cast %2 : vector<1x240x240xf32> to vector<240x240xf32>
    %c0_5 = arith.constant 0 : index
    %c0_6 = arith.constant 0 : index
    %c0_7 = arith.constant 0 : index
    %4 = vector.load %arg3[%c0_5, %c0_6, %c0_7] : memref<1x240x16xf32, #tpu.memory_space<vmem>>, vector<1x240x16xf32>
    %5 = vector.shape_cast %4 : vector<1x240x16xf32> to vector<240x16xf32>
    %6 = arith.truncf %1 : vector<240x240xf32> to vector<240x240xbf16>
    %7 = arith.truncf %5 : vector<240x16xf32> to vector<240x16xbf16>
    %cst = arith.constant dense<0.000000e+00> : vector<240x16xf32>
    %8 = tpu.matmul %6, %7, %cst {dimension_numbers = #tpu.dot_dimension_numbers<[1], [0], [0], [1], [0, 0, 1, 1], [], []>} : vector<240x240xbf16>, vector<240x16xbf16>, vector<240x16xf32> -> vector<240x16xf32>
    %c0_8 = arith.constant 0 : index
    %c0_9 = arith.constant 0 : index
    %9 = vector.load %arg4[%c0_8, %c0_9] : memref<16x32xf32, #tpu.memory_space<vmem>>, vector<16x32xf32>
    %10 = arith.truncf %8 : vector<240x16xf32> to vector<240x16xbf16>
    %11 = arith.truncf %9 : vector<16x32xf32> to vector<16x32xbf16>
    %cst_10 = arith.constant dense<0.000000e+00> : vector<240x32xf32>
    %12 = tpu.matmul %10, %11, %cst_10 {dimension_numbers = #tpu.dot_dimension_numbers<[1], [0], [0], [1], [0, 0, 1, 1], [], []>} : vector<240x16xbf16>, vector<16x32xbf16>, vector<240x32xf32> -> vector<240x32xf32>
    %c0_11 = arith.constant 0 : index
    %c0_12 = arith.constant 0 : index
    %13 = vector.load %arg5[%c0_11, %c0_12] : memref<1x32xf32, #tpu.memory_space<vmem>>, vector<1x32xf32>
    %14 = vector.broadcast %13 : vector<1x32xf32> to vector<240x32xf32>
    %15 = arith.addf %12, %14 : vector<240x32xf32>
    %cst_13 = arith.constant 0.000000e+00 : f32
    %16 = vector.broadcast %cst_13 : f32 to vector<240x32xf32>
    %17 = arith.cmpf ogt, %15, %16 : vector<240x32xf32>
    %cst_14 = arith.constant 1.000000e-01 : f32
    %18 = vector.broadcast %cst_14 : f32 to vector<240x32xf32>
    %19 = arith.mulf %18, %15 : vector<240x32xf32>
    %20 = arith.select %17, %15, %19 : vector<240x32xi1>, vector<240x32xf32>
    %21 = arith.truncf %1 : vector<240x240xf32> to vector<240x240xbf16>
    %22 = arith.truncf %20 : vector<240x32xf32> to vector<240x32xbf16>
    %cst_15 = arith.constant dense<0.000000e+00> : vector<240x32xf32>
    %23 = tpu.matmul %21, %22, %cst_15 {dimension_numbers = #tpu.dot_dimension_numbers<[1], [0], [0], [1], [0, 0, 1, 1], [], []>} : vector<240x240xbf16>, vector<240x32xbf16>, vector<240x32xf32> -> vector<240x32xf32>
    %c0_16 = arith.constant 0 : index
    %c0_17 = arith.constant 0 : index
    %24 = vector.load %arg6[%c0_16, %c0_17] : memref<32x32xf32, #tpu.memory_space<vmem>>, vector<32x32xf32>
    %25 = arith.truncf %23 : vector<240x32xf32> to vector<240x32xbf16>
    %26 = arith.truncf %24 : vector<32x32xf32> to vector<32x32xbf16>
    %cst_18 = arith.constant dense<0.000000e+00> : vector<240x32xf32>
    %27 = tpu.matmul %25, %26, %cst_18 {dimension_numbers = #tpu.dot_dimension_numbers<[1], [0], [0], [1], [0, 0, 1, 1], [], []>} : vector<240x32xbf16>, vector<32x32xbf16>, vector<240x32xf32> -> vector<240x32xf32>
    %c0_19 = arith.constant 0 : index
    %c0_20 = arith.constant 0 : index
    %28 = vector.load %arg7[%c0_19, %c0_20] : memref<1x32xf32, #tpu.memory_space<vmem>>, vector<1x32xf32>
    %29 = vector.broadcast %28 : vector<1x32xf32> to vector<240x32xf32>
    %30 = arith.addf %27, %29 : vector<240x32xf32>
    %cst_21 = arith.constant 0.000000e+00 : f32
    %31 = vector.broadcast %cst_21 : f32 to vector<240x32xf32>
    %32 = arith.cmpf ogt, %30, %31 : vector<240x32xf32>
    %cst_22 = arith.constant 1.000000e-01 : f32
    %33 = vector.broadcast %cst_22 : f32 to vector<240x32xf32>
    %34 = arith.mulf %33, %30 : vector<240x32xf32>
    %35 = arith.select %32, %30, %34 : vector<240x32xi1>, vector<240x32xf32>
    %c0_23 = arith.constant 0 : index
    %c0_24 = arith.constant 0 : index
    %36 = vector.load %arg8[%c0_23, %c0_24] : memref<32x32xf32, #tpu.memory_space<vmem>>, vector<32x32xf32>
    %37 = arith.truncf %35 : vector<240x32xf32> to vector<240x32xbf16>
    %38 = arith.truncf %36 : vector<32x32xf32> to vector<32x32xbf16>
    %cst_25 = arith.constant dense<0.000000e+00> : vector<240x32xf32>
    %39 = tpu.matmul %37, %38, %cst_25 {dimension_numbers = #tpu.dot_dimension_numbers<[1], [0], [0], [1], [0, 0, 1, 1], [], []>} : vector<240x32xbf16>, vector<32x32xbf16>, vector<240x32xf32> -> vector<240x32xf32>
    %40 = arith.truncf %39 : vector<240x32xf32> to vector<240x32xbf16>
    %c0_26 = arith.constant 0 : index
    %c0_27 = arith.constant 0 : index
    %41 = vector.load %arg10[%c0_26, %c0_27] : memref<32x1xf32, #tpu.memory_space<vmem>>, vector<32x1xf32>
    %42 = arith.truncf %41 : vector<32x1xf32> to vector<32x1xbf16>
    %cst_28 = arith.constant dense<0.000000e+00> : vector<240x1xf32>
    %43 = tpu.matmul %40, %42, %cst_28 {dimension_numbers = #tpu.dot_dimension_numbers<[1], [0], [0], [1], [0, 0, 1, 1], [], []>} : vector<240x32xbf16>, vector<32x1xbf16>, vector<240x1xf32> -> vector<240x1xf32>
    %c0_29 = arith.constant 0 : index
    %c0_30 = arith.constant 0 : index
    %44 = vector.load %arg9[%c0_29, %c0_30] : memref<1x32xf32, #tpu.memory_space<vmem>>, vector<1x32xf32>
    %45 = arith.truncf %44 : vector<1x32xf32> to vector<1x32xbf16>
    %cst_31 = arith.constant dense<0.000000e+00> : vector<1x240xf32>
    %46 = tpu.matmul %45, %40, %cst_31 {dimension_numbers = #tpu.dot_dimension_numbers<[1], [1], [0], [0], [0, 0, 1, 0], [], []>} : vector<1x32xbf16>, vector<240x32xbf16>, vector<1x240xf32> -> vector<1x240xf32>
    %47 = vector.broadcast %43 : vector<240x1xf32> to vector<240x240xf32>
    %48 = vector.broadcast %46 : vector<1x240xf32> to vector<240x240xf32>
    %49 = arith.addf %47, %48 : vector<240x240xf32>
    %cst_32 = arith.constant 0.000000e+00 : f32
    %50 = vector.broadcast %cst_32 : f32 to vector<240x240xf32>
    %51 = arith.cmpf ogt, %49, %50 : vector<240x240xf32>
    %cst_33 = arith.constant 2.000000e-01 : f32
    %52 = vector.broadcast %cst_33 : f32 to vector<240x240xf32>
    %53 = arith.mulf %52, %49 : vector<240x240xf32>
    %54 = arith.select %51, %49, %53 : vector<240x240xi1>, vector<240x240xf32>
    %55 = arith.addf %54, %3 : vector<240x240xf32>
    %cst_34 = arith.constant dense<0xFF800000> : vector<240xf32>
    %56 = vector.multi_reduction <maximumf>, %55, %cst_34 [1] : vector<240x240xf32> to vector<240xf32>
    %57 = vector.shape_cast %56 : vector<240xf32> to vector<240x1xf32>
    %58 = vector.broadcast %57 : vector<240x1xf32> to vector<240x240xf32>
    %59 = arith.subf %55, %58 : vector<240x240xf32>
    %60 = math.exp %59 : vector<240x240xf32>
    %cst_35 = arith.constant dense<0.000000e+00> : vector<240xf32>
    %61 = vector.multi_reduction <add>, %60, %cst_35 [1] : vector<240x240xf32> to vector<240xf32>
    %62 = vector.shape_cast %61 : vector<240xf32> to vector<240x1xf32>
    %63 = tpu.reciprocal %62 {approx = true} : vector<240x1xf32> -> vector<240x1xf32>
    %64 = vector.broadcast %63 : vector<240x1xf32> to vector<240x240xf32>
    %65 = arith.mulf %60, %64 : vector<240x240xf32>
    %66 = arith.truncf %65 : vector<240x240xf32> to vector<240x240xbf16>
    %cst_36 = arith.constant dense<0.000000e+00> : vector<240x32xf32>
    %67 = tpu.matmul %66, %40, %cst_36 {dimension_numbers = #tpu.dot_dimension_numbers<[1], [0], [0], [1], [0, 0, 1, 1], [], []>} : vector<240x240xbf16>, vector<240x32xbf16>, vector<240x32xf32> -> vector<240x32xf32>
    %c0_37 = arith.constant 0 : index
    %c0_38 = arith.constant 0 : index
    %68 = vector.load %arg11[%c0_37, %c0_38] : memref<1x32xf32, #tpu.memory_space<vmem>>, vector<1x32xf32>
    %69 = vector.broadcast %68 : vector<1x32xf32> to vector<240x32xf32>
    %70 = arith.addf %67, %69 : vector<240x32xf32>
    %cst_39 = arith.constant 0.000000e+00 : f32
    %71 = vector.broadcast %cst_39 : f32 to vector<240x32xf32>
    %72 = arith.cmpf ogt, %70, %71 : vector<240x32xf32>
    %cst_40 = arith.constant 1.000000e-01 : f32
    %73 = vector.broadcast %cst_40 : f32 to vector<240x32xf32>
    %74 = arith.mulf %73, %70 : vector<240x32xf32>
    %75 = arith.select %72, %70, %74 : vector<240x32xi1>, vector<240x32xf32>
    %c0_41 = arith.constant 0 : index
    %c0_42 = arith.constant 0 : index
    %76 = vector.load %arg12[%c0_41, %c0_42] : memref<32x1280xf32, #tpu.memory_space<vmem>>, vector<32x1280xf32>
    %77 = arith.truncf %75 : vector<240x32xf32> to vector<240x32xbf16>
    %78 = arith.truncf %76 : vector<32x1280xf32> to vector<32x1280xbf16>
    %cst_43 = arith.constant dense<0.000000e+00> : vector<240x1280xf32>
    %79 = tpu.matmul %77, %78, %cst_43 {dimension_numbers = #tpu.dot_dimension_numbers<[1], [0], [0], [1], [0, 0, 1, 1], [], []>} : vector<240x32xbf16>, vector<32x1280xbf16>, vector<240x1280xf32> -> vector<240x1280xf32>
    %c0_44 = arith.constant 0 : index
    %c0_45 = arith.constant 0 : index
    %80 = vector.load %arg13[%c0_44, %c0_45] : memref<240x1280xf32, #tpu.memory_space<vmem>>, vector<240x1280xf32>
    %81 = arith.mulf %79, %80 : vector<240x1280xf32>
    %c0_46 = arith.constant 0 : index
    %c0_47 = arith.constant 0 : index
    %82 = vector.load %arg14[%c0_46, %c0_47] : memref<6x240xf32, #tpu.memory_space<vmem>>, vector<6x240xf32>
    %83 = arith.truncf %82 : vector<6x240xf32> to vector<6x240xbf16>
    %84 = arith.truncf %81 : vector<240x1280xf32> to vector<240x1280xbf16>
    %cst_48 = arith.constant dense<0.000000e+00> : vector<6x1280xf32>
    %85 = tpu.matmul %83, %84, %cst_48 {dimension_numbers = #tpu.dot_dimension_numbers<[1], [0], [0], [1], [0, 0, 1, 1], [], []>} : vector<6x240xbf16>, vector<240x1280xbf16>, vector<6x1280xf32> -> vector<6x1280xf32>
    %c0_49 = arith.constant 0 : index
    %c0_50 = arith.constant 0 : index
    %86 = vector.load %arg15[%c0_49, %c0_50] : memref<1280x64xf32, #tpu.memory_space<vmem>>, vector<1280x64xf32>
    %87 = arith.truncf %85 : vector<6x1280xf32> to vector<6x1280xbf16>
    %88 = arith.truncf %86 : vector<1280x64xf32> to vector<1280x64xbf16>
    %cst_51 = arith.constant dense<0.000000e+00> : vector<6x64xf32>
    %89 = tpu.matmul %87, %88, %cst_51 {dimension_numbers = #tpu.dot_dimension_numbers<[1], [0], [0], [1], [0, 0, 1, 1], [], []>} : vector<6x1280xbf16>, vector<1280x64xbf16>, vector<6x64xf32> -> vector<6x64xf32>
    %c0_52 = arith.constant 0 : index
    %c0_53 = arith.constant 0 : index
    %90 = vector.load %arg16[%c0_52, %c0_53] : memref<1x64xf32, #tpu.memory_space<vmem>>, vector<1x64xf32>
    %91 = vector.broadcast %90 : vector<1x64xf32> to vector<6x64xf32>
    %92 = arith.addf %89, %91 : vector<6x64xf32>
    %cst_54 = arith.constant 0.000000e+00 : f32
    %93 = vector.broadcast %cst_54 : f32 to vector<6x64xf32>
    %94 = arith.cmpf ogt, %92, %93 : vector<6x64xf32>
    %cst_55 = arith.constant 1.000000e-01 : f32
    %95 = vector.broadcast %cst_55 : f32 to vector<6x64xf32>
    %96 = arith.mulf %95, %92 : vector<6x64xf32>
    %97 = arith.select %94, %92, %96 : vector<6x64xi1>, vector<6x64xf32>
    %c0_56 = arith.constant 0 : index
    %c0_57 = arith.constant 0 : index
    %98 = vector.load %arg17[%c0_56, %c0_57] : memref<64x32xf32, #tpu.memory_space<vmem>>, vector<64x32xf32>
    %99 = arith.truncf %97 : vector<6x64xf32> to vector<6x64xbf16>
    %100 = arith.truncf %98 : vector<64x32xf32> to vector<64x32xbf16>
    %cst_58 = arith.constant dense<0.000000e+00> : vector<6x32xf32>
    %101 = tpu.matmul %99, %100, %cst_58 {dimension_numbers = #tpu.dot_dimension_numbers<[1], [0], [0], [1], [0, 0, 1, 1], [], []>} : vector<6x64xbf16>, vector<64x32xbf16>, vector<6x32xf32> -> vector<6x32xf32>
    %c0_59 = arith.constant 0 : index
    %c0_60 = arith.constant 0 : index
    %102 = vector.load %arg18[%c0_59, %c0_60] : memref<1x32xf32, #tpu.memory_space<vmem>>, vector<1x32xf32>
    %103 = vector.broadcast %102 : vector<1x32xf32> to vector<6x32xf32>
    %104 = arith.addf %101, %103 : vector<6x32xf32>
    %cst_61 = arith.constant 0.000000e+00 : f32
    %105 = vector.broadcast %cst_61 : f32 to vector<6x32xf32>
    %106 = arith.cmpf ogt, %104, %105 : vector<6x32xf32>
    %cst_62 = arith.constant 1.000000e-01 : f32
    %107 = vector.broadcast %cst_62 : f32 to vector<6x32xf32>
    %108 = arith.mulf %107, %104 : vector<6x32xf32>
    %109 = arith.select %106, %104, %108 : vector<6x32xi1>, vector<6x32xf32>
    %c0_63 = arith.constant 0 : index
    %c0_64 = arith.constant 0 : index
    %110 = vector.load %arg19[%c0_63, %c0_64] : memref<32x2xf32, #tpu.memory_space<vmem>>, vector<32x2xf32>
    %111 = arith.truncf %109 : vector<6x32xf32> to vector<6x32xbf16>
    %112 = arith.truncf %110 : vector<32x2xf32> to vector<32x2xbf16>
    %cst_65 = arith.constant dense<0.000000e+00> : vector<6x2xf32>
    %113 = tpu.matmul %111, %112, %cst_65 {dimension_numbers = #tpu.dot_dimension_numbers<[1], [0], [0], [1], [0, 0, 1, 1], [], []>} : vector<6x32xbf16>, vector<32x2xbf16>, vector<6x2xf32> -> vector<6x2xf32>
    %c0_66 = arith.constant 0 : index
    %c0_67 = arith.constant 0 : index
    %114 = vector.load %arg20[%c0_66, %c0_67] : memref<1x2xf32, #tpu.memory_space<vmem>>, vector<1x2xf32>
    %115 = vector.broadcast %114 : vector<1x2xf32> to vector<6x2xf32>
    %116 = arith.addf %113, %115 : vector<6x2xf32>
    %c0_68 = arith.constant 0 : index
    %c0_69 = arith.constant 0 : index
    %c0_70 = arith.constant 0 : index
    %117 = vector.load %arg21[%c0_68, %c0_69, %c0_70] : memref<1x6x2xf32, #tpu.memory_space<vmem>>, vector<1x6x2xf32>
    %118 = vector.shape_cast %117 : vector<1x6x2xf32> to vector<6x2xf32>
    %119 = vector.shape_cast %116 : vector<6x2xf32> to vector<1x6x2xf32>
    tpu.vector_store %arg21[%c0_68, %c0_69, %c0_70], %119 {strides = array<i32>} : memref<1x6x2xf32, #tpu.memory_space<vmem>>, vector<1x6x2xf32>,
    return
  }
  func.func @transform_0(%arg0: i32) -> (i32, i32, i32) {
    %c0_i32 = arith.constant 0 : i32
    %c0_i32_0 = arith.constant 0 : i32
    %c0_i32_1 = arith.constant 0 : i32
    return %arg0, %c0_i32, %c0_i32_0 : i32, i32, i32
  }
  func.func @transform_1(%arg0: i32) -> (i32, i32, i32) {
    %c0_i32 = arith.constant 0 : i32
    %c0_i32_0 = arith.constant 0 : i32
    %c0_i32_1 = arith.constant 0 : i32
    return %arg0, %c0_i32, %c0_i32_0 : i32, i32, i32
  }
  func.func @transform_2(%arg0: i32) -> (i32, i32, i32) {
    %c0_i32 = arith.constant 0 : i32
    %c0_i32_0 = arith.constant 0 : i32
    %c0_i32_1 = arith.constant 0 : i32
    return %arg0, %c0_i32, %c0_i32_0 : i32, i32, i32
  }
  func.func @transform_3(%arg0: i32) -> (i32, i32) {
    %c0_i32 = arith.constant 0 : i32
    %c0_i32_0 = arith.constant 0 : i32
    %c0_i32_1 = arith.constant 0 : i32
    return %c0_i32, %c0_i32_0 : i32, i32
  }
  func.func @transform_4(%arg0: i32) -> (i32, i32) {
    %c0_i32 = arith.constant 0 : i32
    %c0_i32_0 = arith.constant 0 : i32
    %c0_i32_1 = arith.constant 0 : i32
    return %c0_i32, %c0_i32_0 : i32, i32
  }
  func.func @transform_5(%arg0: i32) -> (i32, i32) {
    %c0_i32 = arith.constant 0 : i32
    %c0_i32_0 = arith.constant 0 : i32
    %c0_i32_1 = arith.constant 0 : i32
    return %c0_i32, %c0_i32_0 : i32, i32
  }
  func.func @transform_6(%arg0: i32) -> (i32, i32) {
    %c0_i32 = arith.constant 0 : i32
    %c0_i32_0 = arith.constant 0 : i32
    %c0_i32_1 = arith.constant 0 : i32
    return %c0_i32, %c0_i32_0 : i32, i32
  }
  func.func @transform_7(%arg0: i32) -> (i32, i32) {
    %c0_i32 = arith.constant 0 : i32
    %c0_i32_0 = arith.constant 0 : i32
    %c0_i32_1 = arith.constant 0 : i32
    return %c0_i32, %c0_i32_0 : i32, i32
  }
  func.func @transform_8(%arg0: i32) -> (i32, i32) {
    %c0_i32 = arith.constant 0 : i32
    %c0_i32_0 = arith.constant 0 : i32
    %c0_i32_1 = arith.constant 0 : i32
    return %c0_i32, %c0_i32_0 : i32, i32
  }
  func.func @transform_9(%arg0: i32) -> (i32, i32) {
    %c0_i32 = arith.constant 0 : i32
    %c0_i32_0 = arith.constant 0 : i32
    %c0_i32_1 = arith.constant 0 : i32
    return %c0_i32, %c0_i32_0 : i32, i32
  }
  func.func @transform_10(%arg0: i32) -> (i32, i32) {
    %c0_i32 = arith.constant 0 : i32
    %c0_i32_0 = arith.constant 0 : i32
    %c0_i32_1 = arith.constant 0 : i32
    return %c0_i32, %c0_i32_0 : i32, i32
  }
  func.func @transform_11(%arg0: i32) -> (i32, i32) {
    %c0_i32 = arith.constant 0 : i32
    %c0_i32_0 = arith.constant 0 : i32
    %c0_i32_1 = arith.constant 0 : i32
    return %c0_i32, %c0_i32_0 : i32, i32
  }
  func.func @transform_12(%arg0: i32) -> (i32, i32) {
    %c0_i32 = arith.constant 0 : i32
    %c0_i32_0 = arith.constant 0 : i32
    %c0_i32_1 = arith.constant 0 : i32
    return %c0_i32, %c0_i32_0 : i32, i32
  }
  func.func @transform_13(%arg0: i32) -> (i32, i32) {
    %c0_i32 = arith.constant 0 : i32
    %c0_i32_0 = arith.constant 0 : i32
    %c0_i32_1 = arith.constant 0 : i32
    return %c0_i32, %c0_i32_0 : i32, i32
  }
  func.func @transform_14(%arg0: i32) -> (i32, i32) {
    %c0_i32 = arith.constant 0 : i32
    %c0_i32_0 = arith.constant 0 : i32
    %c0_i32_1 = arith.constant 0 : i32
    return %c0_i32, %c0_i32_0 : i32, i32
  }
  func.func @transform_15(%arg0: i32) -> (i32, i32) {
    %c0_i32 = arith.constant 0 : i32
    %c0_i32_0 = arith.constant 0 : i32
    %c0_i32_1 = arith.constant 0 : i32
    return %c0_i32, %c0_i32_0 : i32, i32
  }
  func.func @transform_16(%arg0: i32) -> (i32, i32) {
    %c0_i32 = arith.constant 0 : i32
    %c0_i32_0 = arith.constant 0 : i32
    %c0_i32_1 = arith.constant 0 : i32
    return %c0_i32, %c0_i32_0 : i32, i32
  }
  func.func @transform_17(%arg0: i32) -> (i32, i32) {
    %c0_i32 = arith.constant 0 : i32
    %c0_i32_0 = arith.constant 0 : i32
    %c0_i32_1 = arith.constant 0 : i32
    return %c0_i32, %c0_i32_0 : i32, i32
  }
  func.func @transform_18(%arg0: i32) -> (i32, i32) {
    %c0_i32 = arith.constant 0 : i32
    %c0_i32_0 = arith.constant 0 : i32
    %c0_i32_1 = arith.constant 0 : i32
    return %c0_i32, %c0_i32_0 : i32, i32
  }
  func.func @transform_19(%arg0: i32) -> (i32, i32) {
    %c0_i32 = arith.constant 0 : i32
    %c0_i32_0 = arith.constant 0 : i32
    %c0_i32_1 = arith.constant 0 : i32
    return %c0_i32, %c0_i32_0 : i32, i32
  }
  func.func @transform_20(%arg0: i32) -> (i32, i32, i32) {
    %c0_i32 = arith.constant 0 : i32
    %c0_i32_0 = arith.constant 0 : i32
    %c0_i32_1 = arith.constant 0 : i32
    return %arg0, %c0_i32, %c0_i32_0 : i32, i32, i32
  }
}

</mosaic_0001>

<llo_original>
// kernel: tile.9
$region0: #{tile.9}
  %s0 = inlined_call_operand.vmem [shape: f32[32,40,32], index: 0, kind: input, shape index: {}]
  %s1 = inlined_call_operand.vmem [shape: f32[32,1280], index: 1, kind: output, shape index: {}]
  %v2 = vld [vmem:[%s0] ss:$4 sm:$0xff]
  %vm3 = vcmask 261120
  %4 = vst.msk [vmem:[%s1] ss:$8 sm:$0xf] %vm3, %v2
  %5 = vst.msk [vmem:[%s1] ss:$8 sm:$0xf0] %vm3, %v2
  %s6 = scalar_lea.vmem %s0, 32
  %v7 = vld [vmem:[%s6] ss:$4 sm:$0xff]
  %vm8 = vcmask 261120
  %s9 = scalar_lea.vmem %s1, 64
  %10 = vst.msk [vmem:[%s9] ss:$8 sm:$0x3] %vm8, %v7
  %s11 = scalar_lea.vmem %s1, 4294967281
  %12 = vst.msk [vmem:[%s11] ss:$8 sm:$0x3c] %vm8, %v7
  %s13 = scalar_lea.vmem %s1, 4294967281
  %14 = vst.msk [vmem:[%s13] ss:$8 sm:$0xc0] %vm8, %v7
  %s15 = scalar_lea.vmem %s0, 64
  %v16 = vld [vmem:[%s15] ss:$4 sm:$0xff]
  %vm17 = vcmask 261120
  %s18 = scalar_lea.vmem %s1, 49
  %19 = vst.msk [vmem:[%s18] ss:$8 sm:$0xf] %vm17, %v16
  %s20 = scalar_lea.vmem %s1, 4294967266
  %21 = vst.msk [vmem:[%s20] ss:$8 sm:$0xf0] %vm17, %v16
  %s22 = scalar_lea.vmem %s0, 96
  %v23 = vld [vmem:[%s22] ss:$4 sm:$0xff]
  %vm24 = vcmask 261120
  %s25 = scalar_lea.vmem %s1, 34
  %26 = vst.msk [vmem:[%s25] ss:$8 sm:$0xf] %vm24, %v23
  %s27 = scalar_lea.vmem %s1, 34
  %28 = vst.msk [vmem:[%s27] ss:$8 sm:$0x30] %vm24, %v23
  %s29 = scalar_lea.vmem %s1, 4294967251
  %30 = vst.msk [vmem:[%s29] ss:$8 sm:$0xc0] %vm24, %v23
  %s31 = scalar_lea.vmem %s0, 128
  %v32 = vld [vmem:[%s31] ss:$4 sm:$0xff]
  %vm33 = vcmask 261120
  %s34 = scalar_lea.vmem %s1, 19
  %35 = vst.msk [vmem:[%s34] ss:$8 sm:$0xf] %vm33, %v32
  %s36 = scalar_lea.vmem %s1, 19
  %37 = vst.msk [vmem:[%s36] ss:$8 sm:$0xf0] %vm33, %v32
  %s38 = scalar_lea.vmem %s0, 160
  %v39 = vld [vmem:[%s38] ss:$4 sm:$0xff]
  %vm40 = vcmask 261120
  %s41 = scalar_lea.vmem %s1, 4
  %42 = vst.msk [vmem:[%s41] ss:$8 sm:$0xf] %vm40, %v39
  %s43 = scalar_lea.vmem %s1, 4
  %44 = vst.msk [vmem:[%s43] ss:$8 sm:$0xf0] %vm40, %v39
  %s45 = scalar_lea.vmem %s0, 192
  %v46 = vld [vmem:[%s45] ss:$4 sm:$0xff]
  %vm47 = vcmask 261120
  %s48 = scalar_lea.vmem %s1, 68
  %49 = vst.msk [vmem:[%s48] ss:$8 sm:$0x3] %vm47, %v46
  %s50 = scalar_lea.vmem %s1, 4294967285
  %51 = vst.msk [vmem:[%s50] ss:$8 sm:$0x3c] %vm47, %v46
  %s52 = scalar_lea.vmem %s1, 4294967285
  %53 = vst.msk [vmem:[%s52] ss:$8 sm:$0xc0] %vm47, %v46
  %s54 = scalar_lea.vmem %s0, 224
  %v55 = vld [vmem:[%s54] ss:$4 sm:$0xff]
  %vm56 = vcmask 261120
  %s57 = scalar_lea.vmem %s1, 53
  %58 = vst.msk [vmem:[%s57] ss:$8 sm:$0xf] %vm56, %v55
  %s59 = scalar_lea.vmem %s1, 4294967270
  %60 = vst.msk [vmem:[%s59] ss:$8 sm:$0xf0] %vm56, %v55
  %s61 = scalar_lea.vmem %s0, 256
  %v62 = vld [vmem:[%s61] ss:$4 sm:$0xff]
  %vm63 = vcmask 261120
  %s64 = scalar_lea.vmem %s1, 38
  %65 = vst.msk [vmem:[%s64] ss:$8 sm:$0xf] %vm63, %v62
  %s66 = scalar_lea.vmem %s1, 38
  %67 = vst.msk [vmem:[%s66] ss:$8 sm:$0x30] %vm63, %v62
  %s68 = scalar_lea.vmem %s1, 4294967255
  %69 = vst.msk [vmem:[%s68] ss:$8 sm:$0xc0] %vm63, %v62
  %s70 = scalar_lea.vmem %s0, 288
  %v71 = vld [vmem:[%s70] ss:$4 sm:$0xff]
  %vm72 = vcmask 261120
  %s73 = scalar_lea.vmem %s1, 23
  %74 = vst.msk [vmem:[%s73] ss:$8 sm:$0xf] %vm72, %v71
  %s75 = scalar_lea.vmem %s1, 23
  %76 = vst.msk [vmem:[%s75] ss:$8 sm:$0xf0] %vm72, %v71
  %s77 = scalar_lea.vmem %s0, 320
  %v78 = vld [vmem:[%s77] ss:$4 sm:$0xff]
  %vm79 = vcmask 261120
  %s80 = scalar_lea.vmem %s1, 80
  %81 = vst.msk [vmem:[%s80] ss:$8 sm:$0xf] %vm79, %v78
  %s82 = scalar_lea.vmem %s1, 80
  %83 = vst.msk [vmem:[%s82] ss:$8 sm:$0xf0] %vm79, %v78
  %s84 = scalar_lea.vmem %s0, 352
  %v85 = vld [vmem:[%s84] ss:$4 sm:$0xff]
  %vm86 = vcmask 261120
  %s87 = scalar_lea.vmem %s1, 144
  %88 = vst.msk [vmem:[%s87] ss:$8 sm:$0x3] %vm86, %v85
  %s89 = scalar_lea.vmem %s1, 65
  %90 = vst.msk [vmem:[%s89] ss:$8 sm:$0x3c] %vm86, %v85
  %s91 = scalar_lea.vmem %s1, 65
  %92 = vst.msk [vmem:[%s91] ss:$8 sm:$0xc0] %vm86, %v85
  %s93 = scalar_lea.vmem %s0, 384
  %v94 = vld [vmem:[%s93] ss:$4 sm:$0xff]
  %vm95 = vcmask 261120
  %s96 = scalar_lea.vmem %s1, 129
  %97 = vst.msk [vmem:[%s96] ss:$8 sm:$0xf] %vm95, %v94
  %s98 = scalar_lea.vmem %s1, 50
  %99 = vst.msk [vmem:[%s98] ss:$8 sm:$0xf0] %vm95, %v94
  %s100 = scalar_lea.vmem %s0, 416
  %v101 = vld [vmem:[%s100] ss:$4 sm:$0xff]
  %vm102 = vcmask 261120
  %s103 = scalar_lea.vmem %s1, 114
  %104 = vst.msk [vmem:[%s103] ss:$8 sm:$0xf] %vm102, %v101
  %s105 = scalar_lea.vmem %s1, 114
  %106 = vst.msk [vmem:[%s105] ss:$8 sm:$0x30] %vm102, %v101
  %s107 = scalar_lea.vmem %s1, 35
  %108 = vst.msk [vmem:[%s107] ss:$8 sm:$0xc0] %vm102, %v101
  %s109 = scalar_lea.vmem %s0, 448
  %v110 = vld [vmem:[%s109] ss:$4 sm:$0xff]
  %vm111 = vcmask 261120
  %s112 = scalar_lea.vmem %s1, 99
  %113 = vst.msk [vmem:[%s112] ss:$8 sm:$0xf] %vm111, %v110
  %s114 = scalar_lea.vmem %s1, 99
  %115 = vst.msk [vmem:[%s114] ss:$8 sm:$0xf0] %vm111, %v110
  %s116 = scalar_lea.vmem %s0, 480
  %v117 = vld [vmem:[%s116] ss:$4 sm:$0xff]
  %vm118 = vcmask 261120
  %s119 = scalar_lea.vmem %s1, 84
  %120 = vst.msk [vmem:[%s119] ss:$8 sm:$0xf] %vm118, %v117
  %s121 = scalar_lea.vmem %s1, 84
  %122 = vst.msk [vmem:[%s121] ss:$8 sm:$0xf0] %vm118, %v117
  %s123 = scalar_lea.vmem %s0, 512
  %v124 = vld [vmem:[%s123] ss:$4 sm:$0xff]
  %vm125 = vcmask 261120
  %s126 = scalar_lea.vmem %s1, 148
  %127 = vst.msk [vmem:[%s126] ss:$8 sm:$0x3] %vm125, %v124
  %s128 = scalar_lea.vmem %s1, 69
  %129 = vst.msk [vmem:[%s128] ss:$8 sm:$0x3c] %vm125, %v124
  %s130 = scalar_lea.vmem %s1, 69
  %131 = vst.msk [vmem:[%s130] ss:$8 sm:$0xc0] %vm125, %v124
  %s132 = scalar_lea.vmem %s0, 544
  %v133 = vld [vmem:[%s132] ss:$4 sm:$0xff]
  %vm134 = vcmask 261120
  %s135 = scalar_lea.vmem %s1, 133
  %136 = vst.msk [vmem:[%s135] ss:$8 sm:$0xf] %vm134, %v133
  %s137 = scalar_lea.vmem %s1, 54
  %138 = vst.msk [vmem:[%s137] ss:$8 sm:$0xf0] %vm134, %v133
  %s139 = scalar_lea.vmem %s0, 576
  %v140 = vld [vmem:[%s139] ss:$4 sm:$0xff]
  %vm141 = vcmask 261120
  %s142 = scalar_lea.vmem %s1, 118
  %143 = vst.msk [vmem:[%s142] ss:$8 sm:$0xf] %vm141, %v140
  %s144 = scalar_lea.vmem %s1, 118
  %145 = vst.msk [vmem:[%s144] ss:$8 sm:$0x30] %vm141, %v140
  %s146 = scalar_lea.vmem %s1, 39
  %147 = vst.msk [vmem:[%s146] ss:$8 sm:$0xc0] %vm141, %v140
  %s148 = scalar_lea.vmem %s0, 608
  %v149 = vld [vmem:[%s148] ss:$4 sm:$0xff]
  %vm150 = vcmask 261120
  %s151 = scalar_lea.vmem %s1, 103
  %152 = vst.msk [vmem:[%s151] ss:$8 sm:$0xf] %vm150, %v149
  %s153 = scalar_lea.vmem %s1, 103
  %154 = vst.msk [vmem:[%s153] ss:$8 sm:$0xf0] %vm150, %v149
  %s155 = scalar_lea.vmem %s0, 640
  %v156 = vld [vmem:[%s155] ss:$4 sm:$0xff]
  %vm157 = vcmask 261120
  %s158 = scalar_lea.vmem %s1, 160
  %159 = vst.msk [vmem:[%s158] ss:$8 sm:$0xf] %vm157, %v156
  %s160 = scalar_lea.vmem %s1, 160
  %161 = vst.msk [vmem:[%s160] ss:$8 sm:$0xf0] %vm157, %v156
  %s162 = scalar_lea.vmem %s0, 672
  %v163 = vld [vmem:[%s162] ss:$4 sm:$0xff]
  %vm164 = vcmask 261120
  %s165 = scalar_lea.vmem %s1, 224
  %166 = vst.msk [vmem:[%s165] ss:$8 sm:$0x3] %vm164, %v163
  %s167 = scalar_lea.vmem %s1, 145
  %168 = vst.msk [vmem:[%s167] ss:$8 sm:$0x3c] %vm164, %v163
  %s169 = scalar_lea.vmem %s1, 145
  %170 = vst.msk [vmem:[%s169] ss:$8 sm:$0xc0] %vm164, %v163
  %s171 = scalar_lea.vmem %s0, 704
  %v172 = vld [vmem:[%s171] ss:$4 sm:$0xff]
  %vm173 = vcmask 261120
  %s174 = scalar_lea.vmem %s1, 209
  %175 = vst.msk [vmem:[%s174] ss:$8 sm:$0xf] %vm173, %v172
  %s176 = scalar_lea.vmem %s1, 130
  %177 = vst.msk [vmem:[%s176] ss:$8 sm:$0xf0] %vm173, %v172
  %s178 = scalar_lea.vmem %s0, 736
  %v179 = vld [vmem:[%s178] ss:$4 sm:$0xff]
  %vm180 = vcmask 261120
  %s181 = scalar_lea.vmem %s1, 194
  %182 = vst.msk [vmem:[%s181] ss:$8 sm:$0xf] %vm180, %v179
  %s183 = scalar_lea.vmem %s1, 194
  %184 = vst.msk [vmem:[%s183] ss:$8 sm:$0x30] %vm180, %v179
  %s185 = scalar_lea.vmem %s1, 115
  %186 = vst.msk [vmem:[%s185] ss:$8 sm:$0xc0] %vm180, %v179
  %s187 = scalar_lea.vmem %s0, 768
  %v188 = vld [vmem:[%s187] ss:$4 sm:$0xff]
  %vm189 = vcmask 261120
  %s190 = scalar_lea.vmem %s1, 179
  %191 = vst.msk [vmem:[%s190] ss:$8 sm:$0xf] %vm189, %v188
  %s192 = scalar_lea.vmem %s1, 179
  %193 = vst.msk [vmem:[%s192] ss:$8 sm:$0xf0] %vm189, %v188
  %s194 = scalar_lea.vmem %s0, 800
  %v195 = vld [vmem:[%s194] ss:$4 sm:$0xff]
  %vm196 = vcmask 261120
  %s197 = scalar_lea.vmem %s1, 164
  %198 = vst.msk [vmem:[%s197] ss:$8 sm:$0xf] %vm196, %v195
  %s199 = scalar_lea.vmem %s1, 164
  %200 = vst.msk [vmem:[%s199] ss:$8 sm:$0xf0] %vm196, %v195
  %s201 = scalar_lea.vmem %s0, 832
  %v202 = vld [vmem:[%s201] ss:$4 sm:$0xff]
  %vm203 = vcmask 261120
  %s204 = scalar_lea.vmem %s1, 228
  %205 = vst.msk [vmem:[%s204] ss:$8 sm:$0x3] %vm203, %v202
  %s206 = scalar_lea.vmem %s1, 149
  %207 = vst.msk [vmem:[%s206] ss:$8 sm:$0x3c] %vm203, %v202
  %s208 = scalar_lea.vmem %s1, 149
  %209 = vst.msk [vmem:[%s208] ss:$8 sm:$0xc0] %vm203, %v202
  %s210 = scalar_lea.vmem %s0, 864
  %v211 = vld [vmem:[%s210] ss:$4 sm:$0xff]
  %vm212 = vcmask 261120
  %s213 = scalar_lea.vmem %s1, 213
  %214 = vst.msk [vmem:[%s213] ss:$8 sm:$0xf] %vm212, %v211
  %s215 = scalar_lea.vmem %s1, 134
  %216 = vst.msk [vmem:[%s215] ss:$8 sm:$0xf0] %vm212, %v211
  %s217 = scalar_lea.vmem %s0, 896
  %v218 = vld [vmem:[%s217] ss:$4 sm:$0xff]
  %vm219 = vcmask 261120
  %s220 = scalar_lea.vmem %s1, 198
  %221 = vst.msk [vmem:[%s220] ss:$8 sm:$0xf] %vm219, %v218
  %s222 = scalar_lea.vmem %s1, 198
  %223 = vst.msk [vmem:[%s222] ss:$8 sm:$0x30] %vm219, %v218
  %s224 = scalar_lea.vmem %s1, 119
  %225 = vst.msk [vmem:[%s224] ss:$8 sm:$0xc0] %vm219, %v218
  %s226 = scalar_lea.vmem %s0, 928
  %v227 = vld [vmem:[%s226] ss:$4 sm:$0xff]
  %vm228 = vcmask 261120
  %s229 = scalar_lea.vmem %s1, 183
  %230 = vst.msk [vmem:[%s229] ss:$8 sm:$0xf] %vm228, %v227
  %s231 = scalar_lea.vmem %s1, 183
  %232 = vst.msk [vmem:[%s231] ss:$8 sm:$0xf0] %vm228, %v227
  %s233 = scalar_lea.vmem %s0, 960
  %v234 = vld [vmem:[%s233] ss:$4 sm:$0xff]
  %vm235 = vcmask 261120
  %s236 = scalar_lea.vmem %s1, 240
  %237 = vst.msk [vmem:[%s236] ss:$8 sm:$0xf] %vm235, %v234
  %s238 = scalar_lea.vmem %s1, 240
  %239 = vst.msk [vmem:[%s238] ss:$8 sm:$0xf0] %vm235, %v234
  %s240 = scalar_lea.vmem %s0, 992
  %v241 = vld [vmem:[%s240] ss:$4 sm:$0xff]
  %vm242 = vcmask 261120
  %s243 = scalar_lea.vmem %s1, 304
  %244 = vst.msk [vmem:[%s243] ss:$8 sm:$0x3] %vm242, %v241
  %s245 = scalar_lea.vmem %s1, 225
  %246 = vst.msk [vmem:[%s245] ss:$8 sm:$0x3c] %vm242, %v241
  %s247 = scalar_lea.vmem %s1, 225
  %248 = vst.msk [vmem:[%s247] ss:$8 sm:$0xc0] %vm242, %v241
  %s249 = scalar_lea.vmem %s0, 1024
  %v250 = vld [vmem:[%s249] ss:$4 sm:$0xff]
  %vm251 = vcmask 261120
  %s252 = scalar_lea.vmem %s1, 289
  %253 = vst.msk [vmem:[%s252] ss:$8 sm:$0xf] %vm251, %v250
  %s254 = scalar_lea.vmem %s1, 210
  %255 = vst.msk [vmem:[%s254] ss:$8 sm:$0xf0] %vm251, %v250
  %s256 = scalar_lea.vmem %s0, 1056
  %v257 = vld [vmem:[%s256] ss:$4 sm:$0xff]
  %vm258 = vcmask 261120
  %s259 = scalar_lea.vmem %s1, 274
  %260 = vst.msk [vmem:[%s259] ss:$8 sm:$0xf] %vm258, %v257
  %s261 = scalar_lea.vmem %s1, 274
  %262 = vst.msk [vmem:[%s261] ss:$8 sm:$0x30] %vm258, %v257
  %s263 = scalar_lea.vmem %s1, 195
  %264 = vst.msk [vmem:[%s263] ss:$8 sm:$0xc0] %vm258, %v257
  %s265 = scalar_lea.vmem %s0, 1088
  %v266 = vld [vmem:[%s265] ss:$4 sm:$0xff]
  %vm267 = vcmask 261120
  %s268 = scalar_lea.vmem %s1, 259
  %269 = vst.msk [vmem:[%s268] ss:$8 sm:$0xf] %vm267, %v266
  %s270 = scalar_lea.vmem %s1, 259
  %271 = vst.msk [vmem:[%s270] ss:$8 sm:$0xf0] %vm267, %v266
  %s272 = scalar_lea.vmem %s0, 1120
  %v273 = vld [vmem:[%s272] ss:$4 sm:$0xff]
  %vm274 = vcmask 261120
  %s275 = scalar_lea.vmem %s1, 244
  %276 = vst.msk [vmem:[%s275] ss:$8 sm:$0xf] %vm274, %v273
  %s277 = scalar_lea.vmem %s1, 244
  %278 = vst.msk [vmem:[%s277] ss:$8 sm:$0xf0] %vm274, %v273
  %s279 = scalar_lea.vmem %s0, 1152
  %v280 = vld [vmem:[%s279] ss:$4 sm:$0xff]
  %vm281 = vcmask 261120
  %s282 = scalar_lea.vmem %s1, 308
  %283 = vst.msk [vmem:[%s282] ss:$8 sm:$0x3] %vm281, %v280
  %s284 = scalar_lea.vmem %s1, 229
  %285 = vst.msk [vmem:[%s284] ss:$8 sm:$0x3c] %vm281, %v280
  %s286 = scalar_lea.vmem %s1, 229
  %287 = vst.msk [vmem:[%s286] ss:$8 sm:$0xc0] %vm281, %v280
  %s288 = scalar_lea.vmem %s0, 1184
  %v289 = vld [vmem:[%s288] ss:$4 sm:$0xff]
  %vm290 = vcmask 261120
  %s291 = scalar_lea.vmem %s1, 293
  %292 = vst.msk [vmem:[%s291] ss:$8 sm:$0xf] %vm290, %v289
  %s293 = scalar_lea.vmem %s1, 214
  %294 = vst.msk [vmem:[%s293] ss:$8 sm:$0xf0] %vm290, %v289
  %s295 = scalar_lea.vmem %s0, 1216
  %v296 = vld [vmem:[%s295] ss:$4 sm:$0xff]
  %vm297 = vcmask 261120
  %s298 = scalar_lea.vmem %s1, 278
  %299 = vst.msk [vmem:[%s298] ss:$8 sm:$0xf] %vm297, %v296
  %s300 = scalar_lea.vmem %s1, 278
  %301 = vst.msk [vmem:[%s300] ss:$8 sm:$0x30] %vm297, %v296
  %s302 = scalar_lea.vmem %s1, 199
  %303 = vst.msk [vmem:[%s302] ss:$8 sm:$0xc0] %vm297, %v296
  %s304 = scalar_lea.vmem %s0, 1248
  %v305 = vld [vmem:[%s304] ss:$4 sm:$0xff]
  %vm306 = vcmask 261120
  %s307 = scalar_lea.vmem %s1, 263
  %308 = vst.msk [vmem:[%s307] ss:$8 sm:$0xf] %vm306, %v305
  %s309 = scalar_lea.vmem %s1, 263
  %310 = vst.msk [vmem:[%s309] ss:$8 sm:$0xf0] %vm306, %v305
  %s311 = scalar_lea.vmem %s0, 3
  %v312 = vld [vmem:[%s311] ss:$40 sm:$0xf]
  %s313 = scalar_lea.vmem %s0, 3
  %v314 = vld [vmem:[%s313] ss:$40 sm:$0xf0]
  %vm315 = vcmask 1047556
  %v316 = vsel %vm315, %v314, %v312
  %317 = vrot.lane.b32.xlu0 %v316, 96
  %v318 = vpop.permute.xlu0 %317
  %vm319 = vcmask 1048320
  %320 = vst.msk [vmem:[%s1] sm:$0xff] %vm319, %v318
  %s321 = scalar_lea.vmem %s0, 19
  %v322 = vld [vmem:[%s321] ss:$40 sm:$0xf]
  %s323 = scalar_lea.vmem %s0, 19
  %v324 = vld [vmem:[%s323] ss:$40 sm:$0xf0]
  %vm325 = vcmask 1047556
  %v326 = vsel %vm325, %v324, %v322
  %327 = vrot.lane.b32.xlu0 %v326, 96
  %v328 = vpop.permute.xlu0 %327
  %vm329 = vcmask 1048320
  %s330 = scalar_lea.vmem %s1, 32
  %331 = vst.msk [vmem:[%s330] sm:$0xff] %vm329, %v328
  %s332 = scalar_lea.vmem %s0, 35
  %v333 = vld [vmem:[%s332] ss:$40 sm:$0xf]
  %s334 = scalar_lea.vmem %s0, 35
  %v335 = vld [vmem:[%s334] ss:$40 sm:$0xf0]
  %vm336 = vcmask 1047556
  %v337 = vsel %vm336, %v335, %v333
  %338 = vrot.lane.b32.xlu0 %v337, 96
  %v339 = vpop.permute.xlu0 %338
  %vm340 = vcmask 1048320
  %s341 = scalar_lea.vmem %s1, 64
  %342 = vst.msk [vmem:[%s341] sm:$0xff] %vm340, %v339
  %s343 = scalar_lea.vmem %s0, 331
  %v344 = vld [vmem:[%s343] ss:$40 sm:$0xf]
  %s345 = scalar_lea.vmem %s0, 331
  %v346 = vld [vmem:[%s345] ss:$40 sm:$0xf0]
  %vm347 = vcmask 1047556
  %v348 = vsel %vm347, %v346, %v344
  %349 = vrot.lane.b32.xlu0 %v348, 96
  %v350 = vpop.permute.xlu0 %349
  %vm351 = vcmask 1048320
  %s352 = scalar_lea.vmem %s1, 96
  %353 = vst.msk [vmem:[%s352] sm:$0xff] %vm351, %v350
  %s354 = scalar_lea.vmem %s0, 347
  %v355 = vld [vmem:[%s354] ss:$40 sm:$0xf]
  %s356 = scalar_lea.vmem %s0, 347
  %v357 = vld [vmem:[%s356] ss:$40 sm:$0xf0]
  %vm358 = vcmask 1047556
  %v359 = vsel %vm358, %v357, %v355
  %360 = vrot.lane.b32.xlu0 %v359, 96
  %v361 = vpop.permute.xlu0 %360
  %vm362 = vcmask 1048320
  %s363 = scalar_lea.vmem %s1, 128
  %364 = vst.msk [vmem:[%s363] sm:$0xff] %vm362, %v361
  %s365 = scalar_lea.vmem %s0, 643
  %v366 = vld [vmem:[%s365] ss:$40 sm:$0xf]
  %s367 = scalar_lea.vmem %s0, 643
  %v368 = vld [vmem:[%s367] ss:$40 sm:$0xf0]
  %vm369 = vcmask 1047556
  %v370 = vsel %vm369, %v368, %v366
  %371 = vrot.lane.b32.xlu0 %v370, 96
  %v372 = vpop.permute.xlu0 %371
  %vm373 = vcmask 1048320
  %s374 = scalar_lea.vmem %s1, 160
  %375 = vst.msk [vmem:[%s374] sm:$0xff] %vm373, %v372
  %s376 = scalar_lea.vmem %s0, 659
  %v377 = vld [vmem:[%s376] ss:$40 sm:$0xf]
  %s378 = scalar_lea.vmem %s0, 659
  %v379 = vld [vmem:[%s378] ss:$40 sm:$0xf0]
  %vm380 = vcmask 1047556
  %v381 = vsel %vm380, %v379, %v377
  %382 = vrot.lane.b32.xlu0 %v381, 96
  %v383 = vpop.permute.xlu0 %382
  %vm384 = vcmask 1048320
  %s385 = scalar_lea.vmem %s1, 192
  %386 = vst.msk [vmem:[%s385] sm:$0xff] %vm384, %v383
  %s387 = scalar_lea.vmem %s0, 675
  %v388 = vld [vmem:[%s387] ss:$40 sm:$0xf]
  %s389 = scalar_lea.vmem %s0, 675
  %v390 = vld [vmem:[%s389] ss:$40 sm:$0xf0]
  %vm391 = vcmask 1047556
  %v392 = vsel %vm391, %v390, %v388
  %393 = vrot.lane.b32.xlu0 %v392, 96
  %v394 = vpop.permute.xlu0 %393
  %vm395 = vcmask 1048320
  %s396 = scalar_lea.vmem %s1, 224
  %397 = vst.msk [vmem:[%s396] sm:$0xff] %vm395, %v394
  %s398 = scalar_lea.vmem %s0, 971
  %v399 = vld [vmem:[%s398] ss:$40 sm:$0xf]
  %s400 = scalar_lea.vmem %s0, 971
  %v401 = vld [vmem:[%s400] ss:$40 sm:$0xf0]
  %vm402 = vcmask 1047556
  %v403 = vsel %vm402, %v401, %v399
  %404 = vrot.lane.b32.xlu0 %v403, 96
  %v405 = vpop.permute.xlu0 %404
  %vm406 = vcmask 1048320
  %s407 = scalar_lea.vmem %s1, 256
  %408 = vst.msk [vmem:[%s407] sm:$0xff] %vm406, %v405
  %s409 = scalar_lea.vmem %s0, 987
  %v410 = vld [vmem:[%s409] ss:$40 sm:$0xf]
  %s411 = scalar_lea.vmem %s0, 987
  %v412 = vld [vmem:[%s411] ss:$40 sm:$0xf0]
  %vm413 = vcmask 1047556
  %v414 = vsel %vm413, %v412, %v410
  %415 = vrot.lane.b32.xlu0 %v414, 96
  %v416 = vpop.permute.xlu0 %415
  %vm417 = vcmask 1048320
  %s418 = scalar_lea.vmem %s1, 288
  %419 = vst.msk [vmem:[%s418] sm:$0xff] %vm417, %v416
  %s420 = scalar_lea.vmem %s0, 7
  %v421 = vld [vmem:[%s420] ss:$40 sm:$0xf]
  %s422 = scalar_lea.vmem %s0, 7
  %v423 = vld [vmem:[%s422] ss:$40 sm:$0xf0]
  %vm424 = vcmask 1047556
  %v425 = vsel %vm424, %v423, %v421
  %426 = vrot.lane.b32.xlu0 %v425, 96
  %v427 = vpop.permute.xlu0 %426
  %vm428 = vcmask 1048320
  %s429 = scalar_lea.vmem %s1, 8
  %430 = vst.msk [vmem:[%s429] sm:$0xff] %vm428, %v427
  %s431 = scalar_lea.vmem %s0, 23
  %v432 = vld [vmem:[%s431] ss:$40 sm:$0xf]
  %s433 = scalar_lea.vmem %s0, 23
  %v434 = vld [vmem:[%s433] ss:$40 sm:$0xf0]
  %vm435 = vcmask 1047556
  %v436 = vsel %vm435, %v434, %v432
  %437 = vrot.lane.b32.xlu0 %v436, 96
  %v438 = vpop.permute.xlu0 %437
  %vm439 = vcmask 1048320
  %s440 = scalar_lea.vmem %s1, 40
  %441 = vst.msk [vmem:[%s440] sm:$0xff] %vm439, %v438
  %s442 = scalar_lea.vmem %s0, 39
  %v443 = vld [vmem:[%s442] ss:$40 sm:$0xf]
  %s444 = scalar_lea.vmem %s0, 39
  %v445 = vld [vmem:[%s444] ss:$40 sm:$0xf0]
  %vm446 = vcmask 1047556
  %v447 = vsel %vm446, %v445, %v443
  %448 = vrot.lane.b32.xlu0 %v447, 96
  %v449 = vpop.permute.xlu0 %448
  %vm450 = vcmask 1048320
  %s451 = scalar_lea.vmem %s1, 72
  %452 = vst.msk [vmem:[%s451] sm:$0xff] %vm450, %v449
  %s453 = scalar_lea.vmem %s0, 335
  %v454 = vld [vmem:[%s453] ss:$40 sm:$0xf]
  %s455 = scalar_lea.vmem %s0, 335
  %v456 = vld [vmem:[%s455] ss:$40 sm:$0xf0]
  %vm457 = vcmask 1047556
  %v458 = vsel %vm457, %v456, %v454
  %459 = vrot.lane.b32.xlu0 %v458, 96
  %v460 = vpop.permute.xlu0 %459
  %vm461 = vcmask 1048320
  %s462 = scalar_lea.vmem %s1, 104
  %463 = vst.msk [vmem:[%s462] sm:$0xff] %vm461, %v460
  %s464 = scalar_lea.vmem %s0, 351
  %v465 = vld [vmem:[%s464] ss:$40 sm:$0xf]
  %s466 = scalar_lea.vmem %s0, 351
  %v467 = vld [vmem:[%s466] ss:$40 sm:$0xf0]
  %vm468 = vcmask 1047556
  %v469 = vsel %vm468, %v467, %v465
  %470 = vrot.lane.b32.xlu0 %v469, 96
  %v471 = vpop.permute.xlu0 %470
  %vm472 = vcmask 1048320
  %s473 = scalar_lea.vmem %s1, 136
  %474 = vst.msk [vmem:[%s473] sm:$0xff] %vm472, %v471
  %s475 = scalar_lea.vmem %s0, 647
  %v476 = vld [vmem:[%s475] ss:$40 sm:$0xf]
  %s477 = scalar_lea.vmem %s0, 647
  %v478 = vld [vmem:[%s477] ss:$40 sm:$0xf0]
  %vm479 = vcmask 1047556
  %v480 = vsel %vm479, %v478, %v476
  %481 = vrot.lane.b32.xlu0 %v480, 96
  %v482 = vpop.permute.xlu0 %481
  %vm483 = vcmask 1048320
  %s484 = scalar_lea.vmem %s1, 168
  %485 = vst.msk [vmem:[%s484] sm:$0xff] %vm483, %v482
  %s486 = scalar_lea.vmem %s0, 663
  %v487 = vld [vmem:[%s486] ss:$40 sm:$0xf]
  %s488 = scalar_lea.vmem %s0, 663
  %v489 = vld [vmem:[%s488] ss:$40 sm:$0xf0]
  %vm490 = vcmask 1047556
  %v491 = vsel %vm490, %v489, %v487
  %492 = vrot.lane.b32.xlu0 %v491, 96
  %v493 = vpop.permute.xlu0 %492
  %vm494 = vcmask 1048320
  %s495 = scalar_lea.vmem %s1, 200
  %496 = vst.msk [vmem:[%s495] sm:$0xff] %vm494, %v493
  %s497 = scalar_lea.vmem %s0, 679
  %v498 = vld [vmem:[%s497] ss:$40 sm:$0xf]
  %s499 = scalar_lea.vmem %s0, 679
  %v500 = vld [vmem:[%s499] ss:$40 sm:$0xf0]
  %vm501 = vcmask 1047556
  %v502 = vsel %vm501, %v500, %v498
  %503 = vrot.lane.b32.xlu0 %v502, 96
  %v504 = vpop.permute.xlu0 %503
  %vm505 = vcmask 1048320
  %s506 = scalar_lea.vmem %s1, 232
  %507 = vst.msk [vmem:[%s506] sm:$0xff] %vm505, %v504
  %s508 = scalar_lea.vmem %s0, 975
  %v509 = vld [vmem:[%s508] ss:$40 sm:$0xf]
  %s510 = scalar_lea.vmem %s0, 975
  %v511 = vld [vmem:[%s510] ss:$40 sm:$0xf0]
  %vm512 = vcmask 1047556
  %v513 = vsel %vm512, %v511, %v509
  %514 = vrot.lane.b32.xlu0 %v513, 96
  %v515 = vpop.permute.xlu0 %514
  %vm516 = vcmask 1048320
  %s517 = scalar_lea.vmem %s1, 264
  %518 = vst.msk [vmem:[%s517] sm:$0xff] %vm516, %v515
  %s519 = scalar_lea.vmem %s0, 991
  %v520 = vld [vmem:[%s519] ss:$40 sm:$0xf]
  %s521 = scalar_lea.vmem %s0, 991
  %v522 = vld [vmem:[%s521] ss:$40 sm:$0xf0]
  %vm523 = vcmask 1047556
  %v524 = vsel %vm523, %v522, %v520
  %525 = vrot.lane.b32.xlu0 %v524, 96
  %v526 = vpop.permute.xlu0 %525
  %vm527 = vcmask 1048320
  %s528 = scalar_lea.vmem %s1, 296
  %529 = vst.msk [vmem:[%s528] sm:$0xff] %vm527, %v526
  %s530 = scalar_lea.vmem %s0, 11
  %v531 = vld [vmem:[%s530] ss:$40 sm:$0xf]
  %s532 = scalar_lea.vmem %s0, 11
  %v533 = vld [vmem:[%s532] ss:$40 sm:$0xf0]
  %vm534 = vcmask 1047556
  %v535 = vsel %vm534, %v533, %v531
  %536 = vrot.lane.b32.xlu0 %v535, 96
  %v537 = vpop.permute.xlu0 %536
  %vm538 = vcmask 1048320
  %s539 = scalar_lea.vmem %s1, 16
  %540 = vst.msk [vmem:[%s539] sm:$0xff] %vm538, %v537
  %s541 = scalar_lea.vmem %s0, 27
  %v542 = vld [vmem:[%s541] ss:$40 sm:$0xf]
  %s543 = scalar_lea.vmem %s0, 27
  %v544 = vld [vmem:[%s543] ss:$40 sm:$0xf0]
  %vm545 = vcmask 1047556
  %v546 = vsel %vm545, %v544, %v542
  %547 = vrot.lane.b32.xlu0 %v546, 96
  %v548 = vpop.permute.xlu0 %547
  %vm549 = vcmask 1048320
  %s550 = scalar_lea.vmem %s1, 48
  %551 = vst.msk [vmem:[%s550] sm:$0xff] %vm549, %v548
  %s552 = scalar_lea.vmem %s0, 323
  %v553 = vld [vmem:[%s552] ss:$40 sm:$0xf]
  %s554 = scalar_lea.vmem %s0, 323
  %v555 = vld [vmem:[%s554] ss:$40 sm:$0xf0]
  %vm556 = vcmask 1047556
  %v557 = vsel %vm556, %v555, %v553
  %558 = vrot.lane.b32.xlu0 %v557, 96
  %v559 = vpop.permute.xlu0 %558
  %vm560 = vcmask 1048320
  %s561 = scalar_lea.vmem %s1, 80
  %562 = vst.msk [vmem:[%s561] sm:$0xff] %vm560, %v559
  %s563 = scalar_lea.vmem %s0, 339
  %v564 = vld [vmem:[%s563] ss:$40 sm:$0xf]
  %s565 = scalar_lea.vmem %s0, 339
  %v566 = vld [vmem:[%s565] ss:$40 sm:$0xf0]
  %vm567 = vcmask 1047556
  %v568 = vsel %vm567, %v566, %v564
  %569 = vrot.lane.b32.xlu0 %v568, 96
  %v570 = vpop.permute.xlu0 %569
  %vm571 = vcmask 1048320
  %s572 = scalar_lea.vmem %s1, 112
  %573 = vst.msk [vmem:[%s572] sm:$0xff] %vm571, %v570
  %s574 = scalar_lea.vmem %s0, 355
  %v575 = vld [vmem:[%s574] ss:$40 sm:$0xf]
  %s576 = scalar_lea.vmem %s0, 355
  %v577 = vld [vmem:[%s576] ss:$40 sm:$0xf0]
  %vm578 = vcmask 1047556
  %v579 = vsel %vm578, %v577, %v575
  %580 = vrot.lane.b32.xlu0 %v579, 96
  %v581 = vpop.permute.xlu0 %580
  %vm582 = vcmask 1048320
  %s583 = scalar_lea.vmem %s1, 144
  %584 = vst.msk [vmem:[%s583] sm:$0xff] %vm582, %v581
  %s585 = scalar_lea.vmem %s0, 651
  %v586 = vld [vmem:[%s585] ss:$40 sm:$0xf]
  %s587 = scalar_lea.vmem %s0, 651
  %v588 = vld [vmem:[%s587] ss:$40 sm:$0xf0]
  %vm589 = vcmask 1047556
  %v590 = vsel %vm589, %v588, %v586
  %591 = vrot.lane.b32.xlu0 %v590, 96
  %v592 = vpop.permute.xlu0 %591
  %vm593 = vcmask 1048320
  %s594 = scalar_lea.vmem %s1, 176
  %595 = vst.msk [vmem:[%s594] sm:$0xff] %vm593, %v592
  %s596 = scalar_lea.vmem %s0, 667
  %v597 = vld [vmem:[%s596] ss:$40 sm:$0xf]
  %s598 = scalar_lea.vmem %s0, 667
  %v599 = vld [vmem:[%s598] ss:$40 sm:$0xf0]
  %vm600 = vcmask 1047556
  %v601 = vsel %vm600, %v599, %v597
  %602 = vrot.lane.b32.xlu0 %v601, 96
  %v603 = vpop.permute.xlu0 %602
  %vm604 = vcmask 1048320
  %s605 = scalar_lea.vmem %s1, 208
  %606 = vst.msk [vmem:[%s605] sm:$0xff] %vm604, %v603
  %s607 = scalar_lea.vmem %s0, 963
  %v608 = vld [vmem:[%s607] ss:$40 sm:$0xf]
  %s609 = scalar_lea.vmem %s0, 963
  %v610 = vld [vmem:[%s609] ss:$40 sm:$0xf0]
  %vm611 = vcmask 1047556
  %v612 = vsel %vm611, %v610, %v608
  %613 = vrot.lane.b32.xlu0 %v612, 96
  %v614 = vpop.permute.xlu0 %613
  %vm615 = vcmask 1048320
  %s616 = scalar_lea.vmem %s1, 240
  %617 = vst.msk [vmem:[%s616] sm:$0xff] %vm615, %v614
  %s618 = scalar_lea.vmem %s0, 979
  %v619 = vld [vmem:[%s618] ss:$40 sm:$0xf]
  %s620 = scalar_lea.vmem %s0, 979
  %v621 = vld [vmem:[%s620] ss:$40 sm:$0xf0]
  %vm622 = vcmask 1047556
  %v623 = vsel %vm622, %v621, %v619
  %624 = vrot.lane.b32.xlu0 %v623, 96
  %v625 = vpop.permute.xlu0 %624
  %vm626 = vcmask 1048320
  %s627 = scalar_lea.vmem %s1, 272
  %628 = vst.msk [vmem:[%s627] sm:$0xff] %vm626, %v625
  %s629 = scalar_lea.vmem %s0, 995
  %v630 = vld [vmem:[%s629] ss:$40 sm:$0xf]
  %s631 = scalar_lea.vmem %s0, 995
  %v632 = vld [vmem:[%s631] ss:$40 sm:$0xf0]
  %vm633 = vcmask 1047556
  %v634 = vsel %vm633, %v632, %v630
  %635 = vrot.lane.b32.xlu0 %v634, 96
  %v636 = vpop.permute.xlu0 %635
  %vm637 = vcmask 1048320
  %s638 = scalar_lea.vmem %s1, 304
  %639 = vst.msk [vmem:[%s638] sm:$0xff] %vm637, %v636
  %s640 = scalar_lea.vmem %s0, 15
  %v641 = vld [vmem:[%s640] ss:$40 sm:$0xf]
  %s642 = scalar_lea.vmem %s0, 15
  %v643 = vld [vmem:[%s642] ss:$40 sm:$0xf0]
  %vm644 = vcmask 1047556
  %v645 = vsel %vm644, %v643, %v641
  %646 = vrot.lane.b32.xlu0 %v645, 96
  %v647 = vpop.permute.xlu0 %646
  %vm648 = vcmask 1048320
  %s649 = scalar_lea.vmem %s1, 24
  %650 = vst.msk [vmem:[%s649] sm:$0xff] %vm648, %v647
  %s651 = scalar_lea.vmem %s0, 31
  %v652 = vld [vmem:[%s651] ss:$40 sm:$0xf]
  %s653 = scalar_lea.vmem %s0, 31
  %v654 = vld [vmem:[%s653] ss:$40 sm:$0xf0]
  %vm655 = vcmask 1047556
  %v656 = vsel %vm655, %v654, %v652
  %657 = vrot.lane.b32.xlu0 %v656, 96
  %v658 = vpop.permute.xlu0 %657
  %vm659 = vcmask 1048320
  %s660 = scalar_lea.vmem %s1, 56
  %661 = vst.msk [vmem:[%s660] sm:$0xff] %vm659, %v658
  %s662 = scalar_lea.vmem %s0, 327
  %v663 = vld [vmem:[%s662] ss:$40 sm:$0xf]
  %s664 = scalar_lea.vmem %s0, 327
  %v665 = vld [vmem:[%s664] ss:$40 sm:$0xf0]
  %vm666 = vcmask 1047556
  %v667 = vsel %vm666, %v665, %v663
  %668 = vrot.lane.b32.xlu0 %v667, 96
  %v669 = vpop.permute.xlu0 %668
  %vm670 = vcmask 1048320
  %s671 = scalar_lea.vmem %s1, 88
  %672 = vst.msk [vmem:[%s671] sm:$0xff] %vm670, %v669
  %s673 = scalar_lea.vmem %s0, 343
  %v674 = vld [vmem:[%s673] ss:$40 sm:$0xf]
  %s675 = scalar_lea.vmem %s0, 343
  %v676 = vld [vmem:[%s675] ss:$40 sm:$0xf0]
  %vm677 = vcmask 1047556
  %v678 = vsel %vm677, %v676, %v674
  %679 = vrot.lane.b32.xlu0 %v678, 96
  %v680 = vpop.permute.xlu0 %679
  %vm681 = vcmask 1048320
  %s682 = scalar_lea.vmem %s1, 120
  %683 = vst.msk [vmem:[%s682] sm:$0xff] %vm681, %v680
  %s684 = scalar_lea.vmem %s0, 359
  %v685 = vld [vmem:[%s684] ss:$40 sm:$0xf]
  %s686 = scalar_lea.vmem %s0, 359
  %v687 = vld [vmem:[%s686] ss:$40 sm:$0xf0]
  %vm688 = vcmask 1047556
  %v689 = vsel %vm688, %v687, %v685
  %690 = vrot.lane.b32.xlu0 %v689, 96
  %v691 = vpop.permute.xlu0 %690
  %vm692 = vcmask 1048320
  %s693 = scalar_lea.vmem %s1, 152
  %694 = vst.msk [vmem:[%s693] sm:$0xff] %vm692, %v691
  %s695 = scalar_lea.vmem %s0, 655
  %v696 = vld [vmem:[%s695] ss:$40 sm:$0xf]
  %s697 = scalar_lea.vmem %s0, 655
  %v698 = vld [vmem:[%s697] ss:$40 sm:$0xf0]
  %vm699 = vcmask 1047556
  %v700 = vsel %vm699, %v698, %v696
  %701 = vrot.lane.b32.xlu0 %v700, 96
  %v702 = vpop.permute.xlu0 %701
  %vm703 = vcmask 1048320
  %s704 = scalar_lea.vmem %s1, 184
  %705 = vst.msk [vmem:[%s704] sm:$0xff] %vm703, %v702
  %s706 = scalar_lea.vmem %s0, 671
  %v707 = vld [vmem:[%s706] ss:$40 sm:$0xf]
  %s708 = scalar_lea.vmem %s0, 671
  %v709 = vld [vmem:[%s708] ss:$40 sm:$0xf0]
  %vm710 = vcmask 1047556
  %v711 = vsel %vm710, %v709, %v707
  %712 = vrot.lane.b32.xlu0 %v711, 96
  %v713 = vpop.permute.xlu0 %712
  %vm714 = vcmask 1048320
  %s715 = scalar_lea.vmem %s1, 216
  %716 = vst.msk [vmem:[%s715] sm:$0xff] %vm714, %v713
  %s717 = scalar_lea.vmem %s0, 967
  %v718 = vld [vmem:[%s717] ss:$40 sm:$0xf]
  %s719 = scalar_lea.vmem %s0, 967
  %v720 = vld [vmem:[%s719] ss:$40 sm:$0xf0]
  %vm721 = vcmask 1047556
  %v722 = vsel %vm721, %v720, %v718
  %723 = vrot.lane.b32.xlu0 %v722, 96
  %v724 = vpop.permute.xlu0 %723
  %vm725 = vcmask 1048320
  %s726 = scalar_lea.vmem %s1, 248
  %727 = vst.msk [vmem:[%s726] sm:$0xff] %vm725, %v724
  %s728 = scalar_lea.vmem %s0, 983
  %v729 = vld [vmem:[%s728] ss:$40 sm:$0xf]
  %s730 = scalar_lea.vmem %s0, 983
  %v731 = vld [vmem:[%s730] ss:$40 sm:$0xf0]
  %vm732 = vcmask 1047556
  %v733 = vsel %vm732, %v731, %v729
  %734 = vrot.lane.b32.xlu0 %v733, 96
  %v735 = vpop.permute.xlu0 %734
  %vm736 = vcmask 1048320
  %s737 = scalar_lea.vmem %s1, 280
  %738 = vst.msk [vmem:[%s737] sm:$0xff] %vm736, %v735
  %s739 = scalar_lea.vmem %s0, 999
  %v740 = vld [vmem:[%s739] ss:$40 sm:$0xf]
  %s741 = scalar_lea.vmem %s0, 999
  %v742 = vld [vmem:[%s741] ss:$40 sm:$0xf0]
  %vm743 = vcmask 1047556
  %v744 = vsel %vm743, %v742, %v740
  %745 = vrot.lane.b32.xlu0 %v744, 96
  %v746 = vpop.permute.xlu0 %745
  %vm747 = vcmask 1048320
  %s748 = scalar_lea.vmem %s1, 312
  %749 = vst.msk [vmem:[%s748] sm:$0xff] %vm747, %v746
  %s750 = scalar_lea.vmem %s0, 2
  %v751 = vld [vmem:[%s750] ss:$40 sm:$0xf]
  %s752 = scalar_lea.vmem %s0, 2
  %v753 = vld [vmem:[%s752] ss:$40 sm:$0xf0]
  %vm754 = vcmask 1047556
  %v755 = vsel %vm754, %v753, %v751
  %756 = vrot.lane.b32.xlu0 %v755, 64
  %v757 = vpop.permute.xlu0 %756
  %vm758 = vcmask 785920
  %759 = vst.msk [vmem:[%s1] sm:$0xff] %vm758, %v757
  %s760 = scalar_lea.vmem %s0, 18
  %v761 = vld [vmem:[%s760] ss:$40 sm:$0xf]
  %s762 = scalar_lea.vmem %s0, 18
  %v763 = vld [vmem:[%s762] ss:$40 sm:$0xf0]
  %vm764 = vcmask 1047556
  %v765 = vsel %vm764, %v763, %v761
  %766 = vrot.lane.b32.xlu0 %v765, 64
  %v767 = vpop.permute.xlu0 %766
  %vm768 = vcmask 785920
  %s769 = scalar_lea.vmem %s1, 32
  %770 = vst.msk [vmem:[%s769] sm:$0xff] %vm768, %v767
  %s771 = scalar_lea.vmem %s0, 34
  %v772 = vld [vmem:[%s771] ss:$40 sm:$0xf]
  %s773 = scalar_lea.vmem %s0, 34
  %v774 = vld [vmem:[%s773] ss:$40 sm:$0xf0]
  %vm775 = vcmask 1047556
  %v776 = vsel %vm775, %v774, %v772
  %777 = vrot.lane.b32.xlu0 %v776, 64
  %v778 = vpop.permute.xlu0 %777
  %vm779 = vcmask 785920
  %s780 = scalar_lea.vmem %s1, 64
  %781 = vst.msk [vmem:[%s780] sm:$0xff] %vm779, %v778
  %s782 = scalar_lea.vmem %s0, 330
  %v783 = vld [vmem:[%s782] ss:$40 sm:$0xf]
  %s784 = scalar_lea.vmem %s0, 330
  %v785 = vld [vmem:[%s784] ss:$40 sm:$0xf0]
  %vm786 = vcmask 1047556
  %v787 = vsel %vm786, %v785, %v783
  %788 = vrot.lane.b32.xlu0 %v787, 64
  %v789 = vpop.permute.xlu0 %788
  %vm790 = vcmask 785920
  %s791 = scalar_lea.vmem %s1, 96
  %792 = vst.msk [vmem:[%s791] sm:$0xff] %vm790, %v789
  %s793 = scalar_lea.vmem %s0, 346
  %v794 = vld [vmem:[%s793] ss:$40 sm:$0xf]
  %s795 = scalar_lea.vmem %s0, 346
  %v796 = vld [vmem:[%s795] ss:$40 sm:$0xf0]
  %vm797 = vcmask 1047556
  %v798 = vsel %vm797, %v796, %v794
  %799 = vrot.lane.b32.xlu0 %v798, 64
  %v800 = vpop.permute.xlu0 %799
  %vm801 = vcmask 785920
  %s802 = scalar_lea.vmem %s1, 128
  %803 = vst.msk [vmem:[%s802] sm:$0xff] %vm801, %v800
  %s804 = scalar_lea.vmem %s0, 642
  %v805 = vld [vmem:[%s804] ss:$40 sm:$0xf]
  %s806 = scalar_lea.vmem %s0, 642
  %v807 = vld [vmem:[%s806] ss:$40 sm:$0xf0]
  %vm808 = vcmask 1047556
  %v809 = vsel %vm808, %v807, %v805
  %810 = vrot.lane.b32.xlu0 %v809, 64
  %v811 = vpop.permute.xlu0 %810
  %vm812 = vcmask 785920
  %s813 = scalar_lea.vmem %s1, 160
  %814 = vst.msk [vmem:[%s813] sm:$0xff] %vm812, %v811
  %s815 = scalar_lea.vmem %s0, 658
  %v816 = vld [vmem:[%s815] ss:$40 sm:$0xf]
  %s817 = scalar_lea.vmem %s0, 658
  %v818 = vld [vmem:[%s817] ss:$40 sm:$0xf0]
  %vm819 = vcmask 1047556
  %v820 = vsel %vm819, %v818, %v816
  %821 = vrot.lane.b32.xlu0 %v820, 64
  %v822 = vpop.permute.xlu0 %821
  %vm823 = vcmask 785920
  %s824 = scalar_lea.vmem %s1, 192
  %825 = vst.msk [vmem:[%s824] sm:$0xff] %vm823, %v822
  %s826 = scalar_lea.vmem %s0, 674
  %v827 = vld [vmem:[%s826] ss:$40 sm:$0xf]
  %s828 = scalar_lea.vmem %s0, 674
  %v829 = vld [vmem:[%s828] ss:$40 sm:$0xf0]
  %vm830 = vcmask 1047556
  %v831 = vsel %vm830, %v829, %v827
  %832 = vrot.lane.b32.xlu0 %v831, 64
  %v833 = vpop.permute.xlu0 %832
  %vm834 = vcmask 785920
  %s835 = scalar_lea.vmem %s1, 224
  %836 = vst.msk [vmem:[%s835] sm:$0xff] %vm834, %v833
  %s837 = scalar_lea.vmem %s0, 970
  %v838 = vld [vmem:[%s837] ss:$40 sm:$0xf]
  %s839 = scalar_lea.vmem %s0, 970
  %v840 = vld [vmem:[%s839] ss:$40 sm:$0xf0]
  %vm841 = vcmask 1047556
  %v842 = vsel %vm841, %v840, %v838
  %843 = vrot.lane.b32.xlu0 %v842, 64
  %v844 = vpop.permute.xlu0 %843
  %vm845 = vcmask 785920
  %s846 = scalar_lea.vmem %s1, 256
  %847 = vst.msk [vmem:[%s846] sm:$0xff] %vm845, %v844
  %s848 = scalar_lea.vmem %s0, 986
  %v849 = vld [vmem:[%s848] ss:$40 sm:$0xf]
  %s850 = scalar_lea.vmem %s0, 986
  %v851 = vld [vmem:[%s850] ss:$40 sm:$0xf0]
  %vm852 = vcmask 1047556
  %v853 = vsel %vm852, %v851, %v849
  %854 = vrot.lane.b32.xlu0 %v853, 64
  %v855 = vpop.permute.xlu0 %854
  %vm856 = vcmask 785920
  %s857 = scalar_lea.vmem %s1, 288
  %858 = vst.msk [vmem:[%s857] sm:$0xff] %vm856, %v855
  %s859 = scalar_lea.vmem %s0, 6
  %v860 = vld [vmem:[%s859] ss:$40 sm:$0xf]
  %s861 = scalar_lea.vmem %s0, 6
  %v862 = vld [vmem:[%s861] ss:$40 sm:$0xf0]
  %vm863 = vcmask 1047556
  %v864 = vsel %vm863, %v862, %v860
  %865 = vrot.lane.b32.xlu0 %v864, 64
  %v866 = vpop.permute.xlu0 %865
  %vm867 = vcmask 785920
  %s868 = scalar_lea.vmem %s1, 8
  %869 = vst.msk [vmem:[%s868] sm:$0xff] %vm867, %v866
  %s870 = scalar_lea.vmem %s0, 22
  %v871 = vld [vmem:[%s870] ss:$40 sm:$0xf]
  %s872 = scalar_lea.vmem %s0, 22
  %v873 = vld [vmem:[%s872] ss:$40 sm:$0xf0]
  %vm874 = vcmask 1047556
  %v875 = vsel %vm874, %v873, %v871
  %876 = vrot.lane.b32.xlu0 %v875, 64
  %v877 = vpop.permute.xlu0 %876
  %vm878 = vcmask 785920
  %s879 = scalar_lea.vmem %s1, 40
  %880 = vst.msk [vmem:[%s879] sm:$0xff] %vm878, %v877
  %s881 = scalar_lea.vmem %s0, 38
  %v882 = vld [vmem:[%s881] ss:$40 sm:$0xf]
  %s883 = scalar_lea.vmem %s0, 38
  %v884 = vld [vmem:[%s883] ss:$40 sm:$0xf0]
  %vm885 = vcmask 1047556
  %v886 = vsel %vm885, %v884, %v882
  %887 = vrot.lane.b32.xlu0 %v886, 64
  %v888 = vpop.permute.xlu0 %887
  %vm889 = vcmask 785920
  %s890 = scalar_lea.vmem %s1, 72
  %891 = vst.msk [vmem:[%s890] sm:$0xff] %vm889, %v888
  %s892 = scalar_lea.vmem %s0, 334
  %v893 = vld [vmem:[%s892] ss:$40 sm:$0xf]
  %s894 = scalar_lea.vmem %s0, 334
  %v895 = vld [vmem:[%s894] ss:$40 sm:$0xf0]
  %vm896 = vcmask 1047556
  %v897 = vsel %vm896, %v895, %v893
  %898 = vrot.lane.b32.xlu0 %v897, 64
  %v899 = vpop.permute.xlu0 %898
  %vm900 = vcmask 785920
  %s901 = scalar_lea.vmem %s1, 104
  %902 = vst.msk [vmem:[%s901] sm:$0xff] %vm900, %v899
  %s903 = scalar_lea.vmem %s0, 350
  %v904 = vld [vmem:[%s903] ss:$40 sm:$0xf]
  %s905 = scalar_lea.vmem %s0, 350
  %v906 = vld [vmem:[%s905] ss:$40 sm:$0xf0]
  %vm907 = vcmask 1047556
  %v908 = vsel %vm907, %v906, %v904
  %909 = vrot.lane.b32.xlu0 %v908, 64
  %v910 = vpop.permute.xlu0 %909
  %vm911 = vcmask 785920
  %s912 = scalar_lea.vmem %s1, 136
  %913 = vst.msk [vmem:[%s912] sm:$0xff] %vm911, %v910
  %s914 = scalar_lea.vmem %s0, 646
  %v915 = vld [vmem:[%s914] ss:$40 sm:$0xf]
  %s916 = scalar_lea.vmem %s0, 646
  %v917 = vld [vmem:[%s916] ss:$40 sm:$0xf0]
  %vm918 = vcmask 1047556
  %v919 = vsel %vm918, %v917, %v915
  %920 = vrot.lane.b32.xlu0 %v919, 64
  %v921 = vpop.permute.xlu0 %920
  %vm922 = vcmask 785920
  %s923 = scalar_lea.vmem %s1, 168
  %924 = vst.msk [vmem:[%s923] sm:$0xff] %vm922, %v921
  %s925 = scalar_lea.vmem %s0, 662
  %v926 = vld [vmem:[%s925] ss:$40 sm:$0xf]
  %s927 = scalar_lea.vmem %s0, 662
  %v928 = vld [vmem:[%s927] ss:$40 sm:$0xf0]
  %vm929 = vcmask 1047556
  %v930 = vsel %vm929, %v928, %v926
  %931 = vrot.lane.b32.xlu0 %v930, 64
  %v932 = vpop.permute.xlu0 %931
  %vm933 = vcmask 785920
  %s934 = scalar_lea.vmem %s1, 200
  %935 = vst.msk [vmem:[%s934] sm:$0xff] %vm933, %v932
  %s936 = scalar_lea.vmem %s0, 678
  %v937 = vld [vmem:[%s936] ss:$40 sm:$0xf]
  %s938 = scalar_lea.vmem %s0, 678
  %v939 = vld [vmem:[%s938] ss:$40 sm:$0xf0]
  %vm940 = vcmask 1047556
  %v941 = vsel %vm940, %v939, %v937
  %942 = vrot.lane.b32.xlu0 %v941, 64
  %v943 = vpop.permute.xlu0 %942
  %vm944 = vcmask 785920
  %s945 = scalar_lea.vmem %s1, 232
  %946 = vst.msk [vmem:[%s945] sm:$0xff] %vm944, %v943
  %s947 = scalar_lea.vmem %s0, 974
  %v948 = vld [vmem:[%s947] ss:$40 sm:$0xf]
  %s949 = scalar_lea.vmem %s0, 974
  %v950 = vld [vmem:[%s949] ss:$40 sm:$0xf0]
  %vm951 = vcmask 1047556
  %v952 = vsel %vm951, %v950, %v948
  %953 = vrot.lane.b32.xlu0 %v952, 64
  %v954 = vpop.permute.xlu0 %953
  %vm955 = vcmask 785920
  %s956 = scalar_lea.vmem %s1, 264
  %957 = vst.msk [vmem:[%s956] sm:$0xff] %vm955, %v954
  %s958 = scalar_lea.vmem %s0, 990
  %v959 = vld [vmem:[%s958] ss:$40 sm:$0xf]
  %s960 = scalar_lea.vmem %s0, 990
  %v961 = vld [vmem:[%s960] ss:$40 sm:$0xf0]
  %vm962 = vcmask 1047556
  %v963 = vsel %vm962, %v961, %v959
  %964 = vrot.lane.b32.xlu0 %v963, 64
  %v965 = vpop.permute.xlu0 %964
  %vm966 = vcmask 785920
  %s967 = scalar_lea.vmem %s1, 296
  %968 = vst.msk [vmem:[%s967] sm:$0xff] %vm966, %v965
  %s969 = scalar_lea.vmem %s0, 10
  %v970 = vld [vmem:[%s969] ss:$40 sm:$0xf]
  %s971 = scalar_lea.vmem %s0, 10
  %v972 = vld [vmem:[%s971] ss:$40 sm:$0xf0]
  %vm973 = vcmask 1047556
  %v974 = vsel %vm973, %v972, %v970
  %975 = vrot.lane.b32.xlu0 %v974, 64
  %v976 = vpop.permute.xlu0 %975
  %vm977 = vcmask 785920
  %s978 = scalar_lea.vmem %s1, 16
  %979 = vst.msk [vmem:[%s978] sm:$0xff] %vm977, %v976
  %s980 = scalar_lea.vmem %s0, 26
  %v981 = vld [vmem:[%s980] ss:$40 sm:$0xf]
  %s982 = scalar_lea.vmem %s0, 26
  %v983 = vld [vmem:[%s982] ss:$40 sm:$0xf0]
  %vm984 = vcmask 1047556
  %v985 = vsel %vm984, %v983, %v981
  %986 = vrot.lane.b32.xlu0 %v985, 64
  %v987 = vpop.permute.xlu0 %986
  %vm988 = vcmask 785920
  %s989 = scalar_lea.vmem %s1, 48
  %990 = vst.msk [vmem:[%s989] sm:$0xff] %vm988, %v987
  %s991 = scalar_lea.vmem %s0, 322
  %v992 = vld [vmem:[%s991] ss:$40 sm:$0xf]
  %s993 = scalar_lea.vmem %s0, 322
  %v994 = vld [vmem:[%s993] ss:$40 sm:$0xf0]
  %vm995 = vcmask 1047556
  %v996 = vsel %vm995, %v994, %v992
  %997 = vrot.lane.b32.xlu0 %v996, 64
  %v998 = vpop.permute.xlu0 %997
  %vm999 = vcmask 785920
  %s1000 = scalar_lea.vmem %s1, 80
  %1001 = vst.msk [vmem:[%s1000] sm:$0xff] %vm999, %v998
  %s1002 = scalar_lea.vmem %s0, 338
  %v1003 = vld [vmem:[%s1002] ss:$40 sm:$0xf]
  %s1004 = scalar_lea.vmem %s0, 338
  %v1005 = vld [vmem:[%s1004] ss:$40 sm:$0xf0]
  %vm1006 = vcmask 1047556
  %v1007 = vsel %vm1006, %v1005, %v1003
  %1008 = vrot.lane.b32.xlu0 %v1007, 64
  %v1009 = vpop.permute.xlu0 %1008
  %vm1010 = vcmask 785920
  %s1011 = scalar_lea.vmem %s1, 112
  %1012 = vst.msk [vmem:[%s1011] sm:$0xff] %vm1010, %v1009
  %s1013 = scalar_lea.vmem %s0, 354
  %v1014 = vld [vmem:[%s1013] ss:$40 sm:$0xf]
  %s1015 = scalar_lea.vmem %s0, 354
  %v1016 = vld [vmem:[%s1015] ss:$40 sm:$0xf0]
  %vm1017 = vcmask 1047556
  %v1018 = vsel %vm1017, %v1016, %v1014
  %1019 = vrot.lane.b32.xlu0 %v1018, 64
  %v1020 = vpop.permute.xlu0 %1019
  %vm1021 = vcmask 785920
  %s1022 = scalar_lea.vmem %s1, 144
  %1023 = vst.msk [vmem:[%s1022] sm:$0xff] %vm1021, %v1020
  %s1024 = scalar_lea.vmem %s0, 650
  %v1025 = vld [vmem:[%s1024] ss:$40 sm:$0xf]
  %s1026 = scalar_lea.vmem %s0, 650
  %v1027 = vld [vmem:[%s1026] ss:$40 sm:$0xf0]
  %vm1028 = vcmask 1047556
  %v1029 = vsel %vm1028, %v1027, %v1025
  %1030 = vrot.lane.b32.xlu0 %v1029, 64
  %v1031 = vpop.permute.xlu0 %1030
  %vm1032 = vcmask 785920
  %s1033 = scalar_lea.vmem %s1, 176
  %1034 = vst.msk [vmem:[%s1033] sm:$0xff] %vm1032, %v1031
  %s1035 = scalar_lea.vmem %s0, 666
  %v1036 = vld [vmem:[%s1035] ss:$40 sm:$0xf]
  %s1037 = scalar_lea.vmem %s0, 666
  %v1038 = vld [vmem:[%s1037] ss:$40 sm:$0xf0]
  %vm1039 = vcmask 1047556
  %v1040 = vsel %vm1039, %v1038, %v1036
  %1041 = vrot.lane.b32.xlu0 %v1040, 64
  %v1042 = vpop.permute.xlu0 %1041
  %vm1043 = vcmask 785920
  %s1044 = scalar_lea.vmem %s1, 208
  %1045 = vst.msk [vmem:[%s1044] sm:$0xff] %vm1043, %v1042
  %s1046 = scalar_lea.vmem %s0, 962
  %v1047 = vld [vmem:[%s1046] ss:$40 sm:$0xf]
  %s1048 = scalar_lea.vmem %s0, 962
  %v1049 = vld [vmem:[%s1048] ss:$40 sm:$0xf0]
  %vm1050 = vcmask 1047556
  %v1051 = vsel %vm1050, %v1049, %v1047
  %1052 = vrot.lane.b32.xlu0 %v1051, 64
  %v1053 = vpop.permute.xlu0 %1052
  %vm1054 = vcmask 785920
  %s1055 = scalar_lea.vmem %s1, 240
  %1056 = vst.msk [vmem:[%s1055] sm:$0xff] %vm1054, %v1053
  %s1057 = scalar_lea.vmem %s0, 978
  %v1058 = vld [vmem:[%s1057] ss:$40 sm:$0xf]
  %s1059 = scalar_lea.vmem %s0, 978
  %v1060 = vld [vmem:[%s1059] ss:$40 sm:$0xf0]
  %vm1061 = vcmask 1047556
  %v1062 = vsel %vm1061, %v1060, %v1058
  %1063 = vrot.lane.b32.xlu0 %v1062, 64
  %v1064 = vpop.permute.xlu0 %1063
  %vm1065 = vcmask 785920
  %s1066 = scalar_lea.vmem %s1, 272
  %1067 = vst.msk [vmem:[%s1066] sm:$0xff] %vm1065, %v1064
  %s1068 = scalar_lea.vmem %s0, 994
  %v1069 = vld [vmem:[%s1068] ss:$40 sm:$0xf]
  %s1070 = scalar_lea.vmem %s0, 994
  %v1071 = vld [vmem:[%s1070] ss:$40 sm:$0xf0]
  %vm1072 = vcmask 1047556
  %v1073 = vsel %vm1072, %v1071, %v1069
  %1074 = vrot.lane.b32.xlu0 %v1073, 64
  %v1075 = vpop.permute.xlu0 %1074
  %vm1076 = vcmask 785920
  %s1077 = scalar_lea.vmem %s1, 304
  %1078 = vst.msk [vmem:[%s1077] sm:$0xff] %vm1076, %v1075
  %s1079 = scalar_lea.vmem %s0, 14
  %v1080 = vld [vmem:[%s1079] ss:$40 sm:$0xf]
  %s1081 = scalar_lea.vmem %s0, 14
  %v1082 = vld [vmem:[%s1081] ss:$40 sm:$0xf0]
  %vm1083 = vcmask 1047556
  %v1084 = vsel %vm1083, %v1082, %v1080
  %1085 = vrot.lane.b32.xlu0 %v1084, 64
  %v1086 = vpop.permute.xlu0 %1085
  %vm1087 = vcmask 785920
  %s1088 = scalar_lea.vmem %s1, 24
  %1089 = vst.msk [vmem:[%s1088] sm:$0xff] %vm1087, %v1086
  %s1090 = scalar_lea.vmem %s0, 30
  %v1091 = vld [vmem:[%s1090] ss:$40 sm:$0xf]
  %s1092 = scalar_lea.vmem %s0, 30
  %v1093 = vld [vmem:[%s1092] ss:$40 sm:$0xf0]
  %vm1094 = vcmask 1047556
  %v1095 = vsel %vm1094, %v1093, %v1091
  %1096 = vrot.lane.b32.xlu0 %v1095, 64
  %v1097 = vpop.permute.xlu0 %1096
  %vm1098 = vcmask 785920
  %s1099 = scalar_lea.vmem %s1, 56
  %1100 = vst.msk [vmem:[%s1099] sm:$0xff] %vm1098, %v1097
  %s1101 = scalar_lea.vmem %s0, 326
  %v1102 = vld [vmem:[%s1101] ss:$40 sm:$0xf]
  %s1103 = scalar_lea.vmem %s0, 326
  %v1104 = vld [vmem:[%s1103] ss:$40 sm:$0xf0]
  %vm1105 = vcmask 1047556
  %v1106 = vsel %vm1105, %v1104, %v1102
  %1107 = vrot.lane.b32.xlu0 %v1106, 64
  %v1108 = vpop.permute.xlu0 %1107
  %vm1109 = vcmask 785920
  %s1110 = scalar_lea.vmem %s1, 88
  %1111 = vst.msk [vmem:[%s1110] sm:$0xff] %vm1109, %v1108
  %s1112 = scalar_lea.vmem %s0, 342
  %v1113 = vld [vmem:[%s1112] ss:$40 sm:$0xf]
  %s1114 = scalar_lea.vmem %s0, 342
  %v1115 = vld [vmem:[%s1114] ss:$40 sm:$0xf0]
  %vm1116 = vcmask 1047556
  %v1117 = vsel %vm1116, %v1115, %v1113
  %1118 = vrot.lane.b32.xlu0 %v1117, 64
  %v1119 = vpop.permute.xlu0 %1118
  %vm1120 = vcmask 785920
  %s1121 = scalar_lea.vmem %s1, 120
  %1122 = vst.msk [vmem:[%s1121] sm:$0xff] %vm1120, %v1119
  %s1123 = scalar_lea.vmem %s0, 358
  %v1124 = vld [vmem:[%s1123] ss:$40 sm:$0xf]
  %s1125 = scalar_lea.vmem %s0, 358
  %v1126 = vld [vmem:[%s1125] ss:$40 sm:$0xf0]
  %vm1127 = vcmask 1047556
  %v1128 = vsel %vm1127, %v1126, %v1124
  %1129 = vrot.lane.b32.xlu0 %v1128, 64
  %v1130 = vpop.permute.xlu0 %1129
  %vm1131 = vcmask 785920
  %s1132 = scalar_lea.vmem %s1, 152
  %1133 = vst.msk [vmem:[%s1132] sm:$0xff] %vm1131, %v1130
  %s1134 = scalar_lea.vmem %s0, 654
  %v1135 = vld [vmem:[%s1134] ss:$40 sm:$0xf]
  %s1136 = scalar_lea.vmem %s0, 654
  %v1137 = vld [vmem:[%s1136] ss:$40 sm:$0xf0]
  %vm1138 = vcmask 1047556
  %v1139 = vsel %vm1138, %v1137, %v1135
  %1140 = vrot.lane.b32.xlu0 %v1139, 64
  %v1141 = vpop.permute.xlu0 %1140
  %vm1142 = vcmask 785920
  %s1143 = scalar_lea.vmem %s1, 184
  %1144 = vst.msk [vmem:[%s1143] sm:$0xff] %vm1142, %v1141
  %s1145 = scalar_lea.vmem %s0, 670
  %v1146 = vld [vmem:[%s1145] ss:$40 sm:$0xf]
  %s1147 = scalar_lea.vmem %s0, 670
  %v1148 = vld [vmem:[%s1147] ss:$40 sm:$0xf0]
  %vm1149 = vcmask 1047556
  %v1150 = vsel %vm1149, %v1148, %v1146
  %1151 = vrot.lane.b32.xlu0 %v1150, 64
  %v1152 = vpop.permute.xlu0 %1151
  %vm1153 = vcmask 785920
  %s1154 = scalar_lea.vmem %s1, 216
  %1155 = vst.msk [vmem:[%s1154] sm:$0xff] %vm1153, %v1152
  %s1156 = scalar_lea.vmem %s0, 966
  %v1157 = vld [vmem:[%s1156] ss:$40 sm:$0xf]
  %s1158 = scalar_lea.vmem %s0, 966
  %v1159 = vld [vmem:[%s1158] ss:$40 sm:$0xf0]
  %vm1160 = vcmask 1047556
  %v1161 = vsel %vm1160, %v1159, %v1157
  %1162 = vrot.lane.b32.xlu0 %v1161, 64
  %v1163 = vpop.permute.xlu0 %1162
  %vm1164 = vcmask 785920
  %s1165 = scalar_lea.vmem %s1, 248
  %1166 = vst.msk [vmem:[%s1165] sm:$0xff] %vm1164, %v1163
  %s1167 = scalar_lea.vmem %s0, 982
  %v1168 = vld [vmem:[%s1167] ss:$40 sm:$0xf]
  %s1169 = scalar_lea.vmem %s0, 982
  %v1170 = vld [vmem:[%s1169] ss:$40 sm:$0xf0]
  %vm1171 = vcmask 1047556
  %v1172 = vsel %vm1171, %v1170, %v1168
  %1173 = vrot.lane.b32.xlu0 %v1172, 64
  %v1174 = vpop.permute.xlu0 %1173
  %vm1175 = vcmask 785920
  %s1176 = scalar_lea.vmem %s1, 280
  %1177 = vst.msk [vmem:[%s1176] sm:$0xff] %vm1175, %v1174
  %s1178 = scalar_lea.vmem %s0, 998
  %v1179 = vld [vmem:[%s1178] ss:$40 sm:$0xf]
  %s1180 = scalar_lea.vmem %s0, 998
  %v1181 = vld [vmem:[%s1180] ss:$40 sm:$0xf0]
  %vm1182 = vcmask 1047556
  %v1183 = vsel %vm1182, %v1181, %v1179
  %1184 = vrot.lane.b32.xlu0 %v1183, 64
  %v1185 = vpop.permute.xlu0 %1184
  %vm1186 = vcmask 785920
  %s1187 = scalar_lea.vmem %s1, 312
  %1188 = vst.msk [vmem:[%s1187] sm:$0xff] %vm1186, %v1185
  %s1189 = scalar_lea.vmem %s0, 1
  %v1190 = vld [vmem:[%s1189] ss:$40 sm:$0xf]
  %s1191 = scalar_lea.vmem %s0, 1
  %v1192 = vld [vmem:[%s1191] ss:$40 sm:$0xf0]
  %vm1193 = vcmask 1047556
  %v1194 = vsel %vm1193, %v1192, %v1190
  %1195 = vrot.lane.b32.xlu0 %v1194, 32
  %v1196 = vpop.permute.xlu0 %1195
  %vm1197 = vcmask 523520
  %1198 = vst.msk [vmem:[%s1] sm:$0xff] %vm1197, %v1196
  %s1199 = scalar_lea.vmem %s0, 17
  %v1200 = vld [vmem:[%s1199] ss:$40 sm:$0xf]
  %s1201 = scalar_lea.vmem %s0, 17
  %v1202 = vld [vmem:[%s1201] ss:$40 sm:$0xf0]
  %vm1203 = vcmask 1047556
  %v1204 = vsel %vm1203, %v1202, %v1200
  %1205 = vrot.lane.b32.xlu0 %v1204, 32
  %v1206 = vpop.permute.xlu0 %1205
  %vm1207 = vcmask 523520
  %s1208 = scalar_lea.vmem %s1, 32
  %1209 = vst.msk [vmem:[%s1208] sm:$0xff] %vm1207, %v1206
  %s1210 = scalar_lea.vmem %s0, 33
  %v1211 = vld [vmem:[%s1210] ss:$40 sm:$0xf]
  %s1212 = scalar_lea.vmem %s0, 33
  %v1213 = vld [vmem:[%s1212] ss:$40 sm:$0xf0]
  %vm1214 = vcmask 1047556
  %v1215 = vsel %vm1214, %v1213, %v1211
  %1216 = vrot.lane.b32.xlu0 %v1215, 32
  %v1217 = vpop.permute.xlu0 %1216
  %vm1218 = vcmask 523520
  %s1219 = scalar_lea.vmem %s1, 64
  %1220 = vst.msk [vmem:[%s1219] sm:$0xff] %vm1218, %v1217
  %s1221 = scalar_lea.vmem %s0, 329
  %v1222 = vld [vmem:[%s1221] ss:$40 sm:$0xf]
  %s1223 = scalar_lea.vmem %s0, 329
  %v1224 = vld [vmem:[%s1223] ss:$40 sm:$0xf0]
  %vm1225 = vcmask 1047556
  %v1226 = vsel %vm1225, %v1224, %v1222
  %1227 = vrot.lane.b32.xlu0 %v1226, 32
  %v1228 = vpop.permute.xlu0 %1227
  %vm1229 = vcmask 523520
  %s1230 = scalar_lea.vmem %s1, 96
  %1231 = vst.msk [vmem:[%s1230] sm:$0xff] %vm1229, %v1228
  %s1232 = scalar_lea.vmem %s0, 345
  %v1233 = vld [vmem:[%s1232] ss:$40 sm:$0xf]
  %s1234 = scalar_lea.vmem %s0, 345
  %v1235 = vld [vmem:[%s1234] ss:$40 sm:$0xf0]
  %vm1236 = vcmask 1047556
  %v1237 = vsel %vm1236, %v1235, %v1233
  %1238 = vrot.lane.b32.xlu0 %v1237, 32
  %v1239 = vpop.permute.xlu0 %1238
  %vm1240 = vcmask 523520
  %s1241 = scalar_lea.vmem %s1, 128
  %1242 = vst.msk [vmem:[%s1241] sm:$0xff] %vm1240, %v1239
  %s1243 = scalar_lea.vmem %s0, 641
  %v1244 = vld [vmem:[%s1243] ss:$40 sm:$0xf]
  %s1245 = scalar_lea.vmem %s0, 641
  %v1246 = vld [vmem:[%s1245] ss:$40 sm:$0xf0]
  %vm1247 = vcmask 1047556
  %v1248 = vsel %vm1247, %v1246, %v1244
  %1249 = vrot.lane.b32.xlu0 %v1248, 32
  %v1250 = vpop.permute.xlu0 %1249
  %vm1251 = vcmask 523520
  %s1252 = scalar_lea.vmem %s1, 160
  %1253 = vst.msk [vmem:[%s1252] sm:$0xff] %vm1251, %v1250
  %s1254 = scalar_lea.vmem %s0, 657
  %v1255 = vld [vmem:[%s1254] ss:$40 sm:$0xf]
  %s1256 = scalar_lea.vmem %s0, 657
  %v1257 = vld [vmem:[%s1256] ss:$40 sm:$0xf0]
  %vm1258 = vcmask 1047556
  %v1259 = vsel %vm1258, %v1257, %v1255
  %1260 = vrot.lane.b32.xlu0 %v1259, 32
  %v1261 = vpop.permute.xlu0 %1260
  %vm1262 = vcmask 523520
  %s1263 = scalar_lea.vmem %s1, 192
  %1264 = vst.msk [vmem:[%s1263] sm:$0xff] %vm1262, %v1261
  %s1265 = scalar_lea.vmem %s0, 673
  %v1266 = vld [vmem:[%s1265] ss:$40 sm:$0xf]
  %s1267 = scalar_lea.vmem %s0, 673
  %v1268 = vld [vmem:[%s1267] ss:$40 sm:$0xf0]
  %vm1269 = vcmask 1047556
  %v1270 = vsel %vm1269, %v1268, %v1266
  %1271 = vrot.lane.b32.xlu0 %v1270, 32
  %v1272 = vpop.permute.xlu0 %1271
  %vm1273 = vcmask 523520
  %s1274 = scalar_lea.vmem %s1, 224
  %1275 = vst.msk [vmem:[%s1274] sm:$0xff] %vm1273, %v1272
  %s1276 = scalar_lea.vmem %s0, 969
  %v1277 = vld [vmem:[%s1276] ss:$40 sm:$0xf]
  %s1278 = scalar_lea.vmem %s0, 969
  %v1279 = vld [vmem:[%s1278] ss:$40 sm:$0xf0]
  %vm1280 = vcmask 1047556
  %v1281 = vsel %vm1280, %v1279, %v1277
  %1282 = vrot.lane.b32.xlu0 %v1281, 32
  %v1283 = vpop.permute.xlu0 %1282
  %vm1284 = vcmask 523520
  %s1285 = scalar_lea.vmem %s1, 256
  %1286 = vst.msk [vmem:[%s1285] sm:$0xff] %vm1284, %v1283
  %s1287 = scalar_lea.vmem %s0, 985
  %v1288 = vld [vmem:[%s1287] ss:$40 sm:$0xf]
  %s1289 = scalar_lea.vmem %s0, 985
  %v1290 = vld [vmem:[%s1289] ss:$40 sm:$0xf0]
  %vm1291 = vcmask 1047556
  %v1292 = vsel %vm1291, %v1290, %v1288
  %1293 = vrot.lane.b32.xlu0 %v1292, 32
  %v1294 = vpop.permute.xlu0 %1293
  %vm1295 = vcmask 523520
  %s1296 = scalar_lea.vmem %s1, 288
  %1297 = vst.msk [vmem:[%s1296] sm:$0xff] %vm1295, %v1294
  %s1298 = scalar_lea.vmem %s0, 5
  %v1299 = vld [vmem:[%s1298] ss:$40 sm:$0xf]
  %s1300 = scalar_lea.vmem %s0, 5
  %v1301 = vld [vmem:[%s1300] ss:$40 sm:$0xf0]
  %vm1302 = vcmask 1047556
  %v1303 = vsel %vm1302, %v1301, %v1299
  %1304 = vrot.lane.b32.xlu0 %v1303, 32
  %v1305 = vpop.permute.xlu0 %1304
  %vm1306 = vcmask 523520
  %s1307 = scalar_lea.vmem %s1, 8
  %1308 = vst.msk [vmem:[%s1307] sm:$0xff] %vm1306, %v1305
  %s1309 = scalar_lea.vmem %s0, 21
  %v1310 = vld [vmem:[%s1309] ss:$40 sm:$0xf]
  %s1311 = scalar_lea.vmem %s0, 21
  %v1312 = vld [vmem:[%s1311] ss:$40 sm:$0xf0]
  %vm1313 = vcmask 1047556
  %v1314 = vsel %vm1313, %v1312, %v1310
  %1315 = vrot.lane.b32.xlu0 %v1314, 32
  %v1316 = vpop.permute.xlu0 %1315
  %vm1317 = vcmask 523520
  %s1318 = scalar_lea.vmem %s1, 40
  %1319 = vst.msk [vmem:[%s1318] sm:$0xff] %vm1317, %v1316
  %s1320 = scalar_lea.vmem %s0, 37
  %v1321 = vld [vmem:[%s1320] ss:$40 sm:$0xf]
  %s1322 = scalar_lea.vmem %s0, 37
  %v1323 = vld [vmem:[%s1322] ss:$40 sm:$0xf0]
  %vm1324 = vcmask 1047556
  %v1325 = vsel %vm1324, %v1323, %v1321
  %1326 = vrot.lane.b32.xlu0 %v1325, 32
  %v1327 = vpop.permute.xlu0 %1326
  %vm1328 = vcmask 523520
  %s1329 = scalar_lea.vmem %s1, 72
  %1330 = vst.msk [vmem:[%s1329] sm:$0xff] %vm1328, %v1327
  %s1331 = scalar_lea.vmem %s0, 333
  %v1332 = vld [vmem:[%s1331] ss:$40 sm:$0xf]
  %s1333 = scalar_lea.vmem %s0, 333
  %v1334 = vld [vmem:[%s1333] ss:$40 sm:$0xf0]
  %vm1335 = vcmask 1047556
  %v1336 = vsel %vm1335, %v1334, %v1332
  %1337 = vrot.lane.b32.xlu0 %v1336, 32
  %v1338 = vpop.permute.xlu0 %1337
  %vm1339 = vcmask 523520
  %s1340 = scalar_lea.vmem %s1, 104
  %1341 = vst.msk [vmem:[%s1340] sm:$0xff] %vm1339, %v1338
  %s1342 = scalar_lea.vmem %s0, 349
  %v1343 = vld [vmem:[%s1342] ss:$40 sm:$0xf]
  %s1344 = scalar_lea.vmem %s0, 349
  %v1345 = vld [vmem:[%s1344] ss:$40 sm:$0xf0]
  %vm1346 = vcmask 1047556
  %v1347 = vsel %vm1346, %v1345, %v1343
  %1348 = vrot.lane.b32.xlu0 %v1347, 32
  %v1349 = vpop.permute.xlu0 %1348
  %vm1350 = vcmask 523520
  %s1351 = scalar_lea.vmem %s1, 136
  %1352 = vst.msk [vmem:[%s1351] sm:$0xff] %vm1350, %v1349
  %s1353 = scalar_lea.vmem %s0, 645
  %v1354 = vld [vmem:[%s1353] ss:$40 sm:$0xf]
  %s1355 = scalar_lea.vmem %s0, 645
  %v1356 = vld [vmem:[%s1355] ss:$40 sm:$0xf0]
  %vm1357 = vcmask 1047556
  %v1358 = vsel %vm1357, %v1356, %v1354
  %1359 = vrot.lane.b32.xlu0 %v1358, 32
  %v1360 = vpop.permute.xlu0 %1359
  %vm1361 = vcmask 523520
  %s1362 = scalar_lea.vmem %s1, 168
  %1363 = vst.msk [vmem:[%s1362] sm:$0xff] %vm1361, %v1360
  %s1364 = scalar_lea.vmem %s0, 661
  %v1365 = vld [vmem:[%s1364] ss:$40 sm:$0xf]
  %s1366 = scalar_lea.vmem %s0, 661
  %v1367 = vld [vmem:[%s1366] ss:$40 sm:$0xf0]
  %vm1368 = vcmask 1047556
  %v1369 = vsel %vm1368, %v1367, %v1365
  %1370 = vrot.lane.b32.xlu0 %v1369, 32
  %v1371 = vpop.permute.xlu0 %1370
  %vm1372 = vcmask 523520
  %s1373 = scalar_lea.vmem %s1, 200
  %1374 = vst.msk [vmem:[%s1373] sm:$0xff] %vm1372, %v1371
  %s1375 = scalar_lea.vmem %s0, 677
  %v1376 = vld [vmem:[%s1375] ss:$40 sm:$0xf]
  %s1377 = scalar_lea.vmem %s0, 677
  %v1378 = vld [vmem:[%s1377] ss:$40 sm:$0xf0]
  %vm1379 = vcmask 1047556
  %v1380 = vsel %vm1379, %v1378, %v1376
  %1381 = vrot.lane.b32.xlu0 %v1380, 32
  %v1382 = vpop.permute.xlu0 %1381
  %vm1383 = vcmask 523520
  %s1384 = scalar_lea.vmem %s1, 232
  %1385 = vst.msk [vmem:[%s1384] sm:$0xff] %vm1383, %v1382
  %s1386 = scalar_lea.vmem %s0, 973
  %v1387 = vld [vmem:[%s1386] ss:$40 sm:$0xf]
  %s1388 = scalar_lea.vmem %s0, 973
  %v1389 = vld [vmem:[%s1388] ss:$40 sm:$0xf0]
  %vm1390 = vcmask 1047556
  %v1391 = vsel %vm1390, %v1389, %v1387
  %1392 = vrot.lane.b32.xlu0 %v1391, 32
  %v1393 = vpop.permute.xlu0 %1392
  %vm1394 = vcmask 523520
  %s1395 = scalar_lea.vmem %s1, 264
  %1396 = vst.msk [vmem:[%s1395] sm:$0xff] %vm1394, %v1393
  %s1397 = scalar_lea.vmem %s0, 989
  %v1398 = vld [vmem:[%s1397] ss:$40 sm:$0xf]
  %s1399 = scalar_lea.vmem %s0, 989
  %v1400 = vld [vmem:[%s1399] ss:$40 sm:$0xf0]
  %vm1401 = vcmask 1047556
  %v1402 = vsel %vm1401, %v1400, %v1398
  %1403 = vrot.lane.b32.xlu0 %v1402, 32
  %v1404 = vpop.permute.xlu0 %1403
  %vm1405 = vcmask 523520
  %s1406 = scalar_lea.vmem %s1, 296
  %1407 = vst.msk [vmem:[%s1406] sm:$0xff] %vm1405, %v1404
  %s1408 = scalar_lea.vmem %s0, 9
  %v1409 = vld [vmem:[%s1408] ss:$40 sm:$0xf]
  %s1410 = scalar_lea.vmem %s0, 9
  %v1411 = vld [vmem:[%s1410] ss:$40 sm:$0xf0]
  %vm1412 = vcmask 1047556
  %v1413 = vsel %vm1412, %v1411, %v1409
  %1414 = vrot.lane.b32.xlu0 %v1413, 32
  %v1415 = vpop.permute.xlu0 %1414
  %vm1416 = vcmask 523520
  %s1417 = scalar_lea.vmem %s1, 16
  %1418 = vst.msk [vmem:[%s1417] sm:$0xff] %vm1416, %v1415
  %s1419 = scalar_lea.vmem %s0, 25
  %v1420 = vld [vmem:[%s1419] ss:$40 sm:$0xf]
  %s1421 = scalar_lea.vmem %s0, 25
  %v1422 = vld [vmem:[%s1421] ss:$40 sm:$0xf0]
  %vm1423 = vcmask 1047556
  %v1424 = vsel %vm1423, %v1422, %v1420
  %1425 = vrot.lane.b32.xlu0 %v1424, 32
  %v1426 = vpop.permute.xlu0 %1425
  %vm1427 = vcmask 523520
  %s1428 = scalar_lea.vmem %s1, 48
  %1429 = vst.msk [vmem:[%s1428] sm:$0xff] %vm1427, %v1426
  %s1430 = scalar_lea.vmem %s0, 321
  %v1431 = vld [vmem:[%s1430] ss:$40 sm:$0xf]
  %s1432 = scalar_lea.vmem %s0, 321
  %v1433 = vld [vmem:[%s1432] ss:$40 sm:$0xf0]
  %vm1434 = vcmask 1047556
  %v1435 = vsel %vm1434, %v1433, %v1431
  %1436 = vrot.lane.b32.xlu0 %v1435, 32
  %v1437 = vpop.permute.xlu0 %1436
  %vm1438 = vcmask 523520
  %s1439 = scalar_lea.vmem %s1, 80
  %1440 = vst.msk [vmem:[%s1439] sm:$0xff] %vm1438, %v1437
  %s1441 = scalar_lea.vmem %s0, 337
  %v1442 = vld [vmem:[%s1441] ss:$40 sm:$0xf]
  %s1443 = scalar_lea.vmem %s0, 337
  %v1444 = vld [vmem:[%s1443] ss:$40 sm:$0xf0]
  %vm1445 = vcmask 1047556
  %v1446 = vsel %vm1445, %v1444, %v1442
  %1447 = vrot.lane.b32.xlu0 %v1446, 32
  %v1448 = vpop.permute.xlu0 %1447
  %vm1449 = vcmask 523520
  %s1450 = scalar_lea.vmem %s1, 112
  %1451 = vst.msk [vmem:[%s1450] sm:$0xff] %vm1449, %v1448
  %s1452 = scalar_lea.vmem %s0, 353
  %v1453 = vld [vmem:[%s1452] ss:$40 sm:$0xf]
  %s1454 = scalar_lea.vmem %s0, 353
  %v1455 = vld [vmem:[%s1454] ss:$40 sm:$0xf0]
  %vm1456 = vcmask 1047556
  %v1457 = vsel %vm1456, %v1455, %v1453
  %1458 = vrot.lane.b32.xlu0 %v1457, 32
  %v1459 = vpop.permute.xlu0 %1458
  %vm1460 = vcmask 523520
  %s1461 = scalar_lea.vmem %s1, 144
  %1462 = vst.msk [vmem:[%s1461] sm:$0xff] %vm1460, %v1459
  %s1463 = scalar_lea.vmem %s0, 649
  %v1464 = vld [vmem:[%s1463] ss:$40 sm:$0xf]
  %s1465 = scalar_lea.vmem %s0, 649
  %v1466 = vld [vmem:[%s1465] ss:$40 sm:$0xf0]
  %vm1467 = vcmask 1047556
  %v1468 = vsel %vm1467, %v1466, %v1464
  %1469 = vrot.lane.b32.xlu0 %v1468, 32
  %v1470 = vpop.permute.xlu0 %1469
  %vm1471 = vcmask 523520
  %s1472 = scalar_lea.vmem %s1, 176
  %1473 = vst.msk [vmem:[%s1472] sm:$0xff] %vm1471, %v1470
  %s1474 = scalar_lea.vmem %s0, 665
  %v1475 = vld [vmem:[%s1474] ss:$40 sm:$0xf]
  %s1476 = scalar_lea.vmem %s0, 665
  %v1477 = vld [vmem:[%s1476] ss:$40 sm:$0xf0]
  %vm1478 = vcmask 1047556
  %v1479 = vsel %vm1478, %v1477, %v1475
  %1480 = vrot.lane.b32.xlu0 %v1479, 32
  %v1481 = vpop.permute.xlu0 %1480
  %vm1482 = vcmask 523520
  %s1483 = scalar_lea.vmem %s1, 208
  %1484 = vst.msk [vmem:[%s1483] sm:$0xff] %vm1482, %v1481
  %s1485 = scalar_lea.vmem %s0, 961
  %v1486 = vld [vmem:[%s1485] ss:$40 sm:$0xf]
  %s1487 = scalar_lea.vmem %s0, 961
  %v1488 = vld [vmem:[%s1487] ss:$40 sm:$0xf0]
  %vm1489 = vcmask 1047556
  %v1490 = vsel %vm1489, %v1488, %v1486
  %1491 = vrot.lane.b32.xlu0 %v1490, 32
  %v1492 = vpop.permute.xlu0 %1491
  %vm1493 = vcmask 523520
  %s1494 = scalar_lea.vmem %s1, 240
  %1495 = vst.msk [vmem:[%s1494] sm:$0xff] %vm1493, %v1492
  %s1496 = scalar_lea.vmem %s0, 977
  %v1497 = vld [vmem:[%s1496] ss:$40 sm:$0xf]
  %s1498 = scalar_lea.vmem %s0, 977
  %v1499 = vld [vmem:[%s1498] ss:$40 sm:$0xf0]
  %vm1500 = vcmask 1047556
  %v1501 = vsel %vm1500, %v1499, %v1497
  %1502 = vrot.lane.b32.xlu0 %v1501, 32
  %v1503 = vpop.permute.xlu0 %1502
  %vm1504 = vcmask 523520
  %s1505 = scalar_lea.vmem %s1, 272
  %1506 = vst.msk [vmem:[%s1505] sm:$0xff] %vm1504, %v1503
  %s1507 = scalar_lea.vmem %s0, 993
  %v1508 = vld [vmem:[%s1507] ss:$40 sm:$0xf]
  %s1509 = scalar_lea.vmem %s0, 993
  %v1510 = vld [vmem:[%s1509] ss:$40 sm:$0xf0]
  %vm1511 = vcmask 1047556
  %v1512 = vsel %vm1511, %v1510, %v1508
  %1513 = vrot.lane.b32.xlu0 %v1512, 32
  %v1514 = vpop.permute.xlu0 %1513
  %vm1515 = vcmask 523520
  %s1516 = scalar_lea.vmem %s1, 304
  %1517 = vst.msk [vmem:[%s1516] sm:$0xff] %vm1515, %v1514
  %s1518 = scalar_lea.vmem %s0, 13
  %v1519 = vld [vmem:[%s1518] ss:$40 sm:$0xf]
  %s1520 = scalar_lea.vmem %s0, 13
  %v1521 = vld [vmem:[%s1520] ss:$40 sm:$0xf0]
  %vm1522 = vcmask 1047556
  %v1523 = vsel %vm1522, %v1521, %v1519
  %1524 = vrot.lane.b32.xlu0 %v1523, 32
  %v1525 = vpop.permute.xlu0 %1524
  %vm1526 = vcmask 523520
  %s1527 = scalar_lea.vmem %s1, 24
  %1528 = vst.msk [vmem:[%s1527] sm:$0xff] %vm1526, %v1525
  %s1529 = scalar_lea.vmem %s0, 29
  %v1530 = vld [vmem:[%s1529] ss:$40 sm:$0xf]
  %s1531 = scalar_lea.vmem %s0, 29
  %v1532 = vld [vmem:[%s1531] ss:$40 sm:$0xf0]
  %vm1533 = vcmask 1047556
  %v1534 = vsel %vm1533, %v1532, %v1530
  %1535 = vrot.lane.b32.xlu0 %v1534, 32
  %v1536 = vpop.permute.xlu0 %1535
  %vm1537 = vcmask 523520
  %s1538 = scalar_lea.vmem %s1, 56
  %1539 = vst.msk [vmem:[%s1538] sm:$0xff] %vm1537, %v1536
  %s1540 = scalar_lea.vmem %s0, 325
  %v1541 = vld [vmem:[%s1540] ss:$40 sm:$0xf]
  %s1542 = scalar_lea.vmem %s0, 325
  %v1543 = vld [vmem:[%s1542] ss:$40 sm:$0xf0]
  %vm1544 = vcmask 1047556
  %v1545 = vsel %vm1544, %v1543, %v1541
  %1546 = vrot.lane.b32.xlu0 %v1545, 32
  %v1547 = vpop.permute.xlu0 %1546
  %vm1548 = vcmask 523520
  %s1549 = scalar_lea.vmem %s1, 88
  %1550 = vst.msk [vmem:[%s1549] sm:$0xff] %vm1548, %v1547
  %s1551 = scalar_lea.vmem %s0, 341
  %v1552 = vld [vmem:[%s1551] ss:$40 sm:$0xf]
  %s1553 = scalar_lea.vmem %s0, 341
  %v1554 = vld [vmem:[%s1553] ss:$40 sm:$0xf0]
  %vm1555 = vcmask 1047556
  %v1556 = vsel %vm1555, %v1554, %v1552
  %1557 = vrot.lane.b32.xlu0 %v1556, 32
  %v1558 = vpop.permute.xlu0 %1557
  %vm1559 = vcmask 523520
  %s1560 = scalar_lea.vmem %s1, 120
  %1561 = vst.msk [vmem:[%s1560] sm:$0xff] %vm1559, %v1558
  %s1562 = scalar_lea.vmem %s0, 357
  %v1563 = vld [vmem:[%s1562] ss:$40 sm:$0xf]
  %s1564 = scalar_lea.vmem %s0, 357
  %v1565 = vld [vmem:[%s1564] ss:$40 sm:$0xf0]
  %vm1566 = vcmask 1047556
  %v1567 = vsel %vm1566, %v1565, %v1563
  %1568 = vrot.lane.b32.xlu0 %v1567, 32
  %v1569 = vpop.permute.xlu0 %1568
  %vm1570 = vcmask 523520
  %s1571 = scalar_lea.vmem %s1, 152
  %1572 = vst.msk [vmem:[%s1571] sm:$0xff] %vm1570, %v1569
  %s1573 = scalar_lea.vmem %s0, 653
  %v1574 = vld [vmem:[%s1573] ss:$40 sm:$0xf]
  %s1575 = scalar_lea.vmem %s0, 653
  %v1576 = vld [vmem:[%s1575] ss:$40 sm:$0xf0]
  %vm1577 = vcmask 1047556
  %v1578 = vsel %vm1577, %v1576, %v1574
  %1579 = vrot.lane.b32.xlu0 %v1578, 32
  %v1580 = vpop.permute.xlu0 %1579
  %vm1581 = vcmask 523520
  %s1582 = scalar_lea.vmem %s1, 184
  %1583 = vst.msk [vmem:[%s1582] sm:$0xff] %vm1581, %v1580
  %s1584 = scalar_lea.vmem %s0, 669
  %v1585 = vld [vmem:[%s1584] ss:$40 sm:$0xf]
  %s1586 = scalar_lea.vmem %s0, 669
  %v1587 = vld [vmem:[%s1586] ss:$40 sm:$0xf0]
  %vm1588 = vcmask 1047556
  %v1589 = vsel %vm1588, %v1587, %v1585
  %1590 = vrot.lane.b32.xlu0 %v1589, 32
  %v1591 = vpop.permute.xlu0 %1590
  %vm1592 = vcmask 523520
  %s1593 = scalar_lea.vmem %s1, 216
  %1594 = vst.msk [vmem:[%s1593] sm:$0xff] %vm1592, %v1591
  %s1595 = scalar_lea.vmem %s0, 965
  %v1596 = vld [vmem:[%s1595] ss:$40 sm:$0xf]
  %s1597 = scalar_lea.vmem %s0, 965
  %v1598 = vld [vmem:[%s1597] ss:$40 sm:$0xf0]
  %vm1599 = vcmask 1047556
  %v1600 = vsel %vm1599, %v1598, %v1596
  %1601 = vrot.lane.b32.xlu0 %v1600, 32
  %v1602 = vpop.permute.xlu0 %1601
  %vm1603 = vcmask 523520
  %s1604 = scalar_lea.vmem %s1, 248
  %1605 = vst.msk [vmem:[%s1604] sm:$0xff] %vm1603, %v1602
  %s1606 = scalar_lea.vmem %s0, 981
  %v1607 = vld [vmem:[%s1606] ss:$40 sm:$0xf]
  %s1608 = scalar_lea.vmem %s0, 981
  %v1609 = vld [vmem:[%s1608] ss:$40 sm:$0xf0]
  %vm1610 = vcmask 1047556
  %v1611 = vsel %vm1610, %v1609, %v1607
  %1612 = vrot.lane.b32.xlu0 %v1611, 32
  %v1613 = vpop.permute.xlu0 %1612
  %vm1614 = vcmask 523520
  %s1615 = scalar_lea.vmem %s1, 280
  %1616 = vst.msk [vmem:[%s1615] sm:$0xff] %vm1614, %v1613
  %s1617 = scalar_lea.vmem %s0, 997
  %v1618 = vld [vmem:[%s1617] ss:$40 sm:$0xf]
  %s1619 = scalar_lea.vmem %s0, 997
  %v1620 = vld [vmem:[%s1619] ss:$40 sm:$0xf0]
  %vm1621 = vcmask 1047556
  %v1622 = vsel %vm1621, %v1620, %v1618
  %1623 = vrot.lane.b32.xlu0 %v1622, 32
  %v1624 = vpop.permute.xlu0 %1623
  %vm1625 = vcmask 523520
  %s1626 = scalar_lea.vmem %s1, 312
  %1627 = vst.msk [vmem:[%s1626] sm:$0xff] %vm1625, %v1624

// kernel: sgc_network_forward.1
$region0: #{sgc_network_forward.1}
  #allocation0 [shape = 'u32[]', space=smem, size = 0x4, offset = 0x4, fixed_abs, tag = 'smem constant byte address 0x4 - core index']
  #allocation1 [shape = 'u32[144,128]{1,0:T(1,128)}', space=vmem, size = 0x12000, scoped, tag = 'internal scratch']
  %s0 = inlined_call_operand.vmem [shape: f32[2,240,240], index: 0, kind: input, shape index: {}]
  %s1 = inlined_call_operand.vmem [shape: f32[2,240,240], index: 1, kind: input, shape index: {}]
  %s2 = inlined_call_operand.vmem [shape: f32[2,240,16], index: 2, kind: input, shape index: {}]
  %s3 = inlined_call_operand.vmem [shape: f32[16,32], index: 3, kind: input, shape index: {}]
  %s4 = inlined_call_operand.vmem [shape: f32[1,32], index: 4, kind: input, shape index: {}]
  %s5 = inlined_call_operand.vmem [shape: f32[32,32], index: 5, kind: input, shape index: {}]
  %s6 = inlined_call_operand.vmem [shape: f32[1,32], index: 6, kind: input, shape index: {}]
  %s7 = inlined_call_operand.vmem [shape: f32[32,32], index: 7, kind: input, shape index: {}]
  %s8 = inlined_call_operand.vmem [shape: f32[1,32], index: 8, kind: input, shape index: {}]
  %s9 = inlined_call_operand.vmem [shape: f32[32,1], index: 9, kind: input, shape index: {}]
  %s10 = inlined_call_operand.vmem [shape: f32[1,32], index: 10, kind: input, shape index: {}]
  %s11 = inlined_call_operand.vmem [shape: f32[32,1280], index: 11, kind: input, shape index: {}]
  %s12 = inlined_call_operand.vmem [shape: f32[240,1280], index: 12, kind: input, shape index: {}]
  %s13 = inlined_call_operand.vmem [shape: f32[6,240], index: 13, kind: input, shape index: {}]
  %s14 = inlined_call_operand.vmem [shape: f32[1280,64], index: 14, kind: input, shape index: {}]
  %s15 = inlined_call_operand.vmem [shape: f32[1,64], index: 15, kind: input, shape index: {}]
  %s16 = inlined_call_operand.vmem [shape: f32[64,32], index: 16, kind: input, shape index: {}]
  %s17 = inlined_call_operand.vmem [shape: f32[1,32], index: 17, kind: input, shape index: {}]
  %s18 = inlined_call_operand.vmem [shape: f32[32,2], index: 18, kind: input, shape index: {}]
  %s19 = inlined_call_operand.vmem [shape: f32[1,2], index: 19, kind: input, shape index: {}]
  %s20 = inlined_call_operand.vmem [shape: f32[2,6,2], index: 20, kind: output, shape index: {}]
  %s21 = sld [smem:[#allocation0]]
  $region113: #{sgc_network_forward.1} parent=0
    _
  %s23 = ssub.s32 1, %s21
  %s24 = scalar_select 0, %s23, %s21
  loop: start=0, step=1, limit=4
  $region2: #{sgc_network_forward.1} parent=0 // loop_pre_header
    _
  $region3: #{sgc_network_forward.1} parent=0 // loop_header
    %s26 = sphi 0, %s30
    %p27 = scmp.ge.s32.totalorder %s26, 4
    %s36 = sphi 0, %s38
    %s39 = sphi 0, %s36
    %s40 = sphi 0, %s39
    %s56 = sphi 0, %s40
    %s62 = sphi 0, %s64
    %s65 = sphi 0, %s62
    %s66 = sphi 0, %s65
    %s82 = sphi 0, %s66
    %s88 = sphi 0, %s90
    %s91 = sphi 0, %s88
    %s92 = sphi 0, %s91
    %s108 = sphi 0, %s92
    %s112 = sphi 0, %s112
    %s114 = sphi 0, %s112
    %s115 = sphi 0, %s114
    %s129 = sphi 0, %s115
    %s133 = sphi 0, %s133
    %s135 = sphi 0, %s133
    %s136 = sphi 0, %s135
    %s150 = sphi 0, %s136
    %s154 = sphi 0, %s154
    %s156 = sphi 0, %s154
    %s157 = sphi 0, %s156
    %s171 = sphi 0, %s157
    %s175 = sphi 0, %s175
    %s177 = sphi 0, %s175
    %s178 = sphi 0, %s177
    %s192 = sphi 0, %s178
    %s196 = sphi 0, %s196
    %s198 = sphi 0, %s196
    %s199 = sphi 0, %s198
    %s213 = sphi 0, %s199
    %s217 = sphi 0, %s217
    %s219 = sphi 0, %s217
    %s220 = sphi 0, %s219
    %s234 = sphi 0, %s220
    %s238 = sphi 0, %s238
    %s240 = sphi 0, %s238
    %s241 = sphi 0, %s240
    %s255 = sphi 0, %s241
    %s259 = sphi 0, %s259
    %s261 = sphi 0, %s259
    %s262 = sphi 0, %s261
    %s276 = sphi 0, %s262
    %s280 = sphi 0, %s280
    %s282 = sphi 0, %s280
    %s283 = sphi 0, %s282
    %s297 = sphi 0, %s283
    %s301 = sphi 0, %s301
    %s303 = sphi 0, %s301
    %s304 = sphi 0, %s303
    %s318 = sphi 0, %s304
    %s322 = sphi 0, %s322
    %s324 = sphi 0, %s322
    %s325 = sphi 0, %s324
    %s339 = sphi 0, %s325
    %s343 = sphi 0, %s343
    %s345 = sphi 0, %s343
    %s346 = sphi 0, %s345
    %s360 = sphi 0, %s346
    %s364 = sphi 0, %s364
    %s366 = sphi 0, %s364
    %s367 = sphi 0, %s366
    %s381 = sphi 0, %s367
    %s385 = sphi 0, %s385
    %s387 = sphi 0, %s385
    %s388 = sphi 0, %s387
    %s402 = sphi 0, %s388
    %s406 = sphi 0, %s406
    %s408 = sphi 0, %s406
    %s409 = sphi 0, %s408
    %s423 = sphi 0, %s409
    %s427 = sphi 0, %s427
    %s429 = sphi 0, %s427
    %s430 = sphi 0, %s429
    %s444 = sphi 0, %s430
    %s448 = sphi 0, %s448
    %s450 = sphi 0, %s448
    %s451 = sphi 0, %s450
    %s465 = sphi 0, %s451
    %s471 = sphi 0, %s473
    %s474 = sphi 0, %s471
    %s475 = sphi 0, %s474
    %s491 = sphi 0, %s475
  $region4: #{sgc_network_forward.1} parent=0 // loop_header_branch
    %29 = sbr.rel (%p27) target = $region8
  $region5: #{sgc_network_forward.1} parent=0 // loop_body
    %s31 = ssub.s32 %s26, 1
    %s32 = ssub.s32 %s26, 2
    %s33 = sadd.s32 %s26, 1
    %s34 = ssub.s32 %s26, %s33
    %p35 = scmp.eq.s32.totalorder %s34, 0
    %s37 = sadd.s32 %s36, 1
    %s38 = scalar_select %p35, %s36, %s37
    %p41 = pneg %p35
    %p42 = scmp.eq.s32.totalorder %s26, 1
    %p43 = por %p41, %p42
    %p44 = scmp.ne.s32.totalorder %s36, %s39
    %p45 = scmp.eq.s32.totalorder %s26, 0
    %p46 = por %p44, %p45
    %p47 = scmp.ne.s32.totalorder %s36, %s39
    %p48 = scmp.eq.s32.totalorder %s31, 1
    %p49 = por %p47, %p48
    %p50 = scmp.ne.s32.totalorder %s39, %s40
    %p51 = scmp.eq.s32.totalorder %s31, 0
    %p52 = por %p50, %p51
    %p53 = scmp.ne.s32.totalorder %s39, %s40
    %p54 = scmp.eq.s32.totalorder %s32, 1
    %p55 = por %p53, %p54
    %p57 = scmp.ne.s32.totalorder %s40, %s56
    %p58 = scmp.eq.s32.totalorder %s32, 0
    %p59 = por %p57, %p58
    %s60 = ssub.s32 %s26, %s33
    %p61 = scmp.eq.s32.totalorder %s60, 0
    %s63 = sadd.s32 %s62, 1
    %s64 = scalar_select %p61, %s62, %s63
    %p67 = pneg %p61
    %p68 = scmp.eq.s32.totalorder %s26, 1
    %p69 = por %p67, %p68
    %p70 = scmp.ne.s32.totalorder %s62, %s65
    %p71 = scmp.eq.s32.totalorder %s26, 0
    %p72 = por %p70, %p71
    %p73 = scmp.ne.s32.totalorder %s62, %s65
    %p74 = scmp.eq.s32.totalorder %s31, 1
    %p75 = por %p73, %p74
    %p76 = scmp.ne.s32.totalorder %s65, %s66
    %p77 = scmp.eq.s32.totalorder %s31, 0
    %p78 = por %p76, %p77
    %p79 = scmp.ne.s32.totalorder %s65, %s66
    %p80 = scmp.eq.s32.totalorder %s32, 1
    %p81 = por %p79, %p80
    %p83 = scmp.ne.s32.totalorder %s66, %s82
    %p84 = scmp.eq.s32.totalorder %s32, 0
    %p85 = por %p83, %p84
    %s86 = ssub.s32 %s26, %s33
    %p87 = scmp.eq.s32.totalorder %s86, 0
    %s89 = sadd.s32 %s88, 1
    %s90 = scalar_select %p87, %s88, %s89
    %p93 = pneg %p87
    %p94 = scmp.eq.s32.totalorder %s26, 1
    %p95 = por %p93, %p94
    %p96 = scmp.ne.s32.totalorder %s88, %s91
    %p97 = scmp.eq.s32.totalorder %s26, 0
    %p98 = por %p96, %p97
    %p99 = scmp.ne.s32.totalorder %s88, %s91
    %p100 = scmp.eq.s32.totalorder %s31, 1
    %p101 = por %p99, %p100
    %p102 = scmp.ne.s32.totalorder %s91, %s92
    %p103 = scmp.eq.s32.totalorder %s31, 0
    %p104 = por %p102, %p103
    %p105 = scmp.ne.s32.totalorder %s91, %s92
    %p106 = scmp.eq.s32.totalorder %s32, 1
    %p107 = por %p105, %p106
    %p109 = scmp.ne.s32.totalorder %s92, %s108
    %p110 = scmp.eq.s32.totalorder %s32, 0
    %p111 = por %p109, %p110
    %s113 = sadd.s32 %s112, 1
    %p116 = scmp.eq.s32.totalorder %s26, 1
    %p117 = scmp.ne.s32.totalorder %s112, %s114
    %p118 = scmp.eq.s32.totalorder %s26, 0
    %p119 = por %p117, %p118
    %p120 = scmp.ne.s32.totalorder %s112, %s114
    %p121 = scmp.eq.s32.totalorder %s31, 1
    %p122 = por %p120, %p121
    %p123 = scmp.ne.s32.totalorder %s114, %s115
    %p124 = scmp.eq.s32.totalorder %s31, 0
    %p125 = por %p123, %p124
    %p126 = scmp.ne.s32.totalorder %s114, %s115
    %p127 = scmp.eq.s32.totalorder %s32, 1
    %p128 = por %p126, %p127
    %p130 = scmp.ne.s32.totalorder %s115, %s129
    %p131 = scmp.eq.s32.totalorder %s32, 0
    %p132 = por %p130, %p131
    %s134 = sadd.s32 %s133, 1
    %p137 = scmp.eq.s32.totalorder %s26, 1
    %p138 = scmp.ne.s32.totalorder %s133, %s135
    %p139 = scmp.eq.s32.totalorder %s26, 0
    %p140 = por %p138, %p139
    %p141 = scmp.ne.s32.totalorder %s133, %s135
    %p142 = scmp.eq.s32.totalorder %s31, 1
    %p143 = por %p141, %p142
    %p144 = scmp.ne.s32.totalorder %s135, %s136
    %p145 = scmp.eq.s32.totalorder %s31, 0
    %p146 = por %p144, %p145
    %p147 = scmp.ne.s32.totalorder %s135, %s136
    %p148 = scmp.eq.s32.totalorder %s32, 1
    %p149 = por %p147, %p148
    %p151 = scmp.ne.s32.totalorder %s136, %s150
    %p152 = scmp.eq.s32.totalorder %s32, 0
    %p153 = por %p151, %p152
    %s155 = sadd.s32 %s154, 1
    %p158 = scmp.eq.s32.totalorder %s26, 1
    %p159 = scmp.ne.s32.totalorder %s154, %s156
    %p160 = scmp.eq.s32.totalorder %s26, 0
    %p161 = por %p159, %p160
    %p162 = scmp.ne.s32.totalorder %s154, %s156
    %p163 = scmp.eq.s32.totalorder %s31, 1
    %p164 = por %p162, %p163
    %p165 = scmp.ne.s32.totalorder %s156, %s157
    %p166 = scmp.eq.s32.totalorder %s31, 0
    %p167 = por %p165, %p166
    %p168 = scmp.ne.s32.totalorder %s156, %s157
    %p169 = scmp.eq.s32.totalorder %s32, 1
    %p170 = por %p168, %p169
    %p172 = scmp.ne.s32.totalorder %s157, %s171
    %p173 = scmp.eq.s32.totalorder %s32, 0
    %p174 = por %p172, %p173
    %s176 = sadd.s32 %s175, 1
    %p179 = scmp.eq.s32.totalorder %s26, 1
    %p180 = scmp.ne.s32.totalorder %s175, %s177
    %p181 = scmp.eq.s32.totalorder %s26, 0
    %p182 = por %p180, %p181
    %p183 = scmp.ne.s32.totalorder %s175, %s177
    %p184 = scmp.eq.s32.totalorder %s31, 1
    %p185 = por %p183, %p184
    %p186 = scmp.ne.s32.totalorder %s177, %s178
    %p187 = scmp.eq.s32.totalorder %s31, 0
    %p188 = por %p186, %p187
    %p189 = scmp.ne.s32.totalorder %s177, %s178
    %p190 = scmp.eq.s32.totalorder %s32, 1
    %p191 = por %p189, %p190
    %p193 = scmp.ne.s32.totalorder %s178, %s192
    %p194 = scmp.eq.s32.totalorder %s32, 0
    %p195 = por %p193, %p194
    %s197 = sadd.s32 %s196, 1
    %p200 = scmp.eq.s32.totalorder %s26, 1
    %p201 = scmp.ne.s32.totalorder %s196, %s198
    %p202 = scmp.eq.s32.totalorder %s26, 0
    %p203 = por %p201, %p202
    %p204 = scmp.ne.s32.totalorder %s196, %s198
    %p205 = scmp.eq.s32.totalorder %s31, 1
    %p206 = por %p204, %p205
    %p207 = scmp.ne.s32.totalorder %s198, %s199
    %p208 = scmp.eq.s32.totalorder %s31, 0
    %p209 = por %p207, %p208
    %p210 = scmp.ne.s32.totalorder %s198, %s199
    %p211 = scmp.eq.s32.totalorder %s32, 1
    %p212 = por %p210, %p211
    %p214 = scmp.ne.s32.totalorder %s199, %s213
    %p215 = scmp.eq.s32.totalorder %s32, 0
    %p216 = por %p214, %p215
    %s218 = sadd.s32 %s217, 1
    %p221 = scmp.eq.s32.totalorder %s26, 1
    %p222 = scmp.ne.s32.totalorder %s217, %s219
    %p223 = scmp.eq.s32.totalorder %s26, 0
    %p224 = por %p222, %p223
    %p225 = scmp.ne.s32.totalorder %s217, %s219
    %p226 = scmp.eq.s32.totalorder %s31, 1
    %p227 = por %p225, %p226
    %p228 = scmp.ne.s32.totalorder %s219, %s220
    %p229 = scmp.eq.s32.totalorder %s31, 0
    %p230 = por %p228, %p229
    %p231 = scmp.ne.s32.totalorder %s219, %s220
    %p232 = scmp.eq.s32.totalorder %s32, 1
    %p233 = por %p231, %p232
    %p235 = scmp.ne.s32.totalorder %s220, %s234
    %p236 = scmp.eq.s32.totalorder %s32, 0
    %p237 = por %p235, %p236
    %s239 = sadd.s32 %s238, 1
    %p242 = scmp.eq.s32.totalorder %s26, 1
    %p243 = scmp.ne.s32.totalorder %s238, %s240
    %p244 = scmp.eq.s32.totalorder %s26, 0
    %p245 = por %p243, %p244
    %p246 = scmp.ne.s32.totalorder %s238, %s240
    %p247 = scmp.eq.s32.totalorder %s31, 1
    %p248 = por %p246, %p247
    %p249 = scmp.ne.s32.totalorder %s240, %s241
    %p250 = scmp.eq.s32.totalorder %s31, 0
    %p251 = por %p249, %p250
    %p252 = scmp.ne.s32.totalorder %s240, %s241
    %p253 = scmp.eq.s32.totalorder %s32, 1
    %p254 = por %p252, %p253
    %p256 = scmp.ne.s32.totalorder %s241, %s255
    %p257 = scmp.eq.s32.totalorder %s32, 0
    %p258 = por %p256, %p257
    %s260 = sadd.s32 %s259, 1
    %p263 = scmp.eq.s32.totalorder %s26, 1
    %p264 = scmp.ne.s32.totalorder %s259, %s261
    %p265 = scmp.eq.s32.totalorder %s26, 0
    %p266 = por %p264, %p265
    %p267 = scmp.ne.s32.totalorder %s259, %s261
    %p268 = scmp.eq.s32.totalorder %s31, 1
    %p269 = por %p267, %p268
    %p270 = scmp.ne.s32.totalorder %s261, %s262
    %p271 = scmp.eq.s32.totalorder %s31, 0
    %p272 = por %p270, %p271
    %p273 = scmp.ne.s32.totalorder %s261, %s262
    %p274 = scmp.eq.s32.totalorder %s32, 1
    %p275 = por %p273, %p274
    %p277 = scmp.ne.s32.totalorder %s262, %s276
    %p278 = scmp.eq.s32.totalorder %s32, 0
    %p279 = por %p277, %p278
    %s281 = sadd.s32 %s280, 1
    %p284 = scmp.eq.s32.totalorder %s26, 1
    %p285 = scmp.ne.s32.totalorder %s280, %s282
    %p286 = scmp.eq.s32.totalorder %s26, 0
    %p287 = por %p285, %p286
    %p288 = scmp.ne.s32.totalorder %s280, %s282
    %p289 = scmp.eq.s32.totalorder %s31, 1
    %p290 = por %p288, %p289
    %p291 = scmp.ne.s32.totalorder %s282, %s283
    %p292 = scmp.eq.s32.totalorder %s31, 0
    %p293 = por %p291, %p292
    %p294 = scmp.ne.s32.totalorder %s282, %s283
    %p295 = scmp.eq.s32.totalorder %s32, 1
    %p296 = por %p294, %p295
    %p298 = scmp.ne.s32.totalorder %s283, %s297
    %p299 = scmp.eq.s32.totalorder %s32, 0
    %p300 = por %p298, %p299
    %s302 = sadd.s32 %s301, 1
    %p305 = scmp.eq.s32.totalorder %s26, 1
    %p306 = scmp.ne.s32.totalorder %s301, %s303
    %p307 = scmp.eq.s32.totalorder %s26, 0
    %p308 = por %p306, %p307
    %p309 = scmp.ne.s32.totalorder %s301, %s303
    %p310 = scmp.eq.s32.totalorder %s31, 1
    %p311 = por %p309, %p310
    %p312 = scmp.ne.s32.totalorder %s303, %s304
    %p313 = scmp.eq.s32.totalorder %s31, 0
    %p314 = por %p312, %p313
    %p315 = scmp.ne.s32.totalorder %s303, %s304
    %p316 = scmp.eq.s32.totalorder %s32, 1
    %p317 = por %p315, %p316
    %p319 = scmp.ne.s32.totalorder %s304, %s318
    %p320 = scmp.eq.s32.totalorder %s32, 0
    %p321 = por %p319, %p320
    %s323 = sadd.s32 %s322, 1
    %p326 = scmp.eq.s32.totalorder %s26, 1
    %p327 = scmp.ne.s32.totalorder %s322, %s324
    %p328 = scmp.eq.s32.totalorder %s26, 0
    %p329 = por %p327, %p328
    %p330 = scmp.ne.s32.totalorder %s322, %s324
    %p331 = scmp.eq.s32.totalorder %s31, 1
    %p332 = por %p330, %p331
    %p333 = scmp.ne.s32.totalorder %s324, %s325
    %p334 = scmp.eq.s32.totalorder %s31, 0
    %p335 = por %p333, %p334
    %p336 = scmp.ne.s32.totalorder %s324, %s325
    %p337 = scmp.eq.s32.totalorder %s32, 1
    %p338 = por %p336, %p337
    %p340 = scmp.ne.s32.totalorder %s325, %s339
    %p341 = scmp.eq.s32.totalorder %s32, 0
    %p342 = por %p340, %p341
    %s344 = sadd.s32 %s343, 1
    %p347 = scmp.eq.s32.totalorder %s26, 1
    %p348 = scmp.ne.s32.totalorder %s343, %s345
    %p349 = scmp.eq.s32.totalorder %s26, 0
    %p350 = por %p348, %p349
    %p351 = scmp.ne.s32.totalorder %s343, %s345
    %p352 = scmp.eq.s32.totalorder %s31, 1
    %p353 = por %p351, %p352
    %p354 = scmp.ne.s32.totalorder %s345, %s346
    %p355 = scmp.eq.s32.totalorder %s31, 0
    %p356 = por %p354, %p355
    %p357 = scmp.ne.s32.totalorder %s345, %s346
    %p358 = scmp.eq.s32.totalorder %s32, 1
    %p359 = por %p357, %p358
    %p361 = scmp.ne.s32.totalorder %s346, %s360
    %p362 = scmp.eq.s32.totalorder %s32, 0
    %p363 = por %p361, %p362
    %s365 = sadd.s32 %s364, 1
    %p368 = scmp.eq.s32.totalorder %s26, 1
    %p369 = scmp.ne.s32.totalorder %s364, %s366
    %p370 = scmp.eq.s32.totalorder %s26, 0
    %p371 = por %p369, %p370
    %p372 = scmp.ne.s32.totalorder %s364, %s366
    %p373 = scmp.eq.s32.totalorder %s31, 1
    %p374 = por %p372, %p373
    %p375 = scmp.ne.s32.totalorder %s366, %s367
    %p376 = scmp.eq.s32.totalorder %s31, 0
    %p377 = por %p375, %p376
    %p378 = scmp.ne.s32.totalorder %s366, %s367
    %p379 = scmp.eq.s32.totalorder %s32, 1
    %p380 = por %p378, %p379
    %p382 = scmp.ne.s32.totalorder %s367, %s381
    %p383 = scmp.eq.s32.totalorder %s32, 0
    %p384 = por %p382, %p383
    %s386 = sadd.s32 %s385, 1
    %p389 = scmp.eq.s32.totalorder %s26, 1
    %p390 = scmp.ne.s32.totalorder %s385, %s387
    %p391 = scmp.eq.s32.totalorder %s26, 0
    %p392 = por %p390, %p391
    %p393 = scmp.ne.s32.totalorder %s385, %s387
    %p394 = scmp.eq.s32.totalorder %s31, 1
    %p395 = por %p393, %p394
    %p396 = scmp.ne.s32.totalorder %s387, %s388
    %p397 = scmp.eq.s32.totalorder %s31, 0
    %p398 = por %p396, %p397
    %p399 = scmp.ne.s32.totalorder %s387, %s388
    %p400 = scmp.eq.s32.totalorder %s32, 1
    %p401 = por %p399, %p400
    %p403 = scmp.ne.s32.totalorder %s388, %s402
    %p404 = scmp.eq.s32.totalorder %s32, 0
    %p405 = por %p403, %p404
    %s407 = sadd.s32 %s406, 1
    %p410 = scmp.eq.s32.totalorder %s26, 1
    %p411 = scmp.ne.s32.totalorder %s406, %s408
    %p412 = scmp.eq.s32.totalorder %s26, 0
    %p413 = por %p411, %p412
    %p414 = scmp.ne.s32.totalorder %s406, %s408
    %p415 = scmp.eq.s32.totalorder %s31, 1
    %p416 = por %p414, %p415
    %p417 = scmp.ne.s32.totalorder %s408, %s409
    %p418 = scmp.eq.s32.totalorder %s31, 0
    %p419 = por %p417, %p418
    %p420 = scmp.ne.s32.totalorder %s408, %s409
    %p421 = scmp.eq.s32.totalorder %s32, 1
    %p422 = por %p420, %p421
    %p424 = scmp.ne.s32.totalorder %s409, %s423
    %p425 = scmp.eq.s32.totalorder %s32, 0
    %p426 = por %p424, %p425
    %s428 = sadd.s32 %s427, 1
    %p431 = scmp.eq.s32.totalorder %s26, 1
    %p432 = scmp.ne.s32.totalorder %s427, %s429
    %p433 = scmp.eq.s32.totalorder %s26, 0
    %p434 = por %p432, %p433
    %p435 = scmp.ne.s32.totalorder %s427, %s429
    %p436 = scmp.eq.s32.totalorder %s31, 1
    %p437 = por %p435, %p436
    %p438 = scmp.ne.s32.totalorder %s429, %s430
    %p439 = scmp.eq.s32.totalorder %s31, 0
    %p440 = por %p438, %p439
    %p441 = scmp.ne.s32.totalorder %s429, %s430
    %p442 = scmp.eq.s32.totalorder %s32, 1
    %p443 = por %p441, %p442
    %p445 = scmp.ne.s32.totalorder %s430, %s444
    %p446 = scmp.eq.s32.totalorder %s32, 0
    %p447 = por %p445, %p446
    %s449 = sadd.s32 %s448, 1
    %p452 = scmp.eq.s32.totalorder %s26, 1
    %p453 = scmp.ne.s32.totalorder %s448, %s450
    %p454 = scmp.eq.s32.totalorder %s26, 0
    %p455 = por %p453, %p454
    %p456 = scmp.ne.s32.totalorder %s448, %s450
    %p457 = scmp.eq.s32.totalorder %s31, 1
    %p458 = por %p456, %p457
    %p459 = scmp.ne.s32.totalorder %s450, %s451
    %p460 = scmp.eq.s32.totalorder %s31, 0
    %p461 = por %p459, %p460
    %p462 = scmp.ne.s32.totalorder %s450, %s451
    %p463 = scmp.eq.s32.totalorder %s32, 1
    %p464 = por %p462, %p463
    %p466 = scmp.ne.s32.totalorder %s451, %s465
    %p467 = scmp.eq.s32.totalorder %s32, 0
    %p468 = por %p466, %p467
    %s469 = ssub.s32 %s26, %s33
    %p470 = scmp.eq.s32.totalorder %s469, 0
    %s472 = sadd.s32 %s471, 1
    %s473 = scalar_select %p470, %s471, %s472
    %p476 = pneg %p470
    %p477 = scmp.eq.s32.totalorder %s26, 1
    %p478 = por %p476, %p477
    %p479 = scmp.ne.s32.totalorder %s471, %s474
    %p480 = scmp.eq.s32.totalorder %s26, 0
    %p481 = por %p479, %p480
    %p482 = scmp.ne.s32.totalorder %s471, %s474
    %p483 = scmp.eq.s32.totalorder %s31, 1
    %p484 = por %p482, %p483
    %p485 = scmp.ne.s32.totalorder %s474, %s475
    %p486 = scmp.eq.s32.totalorder %s31, 0
    %p487 = por %p485, %p486
    %p488 = scmp.ne.s32.totalorder %s474, %s475
    %p489 = scmp.eq.s32.totalorder %s32, 1
    %p490 = por %p488, %p489
    %p492 = scmp.ne.s32.totalorder %s475, %s491
    %p493 = scmp.eq.s32.totalorder %s32, 0
    %p494 = por %p492, %p493
    %p495 = scmp.le.s32.totalorder 1, %s26
    %p496 = scmp.lt.s32.totalorder %s26, 3
    %p497 = pnand %p495, %p496
    %p498 = pneg %p497
    // Predicated region
    $region9: #{sgc_network_forward.1} parent=5 // pred_check
      _
    $region10: #{sgc_network_forward.1} parent=5 // pred_check_branch
      %500 = sbr.rel (%p497) target = $region12
    $region11: #{sgc_network_forward.1} parent=5 // pred_region
      %s501 = ssub.s32 %s26, 1
      // Predicated region
      $region13: #{sgc_network_forward.1} parent=11 // pred_check
        %p502 = pneg %p125
      $region14: #{sgc_network_forward.1} parent=11 // pred_check_branch
        %504 = sbr.rel (%p502) target = $region16
      $region15: #{sgc_network_forward.1} parent=11 // pred_region
        _
      $region16: #{sgc_network_forward.1} parent=11 // pred_fallthru
        _
      // Predicated region
      $region17: #{sgc_network_forward.1} parent=11 // pred_check
        %p505 = pneg %p146
      $region18: #{sgc_network_forward.1} parent=11 // pred_check_branch
        %507 = sbr.rel (%p505) target = $region20
      $region19: #{sgc_network_forward.1} parent=11 // pred_region
        _
      $region20: #{sgc_network_forward.1} parent=11 // pred_fallthru
        _
      // Predicated region
      $region21: #{sgc_network_forward.1} parent=11 // pred_check
        %p508 = pneg %p167
      $region22: #{sgc_network_forward.1} parent=11 // pred_check_branch
        %510 = sbr.rel (%p508) target = $region24
      $region23: #{sgc_network_forward.1} parent=11 // pred_region
        _
      $region24: #{sgc_network_forward.1} parent=11 // pred_fallthru
        _
      // Predicated region
      $region25: #{sgc_network_forward.1} parent=11 // pred_check
        %p511 = pneg %p188
      $region26: #{sgc_network_forward.1} parent=11 // pred_check_branch
        %513 = sbr.rel (%p511) target = $region28
      $region27: #{sgc_network_forward.1} parent=11 // pred_region
        _
      $region28: #{sgc_network_forward.1} parent=11 // pred_fallthru
        _
      // Predicated region
      $region29: #{sgc_network_forward.1} parent=11 // pred_check
        %p514 = pneg %p209
      $region30: #{sgc_network_forward.1} parent=11 // pred_check_branch
        %516 = sbr.rel (%p514) target = $region32
      $region31: #{sgc_network_forward.1} parent=11 // pred_region
        _
      $region32: #{sgc_network_forward.1} parent=11 // pred_fallthru
        _
      // Predicated region
      $region33: #{sgc_network_forward.1} parent=11 // pred_check
        %p517 = pneg %p230
      $region34: #{sgc_network_forward.1} parent=11 // pred_check_branch
        %519 = sbr.rel (%p517) target = $region36
      $region35: #{sgc_network_forward.1} parent=11 // pred_region
        _
      $region36: #{sgc_network_forward.1} parent=11 // pred_fallthru
        _
      // Predicated region
      $region37: #{sgc_network_forward.1} parent=11 // pred_check
        %p520 = pneg %p251
      $region38: #{sgc_network_forward.1} parent=11 // pred_check_branch
        %522 = sbr.rel (%p520) target = $region40
      $region39: #{sgc_network_forward.1} parent=11 // pred_region
        _
      $region40: #{sgc_network_forward.1} parent=11 // pred_fallthru
        _
      // Predicated region
      $region41: #{sgc_network_forward.1} parent=11 // pred_check
        %p523 = pneg %p272
      $region42: #{sgc_network_forward.1} parent=11 // pred_check_branch
        %525 = sbr.rel (%p523) target = $region44
      $region43: #{sgc_network_forward.1} parent=11 // pred_region
        _
      $region44: #{sgc_network_forward.1} parent=11 // pred_fallthru
        _
      // Predicated region
      $region45: #{sgc_network_forward.1} parent=11 // pred_check
        %p526 = pneg %p293
      $region46: #{sgc_network_forward.1} parent=11 // pred_check_branch
        %528 = sbr.rel (%p526) target = $region48
      $region47: #{sgc_network_forward.1} parent=11 // pred_region
        _
      $region48: #{sgc_network_forward.1} parent=11 // pred_fallthru
        _
      // Predicated region
      $region49: #{sgc_network_forward.1} parent=11 // pred_check
        %p529 = pneg %p314
      $region50: #{sgc_network_forward.1} parent=11 // pred_check_branch
        %531 = sbr.rel (%p529) target = $region52
      $region51: #{sgc_network_forward.1} parent=11 // pred_region
        _
      $region52: #{sgc_network_forward.1} parent=11 // pred_fallthru
        _
      // Predicated region
      $region53: #{sgc_network_forward.1} parent=11 // pred_check
        %p532 = pneg %p335
      $region54: #{sgc_network_forward.1} parent=11 // pred_check_branch
        %534 = sbr.rel (%p532) target = $region56
      $region55: #{sgc_network_forward.1} parent=11 // pred_region
        _
      $region56: #{sgc_network_forward.1} parent=11 // pred_fallthru
        _
      // Predicated region
      $region57: #{sgc_network_forward.1} parent=11 // pred_check
        %p535 = pneg %p356
      $region58: #{sgc_network_forward.1} parent=11 // pred_check_branch
        %537 = sbr.rel (%p535) target = $region60
      $region59: #{sgc_network_forward.1} parent=11 // pred_region
        _
      $region60: #{sgc_network_forward.1} parent=11 // pred_fallthru
        _
      // Predicated region
      $region61: #{sgc_network_forward.1} parent=11 // pred_check
        %p538 = pneg %p377
      $region62: #{sgc_network_forward.1} parent=11 // pred_check_branch
        %540 = sbr.rel (%p538) target = $region64
      $region63: #{sgc_network_forward.1} parent=11 // pred_region
        _
      $region64: #{sgc_network_forward.1} parent=11 // pred_fallthru
        _
      // Predicated region
      $region65: #{sgc_network_forward.1} parent=11 // pred_check
        %p541 = pneg %p398
      $region66: #{sgc_network_forward.1} parent=11 // pred_check_branch
        %543 = sbr.rel (%p541) target = $region68
      $region67: #{sgc_network_forward.1} parent=11 // pred_region
        _
      $region68: #{sgc_network_forward.1} parent=11 // pred_fallthru
        _
      // Predicated region
      $region69: #{sgc_network_forward.1} parent=11 // pred_check
        %p544 = pneg %p419
      $region70: #{sgc_network_forward.1} parent=11 // pred_check_branch
        %546 = sbr.rel (%p544) target = $region72
      $region71: #{sgc_network_forward.1} parent=11 // pred_region
        _
      $region72: #{sgc_network_forward.1} parent=11 // pred_fallthru
        _
      // Predicated region
      $region73: #{sgc_network_forward.1} parent=11 // pred_check
        %p547 = pneg %p440
      $region74: #{sgc_network_forward.1} parent=11 // pred_check_branch
        %549 = sbr.rel (%p547) target = $region76
      $region75: #{sgc_network_forward.1} parent=11 // pred_region
        _
      $region76: #{sgc_network_forward.1} parent=11 // pred_fallthru
        _
      // Predicated region
      $region77: #{sgc_network_forward.1} parent=11 // pred_check
        %p550 = pneg %p461
      $region78: #{sgc_network_forward.1} parent=11 // pred_check_branch
        %552 = sbr.rel (%p550) target = $region80
      $region79: #{sgc_network_forward.1} parent=11 // pred_region
        _
      $region80: #{sgc_network_forward.1} parent=11 // pred_fallthru
        _
    $region12: #{sgc_network_forward.1} parent=5 // pred_fallthru
      _
    %p553 = scmp.lt.s32.totalorder %s26, 2
    // Predicated region
    $region81: #{sgc_network_forward.1} parent=5 // pred_check
      %p554 = pneg %p553
    $region82: #{sgc_network_forward.1} parent=5 // pred_check_branch
      %556 = sbr.rel (%p554) target = $region84
    $region83: #{sgc_network_forward.1} parent=5 // pred_region
      // Predicated region
      $region85: #{sgc_network_forward.1} parent=83 // pred_check
        %p557 = pneg %p46
      $region86: #{sgc_network_forward.1} parent=83 // pred_check_branch
        %559 = sbr.rel (%p557) target = $region88
      $region87: #{sgc_network_forward.1} parent=83 // pred_region
        %p560 = scmp.lt.s32.totalorder %s26, 1
        %s561 = scalar_select %p560, %s26, 1
        %s562 = smul.addr %s561, 60
        %s563 = smul.addr %s562, 8
        %s564 = scalar_lea.vmem %s0, %s563
      $region88: #{sgc_network_forward.1} parent=83 // pred_fallthru
        _
      // Predicated region
      $region89: #{sgc_network_forward.1} parent=83 // pred_check
        %p565 = pneg %p72
      $region90: #{sgc_network_forward.1} parent=83 // pred_check_branch
        %567 = sbr.rel (%p565) target = $region92
      $region91: #{sgc_network_forward.1} parent=83 // pred_region
        %p568 = scmp.lt.s32.totalorder %s26, 1
        %s569 = scalar_select %p568, %s26, 1
        %s570 = smul.addr %s569, 60
        %s571 = smul.addr %s570, 8
        %s572 = scalar_lea.vmem %s1, %s571
      $region92: #{sgc_network_forward.1} parent=83 // pred_fallthru
        _
      // Predicated region
      $region93: #{sgc_network_forward.1} parent=83 // pred_check
        %p573 = pneg %p98
      $region94: #{sgc_network_forward.1} parent=83 // pred_check_branch
        %575 = sbr.rel (%p573) target = $region96
      $region95: #{sgc_network_forward.1} parent=83 // pred_region
        %p576 = scmp.lt.s32.totalorder %s26, 1
        %s577 = scalar_select %p576, %s26, 1
        %s578 = smul.addr %s577, 30
        %s579 = smul.addr %s578, 8
        %s580 = scalar_lea.vmem %s2, %s579
      $region96: #{sgc_network_forward.1} parent=83 // pred_fallthru
        _
    $region84: #{sgc_network_forward.1} parent=5 // pred_fallthru
      _
    %p581 = scmp.le.s32.totalorder 1, %s26
    %p582 = scmp.lt.s32.totalorder %s26, 3
    %p583 = pnand %p581, %p582
    %p584 = pneg %p583
    // Predicated region
    $region97: #{sgc_network_forward.1} parent=5 // pred_check
      _
    $region98: #{sgc_network_forward.1} parent=5 // pred_check_branch
      %586 = sbr.rel (%p583) target = $region100
    $region99: #{sgc_network_forward.1} parent=5 // pred_region
      %s587 = ssub.s32 %s26, 1
      %p588 = scmp.lt.s32.totalorder %s31, 1
      %s589 = scalar_select %p588, %s31, 1
      %s590 = smul.addr %s589, 60
      %s591 = smul.addr %s590, 8
      %s592 = scalar_lea.vmem %s0, %s591
      %p593 = pneg %p52
      %p594 = pneg %p49
      %p595 = scmp.lt.s32.totalorder %s31, 1
      %s596 = scalar_select %p595, %s31, 1
      %s597 = smul.addr %s596, 60
      %s598 = smul.addr %s597, 8
      %s599 = scalar_lea.vmem %s1, %s598
      %p600 = pneg %p78
      %p601 = pneg %p75
      %p602 = scmp.lt.s32.totalorder %s31, 1
      %s603 = scalar_select %p602, %s31, 1
      %s604 = smul.addr %s603, 30
      %s605 = smul.addr %s604, 8
      %s606 = scalar_lea.vmem %s2, %s605
      %p607 = pneg %p104
      %p608 = pneg %p101
      %p609 = pneg %p125
      %p610 = pneg %p122
      %p611 = pneg %p146
      %p612 = pneg %p143
      %p613 = pneg %p167
      %p614 = pneg %p164
      %p615 = pneg %p188
      %p616 = pneg %p185
      %p617 = pneg %p209
      %p618 = pneg %p206
      %p619 = pneg %p230
      %p620 = pneg %p227
      %p621 = pneg %p251
      %p622 = pneg %p248
      %p623 = pneg %p272
      %p624 = pneg %p269
      %p625 = pneg %p293
      %p626 = pneg %p290
      %p627 = pneg %p314
      %p628 = pneg %p311
      %p629 = pneg %p335
      %p630 = pneg %p332
      %p631 = pneg %p356
      %p632 = pneg %p353
      %p633 = pneg %p377
      %p634 = pneg %p374
      %p635 = pneg %p398
      %p636 = pneg %p395
      %p637 = pneg %p419
      %p638 = pneg %p416
      %p639 = pneg %p440
      %p640 = pneg %p437
      %p641 = pneg %p461
      %p642 = pneg %p458
      %p643 = pneg %p487
      %p644 = pneg %p484
      %p645 = scmp.lt.s32.totalorder %s31, 1
      %s646 = scalar_select %p645, %s31, 1
      %s647 = smul.addr %s646, 8
      %s648 = scalar_lea.vmem %s20, %s647
      %p649 = scmp.lt.s32.totalorder %s31, 1
      %s650 = scalar_select %p649, %s31, 1
      %s651 = smul.addr %s650, 60
      %s652 = smul.addr %s651, 8
      %s653 = scalar_lea.vmem %s0, %s652
      %p654 = scmp.lt.s32.totalorder %s31, 1
      %s655 = scalar_select %p654, %s31, 1
      %s656 = smul.addr %s655, 60
      %s657 = smul.addr %s656, 8
      %s658 = scalar_lea.vmem %s1, %s657
      %p659 = scmp.lt.s32.totalorder %s31, 1
      %s660 = scalar_select %p659, %s31, 1
      %s661 = smul.addr %s660, 30
      %s662 = smul.addr %s661, 8
      %s663 = scalar_lea.vmem %s2, %s662
      %p664 = scmp.lt.s32.totalorder %s31, 1
      %s665 = scalar_select %p664, %s31, 1
      %s666 = smul.addr %s665, 8
      %s667 = scalar_lea.vmem %s20, %s666
      %v669 = vld [vmem:[%s653] sm:$0xff]
      %v670 = vld [vmem:[%s653 + $0x8] sm:$0xff]
      %v671 = vld [vmem:[%s653 + $0x10] sm:$0xff]
      %v672 = vld [vmem:[%s653 + $0x18] sm:$0xff]
      %v673 = vld [vmem:[%s653 + $0x20] sm:$0xff]
      %v674 = vld [vmem:[%s653 + $0x28] sm:$0xff]
      %v675 = vld [vmem:[%s653 + $0x30] sm:$0xff]
      %v676 = vld [vmem:[%s653 + $0x38] sm:$0xff]
      %v677 = vld [vmem:[%s653 + $0x40] sm:$0xff]
      %v678 = vld [vmem:[%s653 + $0x48] sm:$0xff]
      %v679 = vld [vmem:[%s653 + $0x50] sm:$0xff]
      %v680 = vld [vmem:[%s653 + $0x58] sm:$0xff]
      %v681 = vld [vmem:[%s653 + $0x60] sm:$0xff]
      %v682 = vld [vmem:[%s653 + $0x68] sm:$0xff]
      %v683 = vld [vmem:[%s653 + $0x70] sm:$0xff]
      %v684 = vld [vmem:[%s653 + $0x78] sm:$0xff]
      %v685 = vld [vmem:[%s653 + $0x80] sm:$0xff]
      %v686 = vld [vmem:[%s653 + $0x88] sm:$0xff]
      %v687 = vld [vmem:[%s653 + $0x90] sm:$0xff]
      %v688 = vld [vmem:[%s653 + $0x98] sm:$0xff]
      %v689 = vld [vmem:[%s653 + $0xa0] sm:$0xff]
      %v690 = vld [vmem:[%s653 + $0xa8] sm:$0xff]
      %v691 = vld [vmem:[%s653 + $0xb0] sm:$0xff]
      %v692 = vld [vmem:[%s653 + $0xb8] sm:$0xff]
      %v693 = vld [vmem:[%s653 + $0xc0] sm:$0xff]
      %v694 = vld [vmem:[%s653 + $0xc8] sm:$0xff]
      %v695 = vld [vmem:[%s653 + $0xd0] sm:$0xff]
      %v696 = vld [vmem:[%s653 + $0xd8] sm:$0xff]
      %v697 = vld [vmem:[%s653 + $0xe0] sm:$0xff]
      %v698 = vld [vmem:[%s653 + $0xe8] sm:$0xff]
      %v699 = vld [vmem:[%s653 + $0xf0] sm:$0xff]
      %v700 = vld [vmem:[%s653 + $0xf8] sm:$0xff]
      %v701 = vld [vmem:[%s653 + $0x100] sm:$0xff]
      %v702 = vld [vmem:[%s653 + $0x108] sm:$0xff]
      %v703 = vld [vmem:[%s653 + $0x110] sm:$0xff]
      %v704 = vld [vmem:[%s653 + $0x118] sm:$0xff]
      %v705 = vld [vmem:[%s653 + $0x120] sm:$0xff]
      %v706 = vld [vmem:[%s653 + $0x128] sm:$0xff]
      %v707 = vld [vmem:[%s653 + $0x130] sm:$0xff]
      %v708 = vld [vmem:[%s653 + $0x138] sm:$0xff]
      %v709 = vld [vmem:[%s653 + $0x140] sm:$0xff]
      %v710 = vld [vmem:[%s653 + $0x148] sm:$0xff]
      %v711 = vld [vmem:[%s653 + $0x150] sm:$0xff]
      %v712 = vld [vmem:[%s653 + $0x158] sm:$0xff]
      %v713 = vld [vmem:[%s653 + $0x160] sm:$0xff]
      %v714 = vld [vmem:[%s653 + $0x168] sm:$0xff]
      %v715 = vld [vmem:[%s653 + $0x170] sm:$0xff]
      %v716 = vld [vmem:[%s653 + $0x178] sm:$0xff]
      %v717 = vld [vmem:[%s653 + $0x180] sm:$0xff]
      %v718 = vld [vmem:[%s653 + $0x188] sm:$0xff]
      %v719 = vld [vmem:[%s653 + $0x190] sm:$0xff]
      %v720 = vld [vmem:[%s653 + $0x198] sm:$0xff]
      %v721 = vld [vmem:[%s653 + $0x1a0] sm:$0xff]
      %v722 = vld [vmem:[%s653 + $0x1a8] sm:$0xff]
      %v723 = vld [vmem:[%s653 + $0x1b0] sm:$0xff]
      %v724 = vld [vmem:[%s653 + $0x1b8] sm:$0xff]
      %v725 = vld [vmem:[%s653 + $0x1c0] sm:$0xff]
      %v726 = vld [vmem:[%s653 + $0x1c8] sm:$0xff]
      %v727 = vld [vmem:[%s653 + $0x1d0] sm:$0xff]
      %v728 = vld [vmem:[%s653 + $0x1d8] sm:$0xff]
      %v729 = vld [vmem:[%s658] sm:$0xff]
      %v730 = vld [vmem:[%s658 + $0x8] sm:$0xff]
      %v731 = vld [vmem:[%s658 + $0x10] sm:$0xff]
      %v732 = vld [vmem:[%s658 + $0x18] sm:$0xff]
      %v733 = vld [vmem:[%s658 + $0x20] sm:$0xff]
      %v734 = vld [vmem:[%s658 + $0x28] sm:$0xff]
      %v735 = vld [vmem:[%s658 + $0x30] sm:$0xff]
      %v736 = vld [vmem:[%s658 + $0x38] sm:$0xff]
      %v737 = vld [vmem:[%s658 + $0x40] sm:$0xff]
      %v738 = vld [vmem:[%s658 + $0x48] sm:$0xff]
      %v739 = vld [vmem:[%s658 + $0x50] sm:$0xff]
      %v740 = vld [vmem:[%s658 + $0x58] sm:$0xff]
      %v741 = vld [vmem:[%s658 + $0x60] sm:$0xff]
      %v742 = vld [vmem:[%s658 + $0x68] sm:$0xff]
      %v743 = vld [vmem:[%s658 + $0x70] sm:$0xff]
      %v744 = vld [vmem:[%s658 + $0x78] sm:$0xff]
      %v745 = vld [vmem:[%s658 + $0x80] sm:$0xff]
      %v746 = vld [vmem:[%s658 + $0x88] sm:$0xff]
      %v747 = vld [vmem:[%s658 + $0x90] sm:$0xff]
      %v748 = vld [vmem:[%s658 + $0x98] sm:$0xff]
      %v749 = vld [vmem:[%s658 + $0xa0] sm:$0xff]
      %v750 = vld [vmem:[%s658 + $0xa8] sm:$0xff]
      %v751 = vld [vmem:[%s658 + $0xb0] sm:$0xff]
      %v752 = vld [vmem:[%s658 + $0xb8] sm:$0xff]
      %v753 = vld [vmem:[%s658 + $0xc0] sm:$0xff]
      %v754 = vld [vmem:[%s658 + $0xc8] sm:$0xff]
      %v755 = vld [vmem:[%s658 + $0xd0] sm:$0xff]
      %v756 = vld [vmem:[%s658 + $0xd8] sm:$0xff]
      %v757 = vld [vmem:[%s658 + $0xe0] sm:$0xff]
      %v758 = vld [vmem:[%s658 + $0xe8] sm:$0xff]
      %v759 = vld [vmem:[%s658 + $0xf0] sm:$0xff]
      %v760 = vld [vmem:[%s658 + $0xf8] sm:$0xff]
      %v761 = vld [vmem:[%s658 + $0x100] sm:$0xff]
      %v762 = vld [vmem:[%s658 + $0x108] sm:$0xff]
      %v763 = vld [vmem:[%s658 + $0x110] sm:$0xff]
      %v764 = vld [vmem:[%s658 + $0x118] sm:$0xff]
      %v765 = vld [vmem:[%s658 + $0x120] sm:$0xff]
      %v766 = vld [vmem:[%s658 + $0x128] sm:$0xff]
      %v767 = vld [vmem:[%s658 + $0x130] sm:$0xff]
      %v768 = vld [vmem:[%s658 + $0x138] sm:$0xff]
      %v769 = vld [vmem:[%s658 + $0x140] sm:$0xff]
      %v770 = vld [vmem:[%s658 + $0x148] sm:$0xff]
      %v771 = vld [vmem:[%s658 + $0x150] sm:$0xff]
      %v772 = vld [vmem:[%s658 + $0x158] sm:$0xff]
      %v773 = vld [vmem:[%s658 + $0x160] sm:$0xff]
      %v774 = vld [vmem:[%s658 + $0x168] sm:$0xff]
      %v775 = vld [vmem:[%s658 + $0x170] sm:$0xff]
      %v776 = vld [vmem:[%s658 + $0x178] sm:$0xff]
      %v777 = vld [vmem:[%s658 + $0x180] sm:$0xff]
      %v778 = vld [vmem:[%s658 + $0x188] sm:$0xff]
      %v779 = vld [vmem:[%s658 + $0x190] sm:$0xff]
      %v780 = vld [vmem:[%s658 + $0x198] sm:$0xff]
      %v781 = vld [vmem:[%s658 + $0x1a0] sm:$0xff]
      %v782 = vld [vmem:[%s658 + $0x1a8] sm:$0xff]
      %v783 = vld [vmem:[%s658 + $0x1b0] sm:$0xff]
      %v784 = vld [vmem:[%s658 + $0x1b8] sm:$0xff]
      %v785 = vld [vmem:[%s658 + $0x1c0] sm:$0xff]
      %v786 = vld [vmem:[%s658 + $0x1c8] sm:$0xff]
      %v787 = vld [vmem:[%s658 + $0x1d0] sm:$0xff]
      %v788 = vld [vmem:[%s658 + $0x1d8] sm:$0xff]
      %v789 = vld [vmem:[%s663] sm:$0xff]
      %v790 = vld [vmem:[%s663 + $0x8] sm:$0xff]
      %v791 = vld [vmem:[%s663 + $0x10] sm:$0xff]
      %v792 = vld [vmem:[%s663 + $0x18] sm:$0xff]
      %v793 = vld [vmem:[%s663 + $0x20] sm:$0xff]
      %v794 = vld [vmem:[%s663 + $0x28] sm:$0xff]
      %v795 = vld [vmem:[%s663 + $0x30] sm:$0xff]
      %v796 = vld [vmem:[%s663 + $0x38] sm:$0xff]
      %v797 = vld [vmem:[%s663 + $0x40] sm:$0xff]
      %v798 = vld [vmem:[%s663 + $0x48] sm:$0xff]
      %v799 = vld [vmem:[%s663 + $0x50] sm:$0xff]
      %v800 = vld [vmem:[%s663 + $0x58] sm:$0xff]
      %v801 = vld [vmem:[%s663 + $0x60] sm:$0xff]
      %v802 = vld [vmem:[%s663 + $0x68] sm:$0xff]
      %v803 = vld [vmem:[%s663 + $0x70] sm:$0xff]
      %v804 = vld [vmem:[%s663 + $0x78] sm:$0xff]
      %v805 = vld [vmem:[%s663 + $0x80] sm:$0xff]
      %v806 = vld [vmem:[%s663 + $0x88] sm:$0xff]
      %v807 = vld [vmem:[%s663 + $0x90] sm:$0xff]
      %v808 = vld [vmem:[%s663 + $0x98] sm:$0xff]
      %v809 = vld [vmem:[%s663 + $0xa0] sm:$0xff]
      %v810 = vld [vmem:[%s663 + $0xa8] sm:$0xff]
      %v811 = vld [vmem:[%s663 + $0xb0] sm:$0xff]
      %v812 = vld [vmem:[%s663 + $0xb8] sm:$0xff]
      %v813 = vld [vmem:[%s663 + $0xc0] sm:$0xff]
      %v814 = vld [vmem:[%s663 + $0xc8] sm:$0xff]
      %v815 = vld [vmem:[%s663 + $0xd0] sm:$0xff]
      %v816 = vld [vmem:[%s663 + $0xd8] sm:$0xff]
      %v817 = vld [vmem:[%s663 + $0xe0] sm:$0xff]
      %v818 = vld [vmem:[%s663 + $0xe8] sm:$0xff]
      %v819 = vpack.c.bf16 %v671, %v669
      %v820 = vpack.c.bf16 %v672, %v670
      %v821 = vpack.c.bf16 %v675, %v673
      %v822 = vpack.c.bf16 %v676, %v674
      %v823 = vpack.c.bf16 %v679, %v677
      %v824 = vpack.c.bf16 %v680, %v678
      %v825 = vpack.c.bf16 %v683, %v681
      %v826 = vpack.c.bf16 %v684, %v682
      %v827 = vpack.c.bf16 %v687, %v685
      %v828 = vpack.c.bf16 %v688, %v686
      %v829 = vpack.c.bf16 %v691, %v689
      %v830 = vpack.c.bf16 %v692, %v690
      %v831 = vpack.c.bf16 %v695, %v693
      %v832 = vpack.c.bf16 %v696, %v694
      %v833 = vpack.c.bf16 %v699, %v697
      %v834 = vpack.c.bf16 %v700, %v698
      %v835 = vpack.c.bf16 %v703, %v701
      %v836 = vpack.c.bf16 %v704, %v702
      %v837 = vpack.c.bf16 %v707, %v705
      %v838 = vpack.c.bf16 %v708, %v706
      %v839 = vpack.c.bf16 %v711, %v709
      %v840 = vpack.c.bf16 %v712, %v710
      %v841 = vpack.c.bf16 %v715, %v713
      %v842 = vpack.c.bf16 %v716, %v714
      %v843 = vpack.c.bf16 %v719, %v717
      %v844 = vpack.c.bf16 %v720, %v718
      %v845 = vpack.c.bf16 %v723, %v721
      %v846 = vpack.c.bf16 %v724, %v722
      %v847 = vpack.c.bf16 %v727, %v725
      %v848 = vpack.c.bf16 %v728, %v726
      %v849 = vpack.c.bf16 %v790, %v789
      %v850 = vpack.c.bf16 %v792, %v791
      %v851 = vpack.c.bf16 %v794, %v793
      %v852 = vpack.c.bf16 %v796, %v795
      %v853 = vpack.c.bf16 %v798, %v797
      %v854 = vpack.c.bf16 %v800, %v799
      %v855 = vpack.c.bf16 %v802, %v801
      %v856 = vpack.c.bf16 %v804, %v803
      %v857 = vpack.c.bf16 %v806, %v805
      %v858 = vpack.c.bf16 %v808, %v807
      %v859 = vpack.c.bf16 %v810, %v809
      %v860 = vpack.c.bf16 %v812, %v811
      %v861 = vpack.c.bf16 %v814, %v813
      %v862 = vpack.c.bf16 %v816, %v815
      %v863 = vpack.c.bf16 %v818, %v817
      %vm864 = vcmask 916480
      %v866 = vsel %vm864, %v820, 0
      %v869 = vsel %vm864, %v822, 0
      %v872 = vsel %vm864, %v824, 0
      %v875 = vsel %vm864, %v826, 0
      %v878 = vsel %vm864, %v828, 0
      %v881 = vsel %vm864, %v830, 0
      %v884 = vsel %vm864, %v832, 0
      %v887 = vsel %vm864, %v834, 0
      %v890 = vsel %vm864, %v836, 0
      %v893 = vsel %vm864, %v838, 0
      %v896 = vsel %vm864, %v840, 0
      %v899 = vsel %vm864, %v842, 0
      %v902 = vsel %vm864, %v844, 0
      %v905 = vsel %vm864, %v846, 0
      %v908 = vsel %vm864, %v848, 0
      %910 = vmatprep.subr.bf16.mxu0 0
      %911 = vmatpush1.bf16.msra.mxu0 %v849
      %912 = vmatprep.subr.bf16.mxu0 0
      %913 = vmatpush1.bf16.msra.mxu0 %v850
      %914 = vmatprep.subr.bf16.mxu0 0
      %915 = vmatpush1.bf16.msra.mxu0 %v851
      %916 = vmatprep.subr.bf16.mxu0 0
      %917 = vmatpush1.bf16.msra.mxu0 %v852
      %918 = vmatprep.subr.bf16.mxu0 0
      %919 = vmatpush1.bf16.msra.mxu0 %v853
      %920 = vmatprep.subr.bf16.mxu0 0
      %921 = vmatpush1.bf16.msra.mxu0 %v854
      %922 = vmatprep.subr.bf16.mxu0 0
      %923 = vmatpush1.bf16.msra.mxu0 %v855
      %924 = vmatprep.subr.bf16.mxu0 0
      %925 = vmatpush1.bf16.msra.mxu0 %v856
      %926 = vmatprep.subr.bf16.mxu0 0
      %927 = vmatpush1.bf16.msra.mxu0 %v857
      %928 = vmatprep.subr.bf16.mxu0 0
      %929 = vmatpush1.bf16.msra.mxu0 %v858
      %930 = vmatprep.subr.bf16.mxu0 0
      %931 = vmatpush1.bf16.msra.mxu0 %v859
      %932 = vmatprep.subr.bf16.mxu0 0
      %933 = vmatpush1.bf16.msra.mxu0 %v860
      %934 = vmatprep.subr.bf16.mxu0 0
      %935 = vmatpush1.bf16.msra.mxu0 %v861
      %936 = vmatprep.subr.bf16.mxu0 0
      %937 = vmatpush1.bf16.msra.mxu0 %v862
      %938 = vmatprep.subr.bf16.mxu0 0
      %939 = vmatpush1.bf16.msra.mxu0 %v863
      %940 = vmatprep.subr.bf16.mxu0 0
      %941 = vmatpush1.bf16.msra.mxu0 0
      %942 = vmatprep.mubr.bf16.mxu0 %v866
      %943 = vmatmul.mubr.bf16.gmra.mrb[0].mxu0 %v819
      %v944 = vpop.f32.mrb[0].mxu0
      %v945 = vadd.f32 0.0, %v944
      %v946 = vpop.f32.mrb[0].mxu0
      %v947 = vpop.f32.mrb[0].mxu0
      %v948 = vadd.f32 0.0, %v947
      %v949 = vpop.f32.mrb[0].mxu0
      %950 = vmatprep.mubr.bf16.mxu0 %v869
      %951 = vmatmul.mubr.bf16.gmra.mrb[0].mxu0 %v821
      %v952 = vpop.f32.mrb[0].mxu0
      %v953 = vadd.f32 0.0, %v952
      %v954 = vpop.f32.mrb[0].mxu0
      %v955 = vpop.f32.mrb[0].mxu0
      %v956 = vadd.f32 0.0, %v955
      %v957 = vpop.f32.mrb[0].mxu0
      %958 = vmatprep.mubr.bf16.mxu0 %v872
      %959 = vmatmul.mubr.bf16.gmra.mrb[0].mxu0 %v823
      %v960 = vpop.f32.mrb[0].mxu0
      %v961 = vadd.f32 0.0, %v960
      %v962 = vpop.f32.mrb[0].mxu0
      %v963 = vpop.f32.mrb[0].mxu0
      %v964 = vadd.f32 0.0, %v963
      %v965 = vpop.f32.mrb[0].mxu0
      %966 = vmatprep.mubr.bf16.mxu0 %v875
      %967 = vmatmul.mubr.bf16.gmra.mrb[0].mxu0 %v825
      %v968 = vpop.f32.mrb[0].mxu0
      %v969 = vadd.f32 0.0, %v968
      %v970 = vpop.f32.mrb[0].mxu0
      %v971 = vpop.f32.mrb[0].mxu0
      %v972 = vadd.f32 0.0, %v971
      %v973 = vpop.f32.mrb[0].mxu0
      %974 = vmatprep.mubr.bf16.mxu0 %v878
      %975 = vmatmul.mubr.bf16.gmra.mrb[0].mxu0 %v827
      %v976 = vpop.f32.mrb[0].mxu0
      %v977 = vadd.f32 0.0, %v976
      %v978 = vpop.f32.mrb[0].mxu0
      %v979 = vpop.f32.mrb[0].mxu0
      %v980 = vadd.f32 0.0, %v979
      %v981 = vpop.f32.mrb[0].mxu0
      %982 = vmatprep.mubr.bf16.mxu0 %v881
      %983 = vmatmul.mubr.bf16.gmra.mrb[0].mxu0 %v829
      %v984 = vpop.f32.mrb[0].mxu0
      %v985 = vadd.f32 0.0, %v984
      %v986 = vpop.f32.mrb[0].mxu0
      %v987 = vpop.f32.mrb[0].mxu0
      %v988 = vadd.f32 0.0, %v987
      %v989 = vpop.f32.mrb[0].mxu0
      %990 = vmatprep.mubr.bf16.mxu0 %v884
      %991 = vmatmul.mubr.bf16.gmra.mrb[0].mxu0 %v831
      %v992 = vpop.f32.mrb[0].mxu0
      %v993 = vadd.f32 0.0, %v992
      %v994 = vpop.f32.mrb[0].mxu0
      %v995 = vpop.f32.mrb[0].mxu0
      %v996 = vadd.f32 0.0, %v995
      %v997 = vpop.f32.mrb[0].mxu0
      %998 = vmatprep.mubr.bf16.mxu0 %v887
      %999 = vmatmul.mubr.bf16.gmra.mrb[0].mxu0 %v833
      %v1000 = vpop.f32.mrb[0].mxu0
      %v1001 = vadd.f32 0.0, %v1000
      %v1002 = vpop.f32.mrb[0].mxu0
      %v1003 = vpop.f32.mrb[0].mxu0
      %v1004 = vadd.f32 0.0, %v1003
      %v1005 = vpop.f32.mrb[0].mxu0
      %1006 = vmatprep.mubr.bf16.mxu0 %v890
      %1007 = vmatmul.mubr.bf16.gmra.mrb[0].mxu0 %v835
      %v1008 = vpop.f32.mrb[0].mxu0
      %v1009 = vadd.f32 0.0, %v1008
      %v1010 = vpop.f32.mrb[0].mxu0
      %v1011 = vpop.f32.mrb[0].mxu0
      %v1012 = vadd.f32 0.0, %v1011
      %v1013 = vpop.f32.mrb[0].mxu0
      %1014 = vmatprep.mubr.bf16.mxu0 %v893
      %1015 = vmatmul.mubr.bf16.gmra.mrb[0].mxu0 %v837
      %v1016 = vpop.f32.mrb[0].mxu0
      %v1017 = vadd.f32 0.0, %v1016
      %v1018 = vpop.f32.mrb[0].mxu0
      %v1019 = vpop.f32.mrb[0].mxu0
      %v1020 = vadd.f32 0.0, %v1019
      %v1021 = vpop.f32.mrb[0].mxu0
      %1022 = vmatprep.mubr.bf16.mxu0 %v896
      %1023 = vmatmul.mubr.bf16.gmra.mrb[0].mxu0 %v839
      %v1024 = vpop.f32.mrb[0].mxu0
      %v1025 = vadd.f32 0.0, %v1024
      %v1026 = vpop.f32.mrb[0].mxu0
      %v1027 = vpop.f32.mrb[0].mxu0
      %v1028 = vadd.f32 0.0, %v1027
      %v1029 = vpop.f32.mrb[0].mxu0
      %1030 = vmatprep.mubr.bf16.mxu0 %v899
      %1031 = vmatmul.mubr.bf16.gmra.mrb[0].mxu0 %v841
      %v1032 = vpop.f32.mrb[0].mxu0
      %v1033 = vadd.f32 0.0, %v1032
      %v1034 = vpop.f32.mrb[0].mxu0
      %v1035 = vpop.f32.mrb[0].mxu0
      %v1036 = vadd.f32 0.0, %v1035
      %v1037 = vpop.f32.mrb[0].mxu0
      %1038 = vmatprep.mubr.bf16.mxu0 %v902
      %1039 = vmatmul.mubr.bf16.gmra.mrb[0].mxu0 %v843
      %v1040 = vpop.f32.mrb[0].mxu0
      %v1041 = vadd.f32 0.0, %v1040
      %v1042 = vpop.f32.mrb[0].mxu0
      %v1043 = vpop.f32.mrb[0].mxu0
      %v1044 = vadd.f32 0.0, %v1043
      %v1045 = vpop.f32.mrb[0].mxu0
      %1046 = vmatprep.mubr.bf16.mxu0 %v905
      %1047 = vmatmul.mubr.bf16.gmra.mrb[0].mxu0 %v845
      %v1048 = vpop.f32.mrb[0].mxu0
      %v1049 = vadd.f32 0.0, %v1048
      %v1050 = vpop.f32.mrb[0].mxu0
      %v1051 = vpop.f32.mrb[0].mxu0
      %v1052 = vadd.f32 0.0, %v1051
      %v1053 = vpop.f32.mrb[0].mxu0
      %1054 = vmatprep.mubr.bf16.mxu0 %v908
      %1055 = vmatmul.mubr.bf16.gmra.mrb[0].mxu0 %v847
      %v1056 = vpop.f32.mrb[0].mxu0
      %v1057 = vadd.f32 0.0, %v1056
      %v1058 = vpop.f32.mrb[0].mxu0
      %v1059 = vpop.f32.mrb[0].mxu0
      %v1060 = vadd.f32 0.0, %v1059
      %v1061 = vpop.f32.mrb[0].mxu0
      %1062 = vdwg.mxu0
      %v1063 = vld [vmem:[%s3] sm:$0xff]
      %v1064 = vld [vmem:[%s3 + $0x8] sm:$0xff]
      %v1065 = vpack.c.bf16 %v948, %v945
      %v1066 = vpack.c.bf16 %v956, %v953
      %v1067 = vpack.c.bf16 %v964, %v961
      %v1068 = vpack.c.bf16 %v972, %v969
      %v1069 = vpack.c.bf16 %v980, %v977
      %v1070 = vpack.c.bf16 %v988, %v985
      %v1071 = vpack.c.bf16 %v996, %v993
      %v1072 = vpack.c.bf16 %v1004, %v1001
      %v1073 = vpack.c.bf16 %v1012, %v1009
      %v1074 = vpack.c.bf16 %v1020, %v1017
      %v1075 = vpack.c.bf16 %v1028, %v1025
      %v1076 = vpack.c.bf16 %v1036, %v1033
      %v1077 = vpack.c.bf16 %v1044, %v1041
      %v1078 = vpack.c.bf16 %v1052, %v1049
      %v1079 = vpack.c.bf16 %v1060, %v1057
      %v1080 = vpack.c.bf16 %v1064, %v1063
      %v1081 = vld [vmem:[%s4] sm:$0x1]
      %v1083 = vlaneseq
      %v1084 = vshrl.u32 %v1083, 7
      %v1085 = vsub.s32 0, %v1084
      %v1086 = vrot.slane %v1081, %v1085
      %vm1088 = vcmask 130048
      %v1090 = vsel %vm1088, %v1065, 0
      %v1093 = vsel %vm1088, %v1066, 0
      %v1096 = vsel %vm1088, %v1067, 0
      %v1099 = vsel %vm1088, %v1068, 0
      %v1102 = vsel %vm1088, %v1069, 0
      %v1105 = vsel %vm1088, %v1070, 0
      %v1108 = vsel %vm1088, %v1071, 0
      %v1111 = vsel %vm1088, %v1072, 0
      %v1114 = vsel %vm1088, %v1073, 0
      %v1117 = vsel %vm1088, %v1074, 0
      %v1120 = vsel %vm1088, %v1075, 0
      %v1123 = vsel %vm1088, %v1076, 0
      %v1126 = vsel %vm1088, %v1077, 0
      %v1129 = vsel %vm1088, %v1078, 0
      %v1132 = vsel %vm1088, %v1079, 0
      %1134 = vmatprep.subr.bf16.mxu0 0
      %1135 = vmatpush1.bf16.msra.mxu0 %v1080
      %1136 = vmatprep.subr.bf16.mxu0 0
      %1137 = vmatpush1.bf16.msra.mxu0 0
      %1138 = vmatprep.subr.bf16.mxu0 0
      %1139 = vmatpush1.bf16.msra.mxu0 0
      %1140 = vmatprep.subr.bf16.mxu0 0
      %1141 = vmatpush1.bf16.msra.mxu0 0
      %1142 = vmatprep.subr.bf16.mxu0 0
      %1143 = vmatpush1.bf16.msra.mxu0 0
      %1144 = vmatprep.subr.bf16.mxu0 0
      %1145 = vmatpush1.bf16.msra.mxu0 0
      %1146 = vmatprep.subr.bf16.mxu0 0
      %1147 = vmatpush1.bf16.msra.mxu0 0
      %1148 = vmatprep.subr.bf16.mxu0 0
      %1149 = vmatpush1.bf16.msra.mxu0 0
      %1150 = vmatprep.subr.bf16.mxu0 0
      %1151 = vmatpush1.bf16.msra.mxu0 0
      %1152 = vmatprep.subr.bf16.mxu0 0
      %1153 = vmatpush1.bf16.msra.mxu0 0
      %1154 = vmatprep.subr.bf16.mxu0 0
      %1155 = vmatpush1.bf16.msra.mxu0 0
      %1156 = vmatprep.subr.bf16.mxu0 0
      %1157 = vmatpush1.bf16.msra.mxu0 0
      %1158 = vmatprep.subr.bf16.mxu0 0
      %1159 = vmatpush1.bf16.msra.mxu0 0
      %1160 = vmatprep.subr.bf16.mxu0 0
      %1161 = vmatpush1.bf16.msra.mxu0 0
      %1162 = vmatprep.subr.bf16.mxu0 0
      %1163 = vmatpush1.bf16.msra.mxu0 0
      %1164 = vmatprep.subr.bf16.mxu0 0
      %1165 = vmatpush1.bf16.msra.mxu0 0
      %1166 = vmatprep.mubr.bf16.mxu0 0
      %1167 = vmatmul.mubr.bf16.gmra.mrb[0].mxu0 %v1090
      %v1168 = vpop.f32.mrb[0].mxu0
      %v1169 = vadd.f32 %v1086, %v1168
      %v1170 = vpop.f32.mrb[0].mxu0
      %v1171 = vpop.f32.mrb[0].mxu0
      %v1172 = vadd.f32 %v1086, %v1171
      %v1173 = vpop.f32.mrb[0].mxu0
      %1174 = vmatprep.mubr.bf16.mxu0 0
      %1175 = vmatmul.mubr.bf16.gmra.mrb[0].mxu0 %v1093
      %v1176 = vpop.f32.mrb[0].mxu0
      %v1177 = vadd.f32 %v1086, %v1176
      %v1178 = vpop.f32.mrb[0].mxu0
      %v1179 = vpop.f32.mrb[0].mxu0
      %v1180 = vadd.f32 %v1086, %v1179
      %v1181 = vpop.f32.mrb[0].mxu0
      %1182 = vmatprep.mubr.bf16.mxu0 0
      %1183 = vmatmul.mubr.bf16.gmra.mrb[0].mxu0 %v1096
      %v1184 = vpop.f32.mrb[0].mxu0
      %v1185 = vadd.f32 %v1086, %v1184
      %v1186 = vpop.f32.mrb[0].mxu0
      %v1187 = vpop.f32.mrb[0].mxu0
      %v1188 = vadd.f32 %v1086, %v1187
      %v1189 = vpop.f32.mrb[0].mxu0
      %1190 = vmatprep.mubr.bf16.mxu0 0
      %1191 = vmatmul.mubr.bf16.gmra.mrb[0].mxu0 %v1099
      %v1192 = vpop.f32.mrb[0].mxu0
      %v1193 = vadd.f32 %v1086, %v1192
      %v1194 = vpop.f32.mrb[0].mxu0
      %v1195 = vpop.f32.mrb[0].mxu0
      %v1196 = vadd.f32 %v1086, %v1195
      %v1197 = vpop.f32.mrb[0].mxu0
      %1198 = vmatprep.mubr.bf16.mxu0 0
      %1199 = vmatmul.mubr.bf16.gmra.mrb[0].mxu0 %v1102
      %v1200 = vpop.f32.mrb[0].mxu0
      %v1201 = vadd.f32 %v1086, %v1200
      %v1202 = vpop.f32.mrb[0].mxu0
      %v1203 = vpop.f32.mrb[0].mxu0
      %v1204 = vadd.f32 %v1086, %v1203
      %v1205 = vpop.f32.mrb[0].mxu0
      %1206 = vmatprep.mubr.bf16.mxu0 0
      %1207 = vmatmul.mubr.bf16.gmra.mrb[0].mxu0 %v1105
      %v1208 = vpop.f32.mrb[0].mxu0
      %v1209 = vadd.f32 %v1086, %v1208
      %v1210 = vpop.f32.mrb[0].mxu0
      %v1211 = vpop.f32.mrb[0].mxu0
      %v1212 = vadd.f32 %v1086, %v1211
      %v1213 = vpop.f32.mrb[0].mxu0
      %1214 = vmatprep.mubr.bf16.mxu0 0
      %1215 = vmatmul.mubr.bf16.gmra.mrb[0].mxu0 %v1108
      %v1216 = vpop.f32.mrb[0].mxu0
      %v1217 = vadd.f32 %v1086, %v1216
      %v1218 = vpop.f32.mrb[0].mxu0
      %v1219 = vpop.f32.mrb[0].mxu0
      %v1220 = vadd.f32 %v1086, %v1219
      %v1221 = vpop.f32.mrb[0].mxu0
      %1222 = vmatprep.mubr.bf16.mxu0 0
      %1223 = vmatmul.mubr.bf16.gmra.mrb[0].mxu0 %v1111
      %v1224 = vpop.f32.mrb[0].mxu0
      %v1225 = vadd.f32 %v1086, %v1224
      %v1226 = vpop.f32.mrb[0].mxu0
      %v1227 = vpop.f32.mrb[0].mxu0
      %v1228 = vadd.f32 %v1086, %v1227
      %v1229 = vpop.f32.mrb[0].mxu0
      %1230 = vmatprep.mubr.bf16.mxu0 0
      %1231 = vmatmul.mubr.bf16.gmra.mrb[0].mxu0 %v1114
      %v1232 = vpop.f32.mrb[0].mxu0
      %v1233 = vadd.f32 %v1086, %v1232
      %v1234 = vpop.f32.mrb[0].mxu0
      %v1235 = vpop.f32.mrb[0].mxu0
      %v1236 = vadd.f32 %v1086, %v1235
      %v1237 = vpop.f32.mrb[0].mxu0
      %1238 = vmatprep.mubr.bf16.mxu0 0
      %1239 = vmatmul.mubr.bf16.gmra.mrb[0].mxu0 %v1117
      %v1240 = vpop.f32.mrb[0].mxu0
      %v1241 = vadd.f32 %v1086, %v1240
      %v1242 = vpop.f32.mrb[0].mxu0
      %v1243 = vpop.f32.mrb[0].mxu0
      %v1244 = vadd.f32 %v1086, %v1243
      %v1245 = vpop.f32.mrb[0].mxu0
      %1246 = vmatprep.mubr.bf16.mxu0 0
      %1247 = vmatmul.mubr.bf16.gmra.mrb[0].mxu0 %v1120
      %v1248 = vpop.f32.mrb[0].mxu0
      %v1249 = vadd.f32 %v1086, %v1248
      %v1250 = vpop.f32.mrb[0].mxu0
      %v1251 = vpop.f32.mrb[0].mxu0
      %v1252 = vadd.f32 %v1086, %v1251
      %v1253 = vpop.f32.mrb[0].mxu0
      %1254 = vmatprep.mubr.bf16.mxu0 0
      %1255 = vmatmul.mubr.bf16.gmra.mrb[0].mxu0 %v1123
      %v1256 = vpop.f32.mrb[0].mxu0
      %v1257 = vadd.f32 %v1086, %v1256
      %v1258 = vpop.f32.mrb[0].mxu0
      %v1259 = vpop.f32.mrb[0].mxu0
      %v1260 = vadd.f32 %v1086, %v1259
      %v1261 = vpop.f32.mrb[0].mxu0
      %1262 = vmatprep.mubr.bf16.mxu0 0
      %1263 = vmatmul.mubr.bf16.gmra.mrb[0].mxu0 %v1126
      %v1264 = vpop.f32.mrb[0].mxu0
      %v1265 = vadd.f32 %v1086, %v1264
      %v1266 = vpop.f32.mrb[0].mxu0
      %v1267 = vpop.f32.mrb[0].mxu0
      %v1268 = vadd.f32 %v1086, %v1267
      %v1269 = vpop.f32.mrb[0].mxu0
      %1270 = vmatprep.mubr.bf16.mxu0 0
      %1271 = vmatmul.mubr.bf16.gmra.mrb[0].mxu0 %v1129
      %v1272 = vpop.f32.mrb[0].mxu0
      %v1273 = vadd.f32 %v1086, %v1272
      %v1274 = vpop.f32.mrb[0].mxu0
      %v1275 = vpop.f32.mrb[0].mxu0
      %v1276 = vadd.f32 %v1086, %v1275
      %v1277 = vpop.f32.mrb[0].mxu0
      %1278 = vmatprep.mubr.bf16.mxu0 0
      %1279 = vmatmul.mubr.bf16.gmra.mrb[0].mxu0 %v1132
      %v1280 = vpop.f32.mrb[0].mxu0
      %v1281 = vadd.f32 %v1086, %v1280
      %v1282 = vpop.f32.mrb[0].mxu0
      %v1283 = vpop.f32.mrb[0].mxu0
      %v1284 = vadd.f32 %v1086, %v1283
      %v1285 = vpop.f32.mrb[0].mxu0
      %1286 = vdwg.mxu0
      %vm1287 = vcmp.gt.f32.partialorder %v1169, 0.0
      %vm1288 = vcmp.gt.f32.partialorder %v1172, 0.0
      %vm1289 = vcmp.gt.f32.partialorder %v1177, 0.0
      %vm1290 = vcmp.gt.f32.partialorder %v1180, 0.0
      %vm1291 = vcmp.gt.f32.partialorder %v1185, 0.0
      %vm1292 = vcmp.gt.f32.partialorder %v1188, 0.0
      %vm1293 = vcmp.gt.f32.partialorder %v1193, 0.0
      %vm1294 = vcmp.gt.f32.partialorder %v1196, 0.0
      %vm1295 = vcmp.gt.f32.partialorder %v1201, 0.0
      %vm1296 = vcmp.gt.f32.partialorder %v1204, 0.0
      %vm1297 = vcmp.gt.f32.partialorder %v1209, 0.0
      %vm1298 = vcmp.gt.f32.partialorder %v1212, 0.0
      %vm1299 = vcmp.gt.f32.partialorder %v1217, 0.0
      %vm1300 = vcmp.gt.f32.partialorder %v1220, 0.0
      %vm1301 = vcmp.gt.f32.partialorder %v1225, 0.0
      %vm1302 = vcmp.gt.f32.partialorder %v1228, 0.0
      %vm1303 = vcmp.gt.f32.partialorder %v1233, 0.0
      %vm1304 = vcmp.gt.f32.partialorder %v1236, 0.0
      %vm1305 = vcmp.gt.f32.partialorder %v1241, 0.0
      %vm1306 = vcmp.gt.f32.partialorder %v1244, 0.0
      %vm1307 = vcmp.gt.f32.partialorder %v1249, 0.0
      %vm1308 = vcmp.gt.f32.partialorder %v1252, 0.0
      %vm1309 = vcmp.gt.f32.partialorder %v1257, 0.0
      %vm1310 = vcmp.gt.f32.partialorder %v1260, 0.0
      %vm1311 = vcmp.gt.f32.partialorder %v1265, 0.0
      %vm1312 = vcmp.gt.f32.partialorder %v1268, 0.0
      %vm1313 = vcmp.gt.f32.partialorder %v1273, 0.0
      %vm1314 = vcmp.gt.f32.partialorder %v1276, 0.0
      %vm1315 = vcmp.gt.f32.partialorder %v1281, 0.0
      %vm1316 = vcmp.gt.f32.partialorder %v1284, 0.0
      %v1317 = vmul.f32 %v1169, 0.1
      %v1318 = vmul.f32 %v1172, 0.1
      %v1319 = vmul.f32 %v1177, 0.1
      %v1320 = vmul.f32 %v1180, 0.1
      %v1321 = vmul.f32 %v1185, 0.1
      %v1322 = vmul.f32 %v1188, 0.1
      %v1323 = vmul.f32 %v1193, 0.1
      %v1324 = vmul.f32 %v1196, 0.1
      %v1325 = vmul.f32 %v1201, 0.1
      %v1326 = vmul.f32 %v1204, 0.1
      %v1327 = vmul.f32 %v1209, 0.1
      %v1328 = vmul.f32 %v1212, 0.1
      %v1329 = vmul.f32 %v1217, 0.1
      %v1330 = vmul.f32 %v1220, 0.1
      %v1331 = vmul.f32 %v1225, 0.1
      %v1332 = vmul.f32 %v1228, 0.1
      %v1333 = vmul.f32 %v1233, 0.1
      %v1334 = vmul.f32 %v1236, 0.1
      %v1335 = vmul.f32 %v1241, 0.1
      %v1336 = vmul.f32 %v1244, 0.1
      %v1337 = vmul.f32 %v1249, 0.1
      %v1338 = vmul.f32 %v1252, 0.1
      %v1339 = vmul.f32 %v1257, 0.1
      %v1340 = vmul.f32 %v1260, 0.1
      %v1341 = vmul.f32 %v1265, 0.1
      %v1342 = vmul.f32 %v1268, 0.1
      %v1343 = vmul.f32 %v1273, 0.1
      %v1344 = vmul.f32 %v1276, 0.1
      %v1345 = vmul.f32 %v1281, 0.1
      %v1346 = vmul.f32 %v1284, 0.1
      %v1347 = vsel %vm1287, %v1169, %v1317
      %v1348 = vsel %vm1288, %v1172, %v1318
      %v1349 = vsel %vm1289, %v1177, %v1319
      %v1350 = vsel %vm1290, %v1180, %v1320
      %v1351 = vsel %vm1291, %v1185, %v1321
      %v1352 = vsel %vm1292, %v1188, %v1322
      %v1353 = vsel %vm1293, %v1193, %v1323
      %v1354 = vsel %vm1294, %v1196, %v1324
      %v1355 = vsel %vm1295, %v1201, %v1325
      %v1356 = vsel %vm1296, %v1204, %v1326
      %v1357 = vsel %vm1297, %v1209, %v1327
      %v1358 = vsel %vm1298, %v1212, %v1328
      %v1359 = vsel %vm1299, %v1217, %v1329
      %v1360 = vsel %vm1300, %v1220, %v1330
      %v1361 = vsel %vm1301, %v1225, %v1331
      %v1362 = vsel %vm1302, %v1228, %v1332
      %v1363 = vsel %vm1303, %v1233, %v1333
      %v1364 = vsel %vm1304, %v1236, %v1334
      %v1365 = vsel %vm1305, %v1241, %v1335
      %v1366 = vsel %vm1306, %v1244, %v1336
      %v1367 = vsel %vm1307, %v1249, %v1337
      %v1368 = vsel %vm1308, %v1252, %v1338
      %v1369 = vsel %vm1309, %v1257, %v1339
      %v1370 = vsel %vm1310, %v1260, %v1340
      %v1371 = vsel %vm1311, %v1265, %v1341
      %v1372 = vsel %vm1312, %v1268, %v1342
      %v1373 = vsel %vm1313, %v1273, %v1343
      %v1374 = vsel %vm1314, %v1276, %v1344
      %v1375 = vsel %vm1315, %v1281, %v1345
      %v1376 = vsel %vm1316, %v1284, %v1346
      %v1377 = vpack.c.bf16 %v1348, %v1347
      %v1378 = vpack.c.bf16 %v1350, %v1349
      %v1379 = vpack.c.bf16 %v1352, %v1351
      %v1380 = vpack.c.bf16 %v1354, %v1353
      %v1381 = vpack.c.bf16 %v1356, %v1355
      %v1382 = vpack.c.bf16 %v1358, %v1357
      %v1383 = vpack.c.bf16 %v1360, %v1359
      %v1384 = vpack.c.bf16 %v1362, %v1361
      %v1385 = vpack.c.bf16 %v1364, %v1363
      %v1386 = vpack.c.bf16 %v1366, %v1365
      %v1387 = vpack.c.bf16 %v1368, %v1367
      %v1388 = vpack.c.bf16 %v1370, %v1369
      %v1389 = vpack.c.bf16 %v1372, %v1371
      %v1390 = vpack.c.bf16 %v1374, %v1373
      %v1391 = vpack.c.bf16 %v1376, %v1375
      %1392 = vmatprep.subr.bf16.mxu0 0
      %1393 = vmatpush1.bf16.msra.mxu0 %v1377
      %1394 = vmatprep.subr.bf16.mxu0 0
      %1395 = vmatpush1.bf16.msra.mxu0 %v1378
      %1396 = vmatprep.subr.bf16.mxu0 0
      %1397 = vmatpush1.bf16.msra.mxu0 %v1379
      %1398 = vmatprep.subr.bf16.mxu0 0
      %1399 = vmatpush1.bf16.msra.mxu0 %v1380
      %1400 = vmatprep.subr.bf16.mxu0 0
      %1401 = vmatpush1.bf16.msra.mxu0 %v1381
      %1402 = vmatprep.subr.bf16.mxu0 0
      %1403 = vmatpush1.bf16.msra.mxu0 %v1382
      %1404 = vmatprep.subr.bf16.mxu0 0
      %1405 = vmatpush1.bf16.msra.mxu0 %v1383
      %1406 = vmatprep.subr.bf16.mxu0 0
      %1407 = vmatpush1.bf16.msra.mxu0 %v1384
      %1408 = vmatprep.subr.bf16.mxu0 0
      %1409 = vmatpush1.bf16.msra.mxu0 %v1385
      %1410 = vmatprep.subr.bf16.mxu0 0
      %1411 = vmatpush1.bf16.msra.mxu0 %v1386
      %1412 = vmatprep.subr.bf16.mxu0 0
      %1413 = vmatpush1.bf16.msra.mxu0 %v1387
      %1414 = vmatprep.subr.bf16.mxu0 0
      %1415 = vmatpush1.bf16.msra.mxu0 %v1388
      %1416 = vmatprep.subr.bf16.mxu0 0
      %1417 = vmatpush1.bf16.msra.mxu0 %v1389
      %1418 = vmatprep.subr.bf16.mxu0 0
      %1419 = vmatpush1.bf16.msra.mxu0 %v1390
      %1420 = vmatprep.subr.bf16.mxu0 0
      %1421 = vmatpush1.bf16.msra.mxu0 %v1391
      %1422 = vmatprep.subr.bf16.mxu0 0
      %1423 = vmatpush1.bf16.msra.mxu0 0
      %1424 = vmatprep.mubr.bf16.mxu0 %v866
      %1425 = vmatmul.mubr.bf16.gmra.mrb[0].mxu0 %v819
      %v1426 = vpop.f32.mrb[0].mxu0
      %v1427 = vadd.f32 0.0, %v1426
      %v1428 = vpop.f32.mrb[0].mxu0
      %v1429 = vpop.f32.mrb[0].mxu0
      %v1430 = vadd.f32 0.0, %v1429
      %v1431 = vpop.f32.mrb[0].mxu0
      %1432 = vmatprep.mubr.bf16.mxu0 %v869
      %1433 = vmatmul.mubr.bf16.gmra.mrb[0].mxu0 %v821
      %v1434 = vpop.f32.mrb[0].mxu0
      %v1435 = vadd.f32 0.0, %v1434
      %v1436 = vpop.f32.mrb[0].mxu0
      %v1437 = vpop.f32.mrb[0].mxu0
      %v1438 = vadd.f32 0.0, %v1437
      %v1439 = vpop.f32.mrb[0].mxu0
      %1440 = vmatprep.mubr.bf16.mxu0 %v872
      %1441 = vmatmul.mubr.bf16.gmra.mrb[0].mxu0 %v823
      %v1442 = vpop.f32.mrb[0].mxu0
      %v1443 = vadd.f32 0.0, %v1442
      %v1444 = vpop.f32.mrb[0].mxu0
      %v1445 = vpop.f32.mrb[0].mxu0
      %v1446 = vadd.f32 0.0, %v1445
      %v1447 = vpop.f32.mrb[0].mxu0
      %1448 = vmatprep.mubr.bf16.mxu0 %v875
      %1449 = vmatmul.mubr.bf16.gmra.mrb[0].mxu0 %v825
      %v1450 = vpop.f32.mrb[0].mxu0
      %v1451 = vadd.f32 0.0, %v1450
      %v1452 = vpop.f32.mrb[0].mxu0
      %v1453 = vpop.f32.mrb[0].mxu0
      %v1454 = vadd.f32 0.0, %v1453
      %v1455 = vpop.f32.mrb[0].mxu0
      %1456 = vmatprep.mubr.bf16.mxu0 %v878
      %1457 = vmatmul.mubr.bf16.gmra.mrb[0].mxu0 %v827
      %v1458 = vpop.f32.mrb[0].mxu0
      %v1459 = vadd.f32 0.0, %v1458
      %v1460 = vpop.f32.mrb[0].mxu0
      %v1461 = vpop.f32.mrb[0].mxu0
      %v1462 = vadd.f32 0.0, %v1461
      %v1463 = vpop.f32.mrb[0].mxu0
      %1464 = vmatprep.mubr.bf16.mxu0 %v881
      %1465 = vmatmul.mubr.bf16.gmra.mrb[0].mxu0 %v829
      %v1466 = vpop.f32.mrb[0].mxu0
      %v1467 = vadd.f32 0.0, %v1466
      %v1468 = vpop.f32.mrb[0].mxu0
      %v1469 = vpop.f32.mrb[0].mxu0
      %v1470 = vadd.f32 0.0, %v1469
      %v1471 = vpop.f32.mrb[0].mxu0
      %1472 = vmatprep.mubr.bf16.mxu0 %v884
      %1473 = vmatmul.mubr.bf16.gmra.mrb[0].mxu0 %v831
      %v1474 = vpop.f32.mrb[0].mxu0
      %v1475 = vadd.f32 0.0, %v1474
      %v1476 = vpop.f32.mrb[0].mxu0
      %v1477 = vpop.f32.mrb[0].mxu0
      %v1478 = vadd.f32 0.0, %v1477
      %v1479 = vpop.f32.mrb[0].mxu0
      %1480 = vmatprep.mubr.bf16.mxu0 %v887
      %1481 = vmatmul.mubr.bf16.gmra.mrb[0].mxu0 %v833
      %v1482 = vpop.f32.mrb[0].mxu0
      %v1483 = vadd.f32 0.0, %v1482
      %v1484 = vpop.f32.mrb[0].mxu0
      %v1485 = vpop.f32.mrb[0].mxu0
      %v1486 = vadd.f32 0.0, %v1485
      %v1487 = vpop.f32.mrb[0].mxu0
      %1488 = vmatprep.mubr.bf16.mxu0 %v890
      %1489 = vmatmul.mubr.bf16.gmra.mrb[0].mxu0 %v835
      %v1490 = vpop.f32.mrb[0].mxu0
      %v1491 = vadd.f32 0.0, %v1490
      %v1492 = vpop.f32.mrb[0].mxu0
      %v1493 = vpop.f32.mrb[0].mxu0
      %v1494 = vadd.f32 0.0, %v1493
      %v1495 = vpop.f32.mrb[0].mxu0
      %1496 = vmatprep.mubr.bf16.mxu0 %v893
      %1497 = vmatmul.mubr.bf16.gmra.mrb[0].mxu0 %v837
      %v1498 = vpop.f32.mrb[0].mxu0
      %v1499 = vadd.f32 0.0, %v1498
      %v1500 = vpop.f32.mrb[0].mxu0
      %v1501 = vpop.f32.mrb[0].mxu0
      %v1502 = vadd.f32 0.0, %v1501
      %v1503 = vpop.f32.mrb[0].mxu0
      %1504 = vmatprep.mubr.bf16.mxu0 %v896
      %1505 = vmatmul.mubr.bf16.gmra.mrb[0].mxu0 %v839
      %v1506 = vpop.f32.mrb[0].mxu0
      %v1507 = vadd.f32 0.0, %v1506
      %v1508 = vpop.f32.mrb[0].mxu0
      %v1509 = vpop.f32.mrb[0].mxu0
      %v1510 = vadd.f32 0.0, %v1509
      %v1511 = vpop.f32.mrb[0].mxu0
      %1512 = vmatprep.mubr.bf16.mxu0 %v899
      %1513 = vmatmul.mubr.bf16.gmra.mrb[0].mxu0 %v841
      %v1514 = vpop.f32.mrb[0].mxu0
      %v1515 = vadd.f32 0.0, %v1514
      %v1516 = vpop.f32.mrb[0].mxu0
      %v1517 = vpop.f32.mrb[0].mxu0
      %v1518 = vadd.f32 0.0, %v1517
      %v1519 = vpop.f32.mrb[0].mxu0
      %1520 = vmatprep.mubr.bf16.mxu0 %v902
      %1521 = vmatmul.mubr.bf16.gmra.mrb[0].mxu0 %v843
      %v1522 = vpop.f32.mrb[0].mxu0
      %v1523 = vadd.f32 0.0, %v1522
      %v1524 = vpop.f32.mrb[0].mxu0
      %v1525 = vpop.f32.mrb[0].mxu0
      %v1526 = vadd.f32 0.0, %v1525
      %v1527 = vpop.f32.mrb[0].mxu0
      %1528 = vmatprep.mubr.bf16.mxu0 %v905
      %1529 = vmatmul.mubr.bf16.gmra.mrb[0].mxu0 %v845
      %v1530 = vpop.f32.mrb[0].mxu0
      %v1531 = vadd.f32 0.0, %v1530
      %v1532 = vpop.f32.mrb[0].mxu0
      %v1533 = vpop.f32.mrb[0].mxu0
      %v1534 = vadd.f32 0.0, %v1533
      %v1535 = vpop.f32.mrb[0].mxu0
      %1536 = vmatprep.mubr.bf16.mxu0 %v908
      %1537 = vmatmul.mubr.bf16.gmra.mrb[0].mxu0 %v847
      %v1538 = vpop.f32.mrb[0].mxu0
      %v1539 = vadd.f32 0.0, %v1538
      %v1540 = vpop.f32.mrb[0].mxu0
      %v1541 = vpop.f32.mrb[0].mxu0
      %v1542 = vadd.f32 0.0, %v1541
      %v1543 = vpop.f32.mrb[0].mxu0
      %1544 = vdwg.mxu0
      %v1545 = vld [vmem:[%s5] sm:$0xff]
      %v1546 = vld [vmem:[%s5 + $0x8] sm:$0xff]
      %v1547 = vld [vmem:[%s5 + $0x10] sm:$0xff]
      %v1548 = vld [vmem:[%s5 + $0x18] sm:$0xff]
      %v1549 = vpack.c.bf16 %v1430, %v1427
      %v1550 = vpack.c.bf16 %v1438, %v1435
      %v1551 = vpack.c.bf16 %v1446, %v1443
      %v1552 = vpack.c.bf16 %v1454, %v1451
      %v1553 = vpack.c.bf16 %v1462, %v1459
      %v1554 = vpack.c.bf16 %v1470, %v1467
      %v1555 = vpack.c.bf16 %v1478, %v1475
      %v1556 = vpack.c.bf16 %v1486, %v1483
      %v1557 = vpack.c.bf16 %v1494, %v1491
      %v1558 = vpack.c.bf16 %v1502, %v1499
      %v1559 = vpack.c.bf16 %v1510, %v1507
      %v1560 = vpack.c.bf16 %v1518, %v1515
      %v1561 = vpack.c.bf16 %v1526, %v1523
      %v1562 = vpack.c.bf16 %v1534, %v1531
      %v1563 = vpack.c.bf16 %v1542, %v1539
      %v1564 = vpack.c.bf16 %v1546, %v1545
      %v1565 = vpack.c.bf16 %v1548, %v1547
      %v1566 = vld [vmem:[%s6] sm:$0x1]
      %v1568 = vlaneseq
      %v1569 = vshrl.u32 %v1568, 7
      %v1570 = vsub.s32 0, %v1569
      %v1571 = vrot.slane %v1566, %v1570
      %vm1573 = vcmask 261120
      %v1575 = vsel %vm1573, %v1549, 0
      %v1578 = vsel %vm1573, %v1550, 0
      %v1581 = vsel %vm1573, %v1551, 0
      %v1584 = vsel %vm1573, %v1552, 0
      %v1587 = vsel %vm1573, %v1553, 0
      %v1590 = vsel %vm1573, %v1554, 0
      %v1593 = vsel %vm1573, %v1555, 0
      %v1596 = vsel %vm1573, %v1556, 0
      %v1599 = vsel %vm1573, %v1557, 0
      %v1602 = vsel %vm1573, %v1558, 0
      %v1605 = vsel %vm1573, %v1559, 0
      %v1608 = vsel %vm1573, %v1560, 0
      %v1611 = vsel %vm1573, %v1561, 0
      %v1614 = vsel %vm1573, %v1562, 0
      %v1617 = vsel %vm1573, %v1563, 0
      %1619 = vmatprep.subr.bf16.mxu0 0
      %1620 = vmatpush1.bf16.msra.mxu0 %v1564
      %1621 = vmatprep.subr.bf16.mxu0 0
      %1622 = vmatpush1.bf16.msra.mxu0 %v1565
      %1623 = vmatprep.subr.bf16.mxu0 0
      %1624 = vmatpush1.bf16.msra.mxu0 0
      %1625 = vmatprep.subr.bf16.mxu0 0
      %1626 = vmatpush1.bf16.msra.mxu0 0
      %1627 = vmatprep.subr.bf16.mxu0 0
      %1628 = vmatpush1.bf16.msra.mxu0 0
      %1629 = vmatprep.subr.bf16.mxu0 0
      %1630 = vmatpush1.bf16.msra.mxu0 0
      %1631 = vmatprep.subr.bf16.mxu0 0
      %1632 = vmatpush1.bf16.msra.mxu0 0
      %1633 = vmatprep.subr.bf16.mxu0 0
      %1634 = vmatpush1.bf16.msra.mxu0 0
      %1635 = vmatprep.subr.bf16.mxu0 0
      %1636 = vmatpush1.bf16.msra.mxu0 0
      %1637 = vmatprep.subr.bf16.mxu0 0
      %1638 = vmatpush1.bf16.msra.mxu0 0
      %1639 = vmatprep.subr.bf16.mxu0 0
      %1640 = vmatpush1.bf16.msra.mxu0 0
      %1641 = vmatprep.subr.bf16.mxu0 0
      %1642 = vmatpush1.bf16.msra.mxu0 0
      %1643 = vmatprep.subr.bf16.mxu0 0
      %1644 = vmatpush1.bf16.msra.mxu0 0
      %1645 = vmatprep.subr.bf16.mxu0 0
      %1646 = vmatpush1.bf16.msra.mxu0 0
      %1647 = vmatprep.subr.bf16.mxu0 0
      %1648 = vmatpush1.bf16.msra.mxu0 0
      %1649 = vmatprep.subr.bf16.mxu0 0
      %1650 = vmatpush1.bf16.msra.mxu0 0
      %1651 = vmatprep.mubr.bf16.mxu0 0
      %1652 = vmatmul.mubr.bf16.gmra.mrb[0].mxu0 %v1575
      %v1653 = vpop.f32.mrb[0].mxu0
      %v1654 = vadd.f32 %v1571, %v1653
      %v1655 = vpop.f32.mrb[0].mxu0
      %v1656 = vpop.f32.mrb[0].mxu0
      %v1657 = vadd.f32 %v1571, %v1656
      %v1658 = vpop.f32.mrb[0].mxu0
      %1659 = vmatprep.mubr.bf16.mxu0 0
      %1660 = vmatmul.mubr.bf16.gmra.mrb[0].mxu0 %v1578
      %v1661 = vpop.f32.mrb[0].mxu0
      %v1662 = vadd.f32 %v1571, %v1661
      %v1663 = vpop.f32.mrb[0].mxu0
      %v1664 = vpop.f32.mrb[0].mxu0
      %v1665 = vadd.f32 %v1571, %v1664
      %v1666 = vpop.f32.mrb[0].mxu0
      %1667 = vmatprep.mubr.bf16.mxu0 0
      %1668 = vmatmul.mubr.bf16.gmra.mrb[0].mxu0 %v1581
      %v1669 = vpop.f32.mrb[0].mxu0
      %v1670 = vadd.f32 %v1571, %v1669
      %v1671 = vpop.f32.mrb[0].mxu0
      %v1672 = vpop.f32.mrb[0].mxu0
      %v1673 = vadd.f32 %v1571, %v1672
      %v1674 = vpop.f32.mrb[0].mxu0
      %1675 = vmatprep.mubr.bf16.mxu0 0
      %1676 = vmatmul.mubr.bf16.gmra.mrb[0].mxu0 %v1584
      %v1677 = vpop.f32.mrb[0].mxu0
      %v1678 = vadd.f32 %v1571, %v1677
      %v1679 = vpop.f32.mrb[0].mxu0
      %v1680 = vpop.f32.mrb[0].mxu0
      %v1681 = vadd.f32 %v1571, %v1680
      %v1682 = vpop.f32.mrb[0].mxu0
      %1683 = vmatprep.mubr.bf16.mxu0 0
      %1684 = vmatmul.mubr.bf16.gmra.mrb[0].mxu0 %v1587
      %v1685 = vpop.f32.mrb[0].mxu0
      %v1686 = vadd.f32 %v1571, %v1685
      %v1687 = vpop.f32.mrb[0].mxu0
      %v1688 = vpop.f32.mrb[0].mxu0
      %v1689 = vadd.f32 %v1571, %v1688
      %v1690 = vpop.f32.mrb[0].mxu0
      %1691 = vmatprep.mubr.bf16.mxu0 0
      %1692 = vmatmul.mubr.bf16.gmra.mrb[0].mxu0 %v1590
      %v1693 = vpop.f32.mrb[0].mxu0
      %v1694 = vadd.f32 %v1571, %v1693
      %v1695 = vpop.f32.mrb[0].mxu0
      %v1696 = vpop.f32.mrb[0].mxu0
      %v1697 = vadd.f32 %v1571, %v1696
      %v1698 = vpop.f32.mrb[0].mxu0
      %1699 = vmatprep.mubr.bf16.mxu0 0
      %1700 = vmatmul.mubr.bf16.gmra.mrb[0].mxu0 %v1593
      %v1701 = vpop.f32.mrb[0].mxu0
      %v1702 = vadd.f32 %v1571, %v1701
      %v1703 = vpop.f32.mrb[0].mxu0
      %v1704 = vpop.f32.mrb[0].mxu0
      %v1705 = vadd.f32 %v1571, %v1704
      %v1706 = vpop.f32.mrb[0].mxu0
      %1707 = vmatprep.mubr.bf16.mxu0 0
      %1708 = vmatmul.mubr.bf16.gmra.mrb[0].mxu0 %v1596
      %v1709 = vpop.f32.mrb[0].mxu0
      %v1710 = vadd.f32 %v1571, %v1709
      %v1711 = vpop.f32.mrb[0].mxu0
      %v1712 = vpop.f32.mrb[0].mxu0
      %v1713 = vadd.f32 %v1571, %v1712
      %v1714 = vpop.f32.mrb[0].mxu0
      %1715 = vmatprep.mubr.bf16.mxu0 0
      %1716 = vmatmul.mubr.bf16.gmra.mrb[0].mxu0 %v1599
      %v1717 = vpop.f32.mrb[0].mxu0
      %v1718 = vadd.f32 %v1571, %v1717
      %v1719 = vpop.f32.mrb[0].mxu0
      %v1720 = vpop.f32.mrb[0].mxu0
      %v1721 = vadd.f32 %v1571, %v1720
      %v1722 = vpop.f32.mrb[0].mxu0
      %1723 = vmatprep.mubr.bf16.mxu0 0
      %1724 = vmatmul.mubr.bf16.gmra.mrb[0].mxu0 %v1602
      %v1725 = vpop.f32.mrb[0].mxu0
      %v1726 = vadd.f32 %v1571, %v1725
      %v1727 = vpop.f32.mrb[0].mxu0
      %v1728 = vpop.f32.mrb[0].mxu0
      %v1729 = vadd.f32 %v1571, %v1728
      %v1730 = vpop.f32.mrb[0].mxu0
      %1731 = vmatprep.mubr.bf16.mxu0 0
      %1732 = vmatmul.mubr.bf16.gmra.mrb[0].mxu0 %v1605
      %v1733 = vpop.f32.mrb[0].mxu0
      %v1734 = vadd.f32 %v1571, %v1733
      %v1735 = vpop.f32.mrb[0].mxu0
      %v1736 = vpop.f32.mrb[0].mxu0
      %v1737 = vadd.f32 %v1571, %v1736
      %v1738 = vpop.f32.mrb[0].mxu0
      %1739 = vmatprep.mubr.bf16.mxu0 0
      %1740 = vmatmul.mubr.bf16.gmra.mrb[0].mxu0 %v1608
      %v1741 = vpop.f32.mrb[0].mxu0
      %v1742 = vadd.f32 %v1571, %v1741
      %v1743 = vpop.f32.mrb[0].mxu0
      %v1744 = vpop.f32.mrb[0].mxu0
      %v1745 = vadd.f32 %v1571, %v1744
      %v1746 = vpop.f32.mrb[0].mxu0
      %1747 = vmatprep.mubr.bf16.mxu0 0
      %1748 = vmatmul.mubr.bf16.gmra.mrb[0].mxu0 %v1611
      %v1749 = vpop.f32.mrb[0].mxu0
      %v1750 = vadd.f32 %v1571, %v1749
      %v1751 = vpop.f32.mrb[0].mxu0
      %v1752 = vpop.f32.mrb[0].mxu0
      %v1753 = vadd.f32 %v1571, %v1752
      %v1754 = vpop.f32.mrb[0].mxu0
      %1755 = vmatprep.mubr.bf16.mxu0 0
      %1756 = vmatmul.mubr.bf16.gmra.mrb[0].mxu0 %v1614
      %v1757 = vpop.f32.mrb[0].mxu0
      %v1758 = vadd.f32 %v1571, %v1757
      %v1759 = vpop.f32.mrb[0].mxu0
      %v1760 = vpop.f32.mrb[0].mxu0
      %v1761 = vadd.f32 %v1571, %v1760
      %v1762 = vpop.f32.mrb[0].mxu0
      %1763 = vmatprep.mubr.bf16.mxu0 0
      %1764 = vmatmul.mubr.bf16.gmra.mrb[0].mxu0 %v1617
      %v1765 = vpop.f32.mrb[0].mxu0
      %v1766 = vadd.f32 %v1571, %v1765
      %v1767 = vpop.f32.mrb[0].mxu0
      %v1768 = vpop.f32.mrb[0].mxu0
      %v1769 = vadd.f32 %v1571, %v1768
      %v1770 = vpop.f32.mrb[0].mxu0
      %1771 = vdwg.mxu0
      %vm1772 = vcmp.gt.f32.partialorder %v1654, 0.0
      %vm1773 = vcmp.gt.f32.partialorder %v1657, 0.0
      %vm1774 = vcmp.gt.f32.partialorder %v1662, 0.0
      %vm1775 = vcmp.gt.f32.partialorder %v1665, 0.0
      %vm1776 = vcmp.gt.f32.partialorder %v1670, 0.0
      %vm1777 = vcmp.gt.f32.partialorder %v1673, 0.0
      %vm1778 = vcmp.gt.f32.partialorder %v1678, 0.0
      %vm1779 = vcmp.gt.f32.partialorder %v1681, 0.0
      %vm1780 = vcmp.gt.f32.partialorder %v1686, 0.0
      %vm1781 = vcmp.gt.f32.partialorder %v1689, 0.0
      %vm1782 = vcmp.gt.f32.partialorder %v1694, 0.0
      %vm1783 = vcmp.gt.f32.partialorder %v1697, 0.0
      %vm1784 = vcmp.gt.f32.partialorder %v1702, 0.0
      %vm1785 = vcmp.gt.f32.partialorder %v1705, 0.0
      %vm1786 = vcmp.gt.f32.partialorder %v1710, 0.0
      %vm1787 = vcmp.gt.f32.partialorder %v1713, 0.0
      %vm1788 = vcmp.gt.f32.partialorder %v1718, 0.0
      %vm1789 = vcmp.gt.f32.partialorder %v1721, 0.0
      %vm1790 = vcmp.gt.f32.partialorder %v1726, 0.0
      %vm1791 = vcmp.gt.f32.partialorder %v1729, 0.0
      %vm1792 = vcmp.gt.f32.partialorder %v1734, 0.0
      %vm1793 = vcmp.gt.f32.partialorder %v1737, 0.0
      %vm1794 = vcmp.gt.f32.partialorder %v1742, 0.0
      %vm1795 = vcmp.gt.f32.partialorder %v1745, 0.0
      %vm1796 = vcmp.gt.f32.partialorder %v1750, 0.0
      %vm1797 = vcmp.gt.f32.partialorder %v1753, 0.0
      %vm1798 = vcmp.gt.f32.partialorder %v1758, 0.0
      %vm1799 = vcmp.gt.f32.partialorder %v1761, 0.0
      %vm1800 = vcmp.gt.f32.partialorder %v1766, 0.0
      %vm1801 = vcmp.gt.f32.partialorder %v1769, 0.0
      %v1802 = vmul.f32 %v1654, 0.1
      %v1803 = vmul.f32 %v1657, 0.1
      %v1804 = vmul.f32 %v1662, 0.1
      %v1805 = vmul.f32 %v1665, 0.1
      %v1806 = vmul.f32 %v1670, 0.1
      %v1807 = vmul.f32 %v1673, 0.1
      %v1808 = vmul.f32 %v1678, 0.1
      %v1809 = vmul.f32 %v1681, 0.1
      %v1810 = vmul.f32 %v1686, 0.1
      %v1811 = vmul.f32 %v1689, 0.1
      %v1812 = vmul.f32 %v1694, 0.1
      %v1813 = vmul.f32 %v1697, 0.1
      %v1814 = vmul.f32 %v1702, 0.1
      %v1815 = vmul.f32 %v1705, 0.1
      %v1816 = vmul.f32 %v1710, 0.1
      %v1817 = vmul.f32 %v1713, 0.1
      %v1818 = vmul.f32 %v1718, 0.1
      %v1819 = vmul.f32 %v1721, 0.1
      %v1820 = vmul.f32 %v1726, 0.1
      %v1821 = vmul.f32 %v1729, 0.1
      %v1822 = vmul.f32 %v1734, 0.1
      %v1823 = vmul.f32 %v1737, 0.1
      %v1824 = vmul.f32 %v1742, 0.1
      %v1825 = vmul.f32 %v1745, 0.1
      %v1826 = vmul.f32 %v1750, 0.1
      %v1827 = vmul.f32 %v1753, 0.1
      %v1828 = vmul.f32 %v1758, 0.1
      %v1829 = vmul.f32 %v1761, 0.1
      %v1830 = vmul.f32 %v1766, 0.1
      %v1831 = vmul.f32 %v1769, 0.1
      %v1832 = vsel %vm1772, %v1654, %v1802
      %v1833 = vsel %vm1773, %v1657, %v1803
      %v1834 = vsel %vm1774, %v1662, %v1804
      %v1835 = vsel %vm1775, %v1665, %v1805
      %v1836 = vsel %vm1776, %v1670, %v1806
      %v1837 = vsel %vm1777, %v1673, %v1807
      %v1838 = vsel %vm1778, %v1678, %v1808
      %v1839 = vsel %vm1779, %v1681, %v1809
      %v1840 = vsel %vm1780, %v1686, %v1810
      %v1841 = vsel %vm1781, %v1689, %v1811
      %v1842 = vsel %vm1782, %v1694, %v1812
      %v1843 = vsel %vm1783, %v1697, %v1813
      %v1844 = vsel %vm1784, %v1702, %v1814
      %v1845 = vsel %vm1785, %v1705, %v1815
      %v1846 = vsel %vm1786, %v1710, %v1816
      %v1847 = vsel %vm1787, %v1713, %v1817
      %v1848 = vsel %vm1788, %v1718, %v1818
      %v1849 = vsel %vm1789, %v1721, %v1819
      %v1850 = vsel %vm1790, %v1726, %v1820
      %v1851 = vsel %vm1791, %v1729, %v1821
      %v1852 = vsel %vm1792, %v1734, %v1822
      %v1853 = vsel %vm1793, %v1737, %v1823
      %v1854 = vsel %vm1794, %v1742, %v1824
      %v1855 = vsel %vm1795, %v1745, %v1825
      %v1856 = vsel %vm1796, %v1750, %v1826
      %v1857 = vsel %vm1797, %v1753, %v1827
      %v1858 = vsel %vm1798, %v1758, %v1828
      %v1859 = vsel %vm1799, %v1761, %v1829
      %v1860 = vsel %vm1800, %v1766, %v1830
      %v1861 = vsel %vm1801, %v1769, %v1831
      %v1862 = vld [vmem:[%s7] sm:$0xff]
      %v1863 = vld [vmem:[%s7 + $0x8] sm:$0xff]
      %v1864 = vld [vmem:[%s7 + $0x10] sm:$0xff]
      %v1865 = vld [vmem:[%s7 + $0x18] sm:$0xff]
      %v1866 = vpack.c.bf16 %v1833, %v1832
      %v1867 = vpack.c.bf16 %v1835, %v1834
      %v1868 = vpack.c.bf16 %v1837, %v1836
      %v1869 = vpack.c.bf16 %v1839, %v1838
      %v1870 = vpack.c.bf16 %v1841, %v1840
      %v1871 = vpack.c.bf16 %v1843, %v1842
      %v1872 = vpack.c.bf16 %v1845, %v1844
      %v1873 = vpack.c.bf16 %v1847, %v1846
      %v1874 = vpack.c.bf16 %v1849, %v1848
      %v1875 = vpack.c.bf16 %v1851, %v1850
      %v1876 = vpack.c.bf16 %v1853, %v1852
      %v1877 = vpack.c.bf16 %v1855, %v1854
      %v1878 = vpack.c.bf16 %v1857, %v1856
      %v1879 = vpack.c.bf16 %v1859, %v1858
      %v1880 = vpack.c.bf16 %v1861, %v1860
      %v1881 = vpack.c.bf16 %v1863, %v1862
      %v1882 = vpack.c.bf16 %v1865, %v1864
      %v1884 = vsel %vm1573, %v1866, 0
      %v1887 = vsel %vm1573, %v1867, 0
      %v1890 = vsel %vm1573, %v1868, 0
      %v1893 = vsel %vm1573, %v1869, 0
      %v1896 = vsel %vm1573, %v1870, 0
      %v1899 = vsel %vm1573, %v1871, 0
      %v1902 = vsel %vm1573, %v1872, 0
      %v1905 = vsel %vm1573, %v1873, 0
      %v1908 = vsel %vm1573, %v1874, 0
      %v1911 = vsel %vm1573, %v1875, 0
      %v1914 = vsel %vm1573, %v1876, 0
      %v1917 = vsel %vm1573, %v1877, 0
      %v1920 = vsel %vm1573, %v1878, 0
      %v1923 = vsel %vm1573, %v1879, 0
      %v1926 = vsel %vm1573, %v1880, 0
      %1928 = vmatprep.subr.bf16.mxu0 0
      %1929 = vmatpush1.bf16.msra.mxu0 %v1881
      %1930 = vmatprep.subr.bf16.mxu0 0
      %1931 = vmatpush1.bf16.msra.mxu0 %v1882
      %1932 = vmatprep.subr.bf16.mxu0 0
      %1933 = vmatpush1.bf16.msra.mxu0 0
      %1934 = vmatprep.subr.bf16.mxu0 0
      %1935 = vmatpush1.bf16.msra.mxu0 0
      %1936 = vmatprep.subr.bf16.mxu0 0
      %1937 = vmatpush1.bf16.msra.mxu0 0
      %1938 = vmatprep.subr.bf16.mxu0 0
      %1939 = vmatpush1.bf16.msra.mxu0 0
      %1940 = vmatprep.subr.bf16.mxu0 0
      %1941 = vmatpush1.bf16.msra.mxu0 0
      %1942 = vmatprep.subr.bf16.mxu0 0
      %1943 = vmatpush1.bf16.msra.mxu0 0
      %1944 = vmatprep.subr.bf16.mxu0 0
      %1945 = vmatpush1.bf16.msra.mxu0 0
      %1946 = vmatprep.subr.bf16.mxu0 0
      %1947 = vmatpush1.bf16.msra.mxu0 0
      %1948 = vmatprep.subr.bf16.mxu0 0
      %1949 = vmatpush1.bf16.msra.mxu0 0
      %1950 = vmatprep.subr.bf16.mxu0 0
      %1951 = vmatpush1.bf16.msra.mxu0 0
      %1952 = vmatprep.subr.bf16.mxu0 0
      %1953 = vmatpush1.bf16.msra.mxu0 0
      %1954 = vmatprep.subr.bf16.mxu0 0
      %1955 = vmatpush1.bf16.msra.mxu0 0
      %1956 = vmatprep.subr.bf16.mxu0 0
      %1957 = vmatpush1.bf16.msra.mxu0 0
      %1958 = vmatprep.subr.bf16.mxu0 0
      %1959 = vmatpush1.bf16.msra.mxu0 0
      %1960 = vmatprep.mubr.bf16.mxu0 0
      %1961 = vmatmul.mubr.bf16.gmra.mrb[0].mxu0 %v1884
      %v1962 = vpop.f32.mrb[0].mxu0
      %v1963 = vadd.f32 0.0, %v1962
      %v1964 = vpop.f32.mrb[0].mxu0
      %v1965 = vpop.f32.mrb[0].mxu0
      %v1966 = vadd.f32 0.0, %v1965
      %v1967 = vpop.f32.mrb[0].mxu0
      %1968 = vmatprep.mubr.bf16.mxu0 0
      %1969 = vmatmul.mubr.bf16.gmra.mrb[0].mxu0 %v1887
      %v1970 = vpop.f32.mrb[0].mxu0
      %v1971 = vadd.f32 0.0, %v1970
      %v1972 = vpop.f32.mrb[0].mxu0
      %v1973 = vpop.f32.mrb[0].mxu0
      %v1974 = vadd.f32 0.0, %v1973
      %v1975 = vpop.f32.mrb[0].mxu0
      %1976 = vmatprep.mubr.bf16.mxu0 0
      %1977 = vmatmul.mubr.bf16.gmra.mrb[0].mxu0 %v1890
      %v1978 = vpop.f32.mrb[0].mxu0
      %v1979 = vadd.f32 0.0, %v1978
      %v1980 = vpop.f32.mrb[0].mxu0
      %v1981 = vpop.f32.mrb[0].mxu0
      %v1982 = vadd.f32 0.0, %v1981
      %v1983 = vpop.f32.mrb[0].mxu0
      %1984 = vmatprep.mubr.bf16.mxu0 0
      %1985 = vmatmul.mubr.bf16.gmra.mrb[0].mxu0 %v1893
      %v1986 = vpop.f32.mrb[0].mxu0
      %v1987 = vadd.f32 0.0, %v1986
      %v1988 = vpop.f32.mrb[0].mxu0
      %v1989 = vpop.f32.mrb[0].mxu0
      %v1990 = vadd.f32 0.0, %v1989
      %v1991 = vpop.f32.mrb[0].mxu0
      %1992 = vmatprep.mubr.bf16.mxu0 0
      %1993 = vmatmul.mubr.bf16.gmra.mrb[0].mxu0 %v1896
      %v1994 = vpop.f32.mrb[0].mxu0
      %v1995 = vadd.f32 0.0, %v1994
      %v1996 = vpop.f32.mrb[0].mxu0
      %v1997 = vpop.f32.mrb[0].mxu0
      %v1998 = vadd.f32 0.0, %v1997
      %v1999 = vpop.f32.mrb[0].mxu0
      %2000 = vmatprep.mubr.bf16.mxu0 0
      %2001 = vmatmul.mubr.bf16.gmra.mrb[0].mxu0 %v1899
      %v2002 = vpop.f32.mrb[0].mxu0
      %v2003 = vadd.f32 0.0, %v2002
      %v2004 = vpop.f32.mrb[0].mxu0
      %v2005 = vpop.f32.mrb[0].mxu0
      %v2006 = vadd.f32 0.0, %v2005
      %v2007 = vpop.f32.mrb[0].mxu0
      %2008 = vmatprep.mubr.bf16.mxu0 0
      %2009 = vmatmul.mubr.bf16.gmra.mrb[0].mxu0 %v1902
      %v2010 = vpop.f32.mrb[0].mxu0
      %v2011 = vadd.f32 0.0, %v2010
      %v2012 = vpop.f32.mrb[0].mxu0
      %v2013 = vpop.f32.mrb[0].mxu0
      %v2014 = vadd.f32 0.0, %v2013
      %v2015 = vpop.f32.mrb[0].mxu0
      %2016 = vmatprep.mubr.bf16.mxu0 0
      %2017 = vmatmul.mubr.bf16.gmra.mrb[0].mxu0 %v1905
      %v2018 = vpop.f32.mrb[0].mxu0
      %v2019 = vadd.f32 0.0, %v2018
      %v2020 = vpop.f32.mrb[0].mxu0
      %v2021 = vpop.f32.mrb[0].mxu0
      %v2022 = vadd.f32 0.0, %v2021
      %v2023 = vpop.f32.mrb[0].mxu0
      %2024 = vmatprep.mubr.bf16.mxu0 0
      %2025 = vmatmul.mubr.bf16.gmra.mrb[0].mxu0 %v1908
      %v2026 = vpop.f32.mrb[0].mxu0
      %v2027 = vadd.f32 0.0, %v2026
      %v2028 = vpop.f32.mrb[0].mxu0
      %v2029 = vpop.f32.mrb[0].mxu0
      %v2030 = vadd.f32 0.0, %v2029
      %v2031 = vpop.f32.mrb[0].mxu0
      %2032 = vmatprep.mubr.bf16.mxu0 0
      %2033 = vmatmul.mubr.bf16.gmra.mrb[0].mxu0 %v1911
      %v2034 = vpop.f32.mrb[0].mxu0
      %v2035 = vadd.f32 0.0, %v2034
      %v2036 = vpop.f32.mrb[0].mxu0
      %v2037 = vpop.f32.mrb[0].mxu0
      %v2038 = vadd.f32 0.0, %v2037
      %v2039 = vpop.f32.mrb[0].mxu0
      %2040 = vmatprep.mubr.bf16.mxu0 0
      %2041 = vmatmul.mubr.bf16.gmra.mrb[0].mxu0 %v1914
      %v2042 = vpop.f32.mrb[0].mxu0
      %v2043 = vadd.f32 0.0, %v2042
      %v2044 = vpop.f32.mrb[0].mxu0
      %v2045 = vpop.f32.mrb[0].mxu0
      %v2046 = vadd.f32 0.0, %v2045
      %v2047 = vpop.f32.mrb[0].mxu0
      %2048 = vmatprep.mubr.bf16.mxu0 0
      %2049 = vmatmul.mubr.bf16.gmra.mrb[0].mxu0 %v1917
      %v2050 = vpop.f32.mrb[0].mxu0
      %v2051 = vadd.f32 0.0, %v2050
      %v2052 = vpop.f32.mrb[0].mxu0
      %v2053 = vpop.f32.mrb[0].mxu0
      %v2054 = vadd.f32 0.0, %v2053
      %v2055 = vpop.f32.mrb[0].mxu0
      %2056 = vmatprep.mubr.bf16.mxu0 0
      %2057 = vmatmul.mubr.bf16.gmra.mrb[0].mxu0 %v1920
      %v2058 = vpop.f32.mrb[0].mxu0
      %v2059 = vadd.f32 0.0, %v2058
      %v2060 = vpop.f32.mrb[0].mxu0
      %v2061 = vpop.f32.mrb[0].mxu0
      %v2062 = vadd.f32 0.0, %v2061
      %v2063 = vpop.f32.mrb[0].mxu0
      %2064 = vmatprep.mubr.bf16.mxu0 0
      %2065 = vmatmul.mubr.bf16.gmra.mrb[0].mxu0 %v1923
      %v2066 = vpop.f32.mrb[0].mxu0
      %v2067 = vadd.f32 0.0, %v2066
      %v2068 = vpop.f32.mrb[0].mxu0
      %v2069 = vpop.f32.mrb[0].mxu0
      %v2070 = vadd.f32 0.0, %v2069
      %v2071 = vpop.f32.mrb[0].mxu0
      %2072 = vmatprep.mubr.bf16.mxu0 0
      %2073 = vmatmul.mubr.bf16.gmra.mrb[0].mxu0 %v1926
      %v2074 = vpop.f32.mrb[0].mxu0
      %v2075 = vadd.f32 0.0, %v2074
      %v2076 = vpop.f32.mrb[0].mxu0
      %v2077 = vpop.f32.mrb[0].mxu0
      %v2078 = vadd.f32 0.0, %v2077
      %v2079 = vpop.f32.mrb[0].mxu0
      %2080 = vdwg.mxu0
      %v2081 = vpack.c.bf16 %v1966, %v1963
      %v2082 = vpack.c.bf16 %v1974, %v1971
      %v2083 = vpack.c.bf16 %v1982, %v1979
      %v2084 = vpack.c.bf16 %v1990, %v1987
      %v2085 = vpack.c.bf16 %v1998, %v1995
      %v2086 = vpack.c.bf16 %v2006, %v2003
      %v2087 = vpack.c.bf16 %v2014, %v2011
      %v2088 = vpack.c.bf16 %v2022, %v2019
      %v2089 = vpack.c.bf16 %v2030, %v2027
      %v2090 = vpack.c.bf16 %v2038, %v2035
      %v2091 = vpack.c.bf16 %v2046, %v2043
      %v2092 = vpack.c.bf16 %v2054, %v2051
      %v2093 = vpack.c.bf16 %v2062, %v2059
      %v2094 = vpack.c.bf16 %v2070, %v2067
      %v2095 = vpack.c.bf16 %v2078, %v2075
      %v2096 = vld [vmem:[%s9] sm:$0xff]
      %v2097 = vld [vmem:[%s9 + $0x8] sm:$0xff]
      %v2098 = vld [vmem:[%s9 + $0x10] sm:$0xff]
      %v2099 = vld [vmem:[%s9 + $0x18] sm:$0xff]
      %v2100 = vpack.c.bf16 %v2097, %v2096
      %v2101 = vpack.c.bf16 %v2099, %v2098
      %v2103 = vsel %vm1573, %v2081, 0
      %v2106 = vsel %vm1573, %v2082, 0
      %v2109 = vsel %vm1573, %v2083, 0
      %v2112 = vsel %vm1573, %v2084, 0
      %v2115 = vsel %vm1573, %v2085, 0
      %v2118 = vsel %vm1573, %v2086, 0
      %v2121 = vsel %vm1573, %v2087, 0
      %v2124 = vsel %vm1573, %v2088, 0
      %v2127 = vsel %vm1573, %v2089, 0
      %v2130 = vsel %vm1573, %v2090, 0
      %v2133 = vsel %vm1573, %v2091, 0
      %v2136 = vsel %vm1573, %v2092, 0
      %v2139 = vsel %vm1573, %v2093, 0
      %v2142 = vsel %vm1573, %v2094, 0
      %v2145 = vsel %vm1573, %v2095, 0
      %2147 = vmatprep.subr.bf16.mxu0 0
      %2148 = vmatpush1.bf16.msra.mxu0 %v2100
      %2149 = vmatprep.subr.bf16.mxu0 0
      %2150 = vmatpush1.bf16.msra.mxu0 %v2101
      %2151 = vmatprep.subr.bf16.mxu0 0
      %2152 = vmatpush1.bf16.msra.mxu0 0
      %2153 = vmatprep.subr.bf16.mxu0 0
      %2154 = vmatpush1.bf16.msra.mxu0 0
      %2155 = vmatprep.subr.bf16.mxu0 0
      %2156 = vmatpush1.bf16.msra.mxu0 0
      %2157 = vmatprep.subr.bf16.mxu0 0
      %2158 = vmatpush1.bf16.msra.mxu0 0
      %2159 = vmatprep.subr.bf16.mxu0 0
      %2160 = vmatpush1.bf16.msra.mxu0 0
      %2161 = vmatprep.subr.bf16.mxu0 0
      %2162 = vmatpush1.bf16.msra.mxu0 0
      %2163 = vmatprep.subr.bf16.mxu0 0
      %2164 = vmatpush1.bf16.msra.mxu0 0
      %2165 = vmatprep.subr.bf16.mxu0 0
      %2166 = vmatpush1.bf16.msra.mxu0 0
      %2167 = vmatprep.subr.bf16.mxu0 0
      %2168 = vmatpush1.bf16.msra.mxu0 0
      %2169 = vmatprep.subr.bf16.mxu0 0
      %2170 = vmatpush1.bf16.msra.mxu0 0
      %2171 = vmatprep.subr.bf16.mxu0 0
      %2172 = vmatpush1.bf16.msra.mxu0 0
      %2173 = vmatprep.subr.bf16.mxu0 0
      %2174 = vmatpush1.bf16.msra.mxu0 0
      %2175 = vmatprep.subr.bf16.mxu0 0
      %2176 = vmatpush1.bf16.msra.mxu0 0
      %2177 = vmatprep.subr.bf16.mxu0 0
      %2178 = vmatpush1.bf16.msra.mxu0 0
      %2179 = vmatprep.mubr.bf16.mxu0 0
      %2180 = vmatmul.mubr.bf16.gmra.mrb[0].mxu0 %v2103
      %v2181 = vpop.f32.mrb[0].mxu0
      %v2182 = vadd.f32 0.0, %v2181
      %v2183 = vpop.f32.mrb[0].mxu0
      %v2184 = vpop.f32.mrb[0].mxu0
      %v2185 = vadd.f32 0.0, %v2184
      %v2186 = vpop.f32.mrb[0].mxu0
      %2187 = vmatprep.mubr.bf16.mxu0 0
      %2188 = vmatmul.mubr.bf16.gmra.mrb[0].mxu0 %v2106
      %v2189 = vpop.f32.mrb[0].mxu0
      %v2190 = vadd.f32 0.0, %v2189
      %v2191 = vpop.f32.mrb[0].mxu0
      %v2192 = vpop.f32.mrb[0].mxu0
      %v2193 = vadd.f32 0.0, %v2192
      %v2194 = vpop.f32.mrb[0].mxu0
      %2195 = vmatprep.mubr.bf16.mxu0 0
      %2196 = vmatmul.mubr.bf16.gmra.mrb[0].mxu0 %v2109
      %v2197 = vpop.f32.mrb[0].mxu0
      %v2198 = vadd.f32 0.0, %v2197
      %v2199 = vpop.f32.mrb[0].mxu0
      %v2200 = vpop.f32.mrb[0].mxu0
      %v2201 = vadd.f32 0.0, %v2200
      %v2202 = vpop.f32.mrb[0].mxu0
      %2203 = vmatprep.mubr.bf16.mxu0 0
      %2204 = vmatmul.mubr.bf16.gmra.mrb[0].mxu0 %v2112
      %v2205 = vpop.f32.mrb[0].mxu0
      %v2206 = vadd.f32 0.0, %v2205
      %v2207 = vpop.f32.mrb[0].mxu0
      %v2208 = vpop.f32.mrb[0].mxu0
      %v2209 = vadd.f32 0.0, %v2208
      %v2210 = vpop.f32.mrb[0].mxu0
      %2211 = vmatprep.mubr.bf16.mxu0 0
      %2212 = vmatmul.mubr.bf16.gmra.mrb[0].mxu0 %v2115
      %v2213 = vpop.f32.mrb[0].mxu0
      %v2214 = vadd.f32 0.0, %v2213
      %v2215 = vpop.f32.mrb[0].mxu0
      %v2216 = vpop.f32.mrb[0].mxu0
      %v2217 = vadd.f32 0.0, %v2216
      %v2218 = vpop.f32.mrb[0].mxu0
      %2219 = vmatprep.mubr.bf16.mxu0 0
      %2220 = vmatmul.mubr.bf16.gmra.mrb[0].mxu0 %v2118
      %v2221 = vpop.f32.mrb[0].mxu0
      %v2222 = vadd.f32 0.0, %v2221
      %v2223 = vpop.f32.mrb[0].mxu0
      %v2224 = vpop.f32.mrb[0].mxu0
      %v2225 = vadd.f32 0.0, %v2224
      %v2226 = vpop.f32.mrb[0].mxu0
      %2227 = vmatprep.mubr.bf16.mxu0 0
      %2228 = vmatmul.mubr.bf16.gmra.mrb[0].mxu0 %v2121
      %v2229 = vpop.f32.mrb[0].mxu0
      %v2230 = vadd.f32 0.0, %v2229
      %v2231 = vpop.f32.mrb[0].mxu0
      %v2232 = vpop.f32.mrb[0].mxu0
      %v2233 = vadd.f32 0.0, %v2232
      %v2234 = vpop.f32.mrb[0].mxu0
      %2235 = vmatprep.mubr.bf16.mxu0 0
      %2236 = vmatmul.mubr.bf16.gmra.mrb[0].mxu0 %v2124
      %v2237 = vpop.f32.mrb[0].mxu0
      %v2238 = vadd.f32 0.0, %v2237
      %v2239 = vpop.f32.mrb[0].mxu0
      %v2240 = vpop.f32.mrb[0].mxu0
      %v2241 = vadd.f32 0.0, %v2240
      %v2242 = vpop.f32.mrb[0].mxu0
      %2243 = vmatprep.mubr.bf16.mxu0 0
      %2244 = vmatmul.mubr.bf16.gmra.mrb[0].mxu0 %v2127
      %v2245 = vpop.f32.mrb[0].mxu0
      %v2246 = vadd.f32 0.0, %v2245
      %v2247 = vpop.f32.mrb[0].mxu0
      %v2248 = vpop.f32.mrb[0].mxu0
      %v2249 = vadd.f32 0.0, %v2248
      %v2250 = vpop.f32.mrb[0].mxu0
      %2251 = vmatprep.mubr.bf16.mxu0 0
      %2252 = vmatmul.mubr.bf16.gmra.mrb[0].mxu0 %v2130
      %v2253 = vpop.f32.mrb[0].mxu0
      %v2254 = vadd.f32 0.0, %v2253
      %v2255 = vpop.f32.mrb[0].mxu0
      %v2256 = vpop.f32.mrb[0].mxu0
      %v2257 = vadd.f32 0.0, %v2256
      %v2258 = vpop.f32.mrb[0].mxu0
      %2259 = vmatprep.mubr.bf16.mxu0 0
      %2260 = vmatmul.mubr.bf16.gmra.mrb[0].mxu0 %v2133
      %v2261 = vpop.f32.mrb[0].mxu0
      %v2262 = vadd.f32 0.0, %v2261
      %v2263 = vpop.f32.mrb[0].mxu0
      %v2264 = vpop.f32.mrb[0].mxu0
      %v2265 = vadd.f32 0.0, %v2264
      %v2266 = vpop.f32.mrb[0].mxu0
      %2267 = vmatprep.mubr.bf16.mxu0 0
      %2268 = vmatmul.mubr.bf16.gmra.mrb[0].mxu0 %v2136
      %v2269 = vpop.f32.mrb[0].mxu0
      %v2270 = vadd.f32 0.0, %v2269
      %v2271 = vpop.f32.mrb[0].mxu0
      %v2272 = vpop.f32.mrb[0].mxu0
      %v2273 = vadd.f32 0.0, %v2272
      %v2274 = vpop.f32.mrb[0].mxu0
      %2275 = vmatprep.mubr.bf16.mxu0 0
      %2276 = vmatmul.mubr.bf16.gmra.mrb[0].mxu0 %v2139
      %v2277 = vpop.f32.mrb[0].mxu0
      %v2278 = vadd.f32 0.0, %v2277
      %v2279 = vpop.f32.mrb[0].mxu0
      %v2280 = vpop.f32.mrb[0].mxu0
      %v2281 = vadd.f32 0.0, %v2280
      %v2282 = vpop.f32.mrb[0].mxu0
      %2283 = vmatprep.mubr.bf16.mxu0 0
      %2284 = vmatmul.mubr.bf16.gmra.mrb[0].mxu0 %v2142
      %v2285 = vpop.f32.mrb[0].mxu0
      %v2286 = vadd.f32 0.0, %v2285
      %v2287 = vpop.f32.mrb[0].mxu0
      %v2288 = vpop.f32.mrb[0].mxu0
      %v2289 = vadd.f32 0.0, %v2288
      %v2290 = vpop.f32.mrb[0].mxu0
      %2291 = vmatprep.mubr.bf16.mxu0 0
      %2292 = vmatmul.mubr.bf16.gmra.mrb[0].mxu0 %v2145
      %v2293 = vpop.f32.mrb[0].mxu0
      %v2294 = vadd.f32 0.0, %v2293
      %v2295 = vpop.f32.mrb[0].mxu0
      %v2296 = vpop.f32.mrb[0].mxu0
      %v2297 = vadd.f32 0.0, %v2296
      %v2298 = vpop.f32.mrb[0].mxu0
      %2299 = vdwg.mxu0
      %v2300 = vld [vmem:[%s8] sm:$0x1]
      %v2301 = vpack.c.bf16 %v2300, %v2300
      %v2303 = vsel %vm1573, %v2301, 0
      %2305 = vmatprep.subr.bf16.mxu0 0
      %2306 = vmatpush1.bf16.xpose.msra.mxu0 %v2103
      %2307 = vmatprep.subr.bf16.mxu0 0
      %2308 = vmatpush1.bf16.xpose.msra.mxu0 %v2106
      %2309 = vmatprep.subr.bf16.mxu0 0
      %2310 = vmatpush1.bf16.xpose.msra.mxu0 %v2109
      %2311 = vmatprep.subr.bf16.mxu0 0
      %2312 = vmatpush1.bf16.xpose.msra.mxu0 %v2112
      %2313 = vmatprep.subr.bf16.mxu0 0
      %2314 = vmatpush1.bf16.xpose.msra.mxu0 %v2115
      %2315 = vmatprep.subr.bf16.mxu0 0
      %2316 = vmatpush1.bf16.xpose.msra.mxu0 %v2118
      %2317 = vmatprep.subr.bf16.mxu0 0
      %2318 = vmatpush1.bf16.xpose.msra.mxu0 %v2121
      %2319 = vmatprep.subr.bf16.mxu0 0
      %2320 = vmatpush1.bf16.xpose.msra.mxu0 %v2124
      %2321 = vmatprep.subr.bf16.mxu0 0
      %2322 = vmatpush1.bf16.xpose.msra.mxu0 %v2127
      %2323 = vmatprep.subr.bf16.mxu0 0
      %2324 = vmatpush1.bf16.xpose.msra.mxu0 %v2130
      %2325 = vmatprep.subr.bf16.mxu0 0
      %2326 = vmatpush1.bf16.xpose.msra.mxu0 %v2133
      %2327 = vmatprep.subr.bf16.mxu0 0
      %2328 = vmatpush1.bf16.xpose.msra.mxu0 %v2136
      %2329 = vmatprep.subr.bf16.mxu0 0
      %2330 = vmatpush1.bf16.xpose.msra.mxu0 %v2139
      %2331 = vmatprep.subr.bf16.mxu0 0
      %2332 = vmatpush1.bf16.xpose.msra.mxu0 %v2142
      %2333 = vmatprep.subr.bf16.mxu0 0
      %2334 = vmatpush1.bf16.xpose.msra.mxu0 %v2145
      %2335 = vmatprep.subr.bf16.mxu0 0
      %2336 = vmatpush1.bf16.xpose.msra.mxu0 0
      %2337 = vmatprep.mubr.bf16.mxu0 0
      %2338 = vmatmul.mubr.bf16.gmra.mrb[0].mxu0 %v2303
      %v2339 = vpop.f32.mrb[0].mxu0
      %v2340 = vadd.f32 0.0, %v2339
      %v2341 = vpop.f32.mrb[0].mxu0
      %v2342 = vadd.f32 0.0, %v2341
      %v2343 = vpop.f32.mrb[0].mxu0
      %v2344 = vpop.f32.mrb[0].mxu0
      %2345 = vdwg.mxu0
      %2347 = vset.pattern.permute.xlu0 0
      %2348 = vperm.xlu0 %2347, %v2182
      %v2349 = vpop.permute.xlu0 %2348
      %2352 = vset.pattern.permute.xlu0 0
      %2353 = vperm.xlu0 %2352, %v2185
      %v2354 = vpop.permute.xlu0 %2353
      %2357 = vset.pattern.permute.xlu0 0
      %2358 = vperm.xlu0 %2357, %v2190
      %v2359 = vpop.permute.xlu0 %2358
      %2362 = vset.pattern.permute.xlu0 0
      %2363 = vperm.xlu0 %2362, %v2193
      %v2364 = vpop.permute.xlu0 %2363
      %2367 = vset.pattern.permute.xlu0 0
      %2368 = vperm.xlu0 %2367, %v2198
      %v2369 = vpop.permute.xlu0 %2368
      %2372 = vset.pattern.permute.xlu0 0
      %2373 = vperm.xlu0 %2372, %v2201
      %v2374 = vpop.permute.xlu0 %2373
      %2377 = vset.pattern.permute.xlu0 0
      %2378 = vperm.xlu0 %2377, %v2206
      %v2379 = vpop.permute.xlu0 %2378
      %2382 = vset.pattern.permute.xlu0 0
      %2383 = vperm.xlu0 %2382, %v2209
      %v2384 = vpop.permute.xlu0 %2383
      %2387 = vset.pattern.permute.xlu0 0
      %2388 = vperm.xlu0 %2387, %v2214
      %v2389 = vpop.permute.xlu0 %2388
      %2392 = vset.pattern.permute.xlu0 0
      %2393 = vperm.xlu0 %2392, %v2217
      %v2394 = vpop.permute.xlu0 %2393
      %2397 = vset.pattern.permute.xlu0 0
      %2398 = vperm.xlu0 %2397, %v2222
      %v2399 = vpop.permute.xlu0 %2398
      %2402 = vset.pattern.permute.xlu0 0
      %2403 = vperm.xlu0 %2402, %v2225
      %v2404 = vpop.permute.xlu0 %2403
      %2407 = vset.pattern.permute.xlu0 0
      %2408 = vperm.xlu0 %2407, %v2230
      %v2409 = vpop.permute.xlu0 %2408
      %2412 = vset.pattern.permute.xlu0 0
      %2413 = vperm.xlu0 %2412, %v2233
      %v2414 = vpop.permute.xlu0 %2413
      %2417 = vset.pattern.permute.xlu0 0
      %2418 = vperm.xlu0 %2417, %v2238
      %v2419 = vpop.permute.xlu0 %2418
      %2422 = vset.pattern.permute.xlu0 0
      %2423 = vperm.xlu0 %2422, %v2241
      %v2424 = vpop.permute.xlu0 %2423
      %2427 = vset.pattern.permute.xlu0 0
      %2428 = vperm.xlu0 %2427, %v2246
      %v2429 = vpop.permute.xlu0 %2428
      %2432 = vset.pattern.permute.xlu0 0
      %2433 = vperm.xlu0 %2432, %v2249
      %v2434 = vpop.permute.xlu0 %2433
      %2437 = vset.pattern.permute.xlu0 0
      %2438 = vperm.xlu0 %2437, %v2254
      %v2439 = vpop.permute.xlu0 %2438
      %2442 = vset.pattern.permute.xlu0 0
      %2443 = vperm.xlu0 %2442, %v2257
      %v2444 = vpop.permute.xlu0 %2443
      %2447 = vset.pattern.permute.xlu0 0
      %2448 = vperm.xlu0 %2447, %v2262
      %v2449 = vpop.permute.xlu0 %2448
      %2452 = vset.pattern.permute.xlu0 0
      %2453 = vperm.xlu0 %2452, %v2265
      %v2454 = vpop.permute.xlu0 %2453
      %2457 = vset.pattern.permute.xlu0 0
      %2458 = vperm.xlu0 %2457, %v2270
      %v2459 = vpop.permute.xlu0 %2458
      %2462 = vset.pattern.permute.xlu0 0
      %2463 = vperm.xlu0 %2462, %v2273
      %v2464 = vpop.permute.xlu0 %2463
      %2467 = vset.pattern.permute.xlu0 0
      %2468 = vperm.xlu0 %2467, %v2278
      %v2469 = vpop.permute.xlu0 %2468
      %2472 = vset.pattern.permute.xlu0 0
      %2473 = vperm.xlu0 %2472, %v2281
      %v2474 = vpop.permute.xlu0 %2473
      %2477 = vset.pattern.permute.xlu0 0
      %2478 = vperm.xlu0 %2477, %v2286
      %v2479 = vpop.permute.xlu0 %2478
      %2482 = vset.pattern.permute.xlu0 0
      %2483 = vperm.xlu0 %2482, %v2289
      %v2484 = vpop.permute.xlu0 %2483
      %2487 = vset.pattern.permute.xlu0 0
      %2488 = vperm.xlu0 %2487, %v2294
      %v2489 = vpop.permute.xlu0 %2488
      %2492 = vset.pattern.permute.xlu0 0
      %2493 = vperm.xlu0 %2492, %v2297
      %v2494 = vpop.permute.xlu0 %2493
      %v2496 = vlaneseq
      %v2497 = vshrl.u32 %v2496, 7
      %v2498 = vsub.s32 0, %v2497
      %v2499 = vrot.slane %v2340, %v2498
      %v2500 = vlaneseq
      %v2501 = vshrl.u32 %v2500, 7
      %v2502 = vsub.s32 0, %v2501
      %v2503 = vrot.slane %v2342, %v2502
      %v2504 = vadd.f32 %v2349, %v2499
      %v2505 = vadd.f32 %v2349, %v2503
      %v2506 = vadd.f32 %v2354, %v2499
      %v2507 = vadd.f32 %v2354, %v2503
      %v2508 = vadd.f32 %v2359, %v2499
      %v2509 = vadd.f32 %v2359, %v2503
      %v2510 = vadd.f32 %v2364, %v2499
      %v2511 = vadd.f32 %v2364, %v2503
      %v2512 = vadd.f32 %v2369, %v2499
      %v2513 = vadd.f32 %v2369, %v2503
      %v2514 = vadd.f32 %v2374, %v2499
      %v2515 = vadd.f32 %v2374, %v2503
      %v2516 = vadd.f32 %v2379, %v2499
      %v2517 = vadd.f32 %v2379, %v2503
      %v2518 = vadd.f32 %v2384, %v2499
      %v2519 = vadd.f32 %v2384, %v2503
      %v2520 = vadd.f32 %v2389, %v2499
      %v2521 = vadd.f32 %v2389, %v2503
      %v2522 = vadd.f32 %v2394, %v2499
      %v2523 = vadd.f32 %v2394, %v2503
      %v2524 = vadd.f32 %v2399, %v2499
      %v2525 = vadd.f32 %v2399, %v2503
      %v2526 = vadd.f32 %v2404, %v2499
      %v2527 = vadd.f32 %v2404, %v2503
      %v2528 = vadd.f32 %v2409, %v2499
      %v2529 = vadd.f32 %v2409, %v2503
      %v2530 = vadd.f32 %v2414, %v2499
      %v2531 = vadd.f32 %v2414, %v2503
      %v2532 = vadd.f32 %v2419, %v2499
      %v2533 = vadd.f32 %v2419, %v2503
      %v2534 = vadd.f32 %v2424, %v2499
      %v2535 = vadd.f32 %v2424, %v2503
      %v2536 = vadd.f32 %v2429, %v2499
      %v2537 = vadd.f32 %v2429, %v2503
      %v2538 = vadd.f32 %v2434, %v2499
      %v2539 = vadd.f32 %v2434, %v2503
      %v2540 = vadd.f32 %v2439, %v2499
      %v2541 = vadd.f32 %v2439, %v2503
      %v2542 = vadd.f32 %v2444, %v2499
      %v2543 = vadd.f32 %v2444, %v2503
      %v2544 = vadd.f32 %v2449, %v2499
      %v2545 = vadd.f32 %v2449, %v2503
      %v2546 = vadd.f32 %v2454, %v2499
      %v2547 = vadd.f32 %v2454, %v2503
      %v2548 = vadd.f32 %v2459, %v2499
      %v2549 = vadd.f32 %v2459, %v2503
      %v2550 = vadd.f32 %v2464, %v2499
      %v2551 = vadd.f32 %v2464, %v2503
      %v2552 = vadd.f32 %v2469, %v2499
      %v2553 = vadd.f32 %v2469, %v2503
      %v2554 = vadd.f32 %v2474, %v2499
      %v2555 = vadd.f32 %v2474, %v2503
      %v2556 = vadd.f32 %v2479, %v2499
      %v2557 = vadd.f32 %v2479, %v2503
      %v2558 = vadd.f32 %v2484, %v2499
      %v2559 = vadd.f32 %v2484, %v2503
      %v2560 = vadd.f32 %v2489, %v2499
      %v2561 = vadd.f32 %v2489, %v2503
      %v2562 = vadd.f32 %v2494, %v2499
      %v2563 = vadd.f32 %v2494, %v2503
      %vm2564 = vcmp.gt.f32.partialorder %v2504, 0.0
      %vm2565 = vcmp.gt.f32.partialorder %v2505, 0.0
      %vm2566 = vcmp.gt.f32.partialorder %v2506, 0.0
      %vm2567 = vcmp.gt.f32.partialorder %v2507, 0.0
      %vm2568 = vcmp.gt.f32.partialorder %v2508, 0.0
      %vm2569 = vcmp.gt.f32.partialorder %v2509, 0.0
      %vm2570 = vcmp.gt.f32.partialorder %v2510, 0.0
      %vm2571 = vcmp.gt.f32.partialorder %v2511, 0.0
      %vm2572 = vcmp.gt.f32.partialorder %v2512, 0.0
      %vm2573 = vcmp.gt.f32.partialorder %v2513, 0.0
      %vm2574 = vcmp.gt.f32.partialorder %v2514, 0.0
      %vm2575 = vcmp.gt.f32.partialorder %v2515, 0.0
      %vm2576 = vcmp.gt.f32.partialorder %v2516, 0.0
      %vm2577 = vcmp.gt.f32.partialorder %v2517, 0.0
      %vm2578 = vcmp.gt.f32.partialorder %v2518, 0.0
      %vm2579 = vcmp.gt.f32.partialorder %v2519, 0.0
      %vm2580 = vcmp.gt.f32.partialorder %v2520, 0.0
      %vm2581 = vcmp.gt.f32.partialorder %v2521, 0.0
      %vm2582 = vcmp.gt.f32.partialorder %v2522, 0.0
      %vm2583 = vcmp.gt.f32.partialorder %v2523, 0.0
      %vm2584 = vcmp.gt.f32.partialorder %v2524, 0.0
      %vm2585 = vcmp.gt.f32.partialorder %v2525, 0.0
      %vm2586 = vcmp.gt.f32.partialorder %v2526, 0.0
      %vm2587 = vcmp.gt.f32.partialorder %v2527, 0.0
      %vm2588 = vcmp.gt.f32.partialorder %v2528, 0.0
      %vm2589 = vcmp.gt.f32.partialorder %v2529, 0.0
      %vm2590 = vcmp.gt.f32.partialorder %v2530, 0.0
      %vm2591 = vcmp.gt.f32.partialorder %v2531, 0.0
      %vm2592 = vcmp.gt.f32.partialorder %v2532, 0.0
      %vm2593 = vcmp.gt.f32.partialorder %v2533, 0.0
      %vm2594 = vcmp.gt.f32.partialorder %v2534, 0.0
      %vm2595 = vcmp.gt.f32.partialorder %v2535, 0.0
      %vm2596 = vcmp.gt.f32.partialorder %v2536, 0.0
      %vm2597 = vcmp.gt.f32.partialorder %v2537, 0.0
      %vm2598 = vcmp.gt.f32.partialorder %v2538, 0.0
      %vm2599 = vcmp.gt.f32.partialorder %v2539, 0.0
      %vm2600 = vcmp.gt.f32.partialorder %v2540, 0.0
      %vm2601 = vcmp.gt.f32.partialorder %v2541, 0.0
      %vm2602 = vcmp.gt.f32.partialorder %v2542, 0.0
      %vm2603 = vcmp.gt.f32.partialorder %v2543, 0.0
      %vm2604 = vcmp.gt.f32.partialorder %v2544, 0.0
      %vm2605 = vcmp.gt.f32.partialorder %v2545, 0.0
      %vm2606 = vcmp.gt.f32.partialorder %v2546, 0.0
      %vm2607 = vcmp.gt.f32.partialorder %v2547, 0.0
      %vm2608 = vcmp.gt.f32.partialorder %v2548, 0.0
      %vm2609 = vcmp.gt.f32.partialorder %v2549, 0.0
      %vm2610 = vcmp.gt.f32.partialorder %v2550, 0.0
      %vm2611 = vcmp.gt.f32.partialorder %v2551, 0.0
      %vm2612 = vcmp.gt.f32.partialorder %v2552, 0.0
      %vm2613 = vcmp.gt.f32.partialorder %v2553, 0.0
      %vm2614 = vcmp.gt.f32.partialorder %v2554, 0.0
      %vm2615 = vcmp.gt.f32.partialorder %v2555, 0.0
      %vm2616 = vcmp.gt.f32.partialorder %v2556, 0.0
      %vm2617 = vcmp.gt.f32.partialorder %v2557, 0.0
      %vm2618 = vcmp.gt.f32.partialorder %v2558, 0.0
      %vm2619 = vcmp.gt.f32.partialorder %v2559, 0.0
      %vm2620 = vcmp.gt.f32.partialorder %v2560, 0.0
      %vm2621 = vcmp.gt.f32.partialorder %v2561, 0.0
      %vm2622 = vcmp.gt.f32.partialorder %v2562, 0.0
      %vm2623 = vcmp.gt.f32.partialorder %v2563, 0.0
      %v2624 = vmul.f32 %v2504, 0.2
      %v2625 = vmul.f32 %v2505, 0.2
      %v2626 = vmul.f32 %v2506, 0.2
      %v2627 = vmul.f32 %v2507, 0.2
      %v2628 = vmul.f32 %v2508, 0.2
      %v2629 = vmul.f32 %v2509, 0.2
      %v2630 = vmul.f32 %v2510, 0.2
      %v2631 = vmul.f32 %v2511, 0.2
      %v2632 = vmul.f32 %v2512, 0.2
      %v2633 = vmul.f32 %v2513, 0.2
      %v2634 = vmul.f32 %v2514, 0.2
      %v2635 = vmul.f32 %v2515, 0.2
      %v2636 = vmul.f32 %v2516, 0.2
      %v2637 = vmul.f32 %v2517, 0.2
      %v2638 = vmul.f32 %v2518, 0.2
      %v2639 = vmul.f32 %v2519, 0.2
      %v2640 = vmul.f32 %v2520, 0.2
      %v2641 = vmul.f32 %v2521, 0.2
      %v2642 = vmul.f32 %v2522, 0.2
      %v2643 = vmul.f32 %v2523, 0.2
      %v2644 = vmul.f32 %v2524, 0.2
      %v2645 = vmul.f32 %v2525, 0.2
      %v2646 = vmul.f32 %v2526, 0.2
      %v2647 = vmul.f32 %v2527, 0.2
      %v2648 = vmul.f32 %v2528, 0.2
      %v2649 = vmul.f32 %v2529, 0.2
      %v2650 = vmul.f32 %v2530, 0.2
      %v2651 = vmul.f32 %v2531, 0.2
      %v2652 = vmul.f32 %v2532, 0.2
      %v2653 = vmul.f32 %v2533, 0.2
      %v2654 = vmul.f32 %v2534, 0.2
      %v2655 = vmul.f32 %v2535, 0.2
      %v2656 = vmul.f32 %v2536, 0.2
      %v2657 = vmul.f32 %v2537, 0.2
      %v2658 = vmul.f32 %v2538, 0.2
      %v2659 = vmul.f32 %v2539, 0.2
      %v2660 = vmul.f32 %v2540, 0.2
      %v2661 = vmul.f32 %v2541, 0.2
      %v2662 = vmul.f32 %v2542, 0.2
      %v2663 = vmul.f32 %v2543, 0.2
      %v2664 = vmul.f32 %v2544, 0.2
      %v2665 = vmul.f32 %v2545, 0.2
      %v2666 = vmul.f32 %v2546, 0.2
      %v2667 = vmul.f32 %v2547, 0.2
      %v2668 = vmul.f32 %v2548, 0.2
      %v2669 = vmul.f32 %v2549, 0.2
      %v2670 = vmul.f32 %v2550, 0.2
      %v2671 = vmul.f32 %v2551, 0.2
      %v2672 = vmul.f32 %v2552, 0.2
      %v2673 = vmul.f32 %v2553, 0.2
      %v2674 = vmul.f32 %v2554, 0.2
      %v2675 = vmul.f32 %v2555, 0.2
      %v2676 = vmul.f32 %v2556, 0.2
      %v2677 = vmul.f32 %v2557, 0.2
      %v2678 = vmul.f32 %v2558, 0.2
      %v2679 = vmul.f32 %v2559, 0.2
      %v2680 = vmul.f32 %v2560, 0.2
      %v2681 = vmul.f32 %v2561, 0.2
      %v2682 = vmul.f32 %v2562, 0.2
      %v2683 = vmul.f32 %v2563, 0.2
      %v2684 = vsel %vm2564, %v2504, %v2624
      %v2685 = vsel %vm2565, %v2505, %v2625
      %v2686 = vsel %vm2566, %v2506, %v2626
      %v2687 = vsel %vm2567, %v2507, %v2627
      %v2688 = vsel %vm2568, %v2508, %v2628
      %v2689 = vsel %vm2569, %v2509, %v2629
      %v2690 = vsel %vm2570, %v2510, %v2630
      %v2691 = vsel %vm2571, %v2511, %v2631
      %v2692 = vsel %vm2572, %v2512, %v2632
      %v2693 = vsel %vm2573, %v2513, %v2633
      %v2694 = vsel %vm2574, %v2514, %v2634
      %v2695 = vsel %vm2575, %v2515, %v2635
      %v2696 = vsel %vm2576, %v2516, %v2636
      %v2697 = vsel %vm2577, %v2517, %v2637
      %v2698 = vsel %vm2578, %v2518, %v2638
      %v2699 = vsel %vm2579, %v2519, %v2639
      %v2700 = vsel %vm2580, %v2520, %v2640
      %v2701 = vsel %vm2581, %v2521, %v2641
      %v2702 = vsel %vm2582, %v2522, %v2642
      %v2703 = vsel %vm2583, %v2523, %v2643
      %v2704 = vsel %vm2584, %v2524, %v2644
      %v2705 = vsel %vm2585, %v2525, %v2645
      %v2706 = vsel %vm2586, %v2526, %v2646
      %v2707 = vsel %vm2587, %v2527, %v2647
      %v2708 = vsel %vm2588, %v2528, %v2648
      %v2709 = vsel %vm2589, %v2529, %v2649
      %v2710 = vsel %vm2590, %v2530, %v2650
      %v2711 = vsel %vm2591, %v2531, %v2651
      %v2712 = vsel %vm2592, %v2532, %v2652
      %v2713 = vsel %vm2593, %v2533, %v2653
      %v2714 = vsel %vm2594, %v2534, %v2654
      %v2715 = vsel %vm2595, %v2535, %v2655
      %v2716 = vsel %vm2596, %v2536, %v2656
      %v2717 = vsel %vm2597, %v2537, %v2657
      %v2718 = vsel %vm2598, %v2538, %v2658
      %v2719 = vsel %vm2599, %v2539, %v2659
      %v2720 = vsel %vm2600, %v2540, %v2660
      %v2721 = vsel %vm2601, %v2541, %v2661
      %v2722 = vsel %vm2602, %v2542, %v2662
      %v2723 = vsel %vm2603, %v2543, %v2663
      %v2724 = vsel %vm2604, %v2544, %v2664
      %v2725 = vsel %vm2605, %v2545, %v2665
      %v2726 = vsel %vm2606, %v2546, %v2666
      %v2727 = vsel %vm2607, %v2547, %v2667
      %v2728 = vsel %vm2608, %v2548, %v2668
      %v2729 = vsel %vm2609, %v2549, %v2669
      %v2730 = vsel %vm2610, %v2550, %v2670
      %v2731 = vsel %vm2611, %v2551, %v2671
      %v2732 = vsel %vm2612, %v2552, %v2672
      %v2733 = vsel %vm2613, %v2553, %v2673
      %v2734 = vsel %vm2614, %v2554, %v2674
      %v2735 = vsel %vm2615, %v2555, %v2675
      %v2736 = vsel %vm2616, %v2556, %v2676
      %v2737 = vsel %vm2617, %v2557, %v2677
      %v2738 = vsel %vm2618, %v2558, %v2678
      %v2739 = vsel %vm2619, %v2559, %v2679
      %v2740 = vsel %vm2620, %v2560, %v2680
      %v2741 = vsel %vm2621, %v2561, %v2681
      %v2742 = vsel %vm2622, %v2562, %v2682
      %v2743 = vsel %vm2623, %v2563, %v2683
      %v2744 = vadd.f32 %v2684, %v729
      %v2745 = vadd.f32 %v2685, %v730
      %v2746 = vadd.f32 %v2686, %v731
      %v2747 = vadd.f32 %v2687, %v732
      %v2748 = vadd.f32 %v2688, %v733
      %v2749 = vadd.f32 %v2689, %v734
      %v2750 = vadd.f32 %v2690, %v735
      %v2751 = vadd.f32 %v2691, %v736
      %v2752 = vadd.f32 %v2692, %v737
      %v2753 = vadd.f32 %v2693, %v738
      %v2754 = vadd.f32 %v2694, %v739
      %v2755 = vadd.f32 %v2695, %v740
      %v2756 = vadd.f32 %v2696, %v741
      %v2757 = vadd.f32 %v2697, %v742
      %v2758 = vadd.f32 %v2698, %v743
      %v2759 = vadd.f32 %v2699, %v744
      %v2760 = vadd.f32 %v2700, %v745
      %v2761 = vadd.f32 %v2701, %v746
      %v2762 = vadd.f32 %v2702, %v747
      %v2763 = vadd.f32 %v2703, %v748
      %v2764 = vadd.f32 %v2704, %v749
      %v2765 = vadd.f32 %v2705, %v750
      %v2766 = vadd.f32 %v2706, %v751
      %v2767 = vadd.f32 %v2707, %v752
      %v2768 = vadd.f32 %v2708, %v753
      %v2769 = vadd.f32 %v2709, %v754
      %v2770 = vadd.f32 %v2710, %v755
      %v2771 = vadd.f32 %v2711, %v756
      %v2772 = vadd.f32 %v2712, %v757
      %v2773 = vadd.f32 %v2713, %v758
      %v2774 = vadd.f32 %v2714, %v759
      %v2775 = vadd.f32 %v2715, %v760
      %v2776 = vadd.f32 %v2716, %v761
      %v2777 = vadd.f32 %v2717, %v762
      %v2778 = vadd.f32 %v2718, %v763
      %v2779 = vadd.f32 %v2719, %v764
      %v2780 = vadd.f32 %v2720, %v765
      %v2781 = vadd.f32 %v2721, %v766
      %v2782 = vadd.f32 %v2722, %v767
      %v2783 = vadd.f32 %v2723, %v768
      %v2784 = vadd.f32 %v2724, %v769
      %v2785 = vadd.f32 %v2725, %v770
      %v2786 = vadd.f32 %v2726, %v771
      %v2787 = vadd.f32 %v2727, %v772
      %v2788 = vadd.f32 %v2728, %v773
      %v2789 = vadd.f32 %v2729, %v774
      %v2790 = vadd.f32 %v2730, %v775
      %v2791 = vadd.f32 %v2731, %v776
      %v2792 = vadd.f32 %v2732, %v777
      %v2793 = vadd.f32 %v2733, %v778
      %v2794 = vadd.f32 %v2734, %v779
      %v2795 = vadd.f32 %v2735, %v780
      %v2796 = vadd.f32 %v2736, %v781
      %v2797 = vadd.f32 %v2737, %v782
      %v2798 = vadd.f32 %v2738, %v783
      %v2799 = vadd.f32 %v2739, %v784
      %v2800 = vadd.f32 %v2740, %v785
      %v2801 = vadd.f32 %v2741, %v786
      %v2802 = vadd.f32 %v2742, %v787
      %v2803 = vadd.f32 %v2743, %v788
      %v2804 = vsel %vm864, %v2745, -inf
      %v2805 = vmax.f32 %v2744, %v2804
      %2806 = vmax.xlane.f32.xlu0 %v2805
      %v2807 = vpop.xlane.xlu0 %2806
      %v2808 = vsel %vm864, %v2747, -inf
      %v2809 = vmax.f32 %v2746, %v2808
      %2810 = vmax.xlane.f32.xlu0 %v2809
      %v2811 = vpop.xlane.xlu0 %2810
      %v2812 = vsel %vm864, %v2749, -inf
      %v2813 = vmax.f32 %v2748, %v2812
      %2814 = vmax.xlane.f32.xlu0 %v2813
      %v2815 = vpop.xlane.xlu0 %2814
      %v2816 = vsel %vm864, %v2751, -inf
      %v2817 = vmax.f32 %v2750, %v2816
      %2818 = vmax.xlane.f32.xlu0 %v2817
      %v2819 = vpop.xlane.xlu0 %2818
      %v2820 = vsel %vm864, %v2753, -inf
      %v2821 = vmax.f32 %v2752, %v2820
      %2822 = vmax.xlane.f32.xlu0 %v2821
      %v2823 = vpop.xlane.xlu0 %2822
      %v2824 = vsel %vm864, %v2755, -inf
      %v2825 = vmax.f32 %v2754, %v2824
      %2826 = vmax.xlane.f32.xlu0 %v2825
      %v2827 = vpop.xlane.xlu0 %2826
      %v2828 = vsel %vm864, %v2757, -inf
      %v2829 = vmax.f32 %v2756, %v2828
      %2830 = vmax.xlane.f32.xlu0 %v2829
      %v2831 = vpop.xlane.xlu0 %2830
      %v2832 = vsel %vm864, %v2759, -inf
      %v2833 = vmax.f32 %v2758, %v2832
      %2834 = vmax.xlane.f32.xlu0 %v2833
      %v2835 = vpop.xlane.xlu0 %2834
      %v2836 = vsel %vm864, %v2761, -inf
      %v2837 = vmax.f32 %v2760, %v2836
      %2838 = vmax.xlane.f32.xlu0 %v2837
      %v2839 = vpop.xlane.xlu0 %2838
      %v2840 = vsel %vm864, %v2763, -inf
      %v2841 = vmax.f32 %v2762, %v2840
      %2842 = vmax.xlane.f32.xlu0 %v2841
      %v2843 = vpop.xlane.xlu0 %2842
      %v2844 = vsel %vm864, %v2765, -inf
      %v2845 = vmax.f32 %v2764, %v2844
      %2846 = vmax.xlane.f32.xlu0 %v2845
      %v2847 = vpop.xlane.xlu0 %2846
      %v2848 = vsel %vm864, %v2767, -inf
      %v2849 = vmax.f32 %v2766, %v2848
      %2850 = vmax.xlane.f32.xlu0 %v2849
      %v2851 = vpop.xlane.xlu0 %2850
      %v2852 = vsel %vm864, %v2769, -inf
      %v2853 = vmax.f32 %v2768, %v2852
      %2854 = vmax.xlane.f32.xlu0 %v2853
      %v2855 = vpop.xlane.xlu0 %2854
      %v2856 = vsel %vm864, %v2771, -inf
      %v2857 = vmax.f32 %v2770, %v2856
      %2858 = vmax.xlane.f32.xlu0 %v2857
      %v2859 = vpop.xlane.xlu0 %2858
      %v2860 = vsel %vm864, %v2773, -inf
      %v2861 = vmax.f32 %v2772, %v2860
      %2862 = vmax.xlane.f32.xlu0 %v2861
      %v2863 = vpop.xlane.xlu0 %2862
      %v2864 = vsel %vm864, %v2775, -inf
      %v2865 = vmax.f32 %v2774, %v2864
      %2866 = vmax.xlane.f32.xlu0 %v2865
      %v2867 = vpop.xlane.xlu0 %2866
      %v2868 = vsel %vm864, %v2777, -inf
      %v2869 = vmax.f32 %v2776, %v2868
      %2870 = vmax.xlane.f32.xlu0 %v2869
      %v2871 = vpop.xlane.xlu0 %2870
      %v2872 = vsel %vm864, %v2779, -inf
      %v2873 = vmax.f32 %v2778, %v2872
      %2874 = vmax.xlane.f32.xlu0 %v2873
      %v2875 = vpop.xlane.xlu0 %2874
      %v2876 = vsel %vm864, %v2781, -inf
      %v2877 = vmax.f32 %v2780, %v2876
      %2878 = vmax.xlane.f32.xlu0 %v2877
      %v2879 = vpop.xlane.xlu0 %2878
      %v2880 = vsel %vm864, %v2783, -inf
      %v2881 = vmax.f32 %v2782, %v2880
      %2882 = vmax.xlane.f32.xlu0 %v2881
      %v2883 = vpop.xlane.xlu0 %2882
      %v2884 = vsel %vm864, %v2785, -inf
      %v2885 = vmax.f32 %v2784, %v2884
      %2886 = vmax.xlane.f32.xlu0 %v2885
      %v2887 = vpop.xlane.xlu0 %2886
      %v2888 = vsel %vm864, %v2787, -inf
      %v2889 = vmax.f32 %v2786, %v2888
      %2890 = vmax.xlane.f32.xlu0 %v2889
      %v2891 = vpop.xlane.xlu0 %2890
      %v2892 = vsel %vm864, %v2789, -inf
      %v2893 = vmax.f32 %v2788, %v2892
      %2894 = vmax.xlane.f32.xlu0 %v2893
      %v2895 = vpop.xlane.xlu0 %2894
      %v2896 = vsel %vm864, %v2791, -inf
      %v2897 = vmax.f32 %v2790, %v2896
      %2898 = vmax.xlane.f32.xlu0 %v2897
      %v2899 = vpop.xlane.xlu0 %2898
      %v2900 = vsel %vm864, %v2793, -inf
      %v2901 = vmax.f32 %v2792, %v2900
      %2902 = vmax.xlane.f32.xlu0 %v2901
      %v2903 = vpop.xlane.xlu0 %2902
      %v2904 = vsel %vm864, %v2795, -inf
      %v2905 = vmax.f32 %v2794, %v2904
      %2906 = vmax.xlane.f32.xlu0 %v2905
      %v2907 = vpop.xlane.xlu0 %2906
      %v2908 = vsel %vm864, %v2797, -inf
      %v2909 = vmax.f32 %v2796, %v2908
      %2910 = vmax.xlane.f32.xlu0 %v2909
      %v2911 = vpop.xlane.xlu0 %2910
      %v2912 = vsel %vm864, %v2799, -inf
      %v2913 = vmax.f32 %v2798, %v2912
      %2914 = vmax.xlane.f32.xlu0 %v2913
      %v2915 = vpop.xlane.xlu0 %2914
      %v2916 = vsel %vm864, %v2801, -inf
      %v2917 = vmax.f32 %v2800, %v2916
      %2918 = vmax.xlane.f32.xlu0 %v2917
      %v2919 = vpop.xlane.xlu0 %2918
      %v2920 = vsel %vm864, %v2803, -inf
      %v2921 = vmax.f32 %v2802, %v2920
      %2922 = vmax.xlane.f32.xlu0 %v2921
      %v2923 = vpop.xlane.xlu0 %2922
      %v2924 = vsub.f32 %v2744, %v2807
      %v2925 = vsub.f32 %v2745, %v2807
      %v2926 = vsub.f32 %v2746, %v2811
      %v2927 = vsub.f32 %v2747, %v2811
      %v2928 = vsub.f32 %v2748, %v2815
      %v2929 = vsub.f32 %v2749, %v2815
      %v2930 = vsub.f32 %v2750, %v2819
      %v2931 = vsub.f32 %v2751, %v2819
      %v2932 = vsub.f32 %v2752, %v2823
      %v2933 = vsub.f32 %v2753, %v2823
      %v2934 = vsub.f32 %v2754, %v2827
      %v2935 = vsub.f32 %v2755, %v2827
      %v2936 = vsub.f32 %v2756, %v2831
      %v2937 = vsub.f32 %v2757, %v2831
      %v2938 = vsub.f32 %v2758, %v2835
      %v2939 = vsub.f32 %v2759, %v2835
      %v2940 = vsub.f32 %v2760, %v2839
      %v2941 = vsub.f32 %v2761, %v2839
      %v2942 = vsub.f32 %v2762, %v2843
      %v2943 = vsub.f32 %v2763, %v2843
      %v2944 = vsub.f32 %v2764, %v2847
      %v2945 = vsub.f32 %v2765, %v2847
      %v2946 = vsub.f32 %v2766, %v2851
      %v2947 = vsub.f32 %v2767, %v2851
      %v2948 = vsub.f32 %v2768, %v2855
      %v2949 = vsub.f32 %v2769, %v2855
      %v2950 = vsub.f32 %v2770, %v2859
      %v2951 = vsub.f32 %v2771, %v2859
      %v2952 = vsub.f32 %v2772, %v2863
      %v2953 = vsub.f32 %v2773, %v2863
      %v2954 = vsub.f32 %v2774, %v2867
      %v2955 = vsub.f32 %v2775, %v2867
      %v2956 = vsub.f32 %v2776, %v2871
      %v2957 = vsub.f32 %v2777, %v2871
      %v2958 = vsub.f32 %v2778, %v2875
      %v2959 = vsub.f32 %v2779, %v2875
      %v2960 = vsub.f32 %v2780, %v2879
      %v2961 = vsub.f32 %v2781, %v2879
      %v2962 = vsub.f32 %v2782, %v2883
      %v2963 = vsub.f32 %v2783, %v2883
      %v2964 = vsub.f32 %v2784, %v2887
      %v2965 = vsub.f32 %v2785, %v2887
      %v2966 = vsub.f32 %v2786, %v2891
      %v2967 = vsub.f32 %v2787, %v2891
      %v2968 = vsub.f32 %v2788, %v2895
      %v2969 = vsub.f32 %v2789, %v2895
      %v2970 = vsub.f32 %v2790, %v2899
      %v2971 = vsub.f32 %v2791, %v2899
      %v2972 = vsub.f32 %v2792, %v2903
      %v2973 = vsub.f32 %v2793, %v2903
      %v2974 = vsub.f32 %v2794, %v2907
      %v2975 = vsub.f32 %v2795, %v2907
      %v2976 = vsub.f32 %v2796, %v2911
      %v2977 = vsub.f32 %v2797, %v2911
      %v2978 = vsub.f32 %v2798, %v2915
      %v2979 = vsub.f32 %v2799, %v2915
      %v2980 = vsub.f32 %v2800, %v2919
      %v2981 = vsub.f32 %v2801, %v2919
      %v2982 = vsub.f32 %v2802, %v2923
      %v2983 = vsub.f32 %v2803, %v2923
      %v2984 = vmul.f32 %v2924, 1.442695
      %v2985 = vpow.pop %v2984
      %v2986 = vmul.f32 %v2925, 1.442695
      %v2987 = vpow.pop %v2986
      %v2988 = vmul.f32 %v2926, 1.442695
      %v2989 = vpow.pop %v2988
      %v2990 = vmul.f32 %v2927, 1.442695
      %v2991 = vpow.pop %v2990
      %v2992 = vmul.f32 %v2928, 1.442695
      %v2993 = vpow.pop %v2992
      %v2994 = vmul.f32 %v2929, 1.442695
      %v2995 = vpow.pop %v2994
      %v2996 = vmul.f32 %v2930, 1.442695
      %v2997 = vpow.pop %v2996
      %v2998 = vmul.f32 %v2931, 1.442695
      %v2999 = vpow.pop %v2998
      %v3000 = vmul.f32 %v2932, 1.442695
      %v3001 = vpow.pop %v3000
      %v3002 = vmul.f32 %v2933, 1.442695
      %v3003 = vpow.pop %v3002
      %v3004 = vmul.f32 %v2934, 1.442695
      %v3005 = vpow.pop %v3004
      %v3006 = vmul.f32 %v2935, 1.442695
      %v3007 = vpow.pop %v3006
      %v3008 = vmul.f32 %v2936, 1.442695
      %v3009 = vpow.pop %v3008
      %v3010 = vmul.f32 %v2937, 1.442695
      %v3011 = vpow.pop %v3010
      %v3012 = vmul.f32 %v2938, 1.442695
      %v3013 = vpow.pop %v3012
      %v3014 = vmul.f32 %v2939, 1.442695
      %v3015 = vpow.pop %v3014
      %v3016 = vmul.f32 %v2940, 1.442695
      %v3017 = vpow.pop %v3016
      %v3018 = vmul.f32 %v2941, 1.442695
      %v3019 = vpow.pop %v3018
      %v3020 = vmul.f32 %v2942, 1.442695
      %v3021 = vpow.pop %v3020
      %v3022 = vmul.f32 %v2943, 1.442695
      %v3023 = vpow.pop %v3022
      %v3024 = vmul.f32 %v2944, 1.442695
      %v3025 = vpow.pop %v3024
      %v3026 = vmul.f32 %v2945, 1.442695
      %v3027 = vpow.pop %v3026
      %v3028 = vmul.f32 %v2946, 1.442695
      %v3029 = vpow.pop %v3028
      %v3030 = vmul.f32 %v2947, 1.442695
      %v3031 = vpow.pop %v3030
      %v3032 = vmul.f32 %v2948, 1.442695
      %v3033 = vpow.pop %v3032
      %v3034 = vmul.f32 %v2949, 1.442695
      %v3035 = vpow.pop %v3034
      %v3036 = vmul.f32 %v2950, 1.442695
      %v3037 = vpow.pop %v3036
      %v3038 = vmul.f32 %v2951, 1.442695
      %v3039 = vpow.pop %v3038
      %v3040 = vmul.f32 %v2952, 1.442695
      %v3041 = vpow.pop %v3040
      %v3042 = vmul.f32 %v2953, 1.442695
      %v3043 = vpow.pop %v3042
      %v3044 = vmul.f32 %v2954, 1.442695
      %v3045 = vpow.pop %v3044
      %v3046 = vmul.f32 %v2955, 1.442695
      %v3047 = vpow.pop %v3046
      %v3048 = vmul.f32 %v2956, 1.442695
      %v3049 = vpow.pop %v3048
      %v3050 = vmul.f32 %v2957, 1.442695
      %v3051 = vpow.pop %v3050
      %v3052 = vmul.f32 %v2958, 1.442695
      %v3053 = vpow.pop %v3052
      %v3054 = vmul.f32 %v2959, 1.442695
      %v3055 = vpow.pop %v3054
      %v3056 = vmul.f32 %v2960, 1.442695
      %v3057 = vpow.pop %v3056
      %v3058 = vmul.f32 %v2961, 1.442695
      %v3059 = vpow.pop %v3058
      %v3060 = vmul.f32 %v2962, 1.442695
      %v3061 = vpow.pop %v3060
      %v3062 = vmul.f32 %v2963, 1.442695
      %v3063 = vpow.pop %v3062
      %v3064 = vmul.f32 %v2964, 1.442695
      %v3065 = vpow.pop %v3064
      %v3066 = vmul.f32 %v2965, 1.442695
      %v3067 = vpow.pop %v3066
      %v3068 = vmul.f32 %v2966, 1.442695
      %v3069 = vpow.pop %v3068
      %v3070 = vmul.f32 %v2967, 1.442695
      %v3071 = vpow.pop %v3070
      %v3072 = vmul.f32 %v2968, 1.442695
      %v3073 = vpow.pop %v3072
      %v3074 = vmul.f32 %v2969, 1.442695
      %v3075 = vpow.pop %v3074
      %v3076 = vmul.f32 %v2970, 1.442695
      %v3077 = vpow.pop %v3076
      %v3078 = vmul.f32 %v2971, 1.442695
      %v3079 = vpow.pop %v3078
      %v3080 = vmul.f32 %v2972, 1.442695
      %v3081 = vpow.pop %v3080
      %v3082 = vmul.f32 %v2973, 1.442695
      %v3083 = vpow.pop %v3082
      %v3084 = vmul.f32 %v2974, 1.442695
      %v3085 = vpow.pop %v3084
      %v3086 = vmul.f32 %v2975, 1.442695
      %v3087 = vpow.pop %v3086
      %v3088 = vmul.f32 %v2976, 1.442695
      %v3089 = vpow.pop %v3088
      %v3090 = vmul.f32 %v2977, 1.442695
      %v3091 = vpow.pop %v3090
      %v3092 = vmul.f32 %v2978, 1.442695
      %v3093 = vpow.pop %v3092
      %v3094 = vmul.f32 %v2979, 1.442695
      %v3095 = vpow.pop %v3094
      %v3096 = vmul.f32 %v2980, 1.442695
      %v3097 = vpow.pop %v3096
      %v3098 = vmul.f32 %v2981, 1.442695
      %v3099 = vpow.pop %v3098
      %v3100 = vmul.f32 %v2982, 1.442695
      %v3101 = vpow.pop %v3100
      %v3102 = vmul.f32 %v2983, 1.442695
      %v3103 = vpow.pop %v3102
      %v3104 = vsel %vm864, %v2987, 0.0
      %v3105 = vadd.f32 %v2985, %v3104
      %3106 = vadd.xlane.f32.xlu0 %v3105
      %v3107 = vpop.xlane.xlu0 %3106
      %v3108 = vsel %vm864, %v2991, 0.0
      %v3109 = vadd.f32 %v2989, %v3108
      %3110 = vadd.xlane.f32.xlu0 %v3109
      %v3111 = vpop.xlane.xlu0 %3110
      %v3112 = vsel %vm864, %v2995, 0.0
      %v3113 = vadd.f32 %v2993, %v3112
      %3114 = vadd.xlane.f32.xlu0 %v3113
      %v3115 = vpop.xlane.xlu0 %3114
      %v3116 = vsel %vm864, %v2999, 0.0
      %v3117 = vadd.f32 %v2997, %v3116
      %3118 = vadd.xlane.f32.xlu0 %v3117
      %v3119 = vpop.xlane.xlu0 %3118
      %v3120 = vsel %vm864, %v3003, 0.0
      %v3121 = vadd.f32 %v3001, %v3120
      %3122 = vadd.xlane.f32.xlu0 %v3121
      %v3123 = vpop.xlane.xlu0 %3122
      %v3124 = vsel %vm864, %v3007, 0.0
      %v3125 = vadd.f32 %v3005, %v3124
      %3126 = vadd.xlane.f32.xlu0 %v3125
      %v3127 = vpop.xlane.xlu0 %3126
      %v3128 = vsel %vm864, %v3011, 0.0
      %v3129 = vadd.f32 %v3009, %v3128
      %3130 = vadd.xlane.f32.xlu0 %v3129
      %v3131 = vpop.xlane.xlu0 %3130
      %v3132 = vsel %vm864, %v3015, 0.0
      %v3133 = vadd.f32 %v3013, %v3132
      %3134 = vadd.xlane.f32.xlu0 %v3133
      %v3135 = vpop.xlane.xlu0 %3134
      %v3136 = vsel %vm864, %v3019, 0.0
      %v3137 = vadd.f32 %v3017, %v3136
      %3138 = vadd.xlane.f32.xlu0 %v3137
      %v3139 = vpop.xlane.xlu0 %3138
      %v3140 = vsel %vm864, %v3023, 0.0
      %v3141 = vadd.f32 %v3021, %v3140
      %3142 = vadd.xlane.f32.xlu0 %v3141
      %v3143 = vpop.xlane.xlu0 %3142
      %v3144 = vsel %vm864, %v3027, 0.0
      %v3145 = vadd.f32 %v3025, %v3144
      %3146 = vadd.xlane.f32.xlu0 %v3145
      %v3147 = vpop.xlane.xlu0 %3146
      %v3148 = vsel %vm864, %v3031, 0.0
      %v3149 = vadd.f32 %v3029, %v3148
      %3150 = vadd.xlane.f32.xlu0 %v3149
      %v3151 = vpop.xlane.xlu0 %3150
      %v3152 = vsel %vm864, %v3035, 0.0
      %v3153 = vadd.f32 %v3033, %v3152
      %3154 = vadd.xlane.f32.xlu0 %v3153
      %v3155 = vpop.xlane.xlu0 %3154
      %v3156 = vsel %vm864, %v3039, 0.0
      %v3157 = vadd.f32 %v3037, %v3156
      %3158 = vadd.xlane.f32.xlu0 %v3157
      %v3159 = vpop.xlane.xlu0 %3158
      %v3160 = vsel %vm864, %v3043, 0.0
      %v3161 = vadd.f32 %v3041, %v3160
      %3162 = vadd.xlane.f32.xlu0 %v3161
      %v3163 = vpop.xlane.xlu0 %3162
      %v3164 = vsel %vm864, %v3047, 0.0
      %v3165 = vadd.f32 %v3045, %v3164
      %3166 = vadd.xlane.f32.xlu0 %v3165
      %v3167 = vpop.xlane.xlu0 %3166
      %v3168 = vsel %vm864, %v3051, 0.0
      %v3169 = vadd.f32 %v3049, %v3168
      %3170 = vadd.xlane.f32.xlu0 %v3169
      %v3171 = vpop.xlane.xlu0 %3170
      %v3172 = vsel %vm864, %v3055, 0.0
      %v3173 = vadd.f32 %v3053, %v3172
      %3174 = vadd.xlane.f32.xlu0 %v3173
      %v3175 = vpop.xlane.xlu0 %3174
      %v3176 = vsel %vm864, %v3059, 0.0
      %v3177 = vadd.f32 %v3057, %v3176
      %3178 = vadd.xlane.f32.xlu0 %v3177
      %v3179 = vpop.xlane.xlu0 %3178
      %v3180 = vsel %vm864, %v3063, 0.0
      %v3181 = vadd.f32 %v3061, %v3180
      %3182 = vadd.xlane.f32.xlu0 %v3181
      %v3183 = vpop.xlane.xlu0 %3182
      %v3184 = vsel %vm864, %v3067, 0.0
      %v3185 = vadd.f32 %v3065, %v3184
      %3186 = vadd.xlane.f32.xlu0 %v3185
      %v3187 = vpop.xlane.xlu0 %3186
      %v3188 = vsel %vm864, %v3071, 0.0
      %v3189 = vadd.f32 %v3069, %v3188
      %3190 = vadd.xlane.f32.xlu0 %v3189
      %v3191 = vpop.xlane.xlu0 %3190
      %v3192 = vsel %vm864, %v3075, 0.0
      %v3193 = vadd.f32 %v3073, %v3192
      %3194 = vadd.xlane.f32.xlu0 %v3193
      %v3195 = vpop.xlane.xlu0 %3194
      %v3196 = vsel %vm864, %v3079, 0.0
      %v3197 = vadd.f32 %v3077, %v3196
      %3198 = vadd.xlane.f32.xlu0 %v3197
      %v3199 = vpop.xlane.xlu0 %3198
      %v3200 = vsel %vm864, %v3083, 0.0
      %v3201 = vadd.f32 %v3081, %v3200
      %3202 = vadd.xlane.f32.xlu0 %v3201
      %v3203 = vpop.xlane.xlu0 %3202
      %v3204 = vsel %vm864, %v3087, 0.0
      %v3205 = vadd.f32 %v3085, %v3204
      %3206 = vadd.xlane.f32.xlu0 %v3205
      %v3207 = vpop.xlane.xlu0 %3206
      %v3208 = vsel %vm864, %v3091, 0.0
      %v3209 = vadd.f32 %v3089, %v3208
      %3210 = vadd.xlane.f32.xlu0 %v3209
      %v3211 = vpop.xlane.xlu0 %3210
      %v3212 = vsel %vm864, %v3095, 0.0
      %v3213 = vadd.f32 %v3093, %v3212
      %3214 = vadd.xlane.f32.xlu0 %v3213
      %v3215 = vpop.xlane.xlu0 %3214
      %v3216 = vsel %vm864, %v3099, 0.0
      %v3217 = vadd.f32 %v3097, %v3216
      %3218 = vadd.xlane.f32.xlu0 %v3217
      %v3219 = vpop.xlane.xlu0 %3218
      %v3220 = vsel %vm864, %v3103, 0.0
      %v3221 = vadd.f32 %v3101, %v3220
      %3222 = vadd.xlane.f32.xlu0 %v3221
      %v3223 = vpop.xlane.xlu0 %3222
      %v3224 = vrcp.pop %v3107
      %v3225 = vrcp.pop %v3111
      %v3226 = vrcp.pop %v3115
      %v3227 = vrcp.pop %v3119
      %v3228 = vrcp.pop %v3123
      %v3229 = vrcp.pop %v3127
      %v3230 = vrcp.pop %v3131
      %v3231 = vrcp.pop %v3135
      %v3232 = vrcp.pop %v3139
      %v3233 = vrcp.pop %v3143
      %v3234 = vrcp.pop %v3147
      %v3235 = vrcp.pop %v3151
      %v3236 = vrcp.pop %v3155
      %v3237 = vrcp.pop %v3159
      %v3238 = vrcp.pop %v3163
      %v3239 = vrcp.pop %v3167
      %v3240 = vrcp.pop %v3171
      %v3241 = vrcp.pop %v3175
      %v3242 = vrcp.pop %v3179
      %v3243 = vrcp.pop %v3183
      %v3244 = vrcp.pop %v3187
      %v3245 = vrcp.pop %v3191
      %v3246 = vrcp.pop %v3195
      %v3247 = vrcp.pop %v3199
      %v3248 = vrcp.pop %v3203
      %v3249 = vrcp.pop %v3207
      %v3250 = vrcp.pop %v3211
      %v3251 = vrcp.pop %v3215
      %v3252 = vrcp.pop %v3219
      %v3253 = vrcp.pop %v3223
      %v3254 = vmul.f32 %v2985, %v3224
      %v3255 = vmul.f32 %v2987, %v3224
      %v3256 = vmul.f32 %v2989, %v3225
      %v3257 = vmul.f32 %v2991, %v3225
      %v3258 = vmul.f32 %v2993, %v3226
      %v3259 = vmul.f32 %v2995, %v3226
      %v3260 = vmul.f32 %v2997, %v3227
      %v3261 = vmul.f32 %v2999, %v3227
      %v3262 = vmul.f32 %v3001, %v3228
      %v3263 = vmul.f32 %v3003, %v3228
      %v3264 = vmul.f32 %v3005, %v3229
      %v3265 = vmul.f32 %v3007, %v3229
      %v3266 = vmul.f32 %v3009, %v3230
      %v3267 = vmul.f32 %v3011, %v3230
      %v3268 = vmul.f32 %v3013, %v3231
      %v3269 = vmul.f32 %v3015, %v3231
      %v3270 = vmul.f32 %v3017, %v3232
      %v3271 = vmul.f32 %v3019, %v3232
      %v3272 = vmul.f32 %v3021, %v3233
      %v3273 = vmul.f32 %v3023, %v3233
      %v3274 = vmul.f32 %v3025, %v3234
      %v3275 = vmul.f32 %v3027, %v3234
      %v3276 = vmul.f32 %v3029, %v3235
      %v3277 = vmul.f32 %v3031, %v3235
      %v3278 = vmul.f32 %v3033, %v3236
      %v3279 = vmul.f32 %v3035, %v3236
      %v3280 = vmul.f32 %v3037, %v3237
      %v3281 = vmul.f32 %v3039, %v3237
      %v3282 = vmul.f32 %v3041, %v3238
      %v3283 = vmul.f32 %v3043, %v3238
      %v3284 = vmul.f32 %v3045, %v3239
      %v3285 = vmul.f32 %v3047, %v3239
      %v3286 = vmul.f32 %v3049, %v3240
      %v3287 = vmul.f32 %v3051, %v3240
      %v3288 = vmul.f32 %v3053, %v3241
      %v3289 = vmul.f32 %v3055, %v3241
      %v3290 = vmul.f32 %v3057, %v3242
      %v3291 = vmul.f32 %v3059, %v3242
      %v3292 = vmul.f32 %v3061, %v3243
      %v3293 = vmul.f32 %v3063, %v3243
      %v3294 = vmul.f32 %v3065, %v3244
      %v3295 = vmul.f32 %v3067, %v3244
      %v3296 = vmul.f32 %v3069, %v3245
      %v3297 = vmul.f32 %v3071, %v3245
      %v3298 = vmul.f32 %v3073, %v3246
      %v3299 = vmul.f32 %v3075, %v3246
      %v3300 = vmul.f32 %v3077, %v3247
      %v3301 = vmul.f32 %v3079, %v3247
      %v3302 = vmul.f32 %v3081, %v3248
      %v3303 = vmul.f32 %v3083, %v3248
      %v3304 = vmul.f32 %v3085, %v3249
      %v3305 = vmul.f32 %v3087, %v3249
      %v3306 = vmul.f32 %v3089, %v3250
      %v3307 = vmul.f32 %v3091, %v3250
      %v3308 = vmul.f32 %v3093, %v3251
      %v3309 = vmul.f32 %v3095, %v3251
      %v3310 = vmul.f32 %v3097, %v3252
      %v3311 = vmul.f32 %v3099, %v3252
      %v3312 = vmul.f32 %v3101, %v3253
      %v3313 = vmul.f32 %v3103, %v3253
      %v3314 = vpack.c.bf16 %v3256, %v3254
      %v3315 = vpack.c.bf16 %v3257, %v3255
      %v3316 = vpack.c.bf16 %v3260, %v3258
      %v3317 = vpack.c.bf16 %v3261, %v3259
      %v3318 = vpack.c.bf16 %v3264, %v3262
      %v3319 = vpack.c.bf16 %v3265, %v3263
      %v3320 = vpack.c.bf16 %v3268, %v3266
      %v3321 = vpack.c.bf16 %v3269, %v3267
      %v3322 = vpack.c.bf16 %v3272, %v3270
      %v3323 = vpack.c.bf16 %v3273, %v3271
      %v3324 = vpack.c.bf16 %v3276, %v3274
      %v3325 = vpack.c.bf16 %v3277, %v3275
      %v3326 = vpack.c.bf16 %v3280, %v3278
      %v3327 = vpack.c.bf16 %v3281, %v3279
      %v3328 = vpack.c.bf16 %v3284, %v3282
      %v3329 = vpack.c.bf16 %v3285, %v3283
      %v3330 = vpack.c.bf16 %v3288, %v3286
      %v3331 = vpack.c.bf16 %v3289, %v3287
      %v3332 = vpack.c.bf16 %v3292, %v3290
      %v3333 = vpack.c.bf16 %v3293, %v3291
      %v3334 = vpack.c.bf16 %v3296, %v3294
      %v3335 = vpack.c.bf16 %v3297, %v3295
      %v3336 = vpack.c.bf16 %v3300, %v3298
      %v3337 = vpack.c.bf16 %v3301, %v3299
      %v3338 = vpack.c.bf16 %v3304, %v3302
      %v3339 = vpack.c.bf16 %v3305, %v3303
      %v3340 = vpack.c.bf16 %v3308, %v3306
      %v3341 = vpack.c.bf16 %v3309, %v3307
      %v3342 = vpack.c.bf16 %v3312, %v3310
      %v3343 = vpack.c.bf16 %v3313, %v3311
      %v3344 = vld [vmem:[%s10] sm:$0x1]
      %v3346 = vlaneseq
      %v3347 = vshrl.u32 %v3346, 7
      %v3348 = vsub.s32 0, %v3347
      %v3349 = vrot.slane %v3344, %v3348
      %v3352 = vsel %vm864, %v3315, 0
      %v3355 = vsel %vm864, %v3317, 0
      %v3358 = vsel %vm864, %v3319, 0
      %v3361 = vsel %vm864, %v3321, 0
      %v3364 = vsel %vm864, %v3323, 0
      %v3367 = vsel %vm864, %v3325, 0
      %v3370 = vsel %vm864, %v3327, 0
      %v3373 = vsel %vm864, %v3329, 0
      %v3376 = vsel %vm864, %v3331, 0
      %v3379 = vsel %vm864, %v3333, 0
      %v3382 = vsel %vm864, %v3335, 0
      %v3385 = vsel %vm864, %v3337, 0
      %v3388 = vsel %vm864, %v3339, 0
      %v3391 = vsel %vm864, %v3341, 0
      %v3394 = vsel %vm864, %v3343, 0
      %3396 = vmatprep.subr.bf16.mxu0 0
      %3397 = vmatpush1.bf16.msra.mxu0 %v2081
      %3398 = vmatprep.subr.bf16.mxu0 0
      %3399 = vmatpush1.bf16.msra.mxu0 %v2082
      %3400 = vmatprep.subr.bf16.mxu0 0
      %3401 = vmatpush1.bf16.msra.mxu0 %v2083
      %3402 = vmatprep.subr.bf16.mxu0 0
      %3403 = vmatpush1.bf16.msra.mxu0 %v2084
      %3404 = vmatprep.subr.bf16.mxu0 0
      %3405 = vmatpush1.bf16.msra.mxu0 %v2085
      %3406 = vmatprep.subr.bf16.mxu0 0
      %3407 = vmatpush1.bf16.msra.mxu0 %v2086
      %3408 = vmatprep.subr.bf16.mxu0 0
      %3409 = vmatpush1.bf16.msra.mxu0 %v2087
      %3410 = vmatprep.subr.bf16.mxu0 0
      %3411 = vmatpush1.bf16.msra.mxu0 %v2088
      %3412 = vmatprep.subr.bf16.mxu0 0
      %3413 = vmatpush1.bf16.msra.mxu0 %v2089
      %3414 = vmatprep.subr.bf16.mxu0 0
      %3415 = vmatpush1.bf16.msra.mxu0 %v2090
      %3416 = vmatprep.subr.bf16.mxu0 0
      %3417 = vmatpush1.bf16.msra.mxu0 %v2091
      %3418 = vmatprep.subr.bf16.mxu0 0
      %3419 = vmatpush1.bf16.msra.mxu0 %v2092
      %3420 = vmatprep.subr.bf16.mxu0 0
      %3421 = vmatpush1.bf16.msra.mxu0 %v2093
      %3422 = vmatprep.subr.bf16.mxu0 0
      %3423 = vmatpush1.bf16.msra.mxu0 %v2094
      %3424 = vmatprep.subr.bf16.mxu0 0
      %3425 = vmatpush1.bf16.msra.mxu0 %v2095
      %3426 = vmatprep.subr.bf16.mxu0 0
      %3427 = vmatpush1.bf16.msra.mxu0 0
      %3428 = vmatprep.mubr.bf16.mxu0 %v3352
      %3429 = vmatmul.mubr.bf16.gmra.mrb[0].mxu0 %v3314
      %v3430 = vpop.f32.mrb[0].mxu0
      %v3431 = vadd.f32 %v3349, %v3430
      %v3432 = vpop.f32.mrb[0].mxu0
      %v3433 = vpop.f32.mrb[0].mxu0
      %v3434 = vadd.f32 %v3349, %v3433
      %v3435 = vpop.f32.mrb[0].mxu0
      %3436 = vmatprep.mubr.bf16.mxu0 %v3355
      %3437 = vmatmul.mubr.bf16.gmra.mrb[0].mxu0 %v3316
      %v3438 = vpop.f32.mrb[0].mxu0
      %v3439 = vadd.f32 %v3349, %v3438
      %v3440 = vpop.f32.mrb[0].mxu0
      %v3441 = vpop.f32.mrb[0].mxu0
      %v3442 = vadd.f32 %v3349, %v3441
      %v3443 = vpop.f32.mrb[0].mxu0
      %3444 = vmatprep.mubr.bf16.mxu0 %v3358
      %3445 = vmatmul.mubr.bf16.gmra.mrb[0].mxu0 %v3318
      %v3446 = vpop.f32.mrb[0].mxu0
      %v3447 = vadd.f32 %v3349, %v3446
      %v3448 = vpop.f32.mrb[0].mxu0
      %v3449 = vpop.f32.mrb[0].mxu0
      %v3450 = vadd.f32 %v3349, %v3449
      %v3451 = vpop.f32.mrb[0].mxu0
      %3452 = vmatprep.mubr.bf16.mxu0 %v3361
      %3453 = vmatmul.mubr.bf16.gmra.mrb[0].mxu0 %v3320
      %v3454 = vpop.f32.mrb[0].mxu0
      %v3455 = vadd.f32 %v3349, %v3454
      %v3456 = vpop.f32.mrb[0].mxu0
      %v3457 = vpop.f32.mrb[0].mxu0
      %v3458 = vadd.f32 %v3349, %v3457
      %v3459 = vpop.f32.mrb[0].mxu0
      %3460 = vmatprep.mubr.bf16.mxu0 %v3364
      %3461 = vmatmul.mubr.bf16.gmra.mrb[0].mxu0 %v3322
      %v3462 = vpop.f32.mrb[0].mxu0
      %v3463 = vadd.f32 %v3349, %v3462
      %v3464 = vpop.f32.mrb[0].mxu0
      %v3465 = vpop.f32.mrb[0].mxu0
      %v3466 = vadd.f32 %v3349, %v3465
      %v3467 = vpop.f32.mrb[0].mxu0
      %3468 = vmatprep.mubr.bf16.mxu0 %v3367
      %3469 = vmatmul.mubr.bf16.gmra.mrb[0].mxu0 %v3324
      %v3470 = vpop.f32.mrb[0].mxu0
      %v3471 = vadd.f32 %v3349, %v3470
      %v3472 = vpop.f32.mrb[0].mxu0
      %v3473 = vpop.f32.mrb[0].mxu0
      %v3474 = vadd.f32 %v3349, %v3473
      %v3475 = vpop.f32.mrb[0].mxu0
      %3476 = vmatprep.mubr.bf16.mxu0 %v3370
      %3477 = vmatmul.mubr.bf16.gmra.mrb[0].mxu0 %v3326
      %v3478 = vpop.f32.mrb[0].mxu0
      %v3479 = vadd.f32 %v3349, %v3478
      %v3480 = vpop.f32.mrb[0].mxu0
      %v3481 = vpop.f32.mrb[0].mxu0
      %v3482 = vadd.f32 %v3349, %v3481
      %v3483 = vpop.f32.mrb[0].mxu0
      %3484 = vmatprep.mubr.bf16.mxu0 %v3373
      %3485 = vmatmul.mubr.bf16.gmra.mrb[0].mxu0 %v3328
      %v3486 = vpop.f32.mrb[0].mxu0
      %v3487 = vadd.f32 %v3349, %v3486
      %v3488 = vpop.f32.mrb[0].mxu0
      %v3489 = vpop.f32.mrb[0].mxu0
      %v3490 = vadd.f32 %v3349, %v3489
      %v3491 = vpop.f32.mrb[0].mxu0
      %3492 = vmatprep.mubr.bf16.mxu0 %v3376
      %3493 = vmatmul.mubr.bf16.gmra.mrb[0].mxu0 %v3330
      %v3494 = vpop.f32.mrb[0].mxu0
      %v3495 = vadd.f32 %v3349, %v3494
      %v3496 = vpop.f32.mrb[0].mxu0
      %v3497 = vpop.f32.mrb[0].mxu0
      %v3498 = vadd.f32 %v3349, %v3497
      %v3499 = vpop.f32.mrb[0].mxu0
      %3500 = vmatprep.mubr.bf16.mxu0 %v3379
      %3501 = vmatmul.mubr.bf16.gmra.mrb[0].mxu0 %v3332
      %v3502 = vpop.f32.mrb[0].mxu0
      %v3503 = vadd.f32 %v3349, %v3502
      %v3504 = vpop.f32.mrb[0].mxu0
      %v3505 = vpop.f32.mrb[0].mxu0
      %v3506 = vadd.f32 %v3349, %v3505
      %v3507 = vpop.f32.mrb[0].mxu0
      %3508 = vmatprep.mubr.bf16.mxu0 %v3382
      %3509 = vmatmul.mubr.bf16.gmra.mrb[0].mxu0 %v3334
      %v3510 = vpop.f32.mrb[0].mxu0
      %v3511 = vadd.f32 %v3349, %v3510
      %v3512 = vpop.f32.mrb[0].mxu0
      %v3513 = vpop.f32.mrb[0].mxu0
      %v3514 = vadd.f32 %v3349, %v3513
      %v3515 = vpop.f32.mrb[0].mxu0
      %3516 = vmatprep.mubr.bf16.mxu0 %v3385
      %3517 = vmatmul.mubr.bf16.gmra.mrb[0].mxu0 %v3336
      %v3518 = vpop.f32.mrb[0].mxu0
      %v3519 = vadd.f32 %v3349, %v3518
      %v3520 = vpop.f32.mrb[0].mxu0
      %v3521 = vpop.f32.mrb[0].mxu0
      %v3522 = vadd.f32 %v3349, %v3521
      %v3523 = vpop.f32.mrb[0].mxu0
      %3524 = vmatprep.mubr.bf16.mxu0 %v3388
      %3525 = vmatmul.mubr.bf16.gmra.mrb[0].mxu0 %v3338
      %v3526 = vpop.f32.mrb[0].mxu0
      %v3527 = vadd.f32 %v3349, %v3526
      %v3528 = vpop.f32.mrb[0].mxu0
      %v3529 = vpop.f32.mrb[0].mxu0
      %v3530 = vadd.f32 %v3349, %v3529
      %v3531 = vpop.f32.mrb[0].mxu0
      %3532 = vmatprep.mubr.bf16.mxu0 %v3391
      %3533 = vmatmul.mubr.bf16.gmra.mrb[0].mxu0 %v3340
      %v3534 = vpop.f32.mrb[0].mxu0
      %v3535 = vadd.f32 %v3349, %v3534
      %v3536 = vpop.f32.mrb[0].mxu0
      %v3537 = vpop.f32.mrb[0].mxu0
      %v3538 = vadd.f32 %v3349, %v3537
      %v3539 = vpop.f32.mrb[0].mxu0
      %3540 = vmatprep.mubr.bf16.mxu0 %v3394
      %3541 = vmatmul.mubr.bf16.gmra.mrb[0].mxu0 %v3342
      %v3542 = vpop.f32.mrb[0].mxu0
      %v3543 = vadd.f32 %v3349, %v3542
      %v3544 = vpop.f32.mrb[0].mxu0
      %v3545 = vpop.f32.mrb[0].mxu0
      %v3546 = vadd.f32 %v3349, %v3545
      %v3547 = vpop.f32.mrb[0].mxu0
      %3548 = vdwg.mxu0
      %vm3549 = vcmp.gt.f32.partialorder %v3431, 0.0
      %vm3550 = vcmp.gt.f32.partialorder %v3434, 0.0
      %vm3551 = vcmp.gt.f32.partialorder %v3439, 0.0
      %vm3552 = vcmp.gt.f32.partialorder %v3442, 0.0
      %vm3553 = vcmp.gt.f32.partialorder %v3447, 0.0
      %vm3554 = vcmp.gt.f32.partialorder %v3450, 0.0
      %vm3555 = vcmp.gt.f32.partialorder %v3455, 0.0
      %vm3556 = vcmp.gt.f32.partialorder %v3458, 0.0
      %vm3557 = vcmp.gt.f32.partialorder %v3463, 0.0
      %vm3558 = vcmp.gt.f32.partialorder %v3466, 0.0
      %vm3559 = vcmp.gt.f32.partialorder %v3471, 0.0
      %vm3560 = vcmp.gt.f32.partialorder %v3474, 0.0
      %vm3561 = vcmp.gt.f32.partialorder %v3479, 0.0
      %vm3562 = vcmp.gt.f32.partialorder %v3482, 0.0
      %vm3563 = vcmp.gt.f32.partialorder %v3487, 0.0
      %vm3564 = vcmp.gt.f32.partialorder %v3490, 0.0
      %vm3565 = vcmp.gt.f32.partialorder %v3495, 0.0
      %vm3566 = vcmp.gt.f32.partialorder %v3498, 0.0
      %vm3567 = vcmp.gt.f32.partialorder %v3503, 0.0
      %vm3568 = vcmp.gt.f32.partialorder %v3506, 0.0
      %vm3569 = vcmp.gt.f32.partialorder %v3511, 0.0
      %vm3570 = vcmp.gt.f32.partialorder %v3514, 0.0
      %vm3571 = vcmp.gt.f32.partialorder %v3519, 0.0
      %vm3572 = vcmp.gt.f32.partialorder %v3522, 0.0
      %vm3573 = vcmp.gt.f32.partialorder %v3527, 0.0
      %vm3574 = vcmp.gt.f32.partialorder %v3530, 0.0
      %vm3575 = vcmp.gt.f32.partialorder %v3535, 0.0
      %vm3576 = vcmp.gt.f32.partialorder %v3538, 0.0
      %vm3577 = vcmp.gt.f32.partialorder %v3543, 0.0
      %vm3578 = vcmp.gt.f32.partialorder %v3546, 0.0
      %v3579 = vmul.f32 %v3431, 0.1
      %v3580 = vmul.f32 %v3434, 0.1
      %v3581 = vmul.f32 %v3439, 0.1
      %v3582 = vmul.f32 %v3442, 0.1
      %v3583 = vmul.f32 %v3447, 0.1
      %v3584 = vmul.f32 %v3450, 0.1
      %v3585 = vmul.f32 %v3455, 0.1
      %v3586 = vmul.f32 %v3458, 0.1
      %v3587 = vmul.f32 %v3463, 0.1
      %v3588 = vmul.f32 %v3466, 0.1
      %v3589 = vmul.f32 %v3471, 0.1
      %v3590 = vmul.f32 %v3474, 0.1
      %v3591 = vmul.f32 %v3479, 0.1
      %v3592 = vmul.f32 %v3482, 0.1
      %v3593 = vmul.f32 %v3487, 0.1
      %v3594 = vmul.f32 %v3490, 0.1
      %v3595 = vmul.f32 %v3495, 0.1
      %v3596 = vmul.f32 %v3498, 0.1
      %v3597 = vmul.f32 %v3503, 0.1
      %v3598 = vmul.f32 %v3506, 0.1
      %v3599 = vmul.f32 %v3511, 0.1
      %v3600 = vmul.f32 %v3514, 0.1
      %v3601 = vmul.f32 %v3519, 0.1
      %v3602 = vmul.f32 %v3522, 0.1
      %v3603 = vmul.f32 %v3527, 0.1
      %v3604 = vmul.f32 %v3530, 0.1
      %v3605 = vmul.f32 %v3535, 0.1
      %v3606 = vmul.f32 %v3538, 0.1
      %v3607 = vmul.f32 %v3543, 0.1
      %v3608 = vmul.f32 %v3546, 0.1
      %v3609 = vsel %vm3549, %v3431, %v3579
      %v3610 = vsel %vm3550, %v3434, %v3580
      %v3611 = vsel %vm3551, %v3439, %v3581
      %v3612 = vsel %vm3552, %v3442, %v3582
      %v3613 = vsel %vm3553, %v3447, %v3583
      %v3614 = vsel %vm3554, %v3450, %v3584
      %v3615 = vsel %vm3555, %v3455, %v3585
      %v3616 = vsel %vm3556, %v3458, %v3586
      %v3617 = vsel %vm3557, %v3463, %v3587
      %v3618 = vsel %vm3558, %v3466, %v3588
      %v3619 = vsel %vm3559, %v3471, %v3589
      %v3620 = vsel %vm3560, %v3474, %v3590
      %v3621 = vsel %vm3561, %v3479, %v3591
      %v3622 = vsel %vm3562, %v3482, %v3592
      %v3623 = vsel %vm3563, %v3487, %v3593
      %v3624 = vsel %vm3564, %v3490, %v3594
      %v3625 = vsel %vm3565, %v3495, %v3595
      %v3626 = vsel %vm3566, %v3498, %v3596
      %v3627 = vsel %vm3567, %v3503, %v3597
      %v3628 = vsel %vm3568, %v3506, %v3598
      %v3629 = vsel %vm3569, %v3511, %v3599
      %v3630 = vsel %vm3570, %v3514, %v3600
      %v3631 = vsel %vm3571, %v3519, %v3601
      %v3632 = vsel %vm3572, %v3522, %v3602
      %v3633 = vsel %vm3573, %v3527, %v3603
      %v3634 = vsel %vm3574, %v3530, %v3604
      %v3635 = vsel %vm3575, %v3535, %v3605
      %v3636 = vsel %vm3576, %v3538, %v3606
      %v3637 = vsel %vm3577, %v3543, %v3607
      %v3638 = vsel %vm3578, %v3546, %v3608
      %v3639 = vld [vmem:[%s11] sm:$0xff]
      %v3640 = vld [vmem:[%s11 + $0x8] sm:$0xff]
      %v3641 = vld [vmem:[%s11 + $0x10] sm:$0xff]
      %v3642 = vld [vmem:[%s11 + $0x18] sm:$0xff]
      %v3643 = vld [vmem:[%s11 + $0x20] sm:$0xff]
      %v3644 = vld [vmem:[%s11 + $0x28] sm:$0xff]
      %v3645 = vld [vmem:[%s11 + $0x30] sm:$0xff]
      %v3646 = vld [vmem:[%s11 + $0x38] sm:$0xff]
      %v3647 = vld [vmem:[%s11 + $0x40] sm:$0xff]
      %v3648 = vld [vmem:[%s11 + $0x48] sm:$0xff]
      %v3649 = vld [vmem:[%s11 + $0x50] sm:$0xff]
      %v3650 = vld [vmem:[%s11 + $0x58] sm:$0xff]
      %v3651 = vld [vmem:[%s11 + $0x60] sm:$0xff]
      %v3652 = vld [vmem:[%s11 + $0x68] sm:$0xff]
      %v3653 = vld [vmem:[%s11 + $0x70] sm:$0xff]
      %v3654 = vld [vmem:[%s11 + $0x78] sm:$0xff]
      %v3655 = vld [vmem:[%s11 + $0x80] sm:$0xff]
      %v3656 = vld [vmem:[%s11 + $0x88] sm:$0xff]
      %v3657 = vld [vmem:[%s11 + $0x90] sm:$0xff]
      %v3658 = vld [vmem:[%s11 + $0x98] sm:$0xff]
      %v3659 = vld [vmem:[%s11 + $0xa0] sm:$0xff]
      %v3660 = vld [vmem:[%s11 + $0xa8] sm:$0xff]
      %v3661 = vld [vmem:[%s11 + $0xb0] sm:$0xff]
      %v3662 = vld [vmem:[%s11 + $0xb8] sm:$0xff]
      %v3663 = vld [vmem:[%s11 + $0xc0] sm:$0xff]
      %v3664 = vld [vmem:[%s11 + $0xc8] sm:$0xff]
      %v3665 = vld [vmem:[%s11 + $0xd0] sm:$0xff]
      %v3666 = vld [vmem:[%s11 + $0xd8] sm:$0xff]
      %v3667 = vld [vmem:[%s11 + $0xe0] sm:$0xff]
      %v3668 = vld [vmem:[%s11 + $0xe8] sm:$0xff]
      %v3669 = vld [vmem:[%s11 + $0xf0] sm:$0xff]
      %v3670 = vld [vmem:[%s11 + $0xf8] sm:$0xff]
      %v3671 = vld [vmem:[%s11 + $0x100] sm:$0xff]
      %v3672 = vld [vmem:[%s11 + $0x108] sm:$0xff]
      %v3673 = vld [vmem:[%s11 + $0x110] sm:$0xff]
      %v3674 = vld [vmem:[%s11 + $0x118] sm:$0xff]
      %v3675 = vld [vmem:[%s11 + $0x120] sm:$0xff]
      %v3676 = vld [vmem:[%s11 + $0x128] sm:$0xff]
      %v3677 = vld [vmem:[%s11 + $0x130] sm:$0xff]
      %v3678 = vld [vmem:[%s11 + $0x138] sm:$0xff]
      %v3679 = vpack.c.bf16 %v3610, %v3609
      %v3680 = vpack.c.bf16 %v3612, %v3611
      %v3681 = vpack.c.bf16 %v3614, %v3613
      %v3682 = vpack.c.bf16 %v3616, %v3615
      %v3683 = vpack.c.bf16 %v3618, %v3617
      %v3684 = vpack.c.bf16 %v3620, %v3619
      %v3685 = vpack.c.bf16 %v3622, %v3621
      %v3686 = vpack.c.bf16 %v3624, %v3623
      %v3687 = vpack.c.bf16 %v3626, %v3625
      %v3688 = vpack.c.bf16 %v3628, %v3627
      %v3689 = vpack.c.bf16 %v3630, %v3629
      %v3690 = vpack.c.bf16 %v3632, %v3631
      %v3691 = vpack.c.bf16 %v3634, %v3633
      %v3692 = vpack.c.bf16 %v3636, %v3635
      %v3693 = vpack.c.bf16 %v3638, %v3637
      %v3694 = vpack.c.bf16 %v3649, %v3639
      %v3695 = vpack.c.bf16 %v3650, %v3640
      %v3696 = vpack.c.bf16 %v3651, %v3641
      %v3697 = vpack.c.bf16 %v3652, %v3642
      %v3698 = vpack.c.bf16 %v3653, %v3643
      %v3699 = vpack.c.bf16 %v3654, %v3644
      %v3700 = vpack.c.bf16 %v3655, %v3645
      %v3701 = vpack.c.bf16 %v3656, %v3646
      %v3702 = vpack.c.bf16 %v3657, %v3647
      %v3703 = vpack.c.bf16 %v3658, %v3648
      %v3704 = vpack.c.bf16 %v3669, %v3659
      %v3705 = vpack.c.bf16 %v3670, %v3660
      %v3706 = vpack.c.bf16 %v3671, %v3661
      %v3707 = vpack.c.bf16 %v3672, %v3662
      %v3708 = vpack.c.bf16 %v3673, %v3663
      %v3709 = vpack.c.bf16 %v3674, %v3664
      %v3710 = vpack.c.bf16 %v3675, %v3665
      %v3711 = vpack.c.bf16 %v3676, %v3666
      %v3712 = vpack.c.bf16 %v3677, %v3667
      %v3713 = vpack.c.bf16 %v3678, %v3668
      %v3715 = vsel %vm1573, %v3679, 0
      %v3718 = vsel %vm1573, %v3680, 0
      %v3721 = vsel %vm1573, %v3681, 0
      %v3724 = vsel %vm1573, %v3682, 0
      %v3727 = vsel %vm1573, %v3683, 0
      %v3730 = vsel %vm1573, %v3684, 0
      %v3733 = vsel %vm1573, %v3685, 0
      %v3736 = vsel %vm1573, %v3686, 0
      %v3739 = vsel %vm1573, %v3687, 0
      %v3742 = vsel %vm1573, %v3688, 0
      %v3745 = vsel %vm1573, %v3689, 0
      %v3748 = vsel %vm1573, %v3690, 0
      %v3751 = vsel %vm1573, %v3691, 0
      %v3754 = vsel %vm1573, %v3692, 0
      %v3757 = vsel %vm1573, %v3693, 0
      %3759 = vmatprep.subr.bf16.mxu0 %v3695
      %3760 = vmatpush1.bf16.msra.mxu0 %v3694
      %3761 = vmatprep.subr.bf16.mxu0 %v3705
      %3762 = vmatpush1.bf16.msra.mxu0 %v3704
      %3763 = vmatprep.subr.bf16.mxu0 0
      %3764 = vmatpush1.bf16.msra.mxu0 0
      %3765 = vmatprep.subr.bf16.mxu0 0
      %3766 = vmatpush1.bf16.msra.mxu0 0
      %3767 = vmatprep.subr.bf16.mxu0 0
      %3768 = vmatpush1.bf16.msra.mxu0 0
      %3769 = vmatprep.subr.bf16.mxu0 0
      %3770 = vmatpush1.bf16.msra.mxu0 0
      %3771 = vmatprep.subr.bf16.mxu0 0
      %3772 = vmatpush1.bf16.msra.mxu0 0
      %3773 = vmatprep.subr.bf16.mxu0 0
      %3774 = vmatpush1.bf16.msra.mxu0 0
      %3775 = vmatprep.subr.bf16.mxu0 0
      %3776 = vmatpush1.bf16.msra.mxu0 0
      %3777 = vmatprep.subr.bf16.mxu0 0
      %3778 = vmatpush1.bf16.msra.mxu0 0
      %3779 = vmatprep.subr.bf16.mxu0 0
      %3780 = vmatpush1.bf16.msra.mxu0 0
      %3781 = vmatprep.subr.bf16.mxu0 0
      %3782 = vmatpush1.bf16.msra.mxu0 0
      %3783 = vmatprep.subr.bf16.mxu0 0
      %3784 = vmatpush1.bf16.msra.mxu0 0
      %3785 = vmatprep.subr.bf16.mxu0 0
      %3786 = vmatpush1.bf16.msra.mxu0 0
      %3787 = vmatprep.subr.bf16.mxu0 0
      %3788 = vmatpush1.bf16.msra.mxu0 0
      %3789 = vmatprep.subr.bf16.mxu0 0
      %3790 = vmatpush1.bf16.msra.mxu0 0
      %3791 = vmatprep.mubr.bf16.mxu0 0
      %3792 = vmatmul.mubr.bf16.gmra.mrb[0].mxu0 %v3715
      %v3793 = vpop.f32.mrb[0].mxu0
      %v3794 = vadd.f32 0.0, %v3793
      %v3795 = vpop.f32.mrb[0].mxu0
      %v3796 = vadd.f32 0.0, %v3795
      %v3797 = vpop.f32.mrb[0].mxu0
      %v3798 = vadd.f32 0.0, %v3797
      %v3799 = vpop.f32.mrb[0].mxu0
      %v3800 = vadd.f32 0.0, %v3799
      %3801 = vmatprep.mubr.bf16.mxu0 0
      %3802 = vmatmul.mubr.bf16.gmra.mrb[0].mxu0 %v3718
      %v3803 = vpop.f32.mrb[0].mxu0
      %v3804 = vadd.f32 0.0, %v3803
      %v3805 = vpop.f32.mrb[0].mxu0
      %v3806 = vadd.f32 0.0, %v3805
      %v3807 = vpop.f32.mrb[0].mxu0
      %v3808 = vadd.f32 0.0, %v3807
      %v3809 = vpop.f32.mrb[0].mxu0
      %v3810 = vadd.f32 0.0, %v3809
      %3811 = vmatprep.mubr.bf16.mxu0 0
      %3812 = vmatmul.mubr.bf16.gmra.mrb[0].mxu0 %v3721
      %v3813 = vpop.f32.mrb[0].mxu0
      %v3814 = vadd.f32 0.0, %v3813
      %v3815 = vpop.f32.mrb[0].mxu0
      %v3816 = vadd.f32 0.0, %v3815
      %v3817 = vpop.f32.mrb[0].mxu0
      %v3818 = vadd.f32 0.0, %v3817
      %v3819 = vpop.f32.mrb[0].mxu0
      %v3820 = vadd.f32 0.0, %v3819
      %3821 = vmatprep.mubr.bf16.mxu0 0
      %3822 = vmatmul.mubr.bf16.gmra.mrb[0].mxu0 %v3724
      %v3823 = vpop.f32.mrb[0].mxu0
      %v3824 = vadd.f32 0.0, %v3823
      %v3825 = vpop.f32.mrb[0].mxu0
      %v3826 = vadd.f32 0.0, %v3825
      %v3827 = vpop.f32.mrb[0].mxu0
      %v3828 = vadd.f32 0.0, %v3827
      %v3829 = vpop.f32.mrb[0].mxu0
      %v3830 = vadd.f32 0.0, %v3829
      %3831 = vmatprep.mubr.bf16.mxu0 0
      %3832 = vmatmul.mubr.bf16.gmra.mrb[0].mxu0 %v3727
      %v3833 = vpop.f32.mrb[0].mxu0
      %v3834 = vadd.f32 0.0, %v3833
      %v3835 = vpop.f32.mrb[0].mxu0
      %v3836 = vadd.f32 0.0, %v3835
      %v3837 = vpop.f32.mrb[0].mxu0
      %v3838 = vadd.f32 0.0, %v3837
      %v3839 = vpop.f32.mrb[0].mxu0
      %v3840 = vadd.f32 0.0, %v3839
      %3841 = vmatprep.mubr.bf16.mxu0 0
      %3842 = vmatmul.mubr.bf16.gmra.mrb[0].mxu0 %v3730
      %v3843 = vpop.f32.mrb[0].mxu0
      %v3844 = vadd.f32 0.0, %v3843
      %v3845 = vpop.f32.mrb[0].mxu0
      %v3846 = vadd.f32 0.0, %v3845
      %v3847 = vpop.f32.mrb[0].mxu0
      %v3848 = vadd.f32 0.0, %v3847
      %v3849 = vpop.f32.mrb[0].mxu0
      %v3850 = vadd.f32 0.0, %v3849
      %3851 = vmatprep.mubr.bf16.mxu0 0
      %3852 = vmatmul.mubr.bf16.gmra.mrb[0].mxu0 %v3733
      %v3853 = vpop.f32.mrb[0].mxu0
      %v3854 = vadd.f32 0.0, %v3853
      %v3855 = vpop.f32.mrb[0].mxu0
      %v3856 = vadd.f32 0.0, %v3855
      %v3857 = vpop.f32.mrb[0].mxu0
      %v3858 = vadd.f32 0.0, %v3857
      %v3859 = vpop.f32.mrb[0].mxu0
      %v3860 = vadd.f32 0.0, %v3859
      %3861 = vmatprep.mubr.bf16.mxu0 0
      %3862 = vmatmul.mubr.bf16.gmra.mrb[0].mxu0 %v3736
      %v3863 = vpop.f32.mrb[0].mxu0
      %v3864 = vadd.f32 0.0, %v3863
      %v3865 = vpop.f32.mrb[0].mxu0
      %v3866 = vadd.f32 0.0, %v3865
      %v3867 = vpop.f32.mrb[0].mxu0
      %v3868 = vadd.f32 0.0, %v3867
      %v3869 = vpop.f32.mrb[0].mxu0
      %v3870 = vadd.f32 0.0, %v3869
      %3871 = vmatprep.mubr.bf16.mxu0 0
      %3872 = vmatmul.mubr.bf16.gmra.mrb[0].mxu0 %v3739
      %v3873 = vpop.f32.mrb[0].mxu0
      %v3874 = vadd.f32 0.0, %v3873
      %v3875 = vpop.f32.mrb[0].mxu0
      %v3876 = vadd.f32 0.0, %v3875
      %v3877 = vpop.f32.mrb[0].mxu0
      %v3878 = vadd.f32 0.0, %v3877
      %v3879 = vpop.f32.mrb[0].mxu0
      %v3880 = vadd.f32 0.0, %v3879
      %3881 = vmatprep.mubr.bf16.mxu0 0
      %3882 = vmatmul.mubr.bf16.gmra.mrb[0].mxu0 %v3742
      %v3883 = vpop.f32.mrb[0].mxu0
      %v3884 = vadd.f32 0.0, %v3883
      %v3885 = vpop.f32.mrb[0].mxu0
      %v3886 = vadd.f32 0.0, %v3885
      %v3887 = vpop.f32.mrb[0].mxu0
      %v3888 = vadd.f32 0.0, %v3887
      %v3889 = vpop.f32.mrb[0].mxu0
      %v3890 = vadd.f32 0.0, %v3889
      %3891 = vmatprep.mubr.bf16.mxu0 0
      %3892 = vmatmul.mubr.bf16.gmra.mrb[0].mxu0 %v3745
      %v3893 = vpop.f32.mrb[0].mxu0
      %v3894 = vadd.f32 0.0, %v3893
      %v3895 = vpop.f32.mrb[0].mxu0
      %v3896 = vadd.f32 0.0, %v3895
      %v3897 = vpop.f32.mrb[0].mxu0
      %v3898 = vadd.f32 0.0, %v3897
      %v3899 = vpop.f32.mrb[0].mxu0
      %v3900 = vadd.f32 0.0, %v3899
      %3901 = vmatprep.mubr.bf16.mxu0 0
      %3902 = vmatmul.mubr.bf16.gmra.mrb[0].mxu0 %v3748
      %v3903 = vpop.f32.mrb[0].mxu0
      %v3904 = vadd.f32 0.0, %v3903
      %v3905 = vpop.f32.mrb[0].mxu0
      %v3906 = vadd.f32 0.0, %v3905
      %v3907 = vpop.f32.mrb[0].mxu0
      %v3908 = vadd.f32 0.0, %v3907
      %v3909 = vpop.f32.mrb[0].mxu0
      %v3910 = vadd.f32 0.0, %v3909
      %3911 = vmatprep.mubr.bf16.mxu0 0
      %3912 = vmatmul.mubr.bf16.gmra.mrb[0].mxu0 %v3751
      %v3913 = vpop.f32.mrb[0].mxu0
      %v3914 = vadd.f32 0.0, %v3913
      %v3915 = vpop.f32.mrb[0].mxu0
      %v3916 = vadd.f32 0.0, %v3915
      %v3917 = vpop.f32.mrb[0].mxu0
      %v3918 = vadd.f32 0.0, %v3917
      %v3919 = vpop.f32.mrb[0].mxu0
      %v3920 = vadd.f32 0.0, %v3919
      %3921 = vmatprep.mubr.bf16.mxu0 0
      %3922 = vmatmul.mubr.bf16.gmra.mrb[0].mxu0 %v3754
      %v3923 = vpop.f32.mrb[0].mxu0
      %v3924 = vadd.f32 0.0, %v3923
      %v3925 = vpop.f32.mrb[0].mxu0
      %v3926 = vadd.f32 0.0, %v3925
      %v3927 = vpop.f32.mrb[0].mxu0
      %v3928 = vadd.f32 0.0, %v3927
      %v3929 = vpop.f32.mrb[0].mxu0
      %v3930 = vadd.f32 0.0, %v3929
      %3931 = vmatprep.mubr.bf16.mxu0 0
      %3932 = vmatmul.mubr.bf16.gmra.mrb[0].mxu0 %v3757
      %v3933 = vpop.f32.mrb[0].mxu0
      %v3934 = vadd.f32 0.0, %v3933
      %v3935 = vpop.f32.mrb[0].mxu0
      %v3936 = vadd.f32 0.0, %v3935
      %v3937 = vpop.f32.mrb[0].mxu0
      %v3938 = vadd.f32 0.0, %v3937
      %v3939 = vpop.f32.mrb[0].mxu0
      %v3940 = vadd.f32 0.0, %v3939
      %3941 = vdwg.mxu0
      %3942 = vmatprep.subr.bf16.mxu0 %v3697
      %3943 = vmatpush1.bf16.msra.mxu0 %v3696
      %3944 = vmatprep.subr.bf16.mxu0 %v3707
      %3945 = vmatpush1.bf16.msra.mxu0 %v3706
      %3946 = vmatprep.subr.bf16.mxu0 0
      %3947 = vmatpush1.bf16.msra.mxu0 0
      %3948 = vmatprep.subr.bf16.mxu0 0
      %3949 = vmatpush1.bf16.msra.mxu0 0
      %3950 = vmatprep.subr.bf16.mxu0 0
      %3951 = vmatpush1.bf16.msra.mxu0 0
      %3952 = vmatprep.subr.bf16.mxu0 0
      %3953 = vmatpush1.bf16.msra.mxu0 0
      %3954 = vmatprep.subr.bf16.mxu0 0
      %3955 = vmatpush1.bf16.msra.mxu0 0
      %3956 = vmatprep.subr.bf16.mxu0 0
      %3957 = vmatpush1.bf16.msra.mxu0 0
      %3958 = vmatprep.subr.bf16.mxu0 0
      %3959 = vmatpush1.bf16.msra.mxu0 0
      %3960 = vmatprep.subr.bf16.mxu0 0
      %3961 = vmatpush1.bf16.msra.mxu0 0
      %3962 = vmatprep.subr.bf16.mxu0 0
      %3963 = vmatpush1.bf16.msra.mxu0 0
      %3964 = vmatprep.subr.bf16.mxu0 0
      %3965 = vmatpush1.bf16.msra.mxu0 0
      %3966 = vmatprep.subr.bf16.mxu0 0
      %3967 = vmatpush1.bf16.msra.mxu0 0
      %3968 = vmatprep.subr.bf16.mxu0 0
      %3969 = vmatpush1.bf16.msra.mxu0 0
      %3970 = vmatprep.subr.bf16.mxu0 0
      %3971 = vmatpush1.bf16.msra.mxu0 0
      %3972 = vmatprep.subr.bf16.mxu0 0
      %3973 = vmatpush1.bf16.msra.mxu0 0
      %3974 = vmatprep.mubr.bf16.mxu0 0
      %3975 = vmatmul.mubr.bf16.gmra.mrb[0].mxu0 %v3715
      %v3976 = vpop.f32.mrb[0].mxu0
      %v3977 = vadd.f32 0.0, %v3976
      %v3978 = vpop.f32.mrb[0].mxu0
      %v3979 = vadd.f32 0.0, %v3978
      %v3980 = vpop.f32.mrb[0].mxu0
      %v3981 = vadd.f32 0.0, %v3980
      %v3982 = vpop.f32.mrb[0].mxu0
      %v3983 = vadd.f32 0.0, %v3982
      %3984 = vmatprep.mubr.bf16.mxu0 0
      %3985 = vmatmul.mubr.bf16.gmra.mrb[0].mxu0 %v3718
      %v3986 = vpop.f32.mrb[0].mxu0
      %v3987 = vadd.f32 0.0, %v3986
      %v3988 = vpop.f32.mrb[0].mxu0
      %v3989 = vadd.f32 0.0, %v3988
      %v3990 = vpop.f32.mrb[0].mxu0
      %v3991 = vadd.f32 0.0, %v3990
      %v3992 = vpop.f32.mrb[0].mxu0
      %v3993 = vadd.f32 0.0, %v3992
      %3994 = vmatprep.mubr.bf16.mxu0 0
      %3995 = vmatmul.mubr.bf16.gmra.mrb[0].mxu0 %v3721
      %v3996 = vpop.f32.mrb[0].mxu0
      %v3997 = vadd.f32 0.0, %v3996
      %v3998 = vpop.f32.mrb[0].mxu0
      %v3999 = vadd.f32 0.0, %v3998
      %v4000 = vpop.f32.mrb[0].mxu0
      %v4001 = vadd.f32 0.0, %v4000
      %v4002 = vpop.f32.mrb[0].mxu0
      %v4003 = vadd.f32 0.0, %v4002
      %4004 = vmatprep.mubr.bf16.mxu0 0
      %4005 = vmatmul.mubr.bf16.gmra.mrb[0].mxu0 %v3724
      %v4006 = vpop.f32.mrb[0].mxu0
      %v4007 = vadd.f32 0.0, %v4006
      %v4008 = vpop.f32.mrb[0].mxu0
      %v4009 = vadd.f32 0.0, %v4008
      %v4010 = vpop.f32.mrb[0].mxu0
      %v4011 = vadd.f32 0.0, %v4010
      %v4012 = vpop.f32.mrb[0].mxu0
      %v4013 = vadd.f32 0.0, %v4012
      %4014 = vmatprep.mubr.bf16.mxu0 0
      %4015 = vmatmul.mubr.bf16.gmra.mrb[0].mxu0 %v3727
      %v4016 = vpop.f32.mrb[0].mxu0
      %v4017 = vadd.f32 0.0, %v4016
      %v4018 = vpop.f32.mrb[0].mxu0
      %v4019 = vadd.f32 0.0, %v4018
      %v4020 = vpop.f32.mrb[0].mxu0
      %v4021 = vadd.f32 0.0, %v4020
      %v4022 = vpop.f32.mrb[0].mxu0
      %v4023 = vadd.f32 0.0, %v4022
      %4024 = vmatprep.mubr.bf16.mxu0 0
      %4025 = vmatmul.mubr.bf16.gmra.mrb[0].mxu0 %v3730
      %v4026 = vpop.f32.mrb[0].mxu0
      %v4027 = vadd.f32 0.0, %v4026
      %v4028 = vpop.f32.mrb[0].mxu0
      %v4029 = vadd.f32 0.0, %v4028
      %v4030 = vpop.f32.mrb[0].mxu0
      %v4031 = vadd.f32 0.0, %v4030
      %v4032 = vpop.f32.mrb[0].mxu0
      %v4033 = vadd.f32 0.0, %v4032
      %4034 = vmatprep.mubr.bf16.mxu0 0
      %4035 = vmatmul.mubr.bf16.gmra.mrb[0].mxu0 %v3733
      %v4036 = vpop.f32.mrb[0].mxu0
      %v4037 = vadd.f32 0.0, %v4036
      %v4038 = vpop.f32.mrb[0].mxu0
      %v4039 = vadd.f32 0.0, %v4038
      %v4040 = vpop.f32.mrb[0].mxu0
      %v4041 = vadd.f32 0.0, %v4040
      %v4042 = vpop.f32.mrb[0].mxu0
      %v4043 = vadd.f32 0.0, %v4042
      %4044 = vmatprep.mubr.bf16.mxu0 0
      %4045 = vmatmul.mubr.bf16.gmra.mrb[0].mxu0 %v3736
      %v4046 = vpop.f32.mrb[0].mxu0
      %v4047 = vadd.f32 0.0, %v4046
      %v4048 = vpop.f32.mrb[0].mxu0
      %v4049 = vadd.f32 0.0, %v4048
      %v4050 = vpop.f32.mrb[0].mxu0
      %v4051 = vadd.f32 0.0, %v4050
      %v4052 = vpop.f32.mrb[0].mxu0
      %v4053 = vadd.f32 0.0, %v4052
      %4054 = vmatprep.mubr.bf16.mxu0 0
      %4055 = vmatmul.mubr.bf16.gmra.mrb[0].mxu0 %v3739
      %v4056 = vpop.f32.mrb[0].mxu0
      %v4057 = vadd.f32 0.0, %v4056
      %v4058 = vpop.f32.mrb[0].mxu0
      %v4059 = vadd.f32 0.0, %v4058
      %v4060 = vpop.f32.mrb[0].mxu0
      %v4061 = vadd.f32 0.0, %v4060
      %v4062 = vpop.f32.mrb[0].mxu0
      %v4063 = vadd.f32 0.0, %v4062
      %4064 = vmatprep.mubr.bf16.mxu0 0
      %4065 = vmatmul.mubr.bf16.gmra.mrb[0].mxu0 %v3742
      %v4066 = vpop.f32.mrb[0].mxu0
      %v4067 = vadd.f32 0.0, %v4066
      %v4068 = vpop.f32.mrb[0].mxu0
      %v4069 = vadd.f32 0.0, %v4068
      %v4070 = vpop.f32.mrb[0].mxu0
      %v4071 = vadd.f32 0.0, %v4070
      %v4072 = vpop.f32.mrb[0].mxu0
      %v4073 = vadd.f32 0.0, %v4072
      %4074 = vmatprep.mubr.bf16.mxu0 0
      %4075 = vmatmul.mubr.bf16.gmra.mrb[0].mxu0 %v3745
      %v4076 = vpop.f32.mrb[0].mxu0
      %v4077 = vadd.f32 0.0, %v4076
      %v4078 = vpop.f32.mrb[0].mxu0
      %v4079 = vadd.f32 0.0, %v4078
      %v4080 = vpop.f32.mrb[0].mxu0
      %v4081 = vadd.f32 0.0, %v4080
      %v4082 = vpop.f32.mrb[0].mxu0
      %v4083 = vadd.f32 0.0, %v4082
      %4084 = vmatprep.mubr.bf16.mxu0 0
      %4085 = vmatmul.mubr.bf16.gmra.mrb[0].mxu0 %v3748
      %v4086 = vpop.f32.mrb[0].mxu0
      %v4087 = vadd.f32 0.0, %v4086
      %v4088 = vpop.f32.mrb[0].mxu0
      %v4089 = vadd.f32 0.0, %v4088
      %v4090 = vpop.f32.mrb[0].mxu0
      %v4091 = vadd.f32 0.0, %v4090
      %v4092 = vpop.f32.mrb[0].mxu0
      %v4093 = vadd.f32 0.0, %v4092
      %4094 = vmatprep.mubr.bf16.mxu0 0
      %4095 = vmatmul.mubr.bf16.gmra.mrb[0].mxu0 %v3751
      %v4096 = vpop.f32.mrb[0].mxu0
      %v4097 = vadd.f32 0.0, %v4096
      %v4098 = vpop.f32.mrb[0].mxu0
      %v4099 = vadd.f32 0.0, %v4098
      %v4100 = vpop.f32.mrb[0].mxu0
      %v4101 = vadd.f32 0.0, %v4100
      %v4102 = vpop.f32.mrb[0].mxu0
      %v4103 = vadd.f32 0.0, %v4102
      %4104 = vmatprep.mubr.bf16.mxu0 0
      %4105 = vmatmul.mubr.bf16.gmra.mrb[0].mxu0 %v3754
      %v4106 = vpop.f32.mrb[0].mxu0
      %v4107 = vadd.f32 0.0, %v4106
      %v4108 = vpop.f32.mrb[0].mxu0
      %v4109 = vadd.f32 0.0, %v4108
      %v4110 = vpop.f32.mrb[0].mxu0
      %v4111 = vadd.f32 0.0, %v4110
      %v4112 = vpop.f32.mrb[0].mxu0
      %v4113 = vadd.f32 0.0, %v4112
      %4114 = vmatprep.mubr.bf16.mxu0 0
      %4115 = vmatmul.mubr.bf16.gmra.mrb[0].mxu0 %v3757
      %v4116 = vpop.f32.mrb[0].mxu0
      %v4117 = vadd.f32 0.0, %v4116
      %v4118 = vpop.f32.mrb[0].mxu0
      %v4119 = vadd.f32 0.0, %v4118
      %v4120 = vpop.f32.mrb[0].mxu0
      %v4121 = vadd.f32 0.0, %v4120
      %v4122 = vpop.f32.mrb[0].mxu0
      %v4123 = vadd.f32 0.0, %v4122
      %4124 = vdwg.mxu0
      %4125 = vmatprep.subr.bf16.mxu0 %v3699
      %4126 = vmatpush1.bf16.msra.mxu0 %v3698
      %4127 = vmatprep.subr.bf16.mxu0 %v3709
      %4128 = vmatpush1.bf16.msra.mxu0 %v3708
      %4129 = vmatprep.subr.bf16.mxu0 0
      %4130 = vmatpush1.bf16.msra.mxu0 0
      %4131 = vmatprep.subr.bf16.mxu0 0
      %4132 = vmatpush1.bf16.msra.mxu0 0
      %4133 = vmatprep.subr.bf16.mxu0 0
      %4134 = vmatpush1.bf16.msra.mxu0 0
      %4135 = vmatprep.subr.bf16.mxu0 0
      %4136 = vmatpush1.bf16.msra.mxu0 0
      %4137 = vmatprep.subr.bf16.mxu0 0
      %4138 = vmatpush1.bf16.msra.mxu0 0
      %4139 = vmatprep.subr.bf16.mxu0 0
      %4140 = vmatpush1.bf16.msra.mxu0 0
      %4141 = vmatprep.subr.bf16.mxu0 0
      %4142 = vmatpush1.bf16.msra.mxu0 0
      %4143 = vmatprep.subr.bf16.mxu0 0
      %4144 = vmatpush1.bf16.msra.mxu0 0
      %4145 = vmatprep.subr.bf16.mxu0 0
      %4146 = vmatpush1.bf16.msra.mxu0 0
      %4147 = vmatprep.subr.bf16.mxu0 0
      %4148 = vmatpush1.bf16.msra.mxu0 0
      %4149 = vmatprep.subr.bf16.mxu0 0
      %4150 = vmatpush1.bf16.msra.mxu0 0
      %4151 = vmatprep.subr.bf16.mxu0 0
      %4152 = vmatpush1.bf16.msra.mxu0 0
      %4153 = vmatprep.subr.bf16.mxu0 0
      %4154 = vmatpush1.bf16.msra.mxu0 0
      %4155 = vmatprep.subr.bf16.mxu0 0
      %4156 = vmatpush1.bf16.msra.mxu0 0
      %4157 = vmatprep.mubr.bf16.mxu0 0
      %4158 = vmatmul.mubr.bf16.gmra.mrb[0].mxu0 %v3715
      %v4159 = vpop.f32.mrb[0].mxu0
      %v4160 = vadd.f32 0.0, %v4159
      %v4161 = vpop.f32.mrb[0].mxu0
      %v4162 = vadd.f32 0.0, %v4161
      %v4163 = vpop.f32.mrb[0].mxu0
      %v4164 = vadd.f32 0.0, %v4163
      %v4165 = vpop.f32.mrb[0].mxu0
      %v4166 = vadd.f32 0.0, %v4165
      %4167 = vmatprep.mubr.bf16.mxu0 0
      %4168 = vmatmul.mubr.bf16.gmra.mrb[0].mxu0 %v3718
      %v4169 = vpop.f32.mrb[0].mxu0
      %v4170 = vadd.f32 0.0, %v4169
      %v4171 = vpop.f32.mrb[0].mxu0
      %v4172 = vadd.f32 0.0, %v4171
      %v4173 = vpop.f32.mrb[0].mxu0
      %v4174 = vadd.f32 0.0, %v4173
      %v4175 = vpop.f32.mrb[0].mxu0
      %v4176 = vadd.f32 0.0, %v4175
      %4177 = vmatprep.mubr.bf16.mxu0 0
      %4178 = vmatmul.mubr.bf16.gmra.mrb[0].mxu0 %v3721
      %v4179 = vpop.f32.mrb[0].mxu0
      %v4180 = vadd.f32 0.0, %v4179
      %v4181 = vpop.f32.mrb[0].mxu0
      %v4182 = vadd.f32 0.0, %v4181
      %v4183 = vpop.f32.mrb[0].mxu0
      %v4184 = vadd.f32 0.0, %v4183
      %v4185 = vpop.f32.mrb[0].mxu0
      %v4186 = vadd.f32 0.0, %v4185
      %4187 = vmatprep.mubr.bf16.mxu0 0
      %4188 = vmatmul.mubr.bf16.gmra.mrb[0].mxu0 %v3724
      %v4189 = vpop.f32.mrb[0].mxu0
      %v4190 = vadd.f32 0.0, %v4189
      %v4191 = vpop.f32.mrb[0].mxu0
      %v4192 = vadd.f32 0.0, %v4191
      %v4193 = vpop.f32.mrb[0].mxu0
      %v4194 = vadd.f32 0.0, %v4193
      %v4195 = vpop.f32.mrb[0].mxu0
      %v4196 = vadd.f32 0.0, %v4195
      %4197 = vmatprep.mubr.bf16.mxu0 0
      %4198 = vmatmul.mubr.bf16.gmra.mrb[0].mxu0 %v3727
      %v4199 = vpop.f32.mrb[0].mxu0
      %v4200 = vadd.f32 0.0, %v4199
      %v4201 = vpop.f32.mrb[0].mxu0
      %v4202 = vadd.f32 0.0, %v4201
      %v4203 = vpop.f32.mrb[0].mxu0
      %v4204 = vadd.f32 0.0, %v4203
      %v4205 = vpop.f32.mrb[0].mxu0
      %v4206 = vadd.f32 0.0, %v4205
      %4207 = vmatprep.mubr.bf16.mxu0 0
      %4208 = vmatmul.mubr.bf16.gmra.mrb[0].mxu0 %v3730
      %v4209 = vpop.f32.mrb[0].mxu0
      %v4210 = vadd.f32 0.0, %v4209
      %v4211 = vpop.f32.mrb[0].mxu0
      %v4212 = vadd.f32 0.0, %v4211
      %v4213 = vpop.f32.mrb[0].mxu0
      %v4214 = vadd.f32 0.0, %v4213
      %v4215 = vpop.f32.mrb[0].mxu0
      %v4216 = vadd.f32 0.0, %v4215
      %4217 = vmatprep.mubr.bf16.mxu0 0
      %4218 = vmatmul.mubr.bf16.gmra.mrb[0].mxu0 %v3733
      %v4219 = vpop.f32.mrb[0].mxu0
      %v4220 = vadd.f32 0.0, %v4219
      %v4221 = vpop.f32.mrb[0].mxu0
      %v4222 = vadd.f32 0.0, %v4221
      %v4223 = vpop.f32.mrb[0].mxu0
      %v4224 = vadd.f32 0.0, %v4223
      %v4225 = vpop.f32.mrb[0].mxu0
      %v4226 = vadd.f32 0.0, %v4225
      %4227 = vmatprep.mubr.bf16.mxu0 0
      %4228 = vmatmul.mubr.bf16.gmra.mrb[0].mxu0 %v3736
      %v4229 = vpop.f32.mrb[0].mxu0
      %v4230 = vadd.f32 0.0, %v4229
      %v4231 = vpop.f32.mrb[0].mxu0
      %v4232 = vadd.f32 0.0, %v4231
      %v4233 = vpop.f32.mrb[0].mxu0
      %v4234 = vadd.f32 0.0, %v4233
      %v4235 = vpop.f32.mrb[0].mxu0
      %v4236 = vadd.f32 0.0, %v4235
      %4237 = vmatprep.mubr.bf16.mxu0 0
      %4238 = vmatmul.mubr.bf16.gmra.mrb[0].mxu0 %v3739
      %v4239 = vpop.f32.mrb[0].mxu0
      %v4240 = vadd.f32 0.0, %v4239
      %v4241 = vpop.f32.mrb[0].mxu0
      %v4242 = vadd.f32 0.0, %v4241
      %v4243 = vpop.f32.mrb[0].mxu0
      %v4244 = vadd.f32 0.0, %v4243
      %v4245 = vpop.f32.mrb[0].mxu0
      %v4246 = vadd.f32 0.0, %v4245
      %4247 = vmatprep.mubr.bf16.mxu0 0
      %4248 = vmatmul.mubr.bf16.gmra.mrb[0].mxu0 %v3742
      %v4249 = vpop.f32.mrb[0].mxu0
      %v4250 = vadd.f32 0.0, %v4249
      %v4251 = vpop.f32.mrb[0].mxu0
      %v4252 = vadd.f32 0.0, %v4251
      %v4253 = vpop.f32.mrb[0].mxu0
      %v4254 = vadd.f32 0.0, %v4253
      %v4255 = vpop.f32.mrb[0].mxu0
      %v4256 = vadd.f32 0.0, %v4255
      %4257 = vmatprep.mubr.bf16.mxu0 0
      %4258 = vmatmul.mubr.bf16.gmra.mrb[0].mxu0 %v3745
      %v4259 = vpop.f32.mrb[0].mxu0
      %v4260 = vadd.f32 0.0, %v4259
      %v4261 = vpop.f32.mrb[0].mxu0
      %v4262 = vadd.f32 0.0, %v4261
      %v4263 = vpop.f32.mrb[0].mxu0
      %v4264 = vadd.f32 0.0, %v4263
      %v4265 = vpop.f32.mrb[0].mxu0
      %v4266 = vadd.f32 0.0, %v4265
      %4267 = vmatprep.mubr.bf16.mxu0 0
      %4268 = vmatmul.mubr.bf16.gmra.mrb[0].mxu0 %v3748
      %v4269 = vpop.f32.mrb[0].mxu0
      %v4270 = vadd.f32 0.0, %v4269
      %v4271 = vpop.f32.mrb[0].mxu0
      %v4272 = vadd.f32 0.0, %v4271
      %v4273 = vpop.f32.mrb[0].mxu0
      %v4274 = vadd.f32 0.0, %v4273
      %v4275 = vpop.f32.mrb[0].mxu0
      %v4276 = vadd.f32 0.0, %v4275
      %4277 = vmatprep.mubr.bf16.mxu0 0
      %4278 = vmatmul.mubr.bf16.gmra.mrb[0].mxu0 %v3751
      %v4279 = vpop.f32.mrb[0].mxu0
      %v4280 = vadd.f32 0.0, %v4279
      %v4281 = vpop.f32.mrb[0].mxu0
      %v4282 = vadd.f32 0.0, %v4281
      %v4283 = vpop.f32.mrb[0].mxu0
      %v4284 = vadd.f32 0.0, %v4283
      %v4285 = vpop.f32.mrb[0].mxu0
      %v4286 = vadd.f32 0.0, %v4285
      %4287 = vmatprep.mubr.bf16.mxu0 0
      %4288 = vmatmul.mubr.bf16.gmra.mrb[0].mxu0 %v3754
      %v4289 = vpop.f32.mrb[0].mxu0
      %v4290 = vadd.f32 0.0, %v4289
      %v4291 = vpop.f32.mrb[0].mxu0
      %v4292 = vadd.f32 0.0, %v4291
      %v4293 = vpop.f32.mrb[0].mxu0
      %v4294 = vadd.f32 0.0, %v4293
      %v4295 = vpop.f32.mrb[0].mxu0
      %v4296 = vadd.f32 0.0, %v4295
      %4297 = vmatprep.mubr.bf16.mxu0 0
      %4298 = vmatmul.mubr.bf16.gmra.mrb[0].mxu0 %v3757
      %v4299 = vpop.f32.mrb[0].mxu0
      %v4300 = vadd.f32 0.0, %v4299
      %v4301 = vpop.f32.mrb[0].mxu0
      %v4302 = vadd.f32 0.0, %v4301
      %v4303 = vpop.f32.mrb[0].mxu0
      %v4304 = vadd.f32 0.0, %v4303
      %v4305 = vpop.f32.mrb[0].mxu0
      %v4306 = vadd.f32 0.0, %v4305
      %4307 = vdwg.mxu0
      %4308 = vmatprep.subr.bf16.mxu0 %v3701
      %4309 = vmatpush1.bf16.msra.mxu0 %v3700
      %4310 = vmatprep.subr.bf16.mxu0 %v3711
      %4311 = vmatpush1.bf16.msra.mxu0 %v3710
      %4312 = vmatprep.subr.bf16.mxu0 0
      %4313 = vmatpush1.bf16.msra.mxu0 0
      %4314 = vmatprep.subr.bf16.mxu0 0
      %4315 = vmatpush1.bf16.msra.mxu0 0
      %4316 = vmatprep.subr.bf16.mxu0 0
      %4317 = vmatpush1.bf16.msra.mxu0 0
      %4318 = vmatprep.subr.bf16.mxu0 0
      %4319 = vmatpush1.bf16.msra.mxu0 0
      %4320 = vmatprep.subr.bf16.mxu0 0
      %4321 = vmatpush1.bf16.msra.mxu0 0
      %4322 = vmatprep.subr.bf16.mxu0 0
      %4323 = vmatpush1.bf16.msra.mxu0 0
      %4324 = vmatprep.subr.bf16.mxu0 0
      %4325 = vmatpush1.bf16.msra.mxu0 0
      %4326 = vmatprep.subr.bf16.mxu0 0
      %4327 = vmatpush1.bf16.msra.mxu0 0
      %4328 = vmatprep.subr.bf16.mxu0 0
      %4329 = vmatpush1.bf16.msra.mxu0 0
      %4330 = vmatprep.subr.bf16.mxu0 0
      %4331 = vmatpush1.bf16.msra.mxu0 0
      %4332 = vmatprep.subr.bf16.mxu0 0
      %4333 = vmatpush1.bf16.msra.mxu0 0
      %4334 = vmatprep.subr.bf16.mxu0 0
      %4335 = vmatpush1.bf16.msra.mxu0 0
      %4336 = vmatprep.subr.bf16.mxu0 0
      %4337 = vmatpush1.bf16.msra.mxu0 0
      %4338 = vmatprep.subr.bf16.mxu0 0
      %4339 = vmatpush1.bf16.msra.mxu0 0
      %4340 = vmatprep.mubr.bf16.mxu0 0
      %4341 = vmatmul.mubr.bf16.gmra.mrb[0].mxu0 %v3715
      %v4342 = vpop.f32.mrb[0].mxu0
      %v4343 = vadd.f32 0.0, %v4342
      %v4344 = vpop.f32.mrb[0].mxu0
      %v4345 = vadd.f32 0.0, %v4344
      %v4346 = vpop.f32.mrb[0].mxu0
      %v4347 = vadd.f32 0.0, %v4346
      %v4348 = vpop.f32.mrb[0].mxu0
      %v4349 = vadd.f32 0.0, %v4348
      %4350 = vmatprep.mubr.bf16.mxu0 0
      %4351 = vmatmul.mubr.bf16.gmra.mrb[0].mxu0 %v3718
      %v4352 = vpop.f32.mrb[0].mxu0
      %v4353 = vadd.f32 0.0, %v4352
      %v4354 = vpop.f32.mrb[0].mxu0
      %v4355 = vadd.f32 0.0, %v4354
      %v4356 = vpop.f32.mrb[0].mxu0
      %v4357 = vadd.f32 0.0, %v4356
      %v4358 = vpop.f32.mrb[0].mxu0
      %v4359 = vadd.f32 0.0, %v4358
      %4360 = vmatprep.mubr.bf16.mxu0 0
      %4361 = vmatmul.mubr.bf16.gmra.mrb[0].mxu0 %v3721
      %v4362 = vpop.f32.mrb[0].mxu0
      %v4363 = vadd.f32 0.0, %v4362
      %v4364 = vpop.f32.mrb[0].mxu0
      %v4365 = vadd.f32 0.0, %v4364
      %v4366 = vpop.f32.mrb[0].mxu0
      %v4367 = vadd.f32 0.0, %v4366
      %v4368 = vpop.f32.mrb[0].mxu0
      %v4369 = vadd.f32 0.0, %v4368
      %4370 = vmatprep.mubr.bf16.mxu0 0
      %4371 = vmatmul.mubr.bf16.gmra.mrb[0].mxu0 %v3724
      %v4372 = vpop.f32.mrb[0].mxu0
      %v4373 = vadd.f32 0.0, %v4372
      %v4374 = vpop.f32.mrb[0].mxu0
      %v4375 = vadd.f32 0.0, %v4374
      %v4376 = vpop.f32.mrb[0].mxu0
      %v4377 = vadd.f32 0.0, %v4376
      %v4378 = vpop.f32.mrb[0].mxu0
      %v4379 = vadd.f32 0.0, %v4378
      %4380 = vmatprep.mubr.bf16.mxu0 0
      %4381 = vmatmul.mubr.bf16.gmra.mrb[0].mxu0 %v3727
      %v4382 = vpop.f32.mrb[0].mxu0
      %v4383 = vadd.f32 0.0, %v4382
      %v4384 = vpop.f32.mrb[0].mxu0
      %v4385 = vadd.f32 0.0, %v4384
      %v4386 = vpop.f32.mrb[0].mxu0
      %v4387 = vadd.f32 0.0, %v4386
      %v4388 = vpop.f32.mrb[0].mxu0
      %v4389 = vadd.f32 0.0, %v4388
      %4390 = vmatprep.mubr.bf16.mxu0 0
      %4391 = vmatmul.mubr.bf16.gmra.mrb[0].mxu0 %v3730
      %v4392 = vpop.f32.mrb[0].mxu0
      %v4393 = vadd.f32 0.0, %v4392
      %v4394 = vpop.f32.mrb[0].mxu0
      %v4395 = vadd.f32 0.0, %v4394
      %v4396 = vpop.f32.mrb[0].mxu0
      %v4397 = vadd.f32 0.0, %v4396
      %v4398 = vpop.f32.mrb[0].mxu0
      %v4399 = vadd.f32 0.0, %v4398
      %4400 = vmatprep.mubr.bf16.mxu0 0
      %4401 = vmatmul.mubr.bf16.gmra.mrb[0].mxu0 %v3733
      %v4402 = vpop.f32.mrb[0].mxu0
      %v4403 = vadd.f32 0.0, %v4402
      %v4404 = vpop.f32.mrb[0].mxu0
      %v4405 = vadd.f32 0.0, %v4404
      %v4406 = vpop.f32.mrb[0].mxu0
      %v4407 = vadd.f32 0.0, %v4406
      %v4408 = vpop.f32.mrb[0].mxu0
      %v4409 = vadd.f32 0.0, %v4408
      %4410 = vmatprep.mubr.bf16.mxu0 0
      %4411 = vmatmul.mubr.bf16.gmra.mrb[0].mxu0 %v3736
      %v4412 = vpop.f32.mrb[0].mxu0
      %v4413 = vadd.f32 0.0, %v4412
      %v4414 = vpop.f32.mrb[0].mxu0
      %v4415 = vadd.f32 0.0, %v4414
      %v4416 = vpop.f32.mrb[0].mxu0
      %v4417 = vadd.f32 0.0, %v4416
      %v4418 = vpop.f32.mrb[0].mxu0
      %v4419 = vadd.f32 0.0, %v4418
      %4420 = vmatprep.mubr.bf16.mxu0 0
      %4421 = vmatmul.mubr.bf16.gmra.mrb[0].mxu0 %v3739
      %v4422 = vpop.f32.mrb[0].mxu0
      %v4423 = vadd.f32 0.0, %v4422
      %v4424 = vpop.f32.mrb[0].mxu0
      %v4425 = vadd.f32 0.0, %v4424
      %v4426 = vpop.f32.mrb[0].mxu0
      %v4427 = vadd.f32 0.0, %v4426
      %v4428 = vpop.f32.mrb[0].mxu0
      %v4429 = vadd.f32 0.0, %v4428
      %4430 = vmatprep.mubr.bf16.mxu0 0
      %4431 = vmatmul.mubr.bf16.gmra.mrb[0].mxu0 %v3742
      %v4432 = vpop.f32.mrb[0].mxu0
      %v4433 = vadd.f32 0.0, %v4432
      %v4434 = vpop.f32.mrb[0].mxu0
      %v4435 = vadd.f32 0.0, %v4434
      %v4436 = vpop.f32.mrb[0].mxu0
      %v4437 = vadd.f32 0.0, %v4436
      %v4438 = vpop.f32.mrb[0].mxu0
      %v4439 = vadd.f32 0.0, %v4438
      %4440 = vmatprep.mubr.bf16.mxu0 0
      %4441 = vmatmul.mubr.bf16.gmra.mrb[0].mxu0 %v3745
      %v4442 = vpop.f32.mrb[0].mxu0
      %v4443 = vadd.f32 0.0, %v4442
      %v4444 = vpop.f32.mrb[0].mxu0
      %v4445 = vadd.f32 0.0, %v4444
      %v4446 = vpop.f32.mrb[0].mxu0
      %v4447 = vadd.f32 0.0, %v4446
      %v4448 = vpop.f32.mrb[0].mxu0
      %v4449 = vadd.f32 0.0, %v4448
      %4450 = vmatprep.mubr.bf16.mxu0 0
      %4451 = vmatmul.mubr.bf16.gmra.mrb[0].mxu0 %v3748
      %v4452 = vpop.f32.mrb[0].mxu0
      %v4453 = vadd.f32 0.0, %v4452
      %v4454 = vpop.f32.mrb[0].mxu0
      %v4455 = vadd.f32 0.0, %v4454
      %v4456 = vpop.f32.mrb[0].mxu0
      %v4457 = vadd.f32 0.0, %v4456
      %v4458 = vpop.f32.mrb[0].mxu0
      %v4459 = vadd.f32 0.0, %v4458
      %4460 = vmatprep.mubr.bf16.mxu0 0
      %4461 = vmatmul.mubr.bf16.gmra.mrb[0].mxu0 %v3751
      %v4462 = vpop.f32.mrb[0].mxu0
      %v4463 = vadd.f32 0.0, %v4462
      %v4464 = vpop.f32.mrb[0].mxu0
      %v4465 = vadd.f32 0.0, %v4464
      %v4466 = vpop.f32.mrb[0].mxu0
      %v4467 = vadd.f32 0.0, %v4466
      %v4468 = vpop.f32.mrb[0].mxu0
      %v4469 = vadd.f32 0.0, %v4468
      %4470 = vmatprep.mubr.bf16.mxu0 0
      %4471 = vmatmul.mubr.bf16.gmra.mrb[0].mxu0 %v3754
      %v4472 = vpop.f32.mrb[0].mxu0
      %v4473 = vadd.f32 0.0, %v4472
      %v4474 = vpop.f32.mrb[0].mxu0
      %v4475 = vadd.f32 0.0, %v4474
      %v4476 = vpop.f32.mrb[0].mxu0
      %v4477 = vadd.f32 0.0, %v4476
      %v4478 = vpop.f32.mrb[0].mxu0
      %v4479 = vadd.f32 0.0, %v4478
      %4480 = vmatprep.mubr.bf16.mxu0 0
      %4481 = vmatmul.mubr.bf16.gmra.mrb[0].mxu0 %v3757
      %v4482 = vpop.f32.mrb[0].mxu0
      %v4483 = vadd.f32 0.0, %v4482
      %v4484 = vpop.f32.mrb[0].mxu0
      %v4485 = vadd.f32 0.0, %v4484
      %v4486 = vpop.f32.mrb[0].mxu0
      %v4487 = vadd.f32 0.0, %v4486
      %v4488 = vpop.f32.mrb[0].mxu0
      %v4489 = vadd.f32 0.0, %v4488
      %4490 = vdwg.mxu0
      %4491 = vmatprep.subr.bf16.mxu0 %v3703
      %4492 = vmatpush1.bf16.msra.mxu0 %v3702
      %4493 = vmatprep.subr.bf16.mxu0 %v3713
      %4494 = vmatpush1.bf16.msra.mxu0 %v3712
      %4495 = vmatprep.subr.bf16.mxu0 0
      %4496 = vmatpush1.bf16.msra.mxu0 0
      %4497 = vmatprep.subr.bf16.mxu0 0
      %4498 = vmatpush1.bf16.msra.mxu0 0
      %4499 = vmatprep.subr.bf16.mxu0 0
      %4500 = vmatpush1.bf16.msra.mxu0 0
      %4501 = vmatprep.subr.bf16.mxu0 0
      %4502 = vmatpush1.bf16.msra.mxu0 0
      %4503 = vmatprep.subr.bf16.mxu0 0
      %4504 = vmatpush1.bf16.msra.mxu0 0
      %4505 = vmatprep.subr.bf16.mxu0 0
      %4506 = vmatpush1.bf16.msra.mxu0 0
      %4507 = vmatprep.subr.bf16.mxu0 0
      %4508 = vmatpush1.bf16.msra.mxu0 0
      %4509 = vmatprep.subr.bf16.mxu0 0
      %4510 = vmatpush1.bf16.msra.mxu0 0
      %4511 = vmatprep.subr.bf16.mxu0 0
      %4512 = vmatpush1.bf16.msra.mxu0 0
      %4513 = vmatprep.subr.bf16.mxu0 0
      %4514 = vmatpush1.bf16.msra.mxu0 0
      %4515 = vmatprep.subr.bf16.mxu0 0
      %4516 = vmatpush1.bf16.msra.mxu0 0
      %4517 = vmatprep.subr.bf16.mxu0 0
      %4518 = vmatpush1.bf16.msra.mxu0 0
      %4519 = vmatprep.subr.bf16.mxu0 0
      %4520 = vmatpush1.bf16.msra.mxu0 0
      %4521 = vmatprep.subr.bf16.mxu0 0
      %4522 = vmatpush1.bf16.msra.mxu0 0
      %4523 = vmatprep.mubr.bf16.mxu0 0
      %4524 = vmatmul.mubr.bf16.gmra.mrb[0].mxu0 %v3715
      %v4525 = vpop.f32.mrb[0].mxu0
      %v4526 = vadd.f32 0.0, %v4525
      %v4527 = vpop.f32.mrb[0].mxu0
      %v4528 = vadd.f32 0.0, %v4527
      %v4529 = vpop.f32.mrb[0].mxu0
      %v4530 = vadd.f32 0.0, %v4529
      %v4531 = vpop.f32.mrb[0].mxu0
      %v4532 = vadd.f32 0.0, %v4531
      %4533 = vmatprep.mubr.bf16.mxu0 0
      %4534 = vmatmul.mubr.bf16.gmra.mrb[0].mxu0 %v3718
      %v4535 = vpop.f32.mrb[0].mxu0
      %v4536 = vadd.f32 0.0, %v4535
      %v4537 = vpop.f32.mrb[0].mxu0
      %v4538 = vadd.f32 0.0, %v4537
      %v4539 = vpop.f32.mrb[0].mxu0
      %v4540 = vadd.f32 0.0, %v4539
      %v4541 = vpop.f32.mrb[0].mxu0
      %v4542 = vadd.f32 0.0, %v4541
      %4543 = vmatprep.mubr.bf16.mxu0 0
      %4544 = vmatmul.mubr.bf16.gmra.mrb[0].mxu0 %v3721
      %v4545 = vpop.f32.mrb[0].mxu0
      %v4546 = vadd.f32 0.0, %v4545
      %v4547 = vpop.f32.mrb[0].mxu0
      %v4548 = vadd.f32 0.0, %v4547
      %v4549 = vpop.f32.mrb[0].mxu0
      %v4550 = vadd.f32 0.0, %v4549
      %v4551 = vpop.f32.mrb[0].mxu0
      %v4552 = vadd.f32 0.0, %v4551
      %4553 = vmatprep.mubr.bf16.mxu0 0
      %4554 = vmatmul.mubr.bf16.gmra.mrb[0].mxu0 %v3724
      %v4555 = vpop.f32.mrb[0].mxu0
      %v4556 = vadd.f32 0.0, %v4555
      %v4557 = vpop.f32.mrb[0].mxu0
      %v4558 = vadd.f32 0.0, %v4557
      %v4559 = vpop.f32.mrb[0].mxu0
      %v4560 = vadd.f32 0.0, %v4559
      %v4561 = vpop.f32.mrb[0].mxu0
      %v4562 = vadd.f32 0.0, %v4561
      %4563 = vmatprep.mubr.bf16.mxu0 0
      %4564 = vmatmul.mubr.bf16.gmra.mrb[0].mxu0 %v3727
      %v4565 = vpop.f32.mrb[0].mxu0
      %v4566 = vadd.f32 0.0, %v4565
      %v4567 = vpop.f32.mrb[0].mxu0
      %v4568 = vadd.f32 0.0, %v4567
      %v4569 = vpop.f32.mrb[0].mxu0
      %v4570 = vadd.f32 0.0, %v4569
      %v4571 = vpop.f32.mrb[0].mxu0
      %v4572 = vadd.f32 0.0, %v4571
      %4573 = vmatprep.mubr.bf16.mxu0 0
      %4574 = vmatmul.mubr.bf16.gmra.mrb[0].mxu0 %v3730
      %v4575 = vpop.f32.mrb[0].mxu0
      %v4576 = vadd.f32 0.0, %v4575
      %v4577 = vpop.f32.mrb[0].mxu0
      %v4578 = vadd.f32 0.0, %v4577
      %v4579 = vpop.f32.mrb[0].mxu0
      %v4580 = vadd.f32 0.0, %v4579
      %v4581 = vpop.f32.mrb[0].mxu0
      %v4582 = vadd.f32 0.0, %v4581
      %4583 = vmatprep.mubr.bf16.mxu0 0
      %4584 = vmatmul.mubr.bf16.gmra.mrb[0].mxu0 %v3733
      %v4585 = vpop.f32.mrb[0].mxu0
      %v4586 = vadd.f32 0.0, %v4585
      %v4587 = vpop.f32.mrb[0].mxu0
      %v4588 = vadd.f32 0.0, %v4587
      %v4589 = vpop.f32.mrb[0].mxu0
      %v4590 = vadd.f32 0.0, %v4589
      %v4591 = vpop.f32.mrb[0].mxu0
      %v4592 = vadd.f32 0.0, %v4591
      %4593 = vmatprep.mubr.bf16.mxu0 0
      %4594 = vmatmul.mubr.bf16.gmra.mrb[0].mxu0 %v3736
      %v4595 = vpop.f32.mrb[0].mxu0
      %v4596 = vadd.f32 0.0, %v4595
      %v4597 = vpop.f32.mrb[0].mxu0
      %v4598 = vadd.f32 0.0, %v4597
      %v4599 = vpop.f32.mrb[0].mxu0
      %v4600 = vadd.f32 0.0, %v4599
      %v4601 = vpop.f32.mrb[0].mxu0
      %v4602 = vadd.f32 0.0, %v4601
      %4603 = vmatprep.mubr.bf16.mxu0 0
      %4604 = vmatmul.mubr.bf16.gmra.mrb[0].mxu0 %v3739
      %v4605 = vpop.f32.mrb[0].mxu0
      %v4606 = vadd.f32 0.0, %v4605
      %v4607 = vpop.f32.mrb[0].mxu0
      %v4608 = vadd.f32 0.0, %v4607
      %v4609 = vpop.f32.mrb[0].mxu0
      %v4610 = vadd.f32 0.0, %v4609
      %v4611 = vpop.f32.mrb[0].mxu0
      %v4612 = vadd.f32 0.0, %v4611
      %4613 = vmatprep.mubr.bf16.mxu0 0
      %4614 = vmatmul.mubr.bf16.gmra.mrb[0].mxu0 %v3742
      %v4615 = vpop.f32.mrb[0].mxu0
      %v4616 = vadd.f32 0.0, %v4615
      %v4617 = vpop.f32.mrb[0].mxu0
      %v4618 = vadd.f32 0.0, %v4617
      %v4619 = vpop.f32.mrb[0].mxu0
      %v4620 = vadd.f32 0.0, %v4619
      %v4621 = vpop.f32.mrb[0].mxu0
      %v4622 = vadd.f32 0.0, %v4621
      %4623 = vmatprep.mubr.bf16.mxu0 0
      %4624 = vmatmul.mubr.bf16.gmra.mrb[0].mxu0 %v3745
      %v4625 = vpop.f32.mrb[0].mxu0
      %v4626 = vadd.f32 0.0, %v4625
      %v4627 = vpop.f32.mrb[0].mxu0
      %v4628 = vadd.f32 0.0, %v4627
      %v4629 = vpop.f32.mrb[0].mxu0
      %v4630 = vadd.f32 0.0, %v4629
      %v4631 = vpop.f32.mrb[0].mxu0
      %v4632 = vadd.f32 0.0, %v4631
      %4633 = vmatprep.mubr.bf16.mxu0 0
      %4634 = vmatmul.mubr.bf16.gmra.mrb[0].mxu0 %v3748
      %v4635 = vpop.f32.mrb[0].mxu0
      %v4636 = vadd.f32 0.0, %v4635
      %v4637 = vpop.f32.mrb[0].mxu0
      %v4638 = vadd.f32 0.0, %v4637
      %v4639 = vpop.f32.mrb[0].mxu0
      %v4640 = vadd.f32 0.0, %v4639
      %v4641 = vpop.f32.mrb[0].mxu0
      %v4642 = vadd.f32 0.0, %v4641
      %4643 = vmatprep.mubr.bf16.mxu0 0
      %4644 = vmatmul.mubr.bf16.gmra.mrb[0].mxu0 %v3751
      %v4645 = vpop.f32.mrb[0].mxu0
      %v4646 = vadd.f32 0.0, %v4645
      %v4647 = vpop.f32.mrb[0].mxu0
      %v4648 = vadd.f32 0.0, %v4647
      %v4649 = vpop.f32.mrb[0].mxu0
      %v4650 = vadd.f32 0.0, %v4649
      %v4651 = vpop.f32.mrb[0].mxu0
      %v4652 = vadd.f32 0.0, %v4651
      %4653 = vmatprep.mubr.bf16.mxu0 0
      %4654 = vmatmul.mubr.bf16.gmra.mrb[0].mxu0 %v3754
      %v4655 = vpop.f32.mrb[0].mxu0
      %v4656 = vadd.f32 0.0, %v4655
      %v4657 = vpop.f32.mrb[0].mxu0
      %v4658 = vadd.f32 0.0, %v4657
      %v4659 = vpop.f32.mrb[0].mxu0
      %v4660 = vadd.f32 0.0, %v4659
      %v4661 = vpop.f32.mrb[0].mxu0
      %v4662 = vadd.f32 0.0, %v4661
      %4663 = vmatprep.mubr.bf16.mxu0 0
      %4664 = vmatmul.mubr.bf16.gmra.mrb[0].mxu0 %v3757
      %v4665 = vpop.f32.mrb[0].mxu0
      %v4666 = vadd.f32 0.0, %v4665
      %v4667 = vpop.f32.mrb[0].mxu0
      %v4668 = vadd.f32 0.0, %v4667
      %v4669 = vpop.f32.mrb[0].mxu0
      %v4670 = vadd.f32 0.0, %v4669
      %v4671 = vpop.f32.mrb[0].mxu0
      %v4672 = vadd.f32 0.0, %v4671
      %4673 = vdwg.mxu0
      %v4674 = vld [vmem:[%s12] sm:$0xff]
      %v4675 = vld [vmem:[%s12 + $0x8] sm:$0xff]
      %v4676 = vld [vmem:[%s12 + $0x10] sm:$0xff]
      %v4677 = vld [vmem:[%s12 + $0x18] sm:$0xff]
      %v4678 = vld [vmem:[%s12 + $0x20] sm:$0xff]
      %v4679 = vld [vmem:[%s12 + $0x28] sm:$0xff]
      %v4680 = vld [vmem:[%s12 + $0x30] sm:$0xff]
      %v4681 = vld [vmem:[%s12 + $0x38] sm:$0xff]
      %v4682 = vld [vmem:[%s12 + $0x40] sm:$0xff]
      %v4683 = vld [vmem:[%s12 + $0x48] sm:$0xff]
      %v4684 = vld [vmem:[%s12 + $0x50] sm:$0xff]
      %v4685 = vld [vmem:[%s12 + $0x58] sm:$0xff]
      %v4686 = vld [vmem:[%s12 + $0x60] sm:$0xff]
      %v4687 = vld [vmem:[%s12 + $0x68] sm:$0xff]
      %v4688 = vld [vmem:[%s12 + $0x70] sm:$0xff]
      %v4689 = vld [vmem:[%s12 + $0x78] sm:$0xff]
      %v4690 = vld [vmem:[%s12 + $0x80] sm:$0xff]
      %v4691 = vld [vmem:[%s12 + $0x88] sm:$0xff]
      %v4692 = vld [vmem:[%s12 + $0x90] sm:$0xff]
      %v4693 = vld [vmem:[%s12 + $0x98] sm:$0xff]
      %v4694 = vld [vmem:[%s12 + $0xa0] sm:$0xff]
      %v4695 = vld [vmem:[%s12 + $0xa8] sm:$0xff]
      %v4696 = vld [vmem:[%s12 + $0xb0] sm:$0xff]
      %v4697 = vld [vmem:[%s12 + $0xb8] sm:$0xff]
      %v4698 = vld [vmem:[%s12 + $0xc0] sm:$0xff]
      %v4699 = vld [vmem:[%s12 + $0xc8] sm:$0xff]
      %v4700 = vld [vmem:[%s12 + $0xd0] sm:$0xff]
      %v4701 = vld [vmem:[%s12 + $0xd8] sm:$0xff]
      %v4702 = vld [vmem:[%s12 + $0xe0] sm:$0xff]
      %v4703 = vld [vmem:[%s12 + $0xe8] sm:$0xff]
      %v4704 = vld [vmem:[%s12 + $0xf0] sm:$0xff]
      %v4705 = vld [vmem:[%s12 + $0xf8] sm:$0xff]
      %v4706 = vld [vmem:[%s12 + $0x100] sm:$0xff]
      %v4707 = vld [vmem:[%s12 + $0x108] sm:$0xff]
      %v4708 = vld [vmem:[%s12 + $0x110] sm:$0xff]
      %v4709 = vld [vmem:[%s12 + $0x118] sm:$0xff]
      %v4710 = vld [vmem:[%s12 + $0x120] sm:$0xff]
      %v4711 = vld [vmem:[%s12 + $0x128] sm:$0xff]
      %v4712 = vld [vmem:[%s12 + $0x130] sm:$0xff]
      %v4713 = vld [vmem:[%s12 + $0x138] sm:$0xff]
      %v4714 = vld [vmem:[%s12 + $0x140] sm:$0xff]
      %v4715 = vld [vmem:[%s12 + $0x148] sm:$0xff]
      %v4716 = vld [vmem:[%s12 + $0x150] sm:$0xff]
      %v4717 = vld [vmem:[%s12 + $0x158] sm:$0xff]
      %v4718 = vld [vmem:[%s12 + $0x160] sm:$0xff]
      %v4719 = vld [vmem:[%s12 + $0x168] sm:$0xff]
      %v4720 = vld [vmem:[%s12 + $0x170] sm:$0xff]
      %v4721 = vld [vmem:[%s12 + $0x178] sm:$0xff]
      %v4722 = vld [vmem:[%s12 + $0x180] sm:$0xff]
      %v4723 = vld [vmem:[%s12 + $0x188] sm:$0xff]
      %v4724 = vld [vmem:[%s12 + $0x190] sm:$0xff]
      %v4725 = vld [vmem:[%s12 + $0x198] sm:$0xff]
      %v4726 = vld [vmem:[%s12 + $0x1a0] sm:$0xff]
      %v4727 = vld [vmem:[%s12 + $0x1a8] sm:$0xff]
      %v4728 = vld [vmem:[%s12 + $0x1b0] sm:$0xff]
      %v4729 = vld [vmem:[%s12 + $0x1b8] sm:$0xff]
      %v4730 = vld [vmem:[%s12 + $0x1c0] sm:$0xff]
      %v4731 = vld [vmem:[%s12 + $0x1c8] sm:$0xff]
      %v4732 = vld [vmem:[%s12 + $0x1d0] sm:$0xff]
      %v4733 = vld [vmem:[%s12 + $0x1d8] sm:$0xff]
      %v4734 = vld [vmem:[%s12 + $0x1e0] sm:$0xff]
      %v4735 = vld [vmem:[%s12 + $0x1e8] sm:$0xff]
      %v4736 = vld [vmem:[%s12 + $0x1f0] sm:$0xff]
      %v4737 = vld [vmem:[%s12 + $0x1f8] sm:$0xff]
      %v4738 = vld [vmem:[%s12 + $0x200] sm:$0xff]
      %v4739 = vld [vmem:[%s12 + $0x208] sm:$0xff]
      %v4740 = vld [vmem:[%s12 + $0x210] sm:$0xff]
      %v4741 = vld [vmem:[%s12 + $0x218] sm:$0xff]
      %v4742 = vld [vmem:[%s12 + $0x220] sm:$0xff]
      %v4743 = vld [vmem:[%s12 + $0x228] sm:$0xff]
      %v4744 = vld [vmem:[%s12 + $0x230] sm:$0xff]
      %v4745 = vld [vmem:[%s12 + $0x238] sm:$0xff]
      %v4746 = vld [vmem:[%s12 + $0x240] sm:$0xff]
      %v4747 = vld [vmem:[%s12 + $0x248] sm:$0xff]
      %v4748 = vld [vmem:[%s12 + $0x250] sm:$0xff]
      %v4749 = vld [vmem:[%s12 + $0x258] sm:$0xff]
      %v4750 = vld [vmem:[%s12 + $0x260] sm:$0xff]
      %v4751 = vld [vmem:[%s12 + $0x268] sm:$0xff]
      %v4752 = vld [vmem:[%s12 + $0x270] sm:$0xff]
      %v4753 = vld [vmem:[%s12 + $0x278] sm:$0xff]
      %v4754 = vld [vmem:[%s12 + $0x280] sm:$0xff]
      %v4755 = vld [vmem:[%s12 + $0x288] sm:$0xff]
      %v4756 = vld [vmem:[%s12 + $0x290] sm:$0xff]
      %v4757 = vld [vmem:[%s12 + $0x298] sm:$0xff]
      %v4758 = vld [vmem:[%s12 + $0x2a0] sm:$0xff]
      %v4759 = vld [vmem:[%s12 + $0x2a8] sm:$0xff]
      %v4760 = vld [vmem:[%s12 + $0x2b0] sm:$0xff]
      %v4761 = vld [vmem:[%s12 + $0x2b8] sm:$0xff]
      %v4762 = vld [vmem:[%s12 + $0x2c0] sm:$0xff]
      %v4763 = vld [vmem:[%s12 + $0x2c8] sm:$0xff]
      %v4764 = vld [vmem:[%s12 + $0x2d0] sm:$0xff]
      %v4765 = vld [vmem:[%s12 + $0x2d8] sm:$0xff]
      %v4766 = vld [vmem:[%s12 + $0x2e0] sm:$0xff]
      %v4767 = vld [vmem:[%s12 + $0x2e8] sm:$0xff]
      %v4768 = vld [vmem:[%s12 + $0x2f0] sm:$0xff]
      %v4769 = vld [vmem:[%s12 + $0x2f8] sm:$0xff]
      %v4770 = vld [vmem:[%s12 + $0x300] sm:$0xff]
      %v4771 = vld [vmem:[%s12 + $0x308] sm:$0xff]
      %v4772 = vld [vmem:[%s12 + $0x310] sm:$0xff]
      %v4773 = vld [vmem:[%s12 + $0x318] sm:$0xff]
      %v4774 = vld [vmem:[%s12 + $0x320] sm:$0xff]
      %v4775 = vld [vmem:[%s12 + $0x328] sm:$0xff]
      %v4776 = vld [vmem:[%s12 + $0x330] sm:$0xff]
      %v4777 = vld [vmem:[%s12 + $0x338] sm:$0xff]
      %v4778 = vld [vmem:[%s12 + $0x340] sm:$0xff]
      %v4779 = vld [vmem:[%s12 + $0x348] sm:$0xff]
      %v4780 = vld [vmem:[%s12 + $0x350] sm:$0xff]
      %v4781 = vld [vmem:[%s12 + $0x358] sm:$0xff]
      %v4782 = vld [vmem:[%s12 + $0x360] sm:$0xff]
      %v4783 = vld [vmem:[%s12 + $0x368] sm:$0xff]
      %v4784 = vld [vmem:[%s12 + $0x370] sm:$0xff]
      %v4785 = vld [vmem:[%s12 + $0x378] sm:$0xff]
      %v4786 = vld [vmem:[%s12 + $0x380] sm:$0xff]
      %v4787 = vld [vmem:[%s12 + $0x388] sm:$0xff]
      %v4788 = vld [vmem:[%s12 + $0x390] sm:$0xff]
      %v4789 = vld [vmem:[%s12 + $0x398] sm:$0xff]
      %v4790 = vld [vmem:[%s12 + $0x3a0] sm:$0xff]
      %v4791 = vld [vmem:[%s12 + $0x3a8] sm:$0xff]
      %v4792 = vld [vmem:[%s12 + $0x3b0] sm:$0xff]
      %v4793 = vld [vmem:[%s12 + $0x3b8] sm:$0xff]
      %v4794 = vld [vmem:[%s12 + $0x3c0] sm:$0xff]
      %v4795 = vld [vmem:[%s12 + $0x3c8] sm:$0xff]
      %v4796 = vld [vmem:[%s12 + $0x3d0] sm:$0xff]
      %v4797 = vld [vmem:[%s12 + $0x3d8] sm:$0xff]
      %v4798 = vld [vmem:[%s12 + $0x3e0] sm:$0xff]
      %v4799 = vld [vmem:[%s12 + $0x3e8] sm:$0xff]
      %v4800 = vld [vmem:[%s12 + $0x3f0] sm:$0xff]
      %v4801 = vld [vmem:[%s12 + $0x3f8] sm:$0xff]
      %v4802 = vld [vmem:[%s12 + $0x400] sm:$0xff]
      %v4803 = vld [vmem:[%s12 + $0x408] sm:$0xff]
      %v4804 = vld [vmem:[%s12 + $0x410] sm:$0xff]
      %v4805 = vld [vmem:[%s12 + $0x418] sm:$0xff]
      %v4806 = vld [vmem:[%s12 + $0x420] sm:$0xff]
      %v4807 = vld [vmem:[%s12 + $0x428] sm:$0xff]
      %v4808 = vld [vmem:[%s12 + $0x430] sm:$0xff]
      %v4809 = vld [vmem:[%s12 + $0x438] sm:$0xff]
      %v4810 = vld [vmem:[%s12 + $0x440] sm:$0xff]
      %v4811 = vld [vmem:[%s12 + $0x448] sm:$0xff]
      %v4812 = vld [vmem:[%s12 + $0x450] sm:$0xff]
      %v4813 = vld [vmem:[%s12 + $0x458] sm:$0xff]
      %v4814 = vld [vmem:[%s12 + $0x460] sm:$0xff]
      %v4815 = vld [vmem:[%s12 + $0x468] sm:$0xff]
      %v4816 = vld [vmem:[%s12 + $0x470] sm:$0xff]
      %v4817 = vld [vmem:[%s12 + $0x478] sm:$0xff]
      %v4818 = vld [vmem:[%s12 + $0x480] sm:$0xff]
      %v4819 = vld [vmem:[%s12 + $0x488] sm:$0xff]
      %v4820 = vld [vmem:[%s12 + $0x490] sm:$0xff]
      %v4821 = vld [vmem:[%s12 + $0x498] sm:$0xff]
      %v4822 = vld [vmem:[%s12 + $0x4a0] sm:$0xff]
      %v4823 = vld [vmem:[%s12 + $0x4a8] sm:$0xff]
      %v4824 = vld [vmem:[%s12 + $0x4b0] sm:$0xff]
      %v4825 = vld [vmem:[%s12 + $0x4b8] sm:$0xff]
      %v4826 = vld [vmem:[%s12 + $0x4c0] sm:$0xff]
      %v4827 = vld [vmem:[%s12 + $0x4c8] sm:$0xff]
      %v4828 = vld [vmem:[%s12 + $0x4d0] sm:$0xff]
      %v4829 = vld [vmem:[%s12 + $0x4d8] sm:$0xff]
      %v4830 = vld [vmem:[%s12 + $0x4e0] sm:$0xff]
      %v4831 = vld [vmem:[%s12 + $0x4e8] sm:$0xff]
      %v4832 = vld [vmem:[%s12 + $0x4f0] sm:$0xff]
      %v4833 = vld [vmem:[%s12 + $0x4f8] sm:$0xff]
      %v4834 = vld [vmem:[%s12 + $0x500] sm:$0xff]
      %v4835 = vld [vmem:[%s12 + $0x508] sm:$0xff]
      %v4836 = vld [vmem:[%s12 + $0x510] sm:$0xff]
      %v4837 = vld [vmem:[%s12 + $0x518] sm:$0xff]
      %v4838 = vld [vmem:[%s12 + $0x520] sm:$0xff]
      %v4839 = vld [vmem:[%s12 + $0x528] sm:$0xff]
      %v4840 = vld [vmem:[%s12 + $0x530] sm:$0xff]
      %v4841 = vld [vmem:[%s12 + $0x538] sm:$0xff]
      %v4842 = vld [vmem:[%s12 + $0x540] sm:$0xff]
      %v4843 = vld [vmem:[%s12 + $0x548] sm:$0xff]
      %v4844 = vld [vmem:[%s12 + $0x550] sm:$0xff]
      %v4845 = vld [vmem:[%s12 + $0x558] sm:$0xff]
      %v4846 = vld [vmem:[%s12 + $0x560] sm:$0xff]
      %v4847 = vld [vmem:[%s12 + $0x568] sm:$0xff]
      %v4848 = vld [vmem:[%s12 + $0x570] sm:$0xff]
      %v4849 = vld [vmem:[%s12 + $0x578] sm:$0xff]
      %v4850 = vld [vmem:[%s12 + $0x580] sm:$0xff]
      %v4851 = vld [vmem:[%s12 + $0x588] sm:$0xff]
      %v4852 = vld [vmem:[%s12 + $0x590] sm:$0xff]
      %v4853 = vld [vmem:[%s12 + $0x598] sm:$0xff]
      %v4854 = vld [vmem:[%s12 + $0x5a0] sm:$0xff]
      %v4855 = vld [vmem:[%s12 + $0x5a8] sm:$0xff]
      %v4856 = vld [vmem:[%s12 + $0x5b0] sm:$0xff]
      %v4857 = vld [vmem:[%s12 + $0x5b8] sm:$0xff]
      %v4858 = vld [vmem:[%s12 + $0x5c0] sm:$0xff]
      %v4859 = vld [vmem:[%s12 + $0x5c8] sm:$0xff]
      %v4860 = vld [vmem:[%s12 + $0x5d0] sm:$0xff]
      %v4861 = vld [vmem:[%s12 + $0x5d8] sm:$0xff]
      %v4862 = vld [vmem:[%s12 + $0x5e0] sm:$0xff]
      %v4863 = vld [vmem:[%s12 + $0x5e8] sm:$0xff]
      %v4864 = vld [vmem:[%s12 + $0x5f0] sm:$0xff]
      %v4865 = vld [vmem:[%s12 + $0x5f8] sm:$0xff]
      %v4866 = vld [vmem:[%s12 + $0x600] sm:$0xff]
      %v4867 = vld [vmem:[%s12 + $0x608] sm:$0xff]
      %v4868 = vld [vmem:[%s12 + $0x610] sm:$0xff]
      %v4869 = vld [vmem:[%s12 + $0x618] sm:$0xff]
      %v4870 = vld [vmem:[%s12 + $0x620] sm:$0xff]
      %v4871 = vld [vmem:[%s12 + $0x628] sm:$0xff]
      %v4872 = vld [vmem:[%s12 + $0x630] sm:$0xff]
      %v4873 = vld [vmem:[%s12 + $0x638] sm:$0xff]
      %v4874 = vld [vmem:[%s12 + $0x640] sm:$0xff]
      %v4875 = vld [vmem:[%s12 + $0x648] sm:$0xff]
      %v4876 = vld [vmem:[%s12 + $0x650] sm:$0xff]
      %v4877 = vld [vmem:[%s12 + $0x658] sm:$0xff]
      %v4878 = vld [vmem:[%s12 + $0x660] sm:$0xff]
      %v4879 = vld [vmem:[%s12 + $0x668] sm:$0xff]
      %v4880 = vld [vmem:[%s12 + $0x670] sm:$0xff]
      %v4881 = vld [vmem:[%s12 + $0x678] sm:$0xff]
      %v4882 = vld [vmem:[%s12 + $0x680] sm:$0xff]
      %v4883 = vld [vmem:[%s12 + $0x688] sm:$0xff]
      %v4884 = vld [vmem:[%s12 + $0x690] sm:$0xff]
      %v4885 = vld [vmem:[%s12 + $0x698] sm:$0xff]
      %v4886 = vld [vmem:[%s12 + $0x6a0] sm:$0xff]
      %v4887 = vld [vmem:[%s12 + $0x6a8] sm:$0xff]
      %v4888 = vld [vmem:[%s12 + $0x6b0] sm:$0xff]
      %v4889 = vld [vmem:[%s12 + $0x6b8] sm:$0xff]
      %v4890 = vld [vmem:[%s12 + $0x6c0] sm:$0xff]
      %v4891 = vld [vmem:[%s12 + $0x6c8] sm:$0xff]
      %v4892 = vld [vmem:[%s12 + $0x6d0] sm:$0xff]
      %v4893 = vld [vmem:[%s12 + $0x6d8] sm:$0xff]
      %v4894 = vld [vmem:[%s12 + $0x6e0] sm:$0xff]
      %v4895 = vld [vmem:[%s12 + $0x6e8] sm:$0xff]
      %v4896 = vld [vmem:[%s12 + $0x6f0] sm:$0xff]
      %v4897 = vld [vmem:[%s12 + $0x6f8] sm:$0xff]
      %v4898 = vld [vmem:[%s12 + $0x700] sm:$0xff]
      %v4899 = vld [vmem:[%s12 + $0x708] sm:$0xff]
      %v4900 = vld [vmem:[%s12 + $0x710] sm:$0xff]
      %v4901 = vld [vmem:[%s12 + $0x718] sm:$0xff]
      %v4902 = vld [vmem:[%s12 + $0x720] sm:$0xff]
      %v4903 = vld [vmem:[%s12 + $0x728] sm:$0xff]
      %v4904 = vld [vmem:[%s12 + $0x730] sm:$0xff]
      %v4905 = vld [vmem:[%s12 + $0x738] sm:$0xff]
      %v4906 = vld [vmem:[%s12 + $0x740] sm:$0xff]
      %v4907 = vld [vmem:[%s12 + $0x748] sm:$0xff]
      %v4908 = vld [vmem:[%s12 + $0x750] sm:$0xff]
      %v4909 = vld [vmem:[%s12 + $0x758] sm:$0xff]
      %v4910 = vld [vmem:[%s12 + $0x760] sm:$0xff]
      %v4911 = vld [vmem:[%s12 + $0x768] sm:$0xff]
      %v4912 = vld [vmem:[%s12 + $0x770] sm:$0xff]
      %v4913 = vld [vmem:[%s12 + $0x778] sm:$0xff]
      %v4914 = vld [vmem:[%s12 + $0x780] sm:$0xff]
      %v4915 = vld [vmem:[%s12 + $0x788] sm:$0xff]
      %v4916 = vld [vmem:[%s12 + $0x790] sm:$0xff]
      %v4917 = vld [vmem:[%s12 + $0x798] sm:$0xff]
      %v4918 = vld [vmem:[%s12 + $0x7a0] sm:$0xff]
      %v4919 = vld [vmem:[%s12 + $0x7a8] sm:$0xff]
      %v4920 = vld [vmem:[%s12 + $0x7b0] sm:$0xff]
      %v4921 = vld [vmem:[%s12 + $0x7b8] sm:$0xff]
      %v4922 = vld [vmem:[%s12 + $0x7c0] sm:$0xff]
      %v4923 = vld [vmem:[%s12 + $0x7c8] sm:$0xff]
      %v4924 = vld [vmem:[%s12 + $0x7d0] sm:$0xff]
      %v4925 = vld [vmem:[%s12 + $0x7d8] sm:$0xff]
      %v4926 = vld [vmem:[%s12 + $0x7e0] sm:$0xff]
      %v4927 = vld [vmem:[%s12 + $0x7e8] sm:$0xff]
      %v4928 = vld [vmem:[%s12 + $0x7f0] sm:$0xff]
      %v4929 = vld [vmem:[%s12 + $0x7f8] sm:$0xff]
      %v4930 = vld [vmem:[%s12 + $0x800] sm:$0xff]
      %v4931 = vld [vmem:[%s12 + $0x808] sm:$0xff]
      %v4932 = vld [vmem:[%s12 + $0x810] sm:$0xff]
      %v4933 = vld [vmem:[%s12 + $0x818] sm:$0xff]
      %v4934 = vld [vmem:[%s12 + $0x820] sm:$0xff]
      %v4935 = vld [vmem:[%s12 + $0x828] sm:$0xff]
      %v4936 = vld [vmem:[%s12 + $0x830] sm:$0xff]
      %v4937 = vld [vmem:[%s12 + $0x838] sm:$0xff]
      %v4938 = vld [vmem:[%s12 + $0x840] sm:$0xff]
      %v4939 = vld [vmem:[%s12 + $0x848] sm:$0xff]
      %v4940 = vld [vmem:[%s12 + $0x850] sm:$0xff]
      %v4941 = vld [vmem:[%s12 + $0x858] sm:$0xff]
      %v4942 = vld [vmem:[%s12 + $0x860] sm:$0xff]
      %v4943 = vld [vmem:[%s12 + $0x868] sm:$0xff]
      %v4944 = vld [vmem:[%s12 + $0x870] sm:$0xff]
      %v4945 = vld [vmem:[%s12 + $0x878] sm:$0xff]
      %v4946 = vld [vmem:[%s12 + $0x880] sm:$0xff]
      %v4947 = vld [vmem:[%s12 + $0x888] sm:$0xff]
      %v4948 = vld [vmem:[%s12 + $0x890] sm:$0xff]
      %v4949 = vld [vmem:[%s12 + $0x898] sm:$0xff]
      %v4950 = vld [vmem:[%s12 + $0x8a0] sm:$0xff]
      %v4951 = vld [vmem:[%s12 + $0x8a8] sm:$0xff]
      %v4952 = vld [vmem:[%s12 + $0x8b0] sm:$0xff]
      %v4953 = vld [vmem:[%s12 + $0x8b8] sm:$0xff]
      %v4954 = vld [vmem:[%s12 + $0x8c0] sm:$0xff]
      %v4955 = vld [vmem:[%s12 + $0x8c8] sm:$0xff]
      %v4956 = vld [vmem:[%s12 + $0x8d0] sm:$0xff]
      %v4957 = vld [vmem:[%s12 + $0x8d8] sm:$0xff]
      %v4958 = vld [vmem:[%s12 + $0x8e0] sm:$0xff]
      %v4959 = vld [vmem:[%s12 + $0x8e8] sm:$0xff]
      %v4960 = vld [vmem:[%s12 + $0x8f0] sm:$0xff]
      %v4961 = vld [vmem:[%s12 + $0x8f8] sm:$0xff]
      %v4962 = vld [vmem:[%s12 + $0x900] sm:$0xff]
      %v4963 = vld [vmem:[%s12 + $0x908] sm:$0xff]
      %v4964 = vld [vmem:[%s12 + $0x910] sm:$0xff]
      %v4965 = vld [vmem:[%s12 + $0x918] sm:$0xff]
      %v4966 = vld [vmem:[%s12 + $0x920] sm:$0xff]
      %v4967 = vld [vmem:[%s12 + $0x928] sm:$0xff]
      %v4968 = vld [vmem:[%s12 + $0x930] sm:$0xff]
      %v4969 = vld [vmem:[%s12 + $0x938] sm:$0xff]
      %v4970 = vld [vmem:[%s12 + $0x940] sm:$0xff]
      %v4971 = vld [vmem:[%s12 + $0x948] sm:$0xff]
      %v4972 = vld [vmem:[%s12 + $0x950] sm:$0xff]
      %v4973 = vld [vmem:[%s12 + $0x958] sm:$0xff]
      %v4974 = vmul.f32 %v3794, %v4674
      %v4975 = vmul.f32 %v3796, %v4675
      %v4976 = vmul.f32 %v3977, %v4676
      %v4977 = vmul.f32 %v3979, %v4677
      %v4978 = vmul.f32 %v4160, %v4678
      %v4979 = vmul.f32 %v4162, %v4679
      %v4980 = vmul.f32 %v4343, %v4680
      %v4981 = vmul.f32 %v4345, %v4681
      %v4982 = vmul.f32 %v4526, %v4682
      %v4983 = vmul.f32 %v4528, %v4683
      %v4984 = vmul.f32 %v3798, %v4684
      %v4985 = vmul.f32 %v3800, %v4685
      %v4986 = vmul.f32 %v3981, %v4686
      %v4987 = vmul.f32 %v3983, %v4687
      %v4988 = vmul.f32 %v4164, %v4688
      %v4989 = vmul.f32 %v4166, %v4689
      %v4990 = vmul.f32 %v4347, %v4690
      %v4991 = vmul.f32 %v4349, %v4691
      %v4992 = vmul.f32 %v4530, %v4692
      %v4993 = vmul.f32 %v4532, %v4693
      %v4994 = vmul.f32 %v3804, %v4694
      %v4995 = vmul.f32 %v3806, %v4695
      %v4996 = vmul.f32 %v3987, %v4696
      %v4997 = vmul.f32 %v3989, %v4697
      %v4998 = vmul.f32 %v4170, %v4698
      %v4999 = vmul.f32 %v4172, %v4699
      %v5000 = vmul.f32 %v4353, %v4700
      %v5001 = vmul.f32 %v4355, %v4701
      %v5002 = vmul.f32 %v4536, %v4702
      %v5003 = vmul.f32 %v4538, %v4703
      %v5004 = vmul.f32 %v3808, %v4704
      %v5005 = vmul.f32 %v3810, %v4705
      %v5006 = vmul.f32 %v3991, %v4706
      %v5007 = vmul.f32 %v3993, %v4707
      %v5008 = vmul.f32 %v4174, %v4708
      %v5009 = vmul.f32 %v4176, %v4709
      %v5010 = vmul.f32 %v4357, %v4710
      %v5011 = vmul.f32 %v4359, %v4711
      %v5012 = vmul.f32 %v4540, %v4712
      %v5013 = vmul.f32 %v4542, %v4713
      %v5014 = vmul.f32 %v3814, %v4714
      %v5015 = vmul.f32 %v3816, %v4715
      %v5016 = vmul.f32 %v3997, %v4716
      %v5017 = vmul.f32 %v3999, %v4717
      %v5018 = vmul.f32 %v4180, %v4718
      %v5019 = vmul.f32 %v4182, %v4719
      %v5020 = vmul.f32 %v4363, %v4720
      %v5021 = vmul.f32 %v4365, %v4721
      %v5022 = vmul.f32 %v4546, %v4722
      %v5023 = vmul.f32 %v4548, %v4723
      %v5024 = vmul.f32 %v3818, %v4724
      %v5025 = vmul.f32 %v3820, %v4725
      %v5026 = vmul.f32 %v4001, %v4726
      %v5027 = vmul.f32 %v4003, %v4727
      %v5028 = vmul.f32 %v4184, %v4728
      %v5029 = vmul.f32 %v4186, %v4729
      %v5030 = vmul.f32 %v4367, %v4730
      %v5031 = vmul.f32 %v4369, %v4731
      %v5032 = vmul.f32 %v4550, %v4732
      %v5033 = vmul.f32 %v4552, %v4733
      %v5034 = vmul.f32 %v3824, %v4734
      %v5035 = vmul.f32 %v3826, %v4735
      %v5036 = vmul.f32 %v4007, %v4736
      %v5037 = vmul.f32 %v4009, %v4737
      %v5038 = vmul.f32 %v4190, %v4738
      %v5039 = vmul.f32 %v4192, %v4739
      %v5040 = vmul.f32 %v4373, %v4740
      %v5041 = vmul.f32 %v4375, %v4741
      %v5042 = vmul.f32 %v4556, %v4742
      %v5043 = vmul.f32 %v4558, %v4743
      %v5044 = vmul.f32 %v3828, %v4744
      %v5045 = vmul.f32 %v3830, %v4745
      %v5046 = vmul.f32 %v4011, %v4746
      %v5047 = vmul.f32 %v4013, %v4747
      %v5048 = vmul.f32 %v4194, %v4748
      %v5049 = vmul.f32 %v4196, %v4749
      %v5050 = vmul.f32 %v4377, %v4750
      %v5051 = vmul.f32 %v4379, %v4751
      %v5052 = vmul.f32 %v4560, %v4752
      %v5053 = vmul.f32 %v4562, %v4753
      %v5054 = vmul.f32 %v3834, %v4754
      %v5055 = vmul.f32 %v3836, %v4755
      %v5056 = vmul.f32 %v4017, %v4756
      %v5057 = vmul.f32 %v4019, %v4757
      %v5058 = vmul.f32 %v4200, %v4758
      %v5059 = vmul.f32 %v4202, %v4759
      %v5060 = vmul.f32 %v4383, %v4760
      %v5061 = vmul.f32 %v4385, %v4761
      %v5062 = vmul.f32 %v4566, %v4762
      %v5063 = vmul.f32 %v4568, %v4763
      %v5064 = vmul.f32 %v3838, %v4764
      %v5065 = vmul.f32 %v3840, %v4765
      %v5066 = vmul.f32 %v4021, %v4766
      %v5067 = vmul.f32 %v4023, %v4767
      %v5068 = vmul.f32 %v4204, %v4768
      %v5069 = vmul.f32 %v4206, %v4769
      %v5070 = vmul.f32 %v4387, %v4770
      %v5071 = vmul.f32 %v4389, %v4771
      %v5072 = vmul.f32 %v4570, %v4772
      %v5073 = vmul.f32 %v4572, %v4773
      %v5074 = vmul.f32 %v3844, %v4774
      %v5075 = vmul.f32 %v3846, %v4775
      %v5076 = vmul.f32 %v4027, %v4776
      %v5077 = vmul.f32 %v4029, %v4777
      %v5078 = vmul.f32 %v4210, %v4778
      %v5079 = vmul.f32 %v4212, %v4779
      %v5080 = vmul.f32 %v4393, %v4780
      %v5081 = vmul.f32 %v4395, %v4781
      %v5082 = vmul.f32 %v4576, %v4782
      %v5083 = vmul.f32 %v4578, %v4783
      %v5084 = vmul.f32 %v3848, %v4784
      %v5085 = vmul.f32 %v3850, %v4785
      %v5086 = vmul.f32 %v4031, %v4786
      %v5087 = vmul.f32 %v4033, %v4787
      %v5088 = vmul.f32 %v4214, %v4788
      %v5089 = vmul.f32 %v4216, %v4789
      %v5090 = vmul.f32 %v4397, %v4790
      %v5091 = vmul.f32 %v4399, %v4791
      %v5092 = vmul.f32 %v4580, %v4792
      %v5093 = vmul.f32 %v4582, %v4793
      %v5094 = vmul.f32 %v3854, %v4794
      %v5095 = vmul.f32 %v3856, %v4795
      %v5096 = vmul.f32 %v4037, %v4796
      %v5097 = vmul.f32 %v4039, %v4797
      %v5098 = vmul.f32 %v4220, %v4798
      %v5099 = vmul.f32 %v4222, %v4799
      %v5100 = vmul.f32 %v4403, %v4800
      %v5101 = vmul.f32 %v4405, %v4801
      %v5102 = vmul.f32 %v4586, %v4802
      %v5103 = vmul.f32 %v4588, %v4803
      %v5104 = vmul.f32 %v3858, %v4804
      %v5105 = vmul.f32 %v3860, %v4805
      %v5106 = vmul.f32 %v4041, %v4806
      %v5107 = vmul.f32 %v4043, %v4807
      %v5108 = vmul.f32 %v4224, %v4808
      %v5109 = vmul.f32 %v4226, %v4809
      %v5110 = vmul.f32 %v4407, %v4810
      %v5111 = vmul.f32 %v4409, %v4811
      %v5112 = vmul.f32 %v4590, %v4812
      %v5113 = vmul.f32 %v4592, %v4813
      %v5114 = vmul.f32 %v3864, %v4814
      %v5115 = vmul.f32 %v3866, %v4815
      %v5116 = vmul.f32 %v4047, %v4816
      %v5117 = vmul.f32 %v4049, %v4817
      %v5118 = vmul.f32 %v4230, %v4818
      %v5119 = vmul.f32 %v4232, %v4819
      %v5120 = vmul.f32 %v4413, %v4820
      %v5121 = vmul.f32 %v4415, %v4821
      %v5122 = vmul.f32 %v4596, %v4822
      %v5123 = vmul.f32 %v4598, %v4823
      %v5124 = vmul.f32 %v3868, %v4824
      %v5125 = vmul.f32 %v3870, %v4825
      %v5126 = vmul.f32 %v4051, %v4826
      %v5127 = vmul.f32 %v4053, %v4827
      %v5128 = vmul.f32 %v4234, %v4828
      %v5129 = vmul.f32 %v4236, %v4829
      %v5130 = vmul.f32 %v4417, %v4830
      %v5131 = vmul.f32 %v4419, %v4831
      %v5132 = vmul.f32 %v4600, %v4832
      %v5133 = vmul.f32 %v4602, %v4833
      %v5134 = vmul.f32 %v3874, %v4834
      %v5135 = vmul.f32 %v3876, %v4835
      %v5136 = vmul.f32 %v4057, %v4836
      %v5137 = vmul.f32 %v4059, %v4837
      %v5138 = vmul.f32 %v4240, %v4838
      %v5139 = vmul.f32 %v4242, %v4839
      %v5140 = vmul.f32 %v4423, %v4840
      %v5141 = vmul.f32 %v4425, %v4841
      %v5142 = vmul.f32 %v4606, %v4842
      %v5143 = vmul.f32 %v4608, %v4843
      %v5144 = vmul.f32 %v3878, %v4844
      %v5145 = vmul.f32 %v3880, %v4845
      %v5146 = vmul.f32 %v4061, %v4846
      %v5147 = vmul.f32 %v4063, %v4847
      %v5148 = vmul.f32 %v4244, %v4848
      %v5149 = vmul.f32 %v4246, %v4849
      %v5150 = vmul.f32 %v4427, %v4850
      %v5151 = vmul.f32 %v4429, %v4851
      %v5152 = vmul.f32 %v4610, %v4852
      %v5153 = vmul.f32 %v4612, %v4853
      %v5154 = vmul.f32 %v3884, %v4854
      %v5155 = vmul.f32 %v3886, %v4855
      %v5156 = vmul.f32 %v4067, %v4856
      %v5157 = vmul.f32 %v4069, %v4857
      %v5158 = vmul.f32 %v4250, %v4858
      %v5159 = vmul.f32 %v4252, %v4859
      %v5160 = vmul.f32 %v4433, %v4860
      %v5161 = vmul.f32 %v4435, %v4861
      %v5162 = vmul.f32 %v4616, %v4862
      %v5163 = vmul.f32 %v4618, %v4863
      %v5164 = vmul.f32 %v3888, %v4864
      %v5165 = vmul.f32 %v3890, %v4865
      %v5166 = vmul.f32 %v4071, %v4866
      %v5167 = vmul.f32 %v4073, %v4867
      %v5168 = vmul.f32 %v4254, %v4868
      %v5169 = vmul.f32 %v4256, %v4869
      %v5170 = vmul.f32 %v4437, %v4870
      %v5171 = vmul.f32 %v4439, %v4871
      %v5172 = vmul.f32 %v4620, %v4872
      %v5173 = vmul.f32 %v4622, %v4873
      %v5174 = vmul.f32 %v3894, %v4874
      %v5175 = vmul.f32 %v3896, %v4875
      %v5176 = vmul.f32 %v4077, %v4876
      %v5177 = vmul.f32 %v4079, %v4877
      %v5178 = vmul.f32 %v4260, %v4878
      %v5179 = vmul.f32 %v4262, %v4879
      %v5180 = vmul.f32 %v4443, %v4880
      %v5181 = vmul.f32 %v4445, %v4881
      %v5182 = vmul.f32 %v4626, %v4882
      %v5183 = vmul.f32 %v4628, %v4883
      %v5184 = vmul.f32 %v3898, %v4884
      %v5185 = vmul.f32 %v3900, %v4885
      %v5186 = vmul.f32 %v4081, %v4886
      %v5187 = vmul.f32 %v4083, %v4887
      %v5188 = vmul.f32 %v4264, %v4888
      %v5189 = vmul.f32 %v4266, %v4889
      %v5190 = vmul.f32 %v4447, %v4890
      %v5191 = vmul.f32 %v4449, %v4891
      %v5192 = vmul.f32 %v4630, %v4892
      %v5193 = vmul.f32 %v4632, %v4893
      %v5194 = vmul.f32 %v3904, %v4894
      %v5195 = vmul.f32 %v3906, %v4895
      %v5196 = vmul.f32 %v4087, %v4896
      %v5197 = vmul.f32 %v4089, %v4897
      %v5198 = vmul.f32 %v4270, %v4898
      %v5199 = vmul.f32 %v4272, %v4899
      %v5200 = vmul.f32 %v4453, %v4900
      %v5201 = vmul.f32 %v4455, %v4901
      %v5202 = vmul.f32 %v4636, %v4902
      %v5203 = vmul.f32 %v4638, %v4903
      %v5204 = vmul.f32 %v3908, %v4904
      %v5205 = vmul.f32 %v3910, %v4905
      %v5206 = vmul.f32 %v4091, %v4906
      %v5207 = vmul.f32 %v4093, %v4907
      %v5208 = vmul.f32 %v4274, %v4908
      %v5209 = vmul.f32 %v4276, %v4909
      %v5210 = vmul.f32 %v4457, %v4910
      %v5211 = vmul.f32 %v4459, %v4911
      %v5212 = vmul.f32 %v4640, %v4912
      %v5213 = vmul.f32 %v4642, %v4913
      %v5214 = vmul.f32 %v3914, %v4914
      %v5215 = vmul.f32 %v3916, %v4915
      %v5216 = vmul.f32 %v4097, %v4916
      %v5217 = vmul.f32 %v4099, %v4917
      %v5218 = vmul.f32 %v4280, %v4918
      %v5219 = vmul.f32 %v4282, %v4919
      %v5220 = vmul.f32 %v4463, %v4920
      %v5221 = vmul.f32 %v4465, %v4921
      %v5222 = vmul.f32 %v4646, %v4922
      %v5223 = vmul.f32 %v4648, %v4923
      %v5224 = vmul.f32 %v3918, %v4924
      %v5225 = vmul.f32 %v3920, %v4925
      %v5226 = vmul.f32 %v4101, %v4926
      %v5227 = vmul.f32 %v4103, %v4927
      %v5228 = vmul.f32 %v4284, %v4928
      %v5229 = vmul.f32 %v4286, %v4929
      %v5230 = vmul.f32 %v4467, %v4930
      %v5231 = vmul.f32 %v4469, %v4931
      %v5232 = vmul.f32 %v4650, %v4932
      %v5233 = vmul.f32 %v4652, %v4933
      %v5234 = vmul.f32 %v3924, %v4934
      %v5235 = vmul.f32 %v3926, %v4935
      %v5236 = vmul.f32 %v4107, %v4936
      %v5237 = vmul.f32 %v4109, %v4937
      %v5238 = vmul.f32 %v4290, %v4938
      %v5239 = vmul.f32 %v4292, %v4939
      %v5240 = vmul.f32 %v4473, %v4940
      %v5241 = vmul.f32 %v4475, %v4941
      %v5242 = vmul.f32 %v4656, %v4942
      %v5243 = vmul.f32 %v4658, %v4943
      %v5244 = vmul.f32 %v3928, %v4944
      %v5245 = vmul.f32 %v3930, %v4945
      %v5246 = vmul.f32 %v4111, %v4946
      %v5247 = vmul.f32 %v4113, %v4947
      %v5248 = vmul.f32 %v4294, %v4948
      %v5249 = vmul.f32 %v4296, %v4949
      %v5250 = vmul.f32 %v4477, %v4950
      %v5251 = vmul.f32 %v4479, %v4951
      %v5252 = vmul.f32 %v4660, %v4952
      %v5253 = vmul.f32 %v4662, %v4953
      %v5254 = vmul.f32 %v3934, %v4954
      %v5255 = vmul.f32 %v3936, %v4955
      %v5256 = vmul.f32 %v4117, %v4956
      %v5257 = vmul.f32 %v4119, %v4957
      %v5258 = vmul.f32 %v4300, %v4958
      %v5259 = vmul.f32 %v4302, %v4959
      %v5260 = vmul.f32 %v4483, %v4960
      %v5261 = vmul.f32 %v4485, %v4961
      %v5262 = vmul.f32 %v4666, %v4962
      %v5263 = vmul.f32 %v4668, %v4963
      %v5264 = vmul.f32 %v3938, %v4964
      %v5265 = vmul.f32 %v3940, %v4965
      %v5266 = vmul.f32 %v4121, %v4966
      %v5267 = vmul.f32 %v4123, %v4967
      %v5268 = vmul.f32 %v4304, %v4968
      %v5269 = vmul.f32 %v4306, %v4969
      %v5270 = vmul.f32 %v4487, %v4970
      %v5271 = vmul.f32 %v4489, %v4971
      %v5272 = vmul.f32 %v4670, %v4972
      %v5273 = vmul.f32 %v4672, %v4973
      %v5274 = vld [vmem:[%s13] sm:$0x3f]
      %v5275 = vld [vmem:[%s13 + $0x8] sm:$0x3f]
      %v5276 = vpack.c.bf16 %v5274, %v5274
      %v5277 = vpack.c.bf16 %v5275, %v5275
      %v5278 = vpack.c.bf16 %v4984, %v4974
      %v5279 = vpack.c.bf16 %v4985, %v4975
      %v5280 = vpack.c.bf16 %v4986, %v4976
      %v5281 = vpack.c.bf16 %v4987, %v4977
      %v5282 = vpack.c.bf16 %v4988, %v4978
      %v5283 = vpack.c.bf16 %v4989, %v4979
      %v5284 = vpack.c.bf16 %v4990, %v4980
      %v5285 = vpack.c.bf16 %v4991, %v4981
      %v5286 = vpack.c.bf16 %v4992, %v4982
      %v5287 = vpack.c.bf16 %v4993, %v4983
      %v5288 = vpack.c.bf16 %v5004, %v4994
      %v5289 = vpack.c.bf16 %v5005, %v4995
      %v5290 = vpack.c.bf16 %v5006, %v4996
      %v5291 = vpack.c.bf16 %v5007, %v4997
      %v5292 = vpack.c.bf16 %v5008, %v4998
      %v5293 = vpack.c.bf16 %v5009, %v4999
      %v5294 = vpack.c.bf16 %v5010, %v5000
      %v5295 = vpack.c.bf16 %v5011, %v5001
      %v5296 = vpack.c.bf16 %v5012, %v5002
      %v5297 = vpack.c.bf16 %v5013, %v5003
      %v5298 = vpack.c.bf16 %v5024, %v5014
      %v5299 = vpack.c.bf16 %v5025, %v5015
      %v5300 = vpack.c.bf16 %v5026, %v5016
      %v5301 = vpack.c.bf16 %v5027, %v5017
      %v5302 = vpack.c.bf16 %v5028, %v5018
      %v5303 = vpack.c.bf16 %v5029, %v5019
      %v5304 = vpack.c.bf16 %v5030, %v5020
      %v5305 = vpack.c.bf16 %v5031, %v5021
      %v5306 = vpack.c.bf16 %v5032, %v5022
      %v5307 = vpack.c.bf16 %v5033, %v5023
      %v5308 = vpack.c.bf16 %v5044, %v5034
      %v5309 = vpack.c.bf16 %v5045, %v5035
      %v5310 = vpack.c.bf16 %v5046, %v5036
      %v5311 = vpack.c.bf16 %v5047, %v5037
      %v5312 = vpack.c.bf16 %v5048, %v5038
      %v5313 = vpack.c.bf16 %v5049, %v5039
      %v5314 = vpack.c.bf16 %v5050, %v5040
      %v5315 = vpack.c.bf16 %v5051, %v5041
      %v5316 = vpack.c.bf16 %v5052, %v5042
      %v5317 = vpack.c.bf16 %v5053, %v5043
      %v5318 = vpack.c.bf16 %v5064, %v5054
      %v5319 = vpack.c.bf16 %v5065, %v5055
      %v5320 = vpack.c.bf16 %v5066, %v5056
      %v5321 = vpack.c.bf16 %v5067, %v5057
      %v5322 = vpack.c.bf16 %v5068, %v5058
      %v5323 = vpack.c.bf16 %v5069, %v5059
      %v5324 = vpack.c.bf16 %v5070, %v5060
      %v5325 = vpack.c.bf16 %v5071, %v5061
      %v5326 = vpack.c.bf16 %v5072, %v5062
      %v5327 = vpack.c.bf16 %v5073, %v5063
      %v5328 = vpack.c.bf16 %v5084, %v5074
      %v5329 = vpack.c.bf16 %v5085, %v5075
      %v5330 = vpack.c.bf16 %v5086, %v5076
      %v5331 = vpack.c.bf16 %v5087, %v5077
      %v5332 = vpack.c.bf16 %v5088, %v5078
      %v5333 = vpack.c.bf16 %v5089, %v5079
      %v5334 = vpack.c.bf16 %v5090, %v5080
      %v5335 = vpack.c.bf16 %v5091, %v5081
      %v5336 = vpack.c.bf16 %v5092, %v5082
      %v5337 = vpack.c.bf16 %v5093, %v5083
      %v5338 = vpack.c.bf16 %v5104, %v5094
      %v5339 = vpack.c.bf16 %v5105, %v5095
      %v5340 = vpack.c.bf16 %v5106, %v5096
      %v5341 = vpack.c.bf16 %v5107, %v5097
      %v5342 = vpack.c.bf16 %v5108, %v5098
      %v5343 = vpack.c.bf16 %v5109, %v5099
      %v5344 = vpack.c.bf16 %v5110, %v5100
      %v5345 = vpack.c.bf16 %v5111, %v5101
      %v5346 = vpack.c.bf16 %v5112, %v5102
      %v5347 = vpack.c.bf16 %v5113, %v5103
      %v5348 = vpack.c.bf16 %v5124, %v5114
      %v5349 = vpack.c.bf16 %v5125, %v5115
      %v5350 = vpack.c.bf16 %v5126, %v5116
      %v5351 = vpack.c.bf16 %v5127, %v5117
      %v5352 = vpack.c.bf16 %v5128, %v5118
      %v5353 = vpack.c.bf16 %v5129, %v5119
      %v5354 = vpack.c.bf16 %v5130, %v5120
      %v5355 = vpack.c.bf16 %v5131, %v5121
      %v5356 = vpack.c.bf16 %v5132, %v5122
      %v5357 = vpack.c.bf16 %v5133, %v5123
      %v5358 = vpack.c.bf16 %v5144, %v5134
      %v5359 = vpack.c.bf16 %v5145, %v5135
      %v5360 = vpack.c.bf16 %v5146, %v5136
      %v5361 = vpack.c.bf16 %v5147, %v5137
      %v5362 = vpack.c.bf16 %v5148, %v5138
      %v5363 = vpack.c.bf16 %v5149, %v5139
      %v5364 = vpack.c.bf16 %v5150, %v5140
      %v5365 = vpack.c.bf16 %v5151, %v5141
      %v5366 = vpack.c.bf16 %v5152, %v5142
      %v5367 = vpack.c.bf16 %v5153, %v5143
      %v5368 = vpack.c.bf16 %v5164, %v5154
      %v5369 = vpack.c.bf16 %v5165, %v5155
      %v5370 = vpack.c.bf16 %v5166, %v5156
      %v5371 = vpack.c.bf16 %v5167, %v5157
      %v5372 = vpack.c.bf16 %v5168, %v5158
      %v5373 = vpack.c.bf16 %v5169, %v5159
      %v5374 = vpack.c.bf16 %v5170, %v5160
      %v5375 = vpack.c.bf16 %v5171, %v5161
      %v5376 = vpack.c.bf16 %v5172, %v5162
      %v5377 = vpack.c.bf16 %v5173, %v5163
      %v5378 = vpack.c.bf16 %v5184, %v5174
      %v5379 = vpack.c.bf16 %v5185, %v5175
      %v5380 = vpack.c.bf16 %v5186, %v5176
      %v5381 = vpack.c.bf16 %v5187, %v5177
      %v5382 = vpack.c.bf16 %v5188, %v5178
      %v5383 = vpack.c.bf16 %v5189, %v5179
      %v5384 = vpack.c.bf16 %v5190, %v5180
      %v5385 = vpack.c.bf16 %v5191, %v5181
      %v5386 = vpack.c.bf16 %v5192, %v5182
      %v5387 = vpack.c.bf16 %v5193, %v5183
      %v5388 = vpack.c.bf16 %v5204, %v5194
      %v5389 = vpack.c.bf16 %v5205, %v5195
      %v5390 = vpack.c.bf16 %v5206, %v5196
      %v5391 = vpack.c.bf16 %v5207, %v5197
      %v5392 = vpack.c.bf16 %v5208, %v5198
      %v5393 = vpack.c.bf16 %v5209, %v5199
      %v5394 = vpack.c.bf16 %v5210, %v5200
      %v5395 = vpack.c.bf16 %v5211, %v5201
      %v5396 = vpack.c.bf16 %v5212, %v5202
      %v5397 = vpack.c.bf16 %v5213, %v5203
      %v5398 = vpack.c.bf16 %v5224, %v5214
      %v5399 = vpack.c.bf16 %v5225, %v5215
      %v5400 = vpack.c.bf16 %v5226, %v5216
      %v5401 = vpack.c.bf16 %v5227, %v5217
      %v5402 = vpack.c.bf16 %v5228, %v5218
      %v5403 = vpack.c.bf16 %v5229, %v5219
      %v5404 = vpack.c.bf16 %v5230, %v5220
      %v5405 = vpack.c.bf16 %v5231, %v5221
      %v5406 = vpack.c.bf16 %v5232, %v5222
      %v5407 = vpack.c.bf16 %v5233, %v5223
      %v5408 = vpack.c.bf16 %v5244, %v5234
      %v5409 = vpack.c.bf16 %v5245, %v5235
      %v5410 = vpack.c.bf16 %v5246, %v5236
      %v5411 = vpack.c.bf16 %v5247, %v5237
      %v5412 = vpack.c.bf16 %v5248, %v5238
      %v5413 = vpack.c.bf16 %v5249, %v5239
      %v5414 = vpack.c.bf16 %v5250, %v5240
      %v5415 = vpack.c.bf16 %v5251, %v5241
      %v5416 = vpack.c.bf16 %v5252, %v5242
      %v5417 = vpack.c.bf16 %v5253, %v5243
      %v5418 = vpack.c.bf16 %v5264, %v5254
      %v5419 = vpack.c.bf16 %v5265, %v5255
      %v5420 = vpack.c.bf16 %v5266, %v5256
      %v5421 = vpack.c.bf16 %v5267, %v5257
      %v5422 = vpack.c.bf16 %v5268, %v5258
      %v5423 = vpack.c.bf16 %v5269, %v5259
      %v5424 = vpack.c.bf16 %v5270, %v5260
      %v5425 = vpack.c.bf16 %v5271, %v5261
      %v5426 = vpack.c.bf16 %v5272, %v5262
      %v5427 = vpack.c.bf16 %v5273, %v5263
      %v5429 = vsel %vm864, %v5277, 0
      %5431 = vmatprep.subr.bf16.mxu0 %v5279
      %5432 = vmatpush1.bf16.msra.mxu0 %v5278
      %5433 = vmatprep.subr.bf16.mxu0 %v5289
      %5434 = vmatpush1.bf16.msra.mxu0 %v5288
      %5435 = vmatprep.subr.bf16.mxu0 %v5299
      %5436 = vmatpush1.bf16.msra.mxu0 %v5298
      %5437 = vmatprep.subr.bf16.mxu0 %v5309
      %5438 = vmatpush1.bf16.msra.mxu0 %v5308
      %5439 = vmatprep.subr.bf16.mxu0 %v5319
      %5440 = vmatpush1.bf16.msra.mxu0 %v5318
      %5441 = vmatprep.subr.bf16.mxu0 %v5329
      %5442 = vmatpush1.bf16.msra.mxu0 %v5328
      %5443 = vmatprep.subr.bf16.mxu0 %v5339
      %5444 = vmatpush1.bf16.msra.mxu0 %v5338
      %5445 = vmatprep.subr.bf16.mxu0 %v5349
      %5446 = vmatpush1.bf16.msra.mxu0 %v5348
      %5447 = vmatprep.subr.bf16.mxu0 %v5359
      %5448 = vmatpush1.bf16.msra.mxu0 %v5358
      %5449 = vmatprep.subr.bf16.mxu0 %v5369
      %5450 = vmatpush1.bf16.msra.mxu0 %v5368
      %5451 = vmatprep.subr.bf16.mxu0 %v5379
      %5452 = vmatpush1.bf16.msra.mxu0 %v5378
      %5453 = vmatprep.subr.bf16.mxu0 %v5389
      %5454 = vmatpush1.bf16.msra.mxu0 %v5388
      %5455 = vmatprep.subr.bf16.mxu0 %v5399
      %5456 = vmatpush1.bf16.msra.mxu0 %v5398
      %5457 = vmatprep.subr.bf16.mxu0 %v5409
      %5458 = vmatpush1.bf16.msra.mxu0 %v5408
      %5459 = vmatprep.subr.bf16.mxu0 %v5419
      %5460 = vmatpush1.bf16.msra.mxu0 %v5418
      %5461 = vmatprep.subr.bf16.mxu0 0
      %5462 = vmatpush1.bf16.msra.mxu0 0
      %5463 = vmatprep.mubr.bf16.mxu0 %v5429
      %5464 = vmatmul.mubr.bf16.gmra.mrb[0].mxu0 %v5276
      %v5465 = vpop.f32.mrb[0].mxu0
      %v5466 = vadd.f32 0.0, %v5465
      %v5467 = vpop.f32.mrb[0].mxu0
      %v5468 = vadd.f32 0.0, %v5467
      %v5469 = vpop.f32.mrb[0].mxu0
      %v5470 = vpop.f32.mrb[0].mxu0
      %5471 = vdwg.mxu0
      %5472 = vmatprep.subr.bf16.mxu0 %v5281
      %5473 = vmatpush1.bf16.msra.mxu0 %v5280
      %5474 = vmatprep.subr.bf16.mxu0 %v5291
      %5475 = vmatpush1.bf16.msra.mxu0 %v5290
      %5476 = vmatprep.subr.bf16.mxu0 %v5301
      %5477 = vmatpush1.bf16.msra.mxu0 %v5300
      %5478 = vmatprep.subr.bf16.mxu0 %v5311
      %5479 = vmatpush1.bf16.msra.mxu0 %v5310
      %5480 = vmatprep.subr.bf16.mxu0 %v5321
      %5481 = vmatpush1.bf16.msra.mxu0 %v5320
      %5482 = vmatprep.subr.bf16.mxu0 %v5331
      %5483 = vmatpush1.bf16.msra.mxu0 %v5330
      %5484 = vmatprep.subr.bf16.mxu0 %v5341
      %5485 = vmatpush1.bf16.msra.mxu0 %v5340
      %5486 = vmatprep.subr.bf16.mxu0 %v5351
      %5487 = vmatpush1.bf16.msra.mxu0 %v5350
      %5488 = vmatprep.subr.bf16.mxu0 %v5361
      %5489 = vmatpush1.bf16.msra.mxu0 %v5360
      %5490 = vmatprep.subr.bf16.mxu0 %v5371
      %5491 = vmatpush1.bf16.msra.mxu0 %v5370
      %5492 = vmatprep.subr.bf16.mxu0 %v5381
      %5493 = vmatpush1.bf16.msra.mxu0 %v5380
      %5494 = vmatprep.subr.bf16.mxu0 %v5391
      %5495 = vmatpush1.bf16.msra.mxu0 %v5390
      %5496 = vmatprep.subr.bf16.mxu0 %v5401
      %5497 = vmatpush1.bf16.msra.mxu0 %v5400
      %5498 = vmatprep.subr.bf16.mxu0 %v5411
      %5499 = vmatpush1.bf16.msra.mxu0 %v5410
      %5500 = vmatprep.subr.bf16.mxu0 %v5421
      %5501 = vmatpush1.bf16.msra.mxu0 %v5420
      %5502 = vmatprep.subr.bf16.mxu0 0
      %5503 = vmatpush1.bf16.msra.mxu0 0
      %5504 = vmatprep.mubr.bf16.mxu0 %v5429
      %5505 = vmatmul.mubr.bf16.gmra.mrb[0].mxu0 %v5276
      %v5506 = vpop.f32.mrb[0].mxu0
      %v5507 = vadd.f32 0.0, %v5506
      %v5508 = vpop.f32.mrb[0].mxu0
      %v5509 = vadd.f32 0.0, %v5508
      %v5510 = vpop.f32.mrb[0].mxu0
      %v5511 = vpop.f32.mrb[0].mxu0
      %5512 = vdwg.mxu0
      %5513 = vmatprep.subr.bf16.mxu0 %v5283
      %5514 = vmatpush1.bf16.msra.mxu0 %v5282
      %5515 = vmatprep.subr.bf16.mxu0 %v5293
      %5516 = vmatpush1.bf16.msra.mxu0 %v5292
      %5517 = vmatprep.subr.bf16.mxu0 %v5303
      %5518 = vmatpush1.bf16.msra.mxu0 %v5302
      %5519 = vmatprep.subr.bf16.mxu0 %v5313
      %5520 = vmatpush1.bf16.msra.mxu0 %v5312
      %5521 = vmatprep.subr.bf16.mxu0 %v5323
      %5522 = vmatpush1.bf16.msra.mxu0 %v5322
      %5523 = vmatprep.subr.bf16.mxu0 %v5333
      %5524 = vmatpush1.bf16.msra.mxu0 %v5332
      %5525 = vmatprep.subr.bf16.mxu0 %v5343
      %5526 = vmatpush1.bf16.msra.mxu0 %v5342
      %5527 = vmatprep.subr.bf16.mxu0 %v5353
      %5528 = vmatpush1.bf16.msra.mxu0 %v5352
      %5529 = vmatprep.subr.bf16.mxu0 %v5363
      %5530 = vmatpush1.bf16.msra.mxu0 %v5362
      %5531 = vmatprep.subr.bf16.mxu0 %v5373
      %5532 = vmatpush1.bf16.msra.mxu0 %v5372
      %5533 = vmatprep.subr.bf16.mxu0 %v5383
      %5534 = vmatpush1.bf16.msra.mxu0 %v5382
      %5535 = vmatprep.subr.bf16.mxu0 %v5393
      %5536 = vmatpush1.bf16.msra.mxu0 %v5392
      %5537 = vmatprep.subr.bf16.mxu0 %v5403
      %5538 = vmatpush1.bf16.msra.mxu0 %v5402
      %5539 = vmatprep.subr.bf16.mxu0 %v5413
      %5540 = vmatpush1.bf16.msra.mxu0 %v5412
      %5541 = vmatprep.subr.bf16.mxu0 %v5423
      %5542 = vmatpush1.bf16.msra.mxu0 %v5422
      %5543 = vmatprep.subr.bf16.mxu0 0
      %5544 = vmatpush1.bf16.msra.mxu0 0
      %5545 = vmatprep.mubr.bf16.mxu0 %v5429
      %5546 = vmatmul.mubr.bf16.gmra.mrb[0].mxu0 %v5276
      %v5547 = vpop.f32.mrb[0].mxu0
      %v5548 = vadd.f32 0.0, %v5547
      %v5549 = vpop.f32.mrb[0].mxu0
      %v5550 = vadd.f32 0.0, %v5549
      %v5551 = vpop.f32.mrb[0].mxu0
      %v5552 = vpop.f32.mrb[0].mxu0
      %5553 = vdwg.mxu0
      %5554 = vmatprep.subr.bf16.mxu0 %v5285
      %5555 = vmatpush1.bf16.msra.mxu0 %v5284
      %5556 = vmatprep.subr.bf16.mxu0 %v5295
      %5557 = vmatpush1.bf16.msra.mxu0 %v5294
      %5558 = vmatprep.subr.bf16.mxu0 %v5305
      %5559 = vmatpush1.bf16.msra.mxu0 %v5304
      %5560 = vmatprep.subr.bf16.mxu0 %v5315
      %5561 = vmatpush1.bf16.msra.mxu0 %v5314
      %5562 = vmatprep.subr.bf16.mxu0 %v5325
      %5563 = vmatpush1.bf16.msra.mxu0 %v5324
      %5564 = vmatprep.subr.bf16.mxu0 %v5335
      %5565 = vmatpush1.bf16.msra.mxu0 %v5334
      %5566 = vmatprep.subr.bf16.mxu0 %v5345
      %5567 = vmatpush1.bf16.msra.mxu0 %v5344
      %5568 = vmatprep.subr.bf16.mxu0 %v5355
      %5569 = vmatpush1.bf16.msra.mxu0 %v5354
      %5570 = vmatprep.subr.bf16.mxu0 %v5365
      %5571 = vmatpush1.bf16.msra.mxu0 %v5364
      %5572 = vmatprep.subr.bf16.mxu0 %v5375
      %5573 = vmatpush1.bf16.msra.mxu0 %v5374
      %5574 = vmatprep.subr.bf16.mxu0 %v5385
      %5575 = vmatpush1.bf16.msra.mxu0 %v5384
      %5576 = vmatprep.subr.bf16.mxu0 %v5395
      %5577 = vmatpush1.bf16.msra.mxu0 %v5394
      %5578 = vmatprep.subr.bf16.mxu0 %v5405
      %5579 = vmatpush1.bf16.msra.mxu0 %v5404
      %5580 = vmatprep.subr.bf16.mxu0 %v5415
      %5581 = vmatpush1.bf16.msra.mxu0 %v5414
      %5582 = vmatprep.subr.bf16.mxu0 %v5425
      %5583 = vmatpush1.bf16.msra.mxu0 %v5424
      %5584 = vmatprep.subr.bf16.mxu0 0
      %5585 = vmatpush1.bf16.msra.mxu0 0
      %5586 = vmatprep.mubr.bf16.mxu0 %v5429
      %5587 = vmatmul.mubr.bf16.gmra.mrb[0].mxu0 %v5276
      %v5588 = vpop.f32.mrb[0].mxu0
      %v5589 = vadd.f32 0.0, %v5588
      %v5590 = vpop.f32.mrb[0].mxu0
      %v5591 = vadd.f32 0.0, %v5590
      %v5592 = vpop.f32.mrb[0].mxu0
      %v5593 = vpop.f32.mrb[0].mxu0
      %5594 = vdwg.mxu0
      %5595 = vmatprep.subr.bf16.mxu0 %v5287
      %5596 = vmatpush1.bf16.msra.mxu0 %v5286
      %5597 = vmatprep.subr.bf16.mxu0 %v5297
      %5598 = vmatpush1.bf16.msra.mxu0 %v5296
      %5599 = vmatprep.subr.bf16.mxu0 %v5307
      %5600 = vmatpush1.bf16.msra.mxu0 %v5306
      %5601 = vmatprep.subr.bf16.mxu0 %v5317
      %5602 = vmatpush1.bf16.msra.mxu0 %v5316
      %5603 = vmatprep.subr.bf16.mxu0 %v5327
      %5604 = vmatpush1.bf16.msra.mxu0 %v5326
      %5605 = vmatprep.subr.bf16.mxu0 %v5337
      %5606 = vmatpush1.bf16.msra.mxu0 %v5336
      %5607 = vmatprep.subr.bf16.mxu0 %v5347
      %5608 = vmatpush1.bf16.msra.mxu0 %v5346
      %5609 = vmatprep.subr.bf16.mxu0 %v5357
      %5610 = vmatpush1.bf16.msra.mxu0 %v5356
      %5611 = vmatprep.subr.bf16.mxu0 %v5367
      %5612 = vmatpush1.bf16.msra.mxu0 %v5366
      %5613 = vmatprep.subr.bf16.mxu0 %v5377
      %5614 = vmatpush1.bf16.msra.mxu0 %v5376
      %5615 = vmatprep.subr.bf16.mxu0 %v5387
      %5616 = vmatpush1.bf16.msra.mxu0 %v5386
      %5617 = vmatprep.subr.bf16.mxu0 %v5397
      %5618 = vmatpush1.bf16.msra.mxu0 %v5396
      %5619 = vmatprep.subr.bf16.mxu0 %v5407
      %5620 = vmatpush1.bf16.msra.mxu0 %v5406
      %5621 = vmatprep.subr.bf16.mxu0 %v5417
      %5622 = vmatpush1.bf16.msra.mxu0 %v5416
      %5623 = vmatprep.subr.bf16.mxu0 %v5427
      %5624 = vmatpush1.bf16.msra.mxu0 %v5426
      %5625 = vmatprep.subr.bf16.mxu0 0
      %5626 = vmatpush1.bf16.msra.mxu0 0
      %5627 = vmatprep.mubr.bf16.mxu0 %v5429
      %5628 = vmatmul.mubr.bf16.gmra.mrb[0].mxu0 %v5276
      %v5629 = vpop.f32.mrb[0].mxu0
      %v5630 = vadd.f32 0.0, %v5629
      %v5631 = vpop.f32.mrb[0].mxu0
      %v5632 = vadd.f32 0.0, %v5631
      %v5633 = vpop.f32.mrb[0].mxu0
      %v5634 = vpop.f32.mrb[0].mxu0
      %5635 = vdwg.mxu0
      %v5636 = vld [vmem:[%s14] sm:$0xff]
      %v5637 = vld [vmem:[%s14 + $0x8] sm:$0xff]
      %v5638 = vld [vmem:[%s14 + $0x10] sm:$0xff]
      %v5639 = vld [vmem:[%s14 + $0x18] sm:$0xff]
      %v5640 = vld [vmem:[%s14 + $0x20] sm:$0xff]
      %v5641 = vld [vmem:[%s14 + $0x28] sm:$0xff]
      %v5642 = vld [vmem:[%s14 + $0x30] sm:$0xff]
      %v5643 = vld [vmem:[%s14 + $0x38] sm:$0xff]
      %v5644 = vld [vmem:[%s14 + $0x40] sm:$0xff]
      %v5645 = vld [vmem:[%s14 + $0x48] sm:$0xff]
      %v5646 = vld [vmem:[%s14 + $0x50] sm:$0xff]
      %v5647 = vld [vmem:[%s14 + $0x58] sm:$0xff]
      %v5648 = vld [vmem:[%s14 + $0x60] sm:$0xff]
      %v5649 = vld [vmem:[%s14 + $0x68] sm:$0xff]
      %v5650 = vld [vmem:[%s14 + $0x70] sm:$0xff]
      %v5651 = vld [vmem:[%s14 + $0x78] sm:$0xff]
      %v5652 = vld [vmem:[%s14 + $0x80] sm:$0xff]
      %v5653 = vld [vmem:[%s14 + $0x88] sm:$0xff]
      %v5654 = vld [vmem:[%s14 + $0x90] sm:$0xff]
      %v5655 = vld [vmem:[%s14 + $0x98] sm:$0xff]
      %v5656 = vld [vmem:[%s14 + $0xa0] sm:$0xff]
      %v5657 = vld [vmem:[%s14 + $0xa8] sm:$0xff]
      %v5658 = vld [vmem:[%s14 + $0xb0] sm:$0xff]
      %v5659 = vld [vmem:[%s14 + $0xb8] sm:$0xff]
      %v5660 = vld [vmem:[%s14 + $0xc0] sm:$0xff]
      %v5661 = vld [vmem:[%s14 + $0xc8] sm:$0xff]
      %v5662 = vld [vmem:[%s14 + $0xd0] sm:$0xff]
      %v5663 = vld [vmem:[%s14 + $0xd8] sm:$0xff]
      %v5664 = vld [vmem:[%s14 + $0xe0] sm:$0xff]
      %v5665 = vld [vmem:[%s14 + $0xe8] sm:$0xff]
      %v5666 = vld [vmem:[%s14 + $0xf0] sm:$0xff]
      %v5667 = vld [vmem:[%s14 + $0xf8] sm:$0xff]
      %v5668 = vld [vmem:[%s14 + $0x100] sm:$0xff]
      %v5669 = vld [vmem:[%s14 + $0x108] sm:$0xff]
      %v5670 = vld [vmem:[%s14 + $0x110] sm:$0xff]
      %v5671 = vld [vmem:[%s14 + $0x118] sm:$0xff]
      %v5672 = vld [vmem:[%s14 + $0x120] sm:$0xff]
      %v5673 = vld [vmem:[%s14 + $0x128] sm:$0xff]
      %v5674 = vld [vmem:[%s14 + $0x130] sm:$0xff]
      %v5675 = vld [vmem:[%s14 + $0x138] sm:$0xff]
      %v5676 = vld [vmem:[%s14 + $0x140] sm:$0xff]
      %v5677 = vld [vmem:[%s14 + $0x148] sm:$0xff]
      %v5678 = vld [vmem:[%s14 + $0x150] sm:$0xff]
      %v5679 = vld [vmem:[%s14 + $0x158] sm:$0xff]
      %v5680 = vld [vmem:[%s14 + $0x160] sm:$0xff]
      %v5681 = vld [vmem:[%s14 + $0x168] sm:$0xff]
      %v5682 = vld [vmem:[%s14 + $0x170] sm:$0xff]
      %v5683 = vld [vmem:[%s14 + $0x178] sm:$0xff]
      %v5684 = vld [vmem:[%s14 + $0x180] sm:$0xff]
      %v5685 = vld [vmem:[%s14 + $0x188] sm:$0xff]
      %v5686 = vld [vmem:[%s14 + $0x190] sm:$0xff]
      %v5687 = vld [vmem:[%s14 + $0x198] sm:$0xff]
      %v5688 = vld [vmem:[%s14 + $0x1a0] sm:$0xff]
      %v5689 = vld [vmem:[%s14 + $0x1a8] sm:$0xff]
      %v5690 = vld [vmem:[%s14 + $0x1b0] sm:$0xff]
      %v5691 = vld [vmem:[%s14 + $0x1b8] sm:$0xff]
      %v5692 = vld [vmem:[%s14 + $0x1c0] sm:$0xff]
      %v5693 = vld [vmem:[%s14 + $0x1c8] sm:$0xff]
      %v5694 = vld [vmem:[%s14 + $0x1d0] sm:$0xff]
      %v5695 = vld [vmem:[%s14 + $0x1d8] sm:$0xff]
      %v5696 = vld [vmem:[%s14 + $0x1e0] sm:$0xff]
      %v5697 = vld [vmem:[%s14 + $0x1e8] sm:$0xff]
      %v5698 = vld [vmem:[%s14 + $0x1f0] sm:$0xff]
      %v5699 = vld [vmem:[%s14 + $0x1f8] sm:$0xff]
      %v5700 = vld [vmem:[%s14 + $0x200] sm:$0xff]
      %v5701 = vld [vmem:[%s14 + $0x208] sm:$0xff]
      %v5702 = vld [vmem:[%s14 + $0x210] sm:$0xff]
      %v5703 = vld [vmem:[%s14 + $0x218] sm:$0xff]
      %v5704 = vld [vmem:[%s14 + $0x220] sm:$0xff]
      %v5705 = vld [vmem:[%s14 + $0x228] sm:$0xff]
      %v5706 = vld [vmem:[%s14 + $0x230] sm:$0xff]
      %v5707 = vld [vmem:[%s14 + $0x238] sm:$0xff]
      %v5708 = vld [vmem:[%s14 + $0x240] sm:$0xff]
      %v5709 = vld [vmem:[%s14 + $0x248] sm:$0xff]
      %v5710 = vld [vmem:[%s14 + $0x250] sm:$0xff]
      %v5711 = vld [vmem:[%s14 + $0x258] sm:$0xff]
      %v5712 = vld [vmem:[%s14 + $0x260] sm:$0xff]
      %v5713 = vld [vmem:[%s14 + $0x268] sm:$0xff]
      %v5714 = vld [vmem:[%s14 + $0x270] sm:$0xff]
      %v5715 = vld [vmem:[%s14 + $0x278] sm:$0xff]
      %v5716 = vld [vmem:[%s14 + $0x280] sm:$0xff]
      %v5717 = vld [vmem:[%s14 + $0x288] sm:$0xff]
      %v5718 = vld [vmem:[%s14 + $0x290] sm:$0xff]
      %v5719 = vld [vmem:[%s14 + $0x298] sm:$0xff]
      %v5720 = vld [vmem:[%s14 + $0x2a0] sm:$0xff]
      %v5721 = vld [vmem:[%s14 + $0x2a8] sm:$0xff]
      %v5722 = vld [vmem:[%s14 + $0x2b0] sm:$0xff]
      %v5723 = vld [vmem:[%s14 + $0x2b8] sm:$0xff]
      %v5724 = vld [vmem:[%s14 + $0x2c0] sm:$0xff]
      %v5725 = vld [vmem:[%s14 + $0x2c8] sm:$0xff]
      %v5726 = vld [vmem:[%s14 + $0x2d0] sm:$0xff]
      %v5727 = vld [vmem:[%s14 + $0x2d8] sm:$0xff]
      %v5728 = vld [vmem:[%s14 + $0x2e0] sm:$0xff]
      %v5729 = vld [vmem:[%s14 + $0x2e8] sm:$0xff]
      %v5730 = vld [vmem:[%s14 + $0x2f0] sm:$0xff]
      %v5731 = vld [vmem:[%s14 + $0x2f8] sm:$0xff]
      %v5732 = vld [vmem:[%s14 + $0x300] sm:$0xff]
      %v5733 = vld [vmem:[%s14 + $0x308] sm:$0xff]
      %v5734 = vld [vmem:[%s14 + $0x310] sm:$0xff]
      %v5735 = vld [vmem:[%s14 + $0x318] sm:$0xff]
      %v5736 = vld [vmem:[%s14 + $0x320] sm:$0xff]
      %v5737 = vld [vmem:[%s14 + $0x328] sm:$0xff]
      %v5738 = vld [vmem:[%s14 + $0x330] sm:$0xff]
      %v5739 = vld [vmem:[%s14 + $0x338] sm:$0xff]
      %v5740 = vld [vmem:[%s14 + $0x340] sm:$0xff]
      %v5741 = vld [vmem:[%s14 + $0x348] sm:$0xff]
      %v5742 = vld [vmem:[%s14 + $0x350] sm:$0xff]
      %v5743 = vld [vmem:[%s14 + $0x358] sm:$0xff]
      %v5744 = vld [vmem:[%s14 + $0x360] sm:$0xff]
      %v5745 = vld [vmem:[%s14 + $0x368] sm:$0xff]
      %v5746 = vld [vmem:[%s14 + $0x370] sm:$0xff]
      %v5747 = vld [vmem:[%s14 + $0x378] sm:$0xff]
      %v5748 = vld [vmem:[%s14 + $0x380] sm:$0xff]
      %v5749 = vld [vmem:[%s14 + $0x388] sm:$0xff]
      %v5750 = vld [vmem:[%s14 + $0x390] sm:$0xff]
      %v5751 = vld [vmem:[%s14 + $0x398] sm:$0xff]
      %v5752 = vld [vmem:[%s14 + $0x3a0] sm:$0xff]
      %v5753 = vld [vmem:[%s14 + $0x3a8] sm:$0xff]
      %v5754 = vld [vmem:[%s14 + $0x3b0] sm:$0xff]
      %v5755 = vld [vmem:[%s14 + $0x3b8] sm:$0xff]
      %v5756 = vld [vmem:[%s14 + $0x3c0] sm:$0xff]
      %v5757 = vld [vmem:[%s14 + $0x3c8] sm:$0xff]
      %v5758 = vld [vmem:[%s14 + $0x3d0] sm:$0xff]
      %v5759 = vld [vmem:[%s14 + $0x3d8] sm:$0xff]
      %v5760 = vld [vmem:[%s14 + $0x3e0] sm:$0xff]
      %v5761 = vld [vmem:[%s14 + $0x3e8] sm:$0xff]
      %v5762 = vld [vmem:[%s14 + $0x3f0] sm:$0xff]
      %v5763 = vld [vmem:[%s14 + $0x3f8] sm:$0xff]
      %v5764 = vld [vmem:[%s14 + $0x400] sm:$0xff]
      %v5765 = vld [vmem:[%s14 + $0x408] sm:$0xff]
      %v5766 = vld [vmem:[%s14 + $0x410] sm:$0xff]
      %v5767 = vld [vmem:[%s14 + $0x418] sm:$0xff]
      %v5768 = vld [vmem:[%s14 + $0x420] sm:$0xff]
      %v5769 = vld [vmem:[%s14 + $0x428] sm:$0xff]
      %v5770 = vld [vmem:[%s14 + $0x430] sm:$0xff]
      %v5771 = vld [vmem:[%s14 + $0x438] sm:$0xff]
      %v5772 = vld [vmem:[%s14 + $0x440] sm:$0xff]
      %v5773 = vld [vmem:[%s14 + $0x448] sm:$0xff]
      %v5774 = vld [vmem:[%s14 + $0x450] sm:$0xff]
      %v5775 = vld [vmem:[%s14 + $0x458] sm:$0xff]
      %v5776 = vld [vmem:[%s14 + $0x460] sm:$0xff]
      %v5777 = vld [vmem:[%s14 + $0x468] sm:$0xff]
      %v5778 = vld [vmem:[%s14 + $0x470] sm:$0xff]
      %v5779 = vld [vmem:[%s14 + $0x478] sm:$0xff]
      %v5780 = vld [vmem:[%s14 + $0x480] sm:$0xff]
      %v5781 = vld [vmem:[%s14 + $0x488] sm:$0xff]
      %v5782 = vld [vmem:[%s14 + $0x490] sm:$0xff]
      %v5783 = vld [vmem:[%s14 + $0x498] sm:$0xff]
      %v5784 = vld [vmem:[%s14 + $0x4a0] sm:$0xff]
      %v5785 = vld [vmem:[%s14 + $0x4a8] sm:$0xff]
      %v5786 = vld [vmem:[%s14 + $0x4b0] sm:$0xff]
      %v5787 = vld [vmem:[%s14 + $0x4b8] sm:$0xff]
      %v5788 = vld [vmem:[%s14 + $0x4c0] sm:$0xff]
      %v5789 = vld [vmem:[%s14 + $0x4c8] sm:$0xff]
      %v5790 = vld [vmem:[%s14 + $0x4d0] sm:$0xff]
      %v5791 = vld [vmem:[%s14 + $0x4d8] sm:$0xff]
      %v5792 = vld [vmem:[%s14 + $0x4e0] sm:$0xff]
      %v5793 = vld [vmem:[%s14 + $0x4e8] sm:$0xff]
      %v5794 = vld [vmem:[%s14 + $0x4f0] sm:$0xff]
      %v5795 = vld [vmem:[%s14 + $0x4f8] sm:$0xff]
      %v5796 = vpack.c.bf16 %v5466, %v5466
      %v5797 = vpack.c.bf16 %v5468, %v5468
      %v5798 = vpack.c.bf16 %v5507, %v5507
      %v5799 = vpack.c.bf16 %v5509, %v5509
      %v5800 = vpack.c.bf16 %v5548, %v5548
      %v5801 = vpack.c.bf16 %v5550, %v5550
      %v5802 = vpack.c.bf16 %v5589, %v5589
      %v5803 = vpack.c.bf16 %v5591, %v5591
      %v5804 = vpack.c.bf16 %v5630, %v5630
      %v5805 = vpack.c.bf16 %v5632, %v5632
      %v5806 = vpack.c.bf16 %v5637, %v5636
      %v5807 = vpack.c.bf16 %v5639, %v5638
      %v5808 = vpack.c.bf16 %v5641, %v5640
      %v5809 = vpack.c.bf16 %v5643, %v5642
      %v5810 = vpack.c.bf16 %v5645, %v5644
      %v5811 = vpack.c.bf16 %v5647, %v5646
      %v5812 = vpack.c.bf16 %v5649, %v5648
      %v5813 = vpack.c.bf16 %v5651, %v5650
      %v5814 = vpack.c.bf16 %v5653, %v5652
      %v5815 = vpack.c.bf16 %v5655, %v5654
      %v5816 = vpack.c.bf16 %v5657, %v5656
      %v5817 = vpack.c.bf16 %v5659, %v5658
      %v5818 = vpack.c.bf16 %v5661, %v5660
      %v5819 = vpack.c.bf16 %v5663, %v5662
      %v5820 = vpack.c.bf16 %v5665, %v5664
      %v5821 = vpack.c.bf16 %v5667, %v5666
      %v5822 = vpack.c.bf16 %v5669, %v5668
      %v5823 = vpack.c.bf16 %v5671, %v5670
      %v5824 = vpack.c.bf16 %v5673, %v5672
      %v5825 = vpack.c.bf16 %v5675, %v5674
      %v5826 = vpack.c.bf16 %v5677, %v5676
      %v5827 = vpack.c.bf16 %v5679, %v5678
      %v5828 = vpack.c.bf16 %v5681, %v5680
      %v5829 = vpack.c.bf16 %v5683, %v5682
      %v5830 = vpack.c.bf16 %v5685, %v5684
      %v5831 = vpack.c.bf16 %v5687, %v5686
      %v5832 = vpack.c.bf16 %v5689, %v5688
      %v5833 = vpack.c.bf16 %v5691, %v5690
      %v5834 = vpack.c.bf16 %v5693, %v5692
      %v5835 = vpack.c.bf16 %v5695, %v5694
      %v5836 = vpack.c.bf16 %v5697, %v5696
      %v5837 = vpack.c.bf16 %v5699, %v5698
      %v5838 = vpack.c.bf16 %v5701, %v5700
      %v5839 = vpack.c.bf16 %v5703, %v5702
      %v5840 = vpack.c.bf16 %v5705, %v5704
      %v5841 = vpack.c.bf16 %v5707, %v5706
      %v5842 = vpack.c.bf16 %v5709, %v5708
      %v5843 = vpack.c.bf16 %v5711, %v5710
      %v5844 = vpack.c.bf16 %v5713, %v5712
      %v5845 = vpack.c.bf16 %v5715, %v5714
      %v5846 = vpack.c.bf16 %v5717, %v5716
      %v5847 = vpack.c.bf16 %v5719, %v5718
      %v5848 = vpack.c.bf16 %v5721, %v5720
      %v5849 = vpack.c.bf16 %v5723, %v5722
      %v5850 = vpack.c.bf16 %v5725, %v5724
      %v5851 = vpack.c.bf16 %v5727, %v5726
      %v5852 = vpack.c.bf16 %v5729, %v5728
      %v5853 = vpack.c.bf16 %v5731, %v5730
      %v5854 = vpack.c.bf16 %v5733, %v5732
      %v5855 = vpack.c.bf16 %v5735, %v5734
      %v5856 = vpack.c.bf16 %v5737, %v5736
      %v5857 = vpack.c.bf16 %v5739, %v5738
      %v5858 = vpack.c.bf16 %v5741, %v5740
      %v5859 = vpack.c.bf16 %v5743, %v5742
      %v5860 = vpack.c.bf16 %v5745, %v5744
      %v5861 = vpack.c.bf16 %v5747, %v5746
      %v5862 = vpack.c.bf16 %v5749, %v5748
      %v5863 = vpack.c.bf16 %v5751, %v5750
      %v5864 = vpack.c.bf16 %v5753, %v5752
      %v5865 = vpack.c.bf16 %v5755, %v5754
      %v5866 = vpack.c.bf16 %v5757, %v5756
      %v5867 = vpack.c.bf16 %v5759, %v5758
      %v5868 = vpack.c.bf16 %v5761, %v5760
      %v5869 = vpack.c.bf16 %v5763, %v5762
      %v5870 = vpack.c.bf16 %v5765, %v5764
      %v5871 = vpack.c.bf16 %v5767, %v5766
      %v5872 = vpack.c.bf16 %v5769, %v5768
      %v5873 = vpack.c.bf16 %v5771, %v5770
      %v5874 = vpack.c.bf16 %v5773, %v5772
      %v5875 = vpack.c.bf16 %v5775, %v5774
      %v5876 = vpack.c.bf16 %v5777, %v5776
      %v5877 = vpack.c.bf16 %v5779, %v5778
      %v5878 = vpack.c.bf16 %v5781, %v5780
      %v5879 = vpack.c.bf16 %v5783, %v5782
      %v5880 = vpack.c.bf16 %v5785, %v5784
      %v5881 = vpack.c.bf16 %v5787, %v5786
      %v5882 = vpack.c.bf16 %v5789, %v5788
      %v5883 = vpack.c.bf16 %v5791, %v5790
      %v5884 = vpack.c.bf16 %v5793, %v5792
      %v5885 = vpack.c.bf16 %v5795, %v5794
      %v5886 = vld [vmem:[%s15] sm:$0x1]
      %v5888 = vlaneseq
      %v5889 = vshrl.u32 %v5888, 7
      %v5890 = vsub.s32 0, %v5889
      %v5891 = vrot.slane %v5886, %v5890
      %5893 = vmatprep.subr.bf16.mxu0 0
      %5894 = vmatpush1.bf16.msra.mxu0 %v5806
      %5895 = vmatprep.subr.bf16.mxu0 0
      %5896 = vmatpush1.bf16.msra.mxu0 %v5807
      %5897 = vmatprep.subr.bf16.mxu0 0
      %5898 = vmatpush1.bf16.msra.mxu0 %v5808
      %5899 = vmatprep.subr.bf16.mxu0 0
      %5900 = vmatpush1.bf16.msra.mxu0 %v5809
      %5901 = vmatprep.subr.bf16.mxu0 0
      %5902 = vmatpush1.bf16.msra.mxu0 %v5810
      %5903 = vmatprep.subr.bf16.mxu0 0
      %5904 = vmatpush1.bf16.msra.mxu0 %v5811
      %5905 = vmatprep.subr.bf16.mxu0 0
      %5906 = vmatpush1.bf16.msra.mxu0 %v5812
      %5907 = vmatprep.subr.bf16.mxu0 0
      %5908 = vmatpush1.bf16.msra.mxu0 %v5813
      %5909 = vmatprep.subr.bf16.mxu0 0
      %5910 = vmatpush1.bf16.msra.mxu0 %v5814
      %5911 = vmatprep.subr.bf16.mxu0 0
      %5912 = vmatpush1.bf16.msra.mxu0 %v5815
      %5913 = vmatprep.subr.bf16.mxu0 0
      %5914 = vmatpush1.bf16.msra.mxu0 %v5816
      %5915 = vmatprep.subr.bf16.mxu0 0
      %5916 = vmatpush1.bf16.msra.mxu0 %v5817
      %5917 = vmatprep.subr.bf16.mxu0 0
      %5918 = vmatpush1.bf16.msra.mxu0 %v5818
      %5919 = vmatprep.subr.bf16.mxu0 0
      %5920 = vmatpush1.bf16.msra.mxu0 %v5819
      %5921 = vmatprep.subr.bf16.mxu0 0
      %5922 = vmatpush1.bf16.msra.mxu0 %v5820
      %5923 = vmatprep.subr.bf16.mxu0 0
      %5924 = vmatpush1.bf16.msra.mxu0 %v5821
      %5925 = vmatprep.mubr.bf16.mxu0 %v5797
      %5926 = vmatmul.mubr.bf16.gmra.mrb[0].mxu0 %v5796
      %v5927 = vpop.f32.mrb[0].mxu0
      %v5928 = vadd.f32 %v5891, %v5927
      %v5929 = vpop.f32.mrb[0].mxu0
      %v5930 = vpop.f32.mrb[0].mxu0
      %v5931 = vpop.f32.mrb[0].mxu0
      %5932 = vdwg.mxu0
      %5933 = vmatprep.subr.bf16.mxu0 0
      %5934 = vmatpush1.bf16.msra.mxu0 %v5822
      %5935 = vmatprep.subr.bf16.mxu0 0
      %5936 = vmatpush1.bf16.msra.mxu0 %v5823
      %5937 = vmatprep.subr.bf16.mxu0 0
      %5938 = vmatpush1.bf16.msra.mxu0 %v5824
      %5939 = vmatprep.subr.bf16.mxu0 0
      %5940 = vmatpush1.bf16.msra.mxu0 %v5825
      %5941 = vmatprep.subr.bf16.mxu0 0
      %5942 = vmatpush1.bf16.msra.mxu0 %v5826
      %5943 = vmatprep.subr.bf16.mxu0 0
      %5944 = vmatpush1.bf16.msra.mxu0 %v5827
      %5945 = vmatprep.subr.bf16.mxu0 0
      %5946 = vmatpush1.bf16.msra.mxu0 %v5828
      %5947 = vmatprep.subr.bf16.mxu0 0
      %5948 = vmatpush1.bf16.msra.mxu0 %v5829
      %5949 = vmatprep.subr.bf16.mxu0 0
      %5950 = vmatpush1.bf16.msra.mxu0 %v5830
      %5951 = vmatprep.subr.bf16.mxu0 0
      %5952 = vmatpush1.bf16.msra.mxu0 %v5831
      %5953 = vmatprep.subr.bf16.mxu0 0
      %5954 = vmatpush1.bf16.msra.mxu0 %v5832
      %5955 = vmatprep.subr.bf16.mxu0 0
      %5956 = vmatpush1.bf16.msra.mxu0 %v5833
      %5957 = vmatprep.subr.bf16.mxu0 0
      %5958 = vmatpush1.bf16.msra.mxu0 %v5834
      %5959 = vmatprep.subr.bf16.mxu0 0
      %5960 = vmatpush1.bf16.msra.mxu0 %v5835
      %5961 = vmatprep.subr.bf16.mxu0 0
      %5962 = vmatpush1.bf16.msra.mxu0 %v5836
      %5963 = vmatprep.subr.bf16.mxu0 0
      %5964 = vmatpush1.bf16.msra.mxu0 %v5837
      %5965 = vmatprep.mubr.bf16.mxu0 %v5799
      %5966 = vmatmul.mubr.bf16.gmra.mrb[0].mxu0 %v5798
      %v5967 = vpop.f32.mrb[0].mxu0
      %v5968 = vadd.f32 %v5928, %v5967
      %v5969 = vpop.f32.mrb[0].mxu0
      %v5970 = vpop.f32.mrb[0].mxu0
      %v5971 = vpop.f32.mrb[0].mxu0
      %5972 = vdwg.mxu0
      %5973 = vmatprep.subr.bf16.mxu0 0
      %5974 = vmatpush1.bf16.msra.mxu0 %v5838
      %5975 = vmatprep.subr.bf16.mxu0 0
      %5976 = vmatpush1.bf16.msra.mxu0 %v5839
      %5977 = vmatprep.subr.bf16.mxu0 0
      %5978 = vmatpush1.bf16.msra.mxu0 %v5840
      %5979 = vmatprep.subr.bf16.mxu0 0
      %5980 = vmatpush1.bf16.msra.mxu0 %v5841
      %5981 = vmatprep.subr.bf16.mxu0 0
      %5982 = vmatpush1.bf16.msra.mxu0 %v5842
      %5983 = vmatprep.subr.bf16.mxu0 0
      %5984 = vmatpush1.bf16.msra.mxu0 %v5843
      %5985 = vmatprep.subr.bf16.mxu0 0
      %5986 = vmatpush1.bf16.msra.mxu0 %v5844
      %5987 = vmatprep.subr.bf16.mxu0 0
      %5988 = vmatpush1.bf16.msra.mxu0 %v5845
      %5989 = vmatprep.subr.bf16.mxu0 0
      %5990 = vmatpush1.bf16.msra.mxu0 %v5846
      %5991 = vmatprep.subr.bf16.mxu0 0
      %5992 = vmatpush1.bf16.msra.mxu0 %v5847
      %5993 = vmatprep.subr.bf16.mxu0 0
      %5994 = vmatpush1.bf16.msra.mxu0 %v5848
      %5995 = vmatprep.subr.bf16.mxu0 0
      %5996 = vmatpush1.bf16.msra.mxu0 %v5849
      %5997 = vmatprep.subr.bf16.mxu0 0
      %5998 = vmatpush1.bf16.msra.mxu0 %v5850
      %5999 = vmatprep.subr.bf16.mxu0 0
      %6000 = vmatpush1.bf16.msra.mxu0 %v5851
      %6001 = vmatprep.subr.bf16.mxu0 0
      %6002 = vmatpush1.bf16.msra.mxu0 %v5852
      %6003 = vmatprep.subr.bf16.mxu0 0
      %6004 = vmatpush1.bf16.msra.mxu0 %v5853
      %6005 = vmatprep.mubr.bf16.mxu0 %v5801
      %6006 = vmatmul.mubr.bf16.gmra.mrb[0].mxu0 %v5800
      %v6007 = vpop.f32.mrb[0].mxu0
      %v6008 = vadd.f32 %v5968, %v6007
      %v6009 = vpop.f32.mrb[0].mxu0
      %v6010 = vpop.f32.mrb[0].mxu0
      %v6011 = vpop.f32.mrb[0].mxu0
      %6012 = vdwg.mxu0
      %6013 = vmatprep.subr.bf16.mxu0 0
      %6014 = vmatpush1.bf16.msra.mxu0 %v5854
      %6015 = vmatprep.subr.bf16.mxu0 0
      %6016 = vmatpush1.bf16.msra.mxu0 %v5855
      %6017 = vmatprep.subr.bf16.mxu0 0
      %6018 = vmatpush1.bf16.msra.mxu0 %v5856
      %6019 = vmatprep.subr.bf16.mxu0 0
      %6020 = vmatpush1.bf16.msra.mxu0 %v5857
      %6021 = vmatprep.subr.bf16.mxu0 0
      %6022 = vmatpush1.bf16.msra.mxu0 %v5858
      %6023 = vmatprep.subr.bf16.mxu0 0
      %6024 = vmatpush1.bf16.msra.mxu0 %v5859
      %6025 = vmatprep.subr.bf16.mxu0 0
      %6026 = vmatpush1.bf16.msra.mxu0 %v5860
      %6027 = vmatprep.subr.bf16.mxu0 0
      %6028 = vmatpush1.bf16.msra.mxu0 %v5861
      %6029 = vmatprep.subr.bf16.mxu0 0
      %6030 = vmatpush1.bf16.msra.mxu0 %v5862
      %6031 = vmatprep.subr.bf16.mxu0 0
      %6032 = vmatpush1.bf16.msra.mxu0 %v5863
      %6033 = vmatprep.subr.bf16.mxu0 0
      %6034 = vmatpush1.bf16.msra.mxu0 %v5864
      %6035 = vmatprep.subr.bf16.mxu0 0
      %6036 = vmatpush1.bf16.msra.mxu0 %v5865
      %6037 = vmatprep.subr.bf16.mxu0 0
      %6038 = vmatpush1.bf16.msra.mxu0 %v5866
      %6039 = vmatprep.subr.bf16.mxu0 0
      %6040 = vmatpush1.bf16.msra.mxu0 %v5867
      %6041 = vmatprep.subr.bf16.mxu0 0
      %6042 = vmatpush1.bf16.msra.mxu0 %v5868
      %6043 = vmatprep.subr.bf16.mxu0 0
      %6044 = vmatpush1.bf16.msra.mxu0 %v5869
      %6045 = vmatprep.mubr.bf16.mxu0 %v5803
      %6046 = vmatmul.mubr.bf16.gmra.mrb[0].mxu0 %v5802
      %v6047 = vpop.f32.mrb[0].mxu0
      %v6048 = vadd.f32 %v6008, %v6047
      %v6049 = vpop.f32.mrb[0].mxu0
      %v6050 = vpop.f32.mrb[0].mxu0
      %v6051 = vpop.f32.mrb[0].mxu0
      %6052 = vdwg.mxu0
      %6053 = vmatprep.subr.bf16.mxu0 0
      %6054 = vmatpush1.bf16.msra.mxu0 %v5870
      %6055 = vmatprep.subr.bf16.mxu0 0
      %6056 = vmatpush1.bf16.msra.mxu0 %v5871
      %6057 = vmatprep.subr.bf16.mxu0 0
      %6058 = vmatpush1.bf16.msra.mxu0 %v5872
      %6059 = vmatprep.subr.bf16.mxu0 0
      %6060 = vmatpush1.bf16.msra.mxu0 %v5873
      %6061 = vmatprep.subr.bf16.mxu0 0
      %6062 = vmatpush1.bf16.msra.mxu0 %v5874
      %6063 = vmatprep.subr.bf16.mxu0 0
      %6064 = vmatpush1.bf16.msra.mxu0 %v5875
      %6065 = vmatprep.subr.bf16.mxu0 0
      %6066 = vmatpush1.bf16.msra.mxu0 %v5876
      %6067 = vmatprep.subr.bf16.mxu0 0
      %6068 = vmatpush1.bf16.msra.mxu0 %v5877
      %6069 = vmatprep.subr.bf16.mxu0 0
      %6070 = vmatpush1.bf16.msra.mxu0 %v5878
      %6071 = vmatprep.subr.bf16.mxu0 0
      %6072 = vmatpush1.bf16.msra.mxu0 %v5879
      %6073 = vmatprep.subr.bf16.mxu0 0
      %6074 = vmatpush1.bf16.msra.mxu0 %v5880
      %6075 = vmatprep.subr.bf16.mxu0 0
      %6076 = vmatpush1.bf16.msra.mxu0 %v5881
      %6077 = vmatprep.subr.bf16.mxu0 0
      %6078 = vmatpush1.bf16.msra.mxu0 %v5882
      %6079 = vmatprep.subr.bf16.mxu0 0
      %6080 = vmatpush1.bf16.msra.mxu0 %v5883
      %6081 = vmatprep.subr.bf16.mxu0 0
      %6082 = vmatpush1.bf16.msra.mxu0 %v5884
      %6083 = vmatprep.subr.bf16.mxu0 0
      %6084 = vmatpush1.bf16.msra.mxu0 %v5885
      %6085 = vmatprep.mubr.bf16.mxu0 %v5805
      %6086 = vmatmul.mubr.bf16.gmra.mrb[0].mxu0 %v5804
      %v6087 = vpop.f32.mrb[0].mxu0
      %v6088 = vadd.f32 %v6048, %v6087
      %v6089 = vpop.f32.mrb[0].mxu0
      %v6090 = vpop.f32.mrb[0].mxu0
      %v6091 = vpop.f32.mrb[0].mxu0
      %6092 = vdwg.mxu0
      %vm6093 = vcmp.gt.f32.partialorder %v6088, 0.0
      %v6094 = vmul.f32 %v6088, 0.1
      %v6095 = vsel %vm6093, %v6088, %v6094
      %v6096 = vld [vmem:[%s16] sm:$0xff]
      %v6097 = vld [vmem:[%s16 + $0x8] sm:$0xff]
      %v6098 = vld [vmem:[%s16 + $0x10] sm:$0xff]
      %v6099 = vld [vmem:[%s16 + $0x18] sm:$0xff]
      %v6100 = vld [vmem:[%s16 + $0x20] sm:$0xff]
      %v6101 = vld [vmem:[%s16 + $0x28] sm:$0xff]
      %v6102 = vld [vmem:[%s16 + $0x30] sm:$0xff]
      %v6103 = vld [vmem:[%s16 + $0x38] sm:$0xff]
      %v6104 = vpack.c.bf16 %v6095, %v6095
      %v6105 = vpack.c.bf16 %v6097, %v6096
      %v6106 = vpack.c.bf16 %v6099, %v6098
      %v6107 = vpack.c.bf16 %v6101, %v6100
      %v6108 = vpack.c.bf16 %v6103, %v6102
      %v6109 = vld [vmem:[%s17] sm:$0x1]
      %v6111 = vlaneseq
      %v6112 = vshrl.u32 %v6111, 7
      %v6113 = vsub.s32 0, %v6112
      %v6114 = vrot.slane %v6109, %v6113
      %vm6116 = vcmask 523264
      %v6118 = vsel %vm6116, %v6104, 0
      %6120 = vmatprep.subr.bf16.mxu0 0
      %6121 = vmatpush1.bf16.msra.mxu0 %v6105
      %6122 = vmatprep.subr.bf16.mxu0 0
      %6123 = vmatpush1.bf16.msra.mxu0 %v6106
      %6124 = vmatprep.subr.bf16.mxu0 0
      %6125 = vmatpush1.bf16.msra.mxu0 %v6107
      %6126 = vmatprep.subr.bf16.mxu0 0
      %6127 = vmatpush1.bf16.msra.mxu0 %v6108
      %6128 = vmatprep.subr.bf16.mxu0 0
      %6129 = vmatpush1.bf16.msra.mxu0 0
      %6130 = vmatprep.subr.bf16.mxu0 0
      %6131 = vmatpush1.bf16.msra.mxu0 0
      %6132 = vmatprep.subr.bf16.mxu0 0
      %6133 = vmatpush1.bf16.msra.mxu0 0
      %6134 = vmatprep.subr.bf16.mxu0 0
      %6135 = vmatpush1.bf16.msra.mxu0 0
      %6136 = vmatprep.subr.bf16.mxu0 0
      %6137 = vmatpush1.bf16.msra.mxu0 0
      %6138 = vmatprep.subr.bf16.mxu0 0
      %6139 = vmatpush1.bf16.msra.mxu0 0
      %6140 = vmatprep.subr.bf16.mxu0 0
      %6141 = vmatpush1.bf16.msra.mxu0 0
      %6142 = vmatprep.subr.bf16.mxu0 0
      %6143 = vmatpush1.bf16.msra.mxu0 0
      %6144 = vmatprep.subr.bf16.mxu0 0
      %6145 = vmatpush1.bf16.msra.mxu0 0
      %6146 = vmatprep.subr.bf16.mxu0 0
      %6147 = vmatpush1.bf16.msra.mxu0 0
      %6148 = vmatprep.subr.bf16.mxu0 0
      %6149 = vmatpush1.bf16.msra.mxu0 0
      %6150 = vmatprep.subr.bf16.mxu0 0
      %6151 = vmatpush1.bf16.msra.mxu0 0
      %6152 = vmatprep.mubr.bf16.mxu0 0
      %6153 = vmatmul.mubr.bf16.gmra.mrb[0].mxu0 %v6118
      %v6154 = vpop.f32.mrb[0].mxu0
      %v6155 = vadd.f32 %v6114, %v6154
      %v6156 = vpop.f32.mrb[0].mxu0
      %v6157 = vpop.f32.mrb[0].mxu0
      %v6158 = vpop.f32.mrb[0].mxu0
      %6159 = vdwg.mxu0
      %vm6160 = vcmp.gt.f32.partialorder %v6155, 0.0
      %v6161 = vmul.f32 %v6155, 0.1
      %v6162 = vsel %vm6160, %v6155, %v6161
      %v6163 = vld [vmem:[%s18] sm:$0xff]
      %v6164 = vld [vmem:[%s18 + $0x8] sm:$0xff]
      %v6165 = vld [vmem:[%s18 + $0x10] sm:$0xff]
      %v6166 = vld [vmem:[%s18 + $0x18] sm:$0xff]
      %v6167 = vpack.c.bf16 %v6162, %v6162
      %v6168 = vpack.c.bf16 %v6164, %v6163
      %v6169 = vpack.c.bf16 %v6166, %v6165
      %v6170 = vld [vmem:[%s19] sm:$0x1]
      %v6172 = vlaneseq
      %v6173 = vshrl.u32 %v6172, 7
      %v6174 = vsub.s32 0, %v6173
      %v6175 = vrot.slane %v6170, %v6174
      %v6178 = vsel %vm1573, %v6167, 0
      %6180 = vmatprep.subr.bf16.mxu0 0
      %6181 = vmatpush1.bf16.msra.mxu0 %v6168
      %6182 = vmatprep.subr.bf16.mxu0 0
      %6183 = vmatpush1.bf16.msra.mxu0 %v6169
      %6184 = vmatprep.subr.bf16.mxu0 0
      %6185 = vmatpush1.bf16.msra.mxu0 0
      %6186 = vmatprep.subr.bf16.mxu0 0
      %6187 = vmatpush1.bf16.msra.mxu0 0
      %6188 = vmatprep.subr.bf16.mxu0 0
      %6189 = vmatpush1.bf16.msra.mxu0 0
      %6190 = vmatprep.subr.bf16.mxu0 0
      %6191 = vmatpush1.bf16.msra.mxu0 0
      %6192 = vmatprep.subr.bf16.mxu0 0
      %6193 = vmatpush1.bf16.msra.mxu0 0
      %6194 = vmatprep.subr.bf16.mxu0 0
      %6195 = vmatpush1.bf16.msra.mxu0 0
      %6196 = vmatprep.subr.bf16.mxu0 0
      %6197 = vmatpush1.bf16.msra.mxu0 0
      %6198 = vmatprep.subr.bf16.mxu0 0
      %6199 = vmatpush1.bf16.msra.mxu0 0
      %6200 = vmatprep.subr.bf16.mxu0 0
      %6201 = vmatpush1.bf16.msra.mxu0 0
      %6202 = vmatprep.subr.bf16.mxu0 0
      %6203 = vmatpush1.bf16.msra.mxu0 0
      %6204 = vmatprep.subr.bf16.mxu0 0
      %6205 = vmatpush1.bf16.msra.mxu0 0
      %6206 = vmatprep.subr.bf16.mxu0 0
      %6207 = vmatpush1.bf16.msra.mxu0 0
      %6208 = vmatprep.subr.bf16.mxu0 0
      %6209 = vmatpush1.bf16.msra.mxu0 0
      %6210 = vmatprep.subr.bf16.mxu0 0
      %6211 = vmatpush1.bf16.msra.mxu0 0
      %6212 = vmatprep.mubr.bf16.mxu0 0
      %6213 = vmatmul.mubr.bf16.gmra.mrb[0].mxu0 %v6178
      %v6214 = vpop.f32.mrb[0].mxu0
      %v6215 = vadd.f32 %v6175, %v6214
      %v6216 = vpop.f32.mrb[0].mxu0
      %v6217 = vpop.f32.mrb[0].mxu0
      %v6218 = vpop.f32.mrb[0].mxu0
      %6219 = vdwg.mxu0
      %vm6220 = vcmask 13312
      %6221 = vst.msk [vmem:[%s667] sm:$0x3f] %vm6220, %v6215
      %p6222 = scmp.lt.s32.totalorder %s31, 1
      %s6223 = scalar_select %p6222, %s31, 1
      %s6224 = smul.addr %s6223, 8
      %s6225 = scalar_lea.vmem %s20, %s6224
      // Predicated region
      $region101: #{sgc_network_forward.1} parent=99 // pred_check
        %p6226 = pneg %p484
      $region102: #{sgc_network_forward.1} parent=99 // pred_check_branch
        %6228 = sbr.rel (%p6226) target = $region104
      $region103: #{sgc_network_forward.1} parent=99 // pred_region
        _
      $region104: #{sgc_network_forward.1} parent=99 // pred_fallthru
        _
    $region100: #{sgc_network_forward.1} parent=5 // pred_fallthru
      _
    %p6229 = scmp.le.s32.totalorder 2, %s26
    // Predicated region
    $region105: #{sgc_network_forward.1} parent=5 // pred_check
      %p6230 = pneg %p6229
    $region106: #{sgc_network_forward.1} parent=5 // pred_check_branch
      %6232 = sbr.rel (%p6230) target = $region108
    $region107: #{sgc_network_forward.1} parent=5 // pred_region
      %s6233 = ssub.s32 %s26, 2
      // Predicated region
      $region109: #{sgc_network_forward.1} parent=107 // pred_check
        %p6234 = pneg %p490
      $region110: #{sgc_network_forward.1} parent=107 // pred_check_branch
        %6236 = sbr.rel (%p6234) target = $region112
      $region111: #{sgc_network_forward.1} parent=107 // pred_region
        %p6237 = scmp.lt.s32.totalorder %s32, 1
        %s6238 = scalar_select %p6237, %s32, 1
        %s6239 = smul.addr %s6238, 8
        %s6240 = scalar_lea.vmem %s20, %s6239
      $region112: #{sgc_network_forward.1} parent=107 // pred_fallthru
        _
    $region108: #{sgc_network_forward.1} parent=5 // pred_fallthru
      _
  $region6: #{sgc_network_forward.1} parent=0 // loop_footer
    %s30 = sadd.s32 1, %s26
  $region7: #{sgc_network_forward.1} parent=0 // loop_footer_branch
    %25 = sbr.rel target = $region3
  $region8: #{sgc_network_forward.1} parent=0 // loop_exit
    _

</llo_original>
